<compile_context>
chip_gen: v7x
topology: tpu7x:2x2x1
jax: 0.10.0
libtpu: 0.0.40
codegen_flags: <defaults>
</compile_context>

<pallas_src>
import jax
import jax.numpy as jnp
import numpy as np
from jax.experimental import pallas as pl
from jax.experimental.pallas import tpu as pltpu

EPS = 1e-6


def _lnconv_kernel(x_ref, lnw_ref, lnb_ref, w_ref, b_ref, o_ref):
    # x_ref:   (B, C, H, W)           VMEM
    # lnw_ref: (C,)                   SMEM  LayerNorm weight
    # lnb_ref: (C,)                   SMEM  LayerNorm bias
    # w_ref:   (Cout*C*K*K,)          SMEM  conv weight, flattened (Cout, C, K, K) row-major
    # b_ref:   (Cout,)                SMEM  conv bias
    # o_ref:   (B, Cout, Hout, Wout)  VMEM
    B, C, H, W = x_ref.shape
    _, Cout, Hout, Wout = o_ref.shape
    K = H - Hout + 1
    KK = K * K

    for b in range(B):                                    # B=2, fully static
        x = x_ref[b].astype(jnp.float32)                  # (C, H, W)

        # ---- LayerNorm over the channel axis (channels_first semantics) ----
        # Channel axis is the leading (non-layout) dim -> pure VPU adds over C planes.
        u = jnp.mean(x, axis=0, keepdims=True)            # (1, H, W)
        d = x - u
        var = jnp.mean(d * d, axis=0, keepdims=True)      # (1, H, W)
        inv = jax.lax.rsqrt(var + EPS)[0]                 # (H, W), rsqrt -> EUP

        # ---- 3x3 VALID conv, stride 1, as shifted taps + VPU FMAs ----
        # Accumulators (one per output channel) initialized with the broadcast conv bias.
        accs = [jnp.full((Hout, Wout), b_ref[co], dtype=jnp.float32)
                for co in range(Cout)]

        for c in range(C):
            # Per-channel normalize + affine, computed once per input channel.
            p = d[c] * inv * lnw_ref[c] + lnb_ref[c]      # (H, W)
            for kh in range(K):
                q = p[kh:kh + Hout, :]                    # sublane-offset window
                for kw in range(K):
                    tap = q[:, kw:kw + Wout]              # single-vreg lane shift
                    off = c * KK + kh * K + kw
                    # FMA this tap into every output-channel accumulator immediately
                    # (no tap windows kept alive beyond this point).
                    for co in range(Cout):
                        accs[co] = accs[co] + w_ref[co * C * KK + off] * tap

        # One coalesced store per sample instead of Cout masked per-plane stores.
        o_ref[b] = jnp.stack(accs, axis=0).astype(o_ref.dtype)


def ln_conv(x_nchw, ln_w, ln_b, conv_w, conv_b):
    """x_nchw: (B, Cin, H, W); conv_w: (Cout, Cin, K, K) (PyTorch layouts). Returns NCHW."""
    B, C, H, W = x_nchw.shape
    Cout, Cin, K, _ = conv_w.shape
    assert Cin == C
    Hout, Wout = H - K + 1, W - K + 1

    # Flatten weights for scalar SMEM access; reshape is layout-preserving (no HBM pass).
    w_flat = conv_w.reshape(-1)

    flops = 2 * B * Hout * Wout * K * K * C * Cout + 8 * B * C * H * W
    bytes_accessed = 4 * (B * C * H * W + B * Cout * Hout * Wout
                          + w_flat.size + 2 * C + Cout)

    return pl.pallas_call(
        _lnconv_kernel,
        out_shape=jax.ShapeDtypeStruct((B, Cout, Hout, Wout), x_nchw.dtype),
        # Single invocation: whole problem (< 25 KiB in+out) in one step, no grid.
        in_specs=[
            pl.BlockSpec(memory_space=pltpu.MemorySpace.VMEM),   # x (full array)
            pl.BlockSpec(memory_space=pltpu.MemorySpace.SMEM),   # ln weight
            pl.BlockSpec(memory_space=pltpu.MemorySpace.SMEM),   # ln bias
            pl.BlockSpec(memory_space=pltpu.MemorySpace.SMEM),   # conv weight (flat)
            pl.BlockSpec(memory_space=pltpu.MemorySpace.SMEM),   # conv bias
        ],
        out_specs=pl.BlockSpec(memory_space=pltpu.MemorySpace.VMEM),
        cost_estimate=pl.CostEstimate(
            flops=flops,
            transcendentals=B * H * W,                # one rsqrt per pixel
            bytes_accessed=bytes_accessed,
        ),
    )(x_nchw, ln_w, ln_b, w_flat, conv_b)


def _reference(x_nchw, ln_w, ln_b, conv_w, conv_b):
    # Pure-JAX reference matching the PyTorch module semantics.
    u = jnp.mean(x_nchw, axis=1, keepdims=True)
    s = jnp.mean((x_nchw - u) ** 2, axis=1, keepdims=True)
    xn = (x_nchw - u) / jnp.sqrt(s + EPS)
    xn = ln_w[None, :, None, None] * xn + ln_b[None, :, None, None]
    out = jax.lax.conv_general_dilated(
        xn, conv_w, window_strides=(1, 1), padding="VALID",
        dimension_numbers=("NCHW", "OIHW", "NCHW"))
    return out + conv_b[None, :, None, None]


if __name__ == "__main__":
    # Shapes consistent with the module: batch=2, channels_in=4, channels_out=8, spatial=16.
    B, Cin, Cout, H, W, K = 2, 4, 8, 16, 16, 3

    key = jax.random.PRNGKey(0)
    kx, kwt, kb, klw, klb = jax.random.split(key, 5)

    x = jax.random.normal(kx, (B, Cin, H, W), dtype=jnp.float32)

    # Non-trivial LayerNorm affine params so the affine path is actually tested
    # (module init is ones/zeros, but that would mask channel-indexing bugs).
    ln_w = 1.0 + 0.3 * jax.random.normal(klw, (Cin,), dtype=jnp.float32)
    ln_b = 0.2 * jax.random.normal(klb, (Cin,), dtype=jnp.float32)
    # Conv params: deterministic synthetic init (module uses default Conv2d init).
    conv_w = 0.1 * jax.random.normal(kwt, (Cout, Cin, K, K), dtype=jnp.float32)
    conv_b = 0.1 * jax.random.normal(kb, (Cout,), dtype=jnp.float32)

    out = jax.block_until_ready(ln_conv(x, ln_w, ln_b, conv_w, conv_b))
    ref = jax.block_until_ready(_reference(x, ln_w, ln_b, conv_w, conv_b))

    assert out.shape == (B, Cout, H - K + 1, W - K + 1), out.shape
    assert np.allclose(np.asarray(out), np.asarray(ref), atol=1e-4, rtol=1e-4)
    print("KERNEL_OK")
</pallas_src>

<mosaic_0001>
module attributes {stable_mosaic.version = 11 : i64} {
  func.func @_lnconv_kernel(%arg0: memref<2x4x16x16xf32, #tpu.memory_space<vmem>>, %arg1: memref<4xf32, #tpu.memory_space<smem>>, %arg2: memref<4xf32, #tpu.memory_space<smem>>, %arg3: memref<288xf32, #tpu.memory_space<smem>>, %arg4: memref<8xf32, #tpu.memory_space<smem>>, %arg5: memref<2x8x14x14xf32, #tpu.memory_space<vmem>>) attributes {dimension_semantics = [], scalar_prefetch = 0 : i64, scratch_operands = 0 : i64, tpu.core_type = #tpu.core_type<tc>} {
    %c0 = arith.constant 0 : index
    %c0_0 = arith.constant 0 : index
    %c0_1 = arith.constant 0 : index
    %c0_2 = arith.constant 0 : index
    %0 = vector.load %arg0[%c0, %c0_0, %c0_1, %c0_2] : memref<2x4x16x16xf32, #tpu.memory_space<vmem>>, vector<1x4x16x16xf32>
    %1 = vector.shape_cast %0 : vector<1x4x16x16xf32> to vector<4x16x16xf32>
    %cst = arith.constant dense<0.000000e+00> : vector<16x16xf32>
    %2 = vector.multi_reduction <add>, %1, %cst [0] : vector<4x16x16xf32> to vector<16x16xf32>
    %3 = vector.shape_cast %2 : vector<16x16xf32> to vector<1x16x16xf32>
    %cst_3 = arith.constant 4.000000e+00 : f32
    %4 = vector.broadcast %cst_3 : f32 to vector<1x16x16xf32>
    %5 = arith.divf %3, %4 : vector<1x16x16xf32>
    %6 = vector.broadcast %5 : vector<1x16x16xf32> to vector<4x16x16xf32>
    %7 = arith.subf %1, %6 : vector<4x16x16xf32>
    %8 = arith.mulf %7, %7 : vector<4x16x16xf32>
    %cst_4 = arith.constant dense<0.000000e+00> : vector<16x16xf32>
    %9 = vector.multi_reduction <add>, %8, %cst_4 [0] : vector<4x16x16xf32> to vector<16x16xf32>
    %10 = vector.shape_cast %9 : vector<16x16xf32> to vector<1x16x16xf32>
    %cst_5 = arith.constant 4.000000e+00 : f32
    %11 = vector.broadcast %cst_5 : f32 to vector<1x16x16xf32>
    %12 = arith.divf %10, %11 : vector<1x16x16xf32>
    %cst_6 = arith.constant 9.99999997E-7 : f32
    %13 = vector.broadcast %cst_6 : f32 to vector<1x16x16xf32>
    %14 = arith.addf %12, %13 : vector<1x16x16xf32>
    %15 = math.rsqrt %14 : vector<1x16x16xf32>
    %16 = vector.shape_cast %15 : vector<1x16x16xf32> to vector<16x16xf32>
    %c0_7 = arith.constant 0 : index
    %17 = memref.load %arg4[%c0_7] : memref<8xf32, #tpu.memory_space<smem>>
    %18 = vector.broadcast %17 : f32 to vector<14x14xf32>
    %c1 = arith.constant 1 : index
    %19 = memref.load %arg4[%c1] : memref<8xf32, #tpu.memory_space<smem>>
    %20 = vector.broadcast %19 : f32 to vector<14x14xf32>
    %c2 = arith.constant 2 : index
    %21 = memref.load %arg4[%c2] : memref<8xf32, #tpu.memory_space<smem>>
    %22 = vector.broadcast %21 : f32 to vector<14x14xf32>
    %c3 = arith.constant 3 : index
    %23 = memref.load %arg4[%c3] : memref<8xf32, #tpu.memory_space<smem>>
    %24 = vector.broadcast %23 : f32 to vector<14x14xf32>
    %c4 = arith.constant 4 : index
    %25 = memref.load %arg4[%c4] : memref<8xf32, #tpu.memory_space<smem>>
    %26 = vector.broadcast %25 : f32 to vector<14x14xf32>
    %c5 = arith.constant 5 : index
    %27 = memref.load %arg4[%c5] : memref<8xf32, #tpu.memory_space<smem>>
    %28 = vector.broadcast %27 : f32 to vector<14x14xf32>
    %c6 = arith.constant 6 : index
    %29 = memref.load %arg4[%c6] : memref<8xf32, #tpu.memory_space<smem>>
    %30 = vector.broadcast %29 : f32 to vector<14x14xf32>
    %c7 = arith.constant 7 : index
    %31 = memref.load %arg4[%c7] : memref<8xf32, #tpu.memory_space<smem>>
    %32 = vector.broadcast %31 : f32 to vector<14x14xf32>
    %33 = vector.extract_strided_slice %7 {offsets = [0, 0, 0], sizes = [1, 16, 16], strides = [1, 1, 1]} : vector<4x16x16xf32> to vector<1x16x16xf32>
    %34 = vector.shape_cast %33 : vector<1x16x16xf32> to vector<16x16xf32>
    %35 = arith.mulf %34, %16 : vector<16x16xf32>
    %c0_8 = arith.constant 0 : index
    %36 = memref.load %arg1[%c0_8] : memref<4xf32, #tpu.memory_space<smem>>
    %37 = vector.broadcast %36 : f32 to vector<16x16xf32>
    %38 = arith.mulf %35, %37 : vector<16x16xf32>
    %c0_9 = arith.constant 0 : index
    %39 = memref.load %arg2[%c0_9] : memref<4xf32, #tpu.memory_space<smem>>
    %40 = vector.broadcast %39 : f32 to vector<16x16xf32>
    %41 = arith.addf %38, %40 : vector<16x16xf32>
    %42 = vector.extract_strided_slice %41 {offsets = [0, 0], sizes = [14, 16], strides = [1, 1]} : vector<16x16xf32> to vector<14x16xf32>
    %43 = vector.extract_strided_slice %42 {offsets = [0, 0], sizes = [14, 14], strides = [1, 1]} : vector<14x16xf32> to vector<14x14xf32>
    %c0_10 = arith.constant 0 : index
    %44 = memref.load %arg3[%c0_10] : memref<288xf32, #tpu.memory_space<smem>>
    %45 = vector.broadcast %44 : f32 to vector<14x14xf32>
    %46 = arith.mulf %45, %43 : vector<14x14xf32>
    %47 = arith.addf %18, %46 : vector<14x14xf32>
    %c36 = arith.constant 36 : index
    %48 = memref.load %arg3[%c36] : memref<288xf32, #tpu.memory_space<smem>>
    %49 = vector.broadcast %48 : f32 to vector<14x14xf32>
    %50 = arith.mulf %49, %43 : vector<14x14xf32>
    %51 = arith.addf %20, %50 : vector<14x14xf32>
    %c72 = arith.constant 72 : index
    %52 = memref.load %arg3[%c72] : memref<288xf32, #tpu.memory_space<smem>>
    %53 = vector.broadcast %52 : f32 to vector<14x14xf32>
    %54 = arith.mulf %53, %43 : vector<14x14xf32>
    %55 = arith.addf %22, %54 : vector<14x14xf32>
    %c108 = arith.constant 108 : index
    %56 = memref.load %arg3[%c108] : memref<288xf32, #tpu.memory_space<smem>>
    %57 = vector.broadcast %56 : f32 to vector<14x14xf32>
    %58 = arith.mulf %57, %43 : vector<14x14xf32>
    %59 = arith.addf %24, %58 : vector<14x14xf32>
    %c144 = arith.constant 144 : index
    %60 = memref.load %arg3[%c144] : memref<288xf32, #tpu.memory_space<smem>>
    %61 = vector.broadcast %60 : f32 to vector<14x14xf32>
    %62 = arith.mulf %61, %43 : vector<14x14xf32>
    %63 = arith.addf %26, %62 : vector<14x14xf32>
    %c180 = arith.constant 180 : index
    %64 = memref.load %arg3[%c180] : memref<288xf32, #tpu.memory_space<smem>>
    %65 = vector.broadcast %64 : f32 to vector<14x14xf32>
    %66 = arith.mulf %65, %43 : vector<14x14xf32>
    %67 = arith.addf %28, %66 : vector<14x14xf32>
    %c216 = arith.constant 216 : index
    %68 = memref.load %arg3[%c216] : memref<288xf32, #tpu.memory_space<smem>>
    %69 = vector.broadcast %68 : f32 to vector<14x14xf32>
    %70 = arith.mulf %69, %43 : vector<14x14xf32>
    %71 = arith.addf %30, %70 : vector<14x14xf32>
    %c252 = arith.constant 252 : index
    %72 = memref.load %arg3[%c252] : memref<288xf32, #tpu.memory_space<smem>>
    %73 = vector.broadcast %72 : f32 to vector<14x14xf32>
    %74 = arith.mulf %73, %43 : vector<14x14xf32>
    %75 = arith.addf %32, %74 : vector<14x14xf32>
    %76 = vector.extract_strided_slice %42 {offsets = [0, 1], sizes = [14, 14], strides = [1, 1]} : vector<14x16xf32> to vector<14x14xf32>
    %c1_11 = arith.constant 1 : index
    %77 = memref.load %arg3[%c1_11] : memref<288xf32, #tpu.memory_space<smem>>
    %78 = vector.broadcast %77 : f32 to vector<14x14xf32>
    %79 = arith.mulf %78, %76 : vector<14x14xf32>
    %80 = arith.addf %47, %79 : vector<14x14xf32>
    %c37 = arith.constant 37 : index
    %81 = memref.load %arg3[%c37] : memref<288xf32, #tpu.memory_space<smem>>
    %82 = vector.broadcast %81 : f32 to vector<14x14xf32>
    %83 = arith.mulf %82, %76 : vector<14x14xf32>
    %84 = arith.addf %51, %83 : vector<14x14xf32>
    %c73 = arith.constant 73 : index
    %85 = memref.load %arg3[%c73] : memref<288xf32, #tpu.memory_space<smem>>
    %86 = vector.broadcast %85 : f32 to vector<14x14xf32>
    %87 = arith.mulf %86, %76 : vector<14x14xf32>
    %88 = arith.addf %55, %87 : vector<14x14xf32>
    %c109 = arith.constant 109 : index
    %89 = memref.load %arg3[%c109] : memref<288xf32, #tpu.memory_space<smem>>
    %90 = vector.broadcast %89 : f32 to vector<14x14xf32>
    %91 = arith.mulf %90, %76 : vector<14x14xf32>
    %92 = arith.addf %59, %91 : vector<14x14xf32>
    %c145 = arith.constant 145 : index
    %93 = memref.load %arg3[%c145] : memref<288xf32, #tpu.memory_space<smem>>
    %94 = vector.broadcast %93 : f32 to vector<14x14xf32>
    %95 = arith.mulf %94, %76 : vector<14x14xf32>
    %96 = arith.addf %63, %95 : vector<14x14xf32>
    %c181 = arith.constant 181 : index
    %97 = memref.load %arg3[%c181] : memref<288xf32, #tpu.memory_space<smem>>
    %98 = vector.broadcast %97 : f32 to vector<14x14xf32>
    %99 = arith.mulf %98, %76 : vector<14x14xf32>
    %100 = arith.addf %67, %99 : vector<14x14xf32>
    %c217 = arith.constant 217 : index
    %101 = memref.load %arg3[%c217] : memref<288xf32, #tpu.memory_space<smem>>
    %102 = vector.broadcast %101 : f32 to vector<14x14xf32>
    %103 = arith.mulf %102, %76 : vector<14x14xf32>
    %104 = arith.addf %71, %103 : vector<14x14xf32>
    %c253 = arith.constant 253 : index
    %105 = memref.load %arg3[%c253] : memref<288xf32, #tpu.memory_space<smem>>
    %106 = vector.broadcast %105 : f32 to vector<14x14xf32>
    %107 = arith.mulf %106, %76 : vector<14x14xf32>
    %108 = arith.addf %75, %107 : vector<14x14xf32>
    %109 = vector.extract_strided_slice %42 {offsets = [0, 2], sizes = [14, 14], strides = [1, 1]} : vector<14x16xf32> to vector<14x14xf32>
    %c2_12 = arith.constant 2 : index
    %110 = memref.load %arg3[%c2_12] : memref<288xf32, #tpu.memory_space<smem>>
    %111 = vector.broadcast %110 : f32 to vector<14x14xf32>
    %112 = arith.mulf %111, %109 : vector<14x14xf32>
    %113 = arith.addf %80, %112 : vector<14x14xf32>
    %c38 = arith.constant 38 : index
    %114 = memref.load %arg3[%c38] : memref<288xf32, #tpu.memory_space<smem>>
    %115 = vector.broadcast %114 : f32 to vector<14x14xf32>
    %116 = arith.mulf %115, %109 : vector<14x14xf32>
    %117 = arith.addf %84, %116 : vector<14x14xf32>
    %c74 = arith.constant 74 : index
    %118 = memref.load %arg3[%c74] : memref<288xf32, #tpu.memory_space<smem>>
    %119 = vector.broadcast %118 : f32 to vector<14x14xf32>
    %120 = arith.mulf %119, %109 : vector<14x14xf32>
    %121 = arith.addf %88, %120 : vector<14x14xf32>
    %c110 = arith.constant 110 : index
    %122 = memref.load %arg3[%c110] : memref<288xf32, #tpu.memory_space<smem>>
    %123 = vector.broadcast %122 : f32 to vector<14x14xf32>
    %124 = arith.mulf %123, %109 : vector<14x14xf32>
    %125 = arith.addf %92, %124 : vector<14x14xf32>
    %c146 = arith.constant 146 : index
    %126 = memref.load %arg3[%c146] : memref<288xf32, #tpu.memory_space<smem>>
    %127 = vector.broadcast %126 : f32 to vector<14x14xf32>
    %128 = arith.mulf %127, %109 : vector<14x14xf32>
    %129 = arith.addf %96, %128 : vector<14x14xf32>
    %c182 = arith.constant 182 : index
    %130 = memref.load %arg3[%c182] : memref<288xf32, #tpu.memory_space<smem>>
    %131 = vector.broadcast %130 : f32 to vector<14x14xf32>
    %132 = arith.mulf %131, %109 : vector<14x14xf32>
    %133 = arith.addf %100, %132 : vector<14x14xf32>
    %c218 = arith.constant 218 : index
    %134 = memref.load %arg3[%c218] : memref<288xf32, #tpu.memory_space<smem>>
    %135 = vector.broadcast %134 : f32 to vector<14x14xf32>
    %136 = arith.mulf %135, %109 : vector<14x14xf32>
    %137 = arith.addf %104, %136 : vector<14x14xf32>
    %c254 = arith.constant 254 : index
    %138 = memref.load %arg3[%c254] : memref<288xf32, #tpu.memory_space<smem>>
    %139 = vector.broadcast %138 : f32 to vector<14x14xf32>
    %140 = arith.mulf %139, %109 : vector<14x14xf32>
    %141 = arith.addf %108, %140 : vector<14x14xf32>
    %142 = vector.extract_strided_slice %41 {offsets = [1, 0], sizes = [14, 16], strides = [1, 1]} : vector<16x16xf32> to vector<14x16xf32>
    %143 = vector.extract_strided_slice %142 {offsets = [0, 0], sizes = [14, 14], strides = [1, 1]} : vector<14x16xf32> to vector<14x14xf32>
    %c3_13 = arith.constant 3 : index
    %144 = memref.load %arg3[%c3_13] : memref<288xf32, #tpu.memory_space<smem>>
    %145 = vector.broadcast %144 : f32 to vector<14x14xf32>
    %146 = arith.mulf %145, %143 : vector<14x14xf32>
    %147 = arith.addf %113, %146 : vector<14x14xf32>
    %c39 = arith.constant 39 : index
    %148 = memref.load %arg3[%c39] : memref<288xf32, #tpu.memory_space<smem>>
    %149 = vector.broadcast %148 : f32 to vector<14x14xf32>
    %150 = arith.mulf %149, %143 : vector<14x14xf32>
    %151 = arith.addf %117, %150 : vector<14x14xf32>
    %c75 = arith.constant 75 : index
    %152 = memref.load %arg3[%c75] : memref<288xf32, #tpu.memory_space<smem>>
    %153 = vector.broadcast %152 : f32 to vector<14x14xf32>
    %154 = arith.mulf %153, %143 : vector<14x14xf32>
    %155 = arith.addf %121, %154 : vector<14x14xf32>
    %c111 = arith.constant 111 : index
    %156 = memref.load %arg3[%c111] : memref<288xf32, #tpu.memory_space<smem>>
    %157 = vector.broadcast %156 : f32 to vector<14x14xf32>
    %158 = arith.mulf %157, %143 : vector<14x14xf32>
    %159 = arith.addf %125, %158 : vector<14x14xf32>
    %c147 = arith.constant 147 : index
    %160 = memref.load %arg3[%c147] : memref<288xf32, #tpu.memory_space<smem>>
    %161 = vector.broadcast %160 : f32 to vector<14x14xf32>
    %162 = arith.mulf %161, %143 : vector<14x14xf32>
    %163 = arith.addf %129, %162 : vector<14x14xf32>
    %c183 = arith.constant 183 : index
    %164 = memref.load %arg3[%c183] : memref<288xf32, #tpu.memory_space<smem>>
    %165 = vector.broadcast %164 : f32 to vector<14x14xf32>
    %166 = arith.mulf %165, %143 : vector<14x14xf32>
    %167 = arith.addf %133, %166 : vector<14x14xf32>
    %c219 = arith.constant 219 : index
    %168 = memref.load %arg3[%c219] : memref<288xf32, #tpu.memory_space<smem>>
    %169 = vector.broadcast %168 : f32 to vector<14x14xf32>
    %170 = arith.mulf %169, %143 : vector<14x14xf32>
    %171 = arith.addf %137, %170 : vector<14x14xf32>
    %c255 = arith.constant 255 : index
    %172 = memref.load %arg3[%c255] : memref<288xf32, #tpu.memory_space<smem>>
    %173 = vector.broadcast %172 : f32 to vector<14x14xf32>
    %174 = arith.mulf %173, %143 : vector<14x14xf32>
    %175 = arith.addf %141, %174 : vector<14x14xf32>
    %176 = vector.extract_strided_slice %142 {offsets = [0, 1], sizes = [14, 14], strides = [1, 1]} : vector<14x16xf32> to vector<14x14xf32>
    %c4_14 = arith.constant 4 : index
    %177 = memref.load %arg3[%c4_14] : memref<288xf32, #tpu.memory_space<smem>>
    %178 = vector.broadcast %177 : f32 to vector<14x14xf32>
    %179 = arith.mulf %178, %176 : vector<14x14xf32>
    %180 = arith.addf %147, %179 : vector<14x14xf32>
    %c40 = arith.constant 40 : index
    %181 = memref.load %arg3[%c40] : memref<288xf32, #tpu.memory_space<smem>>
    %182 = vector.broadcast %181 : f32 to vector<14x14xf32>
    %183 = arith.mulf %182, %176 : vector<14x14xf32>
    %184 = arith.addf %151, %183 : vector<14x14xf32>
    %c76 = arith.constant 76 : index
    %185 = memref.load %arg3[%c76] : memref<288xf32, #tpu.memory_space<smem>>
    %186 = vector.broadcast %185 : f32 to vector<14x14xf32>
    %187 = arith.mulf %186, %176 : vector<14x14xf32>
    %188 = arith.addf %155, %187 : vector<14x14xf32>
    %c112 = arith.constant 112 : index
    %189 = memref.load %arg3[%c112] : memref<288xf32, #tpu.memory_space<smem>>
    %190 = vector.broadcast %189 : f32 to vector<14x14xf32>
    %191 = arith.mulf %190, %176 : vector<14x14xf32>
    %192 = arith.addf %159, %191 : vector<14x14xf32>
    %c148 = arith.constant 148 : index
    %193 = memref.load %arg3[%c148] : memref<288xf32, #tpu.memory_space<smem>>
    %194 = vector.broadcast %193 : f32 to vector<14x14xf32>
    %195 = arith.mulf %194, %176 : vector<14x14xf32>
    %196 = arith.addf %163, %195 : vector<14x14xf32>
    %c184 = arith.constant 184 : index
    %197 = memref.load %arg3[%c184] : memref<288xf32, #tpu.memory_space<smem>>
    %198 = vector.broadcast %197 : f32 to vector<14x14xf32>
    %199 = arith.mulf %198, %176 : vector<14x14xf32>
    %200 = arith.addf %167, %199 : vector<14x14xf32>
    %c220 = arith.constant 220 : index
    %201 = memref.load %arg3[%c220] : memref<288xf32, #tpu.memory_space<smem>>
    %202 = vector.broadcast %201 : f32 to vector<14x14xf32>
    %203 = arith.mulf %202, %176 : vector<14x14xf32>
    %204 = arith.addf %171, %203 : vector<14x14xf32>
    %c256 = arith.constant 256 : index
    %205 = memref.load %arg3[%c256] : memref<288xf32, #tpu.memory_space<smem>>
    %206 = vector.broadcast %205 : f32 to vector<14x14xf32>
    %207 = arith.mulf %206, %176 : vector<14x14xf32>
    %208 = arith.addf %175, %207 : vector<14x14xf32>
    %209 = vector.extract_strided_slice %142 {offsets = [0, 2], sizes = [14, 14], strides = [1, 1]} : vector<14x16xf32> to vector<14x14xf32>
    %c5_15 = arith.constant 5 : index
    %210 = memref.load %arg3[%c5_15] : memref<288xf32, #tpu.memory_space<smem>>
    %211 = vector.broadcast %210 : f32 to vector<14x14xf32>
    %212 = arith.mulf %211, %209 : vector<14x14xf32>
    %213 = arith.addf %180, %212 : vector<14x14xf32>
    %c41 = arith.constant 41 : index
    %214 = memref.load %arg3[%c41] : memref<288xf32, #tpu.memory_space<smem>>
    %215 = vector.broadcast %214 : f32 to vector<14x14xf32>
    %216 = arith.mulf %215, %209 : vector<14x14xf32>
    %217 = arith.addf %184, %216 : vector<14x14xf32>
    %c77 = arith.constant 77 : index
    %218 = memref.load %arg3[%c77] : memref<288xf32, #tpu.memory_space<smem>>
    %219 = vector.broadcast %218 : f32 to vector<14x14xf32>
    %220 = arith.mulf %219, %209 : vector<14x14xf32>
    %221 = arith.addf %188, %220 : vector<14x14xf32>
    %c113 = arith.constant 113 : index
    %222 = memref.load %arg3[%c113] : memref<288xf32, #tpu.memory_space<smem>>
    %223 = vector.broadcast %222 : f32 to vector<14x14xf32>
    %224 = arith.mulf %223, %209 : vector<14x14xf32>
    %225 = arith.addf %192, %224 : vector<14x14xf32>
    %c149 = arith.constant 149 : index
    %226 = memref.load %arg3[%c149] : memref<288xf32, #tpu.memory_space<smem>>
    %227 = vector.broadcast %226 : f32 to vector<14x14xf32>
    %228 = arith.mulf %227, %209 : vector<14x14xf32>
    %229 = arith.addf %196, %228 : vector<14x14xf32>
    %c185 = arith.constant 185 : index
    %230 = memref.load %arg3[%c185] : memref<288xf32, #tpu.memory_space<smem>>
    %231 = vector.broadcast %230 : f32 to vector<14x14xf32>
    %232 = arith.mulf %231, %209 : vector<14x14xf32>
    %233 = arith.addf %200, %232 : vector<14x14xf32>
    %c221 = arith.constant 221 : index
    %234 = memref.load %arg3[%c221] : memref<288xf32, #tpu.memory_space<smem>>
    %235 = vector.broadcast %234 : f32 to vector<14x14xf32>
    %236 = arith.mulf %235, %209 : vector<14x14xf32>
    %237 = arith.addf %204, %236 : vector<14x14xf32>
    %c257 = arith.constant 257 : index
    %238 = memref.load %arg3[%c257] : memref<288xf32, #tpu.memory_space<smem>>
    %239 = vector.broadcast %238 : f32 to vector<14x14xf32>
    %240 = arith.mulf %239, %209 : vector<14x14xf32>
    %241 = arith.addf %208, %240 : vector<14x14xf32>
    %242 = vector.extract_strided_slice %41 {offsets = [2, 0], sizes = [14, 16], strides = [1, 1]} : vector<16x16xf32> to vector<14x16xf32>
    %243 = vector.extract_strided_slice %242 {offsets = [0, 0], sizes = [14, 14], strides = [1, 1]} : vector<14x16xf32> to vector<14x14xf32>
    %c6_16 = arith.constant 6 : index
    %244 = memref.load %arg3[%c6_16] : memref<288xf32, #tpu.memory_space<smem>>
    %245 = vector.broadcast %244 : f32 to vector<14x14xf32>
    %246 = arith.mulf %245, %243 : vector<14x14xf32>
    %247 = arith.addf %213, %246 : vector<14x14xf32>
    %c42 = arith.constant 42 : index
    %248 = memref.load %arg3[%c42] : memref<288xf32, #tpu.memory_space<smem>>
    %249 = vector.broadcast %248 : f32 to vector<14x14xf32>
    %250 = arith.mulf %249, %243 : vector<14x14xf32>
    %251 = arith.addf %217, %250 : vector<14x14xf32>
    %c78 = arith.constant 78 : index
    %252 = memref.load %arg3[%c78] : memref<288xf32, #tpu.memory_space<smem>>
    %253 = vector.broadcast %252 : f32 to vector<14x14xf32>
    %254 = arith.mulf %253, %243 : vector<14x14xf32>
    %255 = arith.addf %221, %254 : vector<14x14xf32>
    %c114 = arith.constant 114 : index
    %256 = memref.load %arg3[%c114] : memref<288xf32, #tpu.memory_space<smem>>
    %257 = vector.broadcast %256 : f32 to vector<14x14xf32>
    %258 = arith.mulf %257, %243 : vector<14x14xf32>
    %259 = arith.addf %225, %258 : vector<14x14xf32>
    %c150 = arith.constant 150 : index
    %260 = memref.load %arg3[%c150] : memref<288xf32, #tpu.memory_space<smem>>
    %261 = vector.broadcast %260 : f32 to vector<14x14xf32>
    %262 = arith.mulf %261, %243 : vector<14x14xf32>
    %263 = arith.addf %229, %262 : vector<14x14xf32>
    %c186 = arith.constant 186 : index
    %264 = memref.load %arg3[%c186] : memref<288xf32, #tpu.memory_space<smem>>
    %265 = vector.broadcast %264 : f32 to vector<14x14xf32>
    %266 = arith.mulf %265, %243 : vector<14x14xf32>
    %267 = arith.addf %233, %266 : vector<14x14xf32>
    %c222 = arith.constant 222 : index
    %268 = memref.load %arg3[%c222] : memref<288xf32, #tpu.memory_space<smem>>
    %269 = vector.broadcast %268 : f32 to vector<14x14xf32>
    %270 = arith.mulf %269, %243 : vector<14x14xf32>
    %271 = arith.addf %237, %270 : vector<14x14xf32>
    %c258 = arith.constant 258 : index
    %272 = memref.load %arg3[%c258] : memref<288xf32, #tpu.memory_space<smem>>
    %273 = vector.broadcast %272 : f32 to vector<14x14xf32>
    %274 = arith.mulf %273, %243 : vector<14x14xf32>
    %275 = arith.addf %241, %274 : vector<14x14xf32>
    %276 = vector.extract_strided_slice %242 {offsets = [0, 1], sizes = [14, 14], strides = [1, 1]} : vector<14x16xf32> to vector<14x14xf32>
    %c7_17 = arith.constant 7 : index
    %277 = memref.load %arg3[%c7_17] : memref<288xf32, #tpu.memory_space<smem>>
    %278 = vector.broadcast %277 : f32 to vector<14x14xf32>
    %279 = arith.mulf %278, %276 : vector<14x14xf32>
    %280 = arith.addf %247, %279 : vector<14x14xf32>
    %c43 = arith.constant 43 : index
    %281 = memref.load %arg3[%c43] : memref<288xf32, #tpu.memory_space<smem>>
    %282 = vector.broadcast %281 : f32 to vector<14x14xf32>
    %283 = arith.mulf %282, %276 : vector<14x14xf32>
    %284 = arith.addf %251, %283 : vector<14x14xf32>
    %c79 = arith.constant 79 : index
    %285 = memref.load %arg3[%c79] : memref<288xf32, #tpu.memory_space<smem>>
    %286 = vector.broadcast %285 : f32 to vector<14x14xf32>
    %287 = arith.mulf %286, %276 : vector<14x14xf32>
    %288 = arith.addf %255, %287 : vector<14x14xf32>
    %c115 = arith.constant 115 : index
    %289 = memref.load %arg3[%c115] : memref<288xf32, #tpu.memory_space<smem>>
    %290 = vector.broadcast %289 : f32 to vector<14x14xf32>
    %291 = arith.mulf %290, %276 : vector<14x14xf32>
    %292 = arith.addf %259, %291 : vector<14x14xf32>
    %c151 = arith.constant 151 : index
    %293 = memref.load %arg3[%c151] : memref<288xf32, #tpu.memory_space<smem>>
    %294 = vector.broadcast %293 : f32 to vector<14x14xf32>
    %295 = arith.mulf %294, %276 : vector<14x14xf32>
    %296 = arith.addf %263, %295 : vector<14x14xf32>
    %c187 = arith.constant 187 : index
    %297 = memref.load %arg3[%c187] : memref<288xf32, #tpu.memory_space<smem>>
    %298 = vector.broadcast %297 : f32 to vector<14x14xf32>
    %299 = arith.mulf %298, %276 : vector<14x14xf32>
    %300 = arith.addf %267, %299 : vector<14x14xf32>
    %c223 = arith.constant 223 : index
    %301 = memref.load %arg3[%c223] : memref<288xf32, #tpu.memory_space<smem>>
    %302 = vector.broadcast %301 : f32 to vector<14x14xf32>
    %303 = arith.mulf %302, %276 : vector<14x14xf32>
    %304 = arith.addf %271, %303 : vector<14x14xf32>
    %c259 = arith.constant 259 : index
    %305 = memref.load %arg3[%c259] : memref<288xf32, #tpu.memory_space<smem>>
    %306 = vector.broadcast %305 : f32 to vector<14x14xf32>
    %307 = arith.mulf %306, %276 : vector<14x14xf32>
    %308 = arith.addf %275, %307 : vector<14x14xf32>
    %309 = vector.extract_strided_slice %242 {offsets = [0, 2], sizes = [14, 14], strides = [1, 1]} : vector<14x16xf32> to vector<14x14xf32>
    %c8 = arith.constant 8 : index
    %310 = memref.load %arg3[%c8] : memref<288xf32, #tpu.memory_space<smem>>
    %311 = vector.broadcast %310 : f32 to vector<14x14xf32>
    %312 = arith.mulf %311, %309 : vector<14x14xf32>
    %313 = arith.addf %280, %312 : vector<14x14xf32>
    %c44 = arith.constant 44 : index
    %314 = memref.load %arg3[%c44] : memref<288xf32, #tpu.memory_space<smem>>
    %315 = vector.broadcast %314 : f32 to vector<14x14xf32>
    %316 = arith.mulf %315, %309 : vector<14x14xf32>
    %317 = arith.addf %284, %316 : vector<14x14xf32>
    %c80 = arith.constant 80 : index
    %318 = memref.load %arg3[%c80] : memref<288xf32, #tpu.memory_space<smem>>
    %319 = vector.broadcast %318 : f32 to vector<14x14xf32>
    %320 = arith.mulf %319, %309 : vector<14x14xf32>
    %321 = arith.addf %288, %320 : vector<14x14xf32>
    %c116 = arith.constant 116 : index
    %322 = memref.load %arg3[%c116] : memref<288xf32, #tpu.memory_space<smem>>
    %323 = vector.broadcast %322 : f32 to vector<14x14xf32>
    %324 = arith.mulf %323, %309 : vector<14x14xf32>
    %325 = arith.addf %292, %324 : vector<14x14xf32>
    %c152 = arith.constant 152 : index
    %326 = memref.load %arg3[%c152] : memref<288xf32, #tpu.memory_space<smem>>
    %327 = vector.broadcast %326 : f32 to vector<14x14xf32>
    %328 = arith.mulf %327, %309 : vector<14x14xf32>
    %329 = arith.addf %296, %328 : vector<14x14xf32>
    %c188 = arith.constant 188 : index
    %330 = memref.load %arg3[%c188] : memref<288xf32, #tpu.memory_space<smem>>
    %331 = vector.broadcast %330 : f32 to vector<14x14xf32>
    %332 = arith.mulf %331, %309 : vector<14x14xf32>
    %333 = arith.addf %300, %332 : vector<14x14xf32>
    %c224 = arith.constant 224 : index
    %334 = memref.load %arg3[%c224] : memref<288xf32, #tpu.memory_space<smem>>
    %335 = vector.broadcast %334 : f32 to vector<14x14xf32>
    %336 = arith.mulf %335, %309 : vector<14x14xf32>
    %337 = arith.addf %304, %336 : vector<14x14xf32>
    %c260 = arith.constant 260 : index
    %338 = memref.load %arg3[%c260] : memref<288xf32, #tpu.memory_space<smem>>
    %339 = vector.broadcast %338 : f32 to vector<14x14xf32>
    %340 = arith.mulf %339, %309 : vector<14x14xf32>
    %341 = arith.addf %308, %340 : vector<14x14xf32>
    %342 = vector.extract_strided_slice %7 {offsets = [1, 0, 0], sizes = [1, 16, 16], strides = [1, 1, 1]} : vector<4x16x16xf32> to vector<1x16x16xf32>
    %343 = vector.shape_cast %342 : vector<1x16x16xf32> to vector<16x16xf32>
    %344 = arith.mulf %343, %16 : vector<16x16xf32>
    %c1_18 = arith.constant 1 : index
    %345 = memref.load %arg1[%c1_18] : memref<4xf32, #tpu.memory_space<smem>>
    %346 = vector.broadcast %345 : f32 to vector<16x16xf32>
    %347 = arith.mulf %344, %346 : vector<16x16xf32>
    %c1_19 = arith.constant 1 : index
    %348 = memref.load %arg2[%c1_19] : memref<4xf32, #tpu.memory_space<smem>>
    %349 = vector.broadcast %348 : f32 to vector<16x16xf32>
    %350 = arith.addf %347, %349 : vector<16x16xf32>
    %351 = vector.extract_strided_slice %350 {offsets = [0, 0], sizes = [14, 16], strides = [1, 1]} : vector<16x16xf32> to vector<14x16xf32>
    %352 = vector.extract_strided_slice %351 {offsets = [0, 0], sizes = [14, 14], strides = [1, 1]} : vector<14x16xf32> to vector<14x14xf32>
    %c9 = arith.constant 9 : index
    %353 = memref.load %arg3[%c9] : memref<288xf32, #tpu.memory_space<smem>>
    %354 = vector.broadcast %353 : f32 to vector<14x14xf32>
    %355 = arith.mulf %354, %352 : vector<14x14xf32>
    %356 = arith.addf %313, %355 : vector<14x14xf32>
    %c45 = arith.constant 45 : index
    %357 = memref.load %arg3[%c45] : memref<288xf32, #tpu.memory_space<smem>>
    %358 = vector.broadcast %357 : f32 to vector<14x14xf32>
    %359 = arith.mulf %358, %352 : vector<14x14xf32>
    %360 = arith.addf %317, %359 : vector<14x14xf32>
    %c81 = arith.constant 81 : index
    %361 = memref.load %arg3[%c81] : memref<288xf32, #tpu.memory_space<smem>>
    %362 = vector.broadcast %361 : f32 to vector<14x14xf32>
    %363 = arith.mulf %362, %352 : vector<14x14xf32>
    %364 = arith.addf %321, %363 : vector<14x14xf32>
    %c117 = arith.constant 117 : index
    %365 = memref.load %arg3[%c117] : memref<288xf32, #tpu.memory_space<smem>>
    %366 = vector.broadcast %365 : f32 to vector<14x14xf32>
    %367 = arith.mulf %366, %352 : vector<14x14xf32>
    %368 = arith.addf %325, %367 : vector<14x14xf32>
    %c153 = arith.constant 153 : index
    %369 = memref.load %arg3[%c153] : memref<288xf32, #tpu.memory_space<smem>>
    %370 = vector.broadcast %369 : f32 to vector<14x14xf32>
    %371 = arith.mulf %370, %352 : vector<14x14xf32>
    %372 = arith.addf %329, %371 : vector<14x14xf32>
    %c189 = arith.constant 189 : index
    %373 = memref.load %arg3[%c189] : memref<288xf32, #tpu.memory_space<smem>>
    %374 = vector.broadcast %373 : f32 to vector<14x14xf32>
    %375 = arith.mulf %374, %352 : vector<14x14xf32>
    %376 = arith.addf %333, %375 : vector<14x14xf32>
    %c225 = arith.constant 225 : index
    %377 = memref.load %arg3[%c225] : memref<288xf32, #tpu.memory_space<smem>>
    %378 = vector.broadcast %377 : f32 to vector<14x14xf32>
    %379 = arith.mulf %378, %352 : vector<14x14xf32>
    %380 = arith.addf %337, %379 : vector<14x14xf32>
    %c261 = arith.constant 261 : index
    %381 = memref.load %arg3[%c261] : memref<288xf32, #tpu.memory_space<smem>>
    %382 = vector.broadcast %381 : f32 to vector<14x14xf32>
    %383 = arith.mulf %382, %352 : vector<14x14xf32>
    %384 = arith.addf %341, %383 : vector<14x14xf32>
    %385 = vector.extract_strided_slice %351 {offsets = [0, 1], sizes = [14, 14], strides = [1, 1]} : vector<14x16xf32> to vector<14x14xf32>
    %c10 = arith.constant 10 : index
    %386 = memref.load %arg3[%c10] : memref<288xf32, #tpu.memory_space<smem>>
    %387 = vector.broadcast %386 : f32 to vector<14x14xf32>
    %388 = arith.mulf %387, %385 : vector<14x14xf32>
    %389 = arith.addf %356, %388 : vector<14x14xf32>
    %c46 = arith.constant 46 : index
    %390 = memref.load %arg3[%c46] : memref<288xf32, #tpu.memory_space<smem>>
    %391 = vector.broadcast %390 : f32 to vector<14x14xf32>
    %392 = arith.mulf %391, %385 : vector<14x14xf32>
    %393 = arith.addf %360, %392 : vector<14x14xf32>
    %c82 = arith.constant 82 : index
    %394 = memref.load %arg3[%c82] : memref<288xf32, #tpu.memory_space<smem>>
    %395 = vector.broadcast %394 : f32 to vector<14x14xf32>
    %396 = arith.mulf %395, %385 : vector<14x14xf32>
    %397 = arith.addf %364, %396 : vector<14x14xf32>
    %c118 = arith.constant 118 : index
    %398 = memref.load %arg3[%c118] : memref<288xf32, #tpu.memory_space<smem>>
    %399 = vector.broadcast %398 : f32 to vector<14x14xf32>
    %400 = arith.mulf %399, %385 : vector<14x14xf32>
    %401 = arith.addf %368, %400 : vector<14x14xf32>
    %c154 = arith.constant 154 : index
    %402 = memref.load %arg3[%c154] : memref<288xf32, #tpu.memory_space<smem>>
    %403 = vector.broadcast %402 : f32 to vector<14x14xf32>
    %404 = arith.mulf %403, %385 : vector<14x14xf32>
    %405 = arith.addf %372, %404 : vector<14x14xf32>
    %c190 = arith.constant 190 : index
    %406 = memref.load %arg3[%c190] : memref<288xf32, #tpu.memory_space<smem>>
    %407 = vector.broadcast %406 : f32 to vector<14x14xf32>
    %408 = arith.mulf %407, %385 : vector<14x14xf32>
    %409 = arith.addf %376, %408 : vector<14x14xf32>
    %c226 = arith.constant 226 : index
    %410 = memref.load %arg3[%c226] : memref<288xf32, #tpu.memory_space<smem>>
    %411 = vector.broadcast %410 : f32 to vector<14x14xf32>
    %412 = arith.mulf %411, %385 : vector<14x14xf32>
    %413 = arith.addf %380, %412 : vector<14x14xf32>
    %c262 = arith.constant 262 : index
    %414 = memref.load %arg3[%c262] : memref<288xf32, #tpu.memory_space<smem>>
    %415 = vector.broadcast %414 : f32 to vector<14x14xf32>
    %416 = arith.mulf %415, %385 : vector<14x14xf32>
    %417 = arith.addf %384, %416 : vector<14x14xf32>
    %418 = vector.extract_strided_slice %351 {offsets = [0, 2], sizes = [14, 14], strides = [1, 1]} : vector<14x16xf32> to vector<14x14xf32>
    %c11 = arith.constant 11 : index
    %419 = memref.load %arg3[%c11] : memref<288xf32, #tpu.memory_space<smem>>
    %420 = vector.broadcast %419 : f32 to vector<14x14xf32>
    %421 = arith.mulf %420, %418 : vector<14x14xf32>
    %422 = arith.addf %389, %421 : vector<14x14xf32>
    %c47 = arith.constant 47 : index
    %423 = memref.load %arg3[%c47] : memref<288xf32, #tpu.memory_space<smem>>
    %424 = vector.broadcast %423 : f32 to vector<14x14xf32>
    %425 = arith.mulf %424, %418 : vector<14x14xf32>
    %426 = arith.addf %393, %425 : vector<14x14xf32>
    %c83 = arith.constant 83 : index
    %427 = memref.load %arg3[%c83] : memref<288xf32, #tpu.memory_space<smem>>
    %428 = vector.broadcast %427 : f32 to vector<14x14xf32>
    %429 = arith.mulf %428, %418 : vector<14x14xf32>
    %430 = arith.addf %397, %429 : vector<14x14xf32>
    %c119 = arith.constant 119 : index
    %431 = memref.load %arg3[%c119] : memref<288xf32, #tpu.memory_space<smem>>
    %432 = vector.broadcast %431 : f32 to vector<14x14xf32>
    %433 = arith.mulf %432, %418 : vector<14x14xf32>
    %434 = arith.addf %401, %433 : vector<14x14xf32>
    %c155 = arith.constant 155 : index
    %435 = memref.load %arg3[%c155] : memref<288xf32, #tpu.memory_space<smem>>
    %436 = vector.broadcast %435 : f32 to vector<14x14xf32>
    %437 = arith.mulf %436, %418 : vector<14x14xf32>
    %438 = arith.addf %405, %437 : vector<14x14xf32>
    %c191 = arith.constant 191 : index
    %439 = memref.load %arg3[%c191] : memref<288xf32, #tpu.memory_space<smem>>
    %440 = vector.broadcast %439 : f32 to vector<14x14xf32>
    %441 = arith.mulf %440, %418 : vector<14x14xf32>
    %442 = arith.addf %409, %441 : vector<14x14xf32>
    %c227 = arith.constant 227 : index
    %443 = memref.load %arg3[%c227] : memref<288xf32, #tpu.memory_space<smem>>
    %444 = vector.broadcast %443 : f32 to vector<14x14xf32>
    %445 = arith.mulf %444, %418 : vector<14x14xf32>
    %446 = arith.addf %413, %445 : vector<14x14xf32>
    %c263 = arith.constant 263 : index
    %447 = memref.load %arg3[%c263] : memref<288xf32, #tpu.memory_space<smem>>
    %448 = vector.broadcast %447 : f32 to vector<14x14xf32>
    %449 = arith.mulf %448, %418 : vector<14x14xf32>
    %450 = arith.addf %417, %449 : vector<14x14xf32>
    %451 = vector.extract_strided_slice %350 {offsets = [1, 0], sizes = [14, 16], strides = [1, 1]} : vector<16x16xf32> to vector<14x16xf32>
    %452 = vector.extract_strided_slice %451 {offsets = [0, 0], sizes = [14, 14], strides = [1, 1]} : vector<14x16xf32> to vector<14x14xf32>
    %c12 = arith.constant 12 : index
    %453 = memref.load %arg3[%c12] : memref<288xf32, #tpu.memory_space<smem>>
    %454 = vector.broadcast %453 : f32 to vector<14x14xf32>
    %455 = arith.mulf %454, %452 : vector<14x14xf32>
    %456 = arith.addf %422, %455 : vector<14x14xf32>
    %c48 = arith.constant 48 : index
    %457 = memref.load %arg3[%c48] : memref<288xf32, #tpu.memory_space<smem>>
    %458 = vector.broadcast %457 : f32 to vector<14x14xf32>
    %459 = arith.mulf %458, %452 : vector<14x14xf32>
    %460 = arith.addf %426, %459 : vector<14x14xf32>
    %c84 = arith.constant 84 : index
    %461 = memref.load %arg3[%c84] : memref<288xf32, #tpu.memory_space<smem>>
    %462 = vector.broadcast %461 : f32 to vector<14x14xf32>
    %463 = arith.mulf %462, %452 : vector<14x14xf32>
    %464 = arith.addf %430, %463 : vector<14x14xf32>
    %c120 = arith.constant 120 : index
    %465 = memref.load %arg3[%c120] : memref<288xf32, #tpu.memory_space<smem>>
    %466 = vector.broadcast %465 : f32 to vector<14x14xf32>
    %467 = arith.mulf %466, %452 : vector<14x14xf32>
    %468 = arith.addf %434, %467 : vector<14x14xf32>
    %c156 = arith.constant 156 : index
    %469 = memref.load %arg3[%c156] : memref<288xf32, #tpu.memory_space<smem>>
    %470 = vector.broadcast %469 : f32 to vector<14x14xf32>
    %471 = arith.mulf %470, %452 : vector<14x14xf32>
    %472 = arith.addf %438, %471 : vector<14x14xf32>
    %c192 = arith.constant 192 : index
    %473 = memref.load %arg3[%c192] : memref<288xf32, #tpu.memory_space<smem>>
    %474 = vector.broadcast %473 : f32 to vector<14x14xf32>
    %475 = arith.mulf %474, %452 : vector<14x14xf32>
    %476 = arith.addf %442, %475 : vector<14x14xf32>
    %c228 = arith.constant 228 : index
    %477 = memref.load %arg3[%c228] : memref<288xf32, #tpu.memory_space<smem>>
    %478 = vector.broadcast %477 : f32 to vector<14x14xf32>
    %479 = arith.mulf %478, %452 : vector<14x14xf32>
    %480 = arith.addf %446, %479 : vector<14x14xf32>
    %c264 = arith.constant 264 : index
    %481 = memref.load %arg3[%c264] : memref<288xf32, #tpu.memory_space<smem>>
    %482 = vector.broadcast %481 : f32 to vector<14x14xf32>
    %483 = arith.mulf %482, %452 : vector<14x14xf32>
    %484 = arith.addf %450, %483 : vector<14x14xf32>
    %485 = vector.extract_strided_slice %451 {offsets = [0, 1], sizes = [14, 14], strides = [1, 1]} : vector<14x16xf32> to vector<14x14xf32>
    %c13 = arith.constant 13 : index
    %486 = memref.load %arg3[%c13] : memref<288xf32, #tpu.memory_space<smem>>
    %487 = vector.broadcast %486 : f32 to vector<14x14xf32>
    %488 = arith.mulf %487, %485 : vector<14x14xf32>
    %489 = arith.addf %456, %488 : vector<14x14xf32>
    %c49 = arith.constant 49 : index
    %490 = memref.load %arg3[%c49] : memref<288xf32, #tpu.memory_space<smem>>
    %491 = vector.broadcast %490 : f32 to vector<14x14xf32>
    %492 = arith.mulf %491, %485 : vector<14x14xf32>
    %493 = arith.addf %460, %492 : vector<14x14xf32>
    %c85 = arith.constant 85 : index
    %494 = memref.load %arg3[%c85] : memref<288xf32, #tpu.memory_space<smem>>
    %495 = vector.broadcast %494 : f32 to vector<14x14xf32>
    %496 = arith.mulf %495, %485 : vector<14x14xf32>
    %497 = arith.addf %464, %496 : vector<14x14xf32>
    %c121 = arith.constant 121 : index
    %498 = memref.load %arg3[%c121] : memref<288xf32, #tpu.memory_space<smem>>
    %499 = vector.broadcast %498 : f32 to vector<14x14xf32>
    %500 = arith.mulf %499, %485 : vector<14x14xf32>
    %501 = arith.addf %468, %500 : vector<14x14xf32>
    %c157 = arith.constant 157 : index
    %502 = memref.load %arg3[%c157] : memref<288xf32, #tpu.memory_space<smem>>
    %503 = vector.broadcast %502 : f32 to vector<14x14xf32>
    %504 = arith.mulf %503, %485 : vector<14x14xf32>
    %505 = arith.addf %472, %504 : vector<14x14xf32>
    %c193 = arith.constant 193 : index
    %506 = memref.load %arg3[%c193] : memref<288xf32, #tpu.memory_space<smem>>
    %507 = vector.broadcast %506 : f32 to vector<14x14xf32>
    %508 = arith.mulf %507, %485 : vector<14x14xf32>
    %509 = arith.addf %476, %508 : vector<14x14xf32>
    %c229 = arith.constant 229 : index
    %510 = memref.load %arg3[%c229] : memref<288xf32, #tpu.memory_space<smem>>
    %511 = vector.broadcast %510 : f32 to vector<14x14xf32>
    %512 = arith.mulf %511, %485 : vector<14x14xf32>
    %513 = arith.addf %480, %512 : vector<14x14xf32>
    %c265 = arith.constant 265 : index
    %514 = memref.load %arg3[%c265] : memref<288xf32, #tpu.memory_space<smem>>
    %515 = vector.broadcast %514 : f32 to vector<14x14xf32>
    %516 = arith.mulf %515, %485 : vector<14x14xf32>
    %517 = arith.addf %484, %516 : vector<14x14xf32>
    %518 = vector.extract_strided_slice %451 {offsets = [0, 2], sizes = [14, 14], strides = [1, 1]} : vector<14x16xf32> to vector<14x14xf32>
    %c14 = arith.constant 14 : index
    %519 = memref.load %arg3[%c14] : memref<288xf32, #tpu.memory_space<smem>>
    %520 = vector.broadcast %519 : f32 to vector<14x14xf32>
    %521 = arith.mulf %520, %518 : vector<14x14xf32>
    %522 = arith.addf %489, %521 : vector<14x14xf32>
    %c50 = arith.constant 50 : index
    %523 = memref.load %arg3[%c50] : memref<288xf32, #tpu.memory_space<smem>>
    %524 = vector.broadcast %523 : f32 to vector<14x14xf32>
    %525 = arith.mulf %524, %518 : vector<14x14xf32>
    %526 = arith.addf %493, %525 : vector<14x14xf32>
    %c86 = arith.constant 86 : index
    %527 = memref.load %arg3[%c86] : memref<288xf32, #tpu.memory_space<smem>>
    %528 = vector.broadcast %527 : f32 to vector<14x14xf32>
    %529 = arith.mulf %528, %518 : vector<14x14xf32>
    %530 = arith.addf %497, %529 : vector<14x14xf32>
    %c122 = arith.constant 122 : index
    %531 = memref.load %arg3[%c122] : memref<288xf32, #tpu.memory_space<smem>>
    %532 = vector.broadcast %531 : f32 to vector<14x14xf32>
    %533 = arith.mulf %532, %518 : vector<14x14xf32>
    %534 = arith.addf %501, %533 : vector<14x14xf32>
    %c158 = arith.constant 158 : index
    %535 = memref.load %arg3[%c158] : memref<288xf32, #tpu.memory_space<smem>>
    %536 = vector.broadcast %535 : f32 to vector<14x14xf32>
    %537 = arith.mulf %536, %518 : vector<14x14xf32>
    %538 = arith.addf %505, %537 : vector<14x14xf32>
    %c194 = arith.constant 194 : index
    %539 = memref.load %arg3[%c194] : memref<288xf32, #tpu.memory_space<smem>>
    %540 = vector.broadcast %539 : f32 to vector<14x14xf32>
    %541 = arith.mulf %540, %518 : vector<14x14xf32>
    %542 = arith.addf %509, %541 : vector<14x14xf32>
    %c230 = arith.constant 230 : index
    %543 = memref.load %arg3[%c230] : memref<288xf32, #tpu.memory_space<smem>>
    %544 = vector.broadcast %543 : f32 to vector<14x14xf32>
    %545 = arith.mulf %544, %518 : vector<14x14xf32>
    %546 = arith.addf %513, %545 : vector<14x14xf32>
    %c266 = arith.constant 266 : index
    %547 = memref.load %arg3[%c266] : memref<288xf32, #tpu.memory_space<smem>>
    %548 = vector.broadcast %547 : f32 to vector<14x14xf32>
    %549 = arith.mulf %548, %518 : vector<14x14xf32>
    %550 = arith.addf %517, %549 : vector<14x14xf32>
    %551 = vector.extract_strided_slice %350 {offsets = [2, 0], sizes = [14, 16], strides = [1, 1]} : vector<16x16xf32> to vector<14x16xf32>
    %552 = vector.extract_strided_slice %551 {offsets = [0, 0], sizes = [14, 14], strides = [1, 1]} : vector<14x16xf32> to vector<14x14xf32>
    %c15 = arith.constant 15 : index
    %553 = memref.load %arg3[%c15] : memref<288xf32, #tpu.memory_space<smem>>
    %554 = vector.broadcast %553 : f32 to vector<14x14xf32>
    %555 = arith.mulf %554, %552 : vector<14x14xf32>
    %556 = arith.addf %522, %555 : vector<14x14xf32>
    %c51 = arith.constant 51 : index
    %557 = memref.load %arg3[%c51] : memref<288xf32, #tpu.memory_space<smem>>
    %558 = vector.broadcast %557 : f32 to vector<14x14xf32>
    %559 = arith.mulf %558, %552 : vector<14x14xf32>
    %560 = arith.addf %526, %559 : vector<14x14xf32>
    %c87 = arith.constant 87 : index
    %561 = memref.load %arg3[%c87] : memref<288xf32, #tpu.memory_space<smem>>
    %562 = vector.broadcast %561 : f32 to vector<14x14xf32>
    %563 = arith.mulf %562, %552 : vector<14x14xf32>
    %564 = arith.addf %530, %563 : vector<14x14xf32>
    %c123 = arith.constant 123 : index
    %565 = memref.load %arg3[%c123] : memref<288xf32, #tpu.memory_space<smem>>
    %566 = vector.broadcast %565 : f32 to vector<14x14xf32>
    %567 = arith.mulf %566, %552 : vector<14x14xf32>
    %568 = arith.addf %534, %567 : vector<14x14xf32>
    %c159 = arith.constant 159 : index
    %569 = memref.load %arg3[%c159] : memref<288xf32, #tpu.memory_space<smem>>
    %570 = vector.broadcast %569 : f32 to vector<14x14xf32>
    %571 = arith.mulf %570, %552 : vector<14x14xf32>
    %572 = arith.addf %538, %571 : vector<14x14xf32>
    %c195 = arith.constant 195 : index
    %573 = memref.load %arg3[%c195] : memref<288xf32, #tpu.memory_space<smem>>
    %574 = vector.broadcast %573 : f32 to vector<14x14xf32>
    %575 = arith.mulf %574, %552 : vector<14x14xf32>
    %576 = arith.addf %542, %575 : vector<14x14xf32>
    %c231 = arith.constant 231 : index
    %577 = memref.load %arg3[%c231] : memref<288xf32, #tpu.memory_space<smem>>
    %578 = vector.broadcast %577 : f32 to vector<14x14xf32>
    %579 = arith.mulf %578, %552 : vector<14x14xf32>
    %580 = arith.addf %546, %579 : vector<14x14xf32>
    %c267 = arith.constant 267 : index
    %581 = memref.load %arg3[%c267] : memref<288xf32, #tpu.memory_space<smem>>
    %582 = vector.broadcast %581 : f32 to vector<14x14xf32>
    %583 = arith.mulf %582, %552 : vector<14x14xf32>
    %584 = arith.addf %550, %583 : vector<14x14xf32>
    %585 = vector.extract_strided_slice %551 {offsets = [0, 1], sizes = [14, 14], strides = [1, 1]} : vector<14x16xf32> to vector<14x14xf32>
    %c16 = arith.constant 16 : index
    %586 = memref.load %arg3[%c16] : memref<288xf32, #tpu.memory_space<smem>>
    %587 = vector.broadcast %586 : f32 to vector<14x14xf32>
    %588 = arith.mulf %587, %585 : vector<14x14xf32>
    %589 = arith.addf %556, %588 : vector<14x14xf32>
    %c52 = arith.constant 52 : index
    %590 = memref.load %arg3[%c52] : memref<288xf32, #tpu.memory_space<smem>>
    %591 = vector.broadcast %590 : f32 to vector<14x14xf32>
    %592 = arith.mulf %591, %585 : vector<14x14xf32>
    %593 = arith.addf %560, %592 : vector<14x14xf32>
    %c88 = arith.constant 88 : index
    %594 = memref.load %arg3[%c88] : memref<288xf32, #tpu.memory_space<smem>>
    %595 = vector.broadcast %594 : f32 to vector<14x14xf32>
    %596 = arith.mulf %595, %585 : vector<14x14xf32>
    %597 = arith.addf %564, %596 : vector<14x14xf32>
    %c124 = arith.constant 124 : index
    %598 = memref.load %arg3[%c124] : memref<288xf32, #tpu.memory_space<smem>>
    %599 = vector.broadcast %598 : f32 to vector<14x14xf32>
    %600 = arith.mulf %599, %585 : vector<14x14xf32>
    %601 = arith.addf %568, %600 : vector<14x14xf32>
    %c160 = arith.constant 160 : index
    %602 = memref.load %arg3[%c160] : memref<288xf32, #tpu.memory_space<smem>>
    %603 = vector.broadcast %602 : f32 to vector<14x14xf32>
    %604 = arith.mulf %603, %585 : vector<14x14xf32>
    %605 = arith.addf %572, %604 : vector<14x14xf32>
    %c196 = arith.constant 196 : index
    %606 = memref.load %arg3[%c196] : memref<288xf32, #tpu.memory_space<smem>>
    %607 = vector.broadcast %606 : f32 to vector<14x14xf32>
    %608 = arith.mulf %607, %585 : vector<14x14xf32>
    %609 = arith.addf %576, %608 : vector<14x14xf32>
    %c232 = arith.constant 232 : index
    %610 = memref.load %arg3[%c232] : memref<288xf32, #tpu.memory_space<smem>>
    %611 = vector.broadcast %610 : f32 to vector<14x14xf32>
    %612 = arith.mulf %611, %585 : vector<14x14xf32>
    %613 = arith.addf %580, %612 : vector<14x14xf32>
    %c268 = arith.constant 268 : index
    %614 = memref.load %arg3[%c268] : memref<288xf32, #tpu.memory_space<smem>>
    %615 = vector.broadcast %614 : f32 to vector<14x14xf32>
    %616 = arith.mulf %615, %585 : vector<14x14xf32>
    %617 = arith.addf %584, %616 : vector<14x14xf32>
    %618 = vector.extract_strided_slice %551 {offsets = [0, 2], sizes = [14, 14], strides = [1, 1]} : vector<14x16xf32> to vector<14x14xf32>
    %c17 = arith.constant 17 : index
    %619 = memref.load %arg3[%c17] : memref<288xf32, #tpu.memory_space<smem>>
    %620 = vector.broadcast %619 : f32 to vector<14x14xf32>
    %621 = arith.mulf %620, %618 : vector<14x14xf32>
    %622 = arith.addf %589, %621 : vector<14x14xf32>
    %c53 = arith.constant 53 : index
    %623 = memref.load %arg3[%c53] : memref<288xf32, #tpu.memory_space<smem>>
    %624 = vector.broadcast %623 : f32 to vector<14x14xf32>
    %625 = arith.mulf %624, %618 : vector<14x14xf32>
    %626 = arith.addf %593, %625 : vector<14x14xf32>
    %c89 = arith.constant 89 : index
    %627 = memref.load %arg3[%c89] : memref<288xf32, #tpu.memory_space<smem>>
    %628 = vector.broadcast %627 : f32 to vector<14x14xf32>
    %629 = arith.mulf %628, %618 : vector<14x14xf32>
    %630 = arith.addf %597, %629 : vector<14x14xf32>
    %c125 = arith.constant 125 : index
    %631 = memref.load %arg3[%c125] : memref<288xf32, #tpu.memory_space<smem>>
    %632 = vector.broadcast %631 : f32 to vector<14x14xf32>
    %633 = arith.mulf %632, %618 : vector<14x14xf32>
    %634 = arith.addf %601, %633 : vector<14x14xf32>
    %c161 = arith.constant 161 : index
    %635 = memref.load %arg3[%c161] : memref<288xf32, #tpu.memory_space<smem>>
    %636 = vector.broadcast %635 : f32 to vector<14x14xf32>
    %637 = arith.mulf %636, %618 : vector<14x14xf32>
    %638 = arith.addf %605, %637 : vector<14x14xf32>
    %c197 = arith.constant 197 : index
    %639 = memref.load %arg3[%c197] : memref<288xf32, #tpu.memory_space<smem>>
    %640 = vector.broadcast %639 : f32 to vector<14x14xf32>
    %641 = arith.mulf %640, %618 : vector<14x14xf32>
    %642 = arith.addf %609, %641 : vector<14x14xf32>
    %c233 = arith.constant 233 : index
    %643 = memref.load %arg3[%c233] : memref<288xf32, #tpu.memory_space<smem>>
    %644 = vector.broadcast %643 : f32 to vector<14x14xf32>
    %645 = arith.mulf %644, %618 : vector<14x14xf32>
    %646 = arith.addf %613, %645 : vector<14x14xf32>
    %c269 = arith.constant 269 : index
    %647 = memref.load %arg3[%c269] : memref<288xf32, #tpu.memory_space<smem>>
    %648 = vector.broadcast %647 : f32 to vector<14x14xf32>
    %649 = arith.mulf %648, %618 : vector<14x14xf32>
    %650 = arith.addf %617, %649 : vector<14x14xf32>
    %651 = vector.extract_strided_slice %7 {offsets = [2, 0, 0], sizes = [1, 16, 16], strides = [1, 1, 1]} : vector<4x16x16xf32> to vector<1x16x16xf32>
    %652 = vector.shape_cast %651 : vector<1x16x16xf32> to vector<16x16xf32>
    %653 = arith.mulf %652, %16 : vector<16x16xf32>
    %c2_20 = arith.constant 2 : index
    %654 = memref.load %arg1[%c2_20] : memref<4xf32, #tpu.memory_space<smem>>
    %655 = vector.broadcast %654 : f32 to vector<16x16xf32>
    %656 = arith.mulf %653, %655 : vector<16x16xf32>
    %c2_21 = arith.constant 2 : index
    %657 = memref.load %arg2[%c2_21] : memref<4xf32, #tpu.memory_space<smem>>
    %658 = vector.broadcast %657 : f32 to vector<16x16xf32>
    %659 = arith.addf %656, %658 : vector<16x16xf32>
    %660 = vector.extract_strided_slice %659 {offsets = [0, 0], sizes = [14, 16], strides = [1, 1]} : vector<16x16xf32> to vector<14x16xf32>
    %661 = vector.extract_strided_slice %660 {offsets = [0, 0], sizes = [14, 14], strides = [1, 1]} : vector<14x16xf32> to vector<14x14xf32>
    %c18 = arith.constant 18 : index
    %662 = memref.load %arg3[%c18] : memref<288xf32, #tpu.memory_space<smem>>
    %663 = vector.broadcast %662 : f32 to vector<14x14xf32>
    %664 = arith.mulf %663, %661 : vector<14x14xf32>
    %665 = arith.addf %622, %664 : vector<14x14xf32>
    %c54 = arith.constant 54 : index
    %666 = memref.load %arg3[%c54] : memref<288xf32, #tpu.memory_space<smem>>
    %667 = vector.broadcast %666 : f32 to vector<14x14xf32>
    %668 = arith.mulf %667, %661 : vector<14x14xf32>
    %669 = arith.addf %626, %668 : vector<14x14xf32>
    %c90 = arith.constant 90 : index
    %670 = memref.load %arg3[%c90] : memref<288xf32, #tpu.memory_space<smem>>
    %671 = vector.broadcast %670 : f32 to vector<14x14xf32>
    %672 = arith.mulf %671, %661 : vector<14x14xf32>
    %673 = arith.addf %630, %672 : vector<14x14xf32>
    %c126 = arith.constant 126 : index
    %674 = memref.load %arg3[%c126] : memref<288xf32, #tpu.memory_space<smem>>
    %675 = vector.broadcast %674 : f32 to vector<14x14xf32>
    %676 = arith.mulf %675, %661 : vector<14x14xf32>
    %677 = arith.addf %634, %676 : vector<14x14xf32>
    %c162 = arith.constant 162 : index
    %678 = memref.load %arg3[%c162] : memref<288xf32, #tpu.memory_space<smem>>
    %679 = vector.broadcast %678 : f32 to vector<14x14xf32>
    %680 = arith.mulf %679, %661 : vector<14x14xf32>
    %681 = arith.addf %638, %680 : vector<14x14xf32>
    %c198 = arith.constant 198 : index
    %682 = memref.load %arg3[%c198] : memref<288xf32, #tpu.memory_space<smem>>
    %683 = vector.broadcast %682 : f32 to vector<14x14xf32>
    %684 = arith.mulf %683, %661 : vector<14x14xf32>
    %685 = arith.addf %642, %684 : vector<14x14xf32>
    %c234 = arith.constant 234 : index
    %686 = memref.load %arg3[%c234] : memref<288xf32, #tpu.memory_space<smem>>
    %687 = vector.broadcast %686 : f32 to vector<14x14xf32>
    %688 = arith.mulf %687, %661 : vector<14x14xf32>
    %689 = arith.addf %646, %688 : vector<14x14xf32>
    %c270 = arith.constant 270 : index
    %690 = memref.load %arg3[%c270] : memref<288xf32, #tpu.memory_space<smem>>
    %691 = vector.broadcast %690 : f32 to vector<14x14xf32>
    %692 = arith.mulf %691, %661 : vector<14x14xf32>
    %693 = arith.addf %650, %692 : vector<14x14xf32>
    %694 = vector.extract_strided_slice %660 {offsets = [0, 1], sizes = [14, 14], strides = [1, 1]} : vector<14x16xf32> to vector<14x14xf32>
    %c19 = arith.constant 19 : index
    %695 = memref.load %arg3[%c19] : memref<288xf32, #tpu.memory_space<smem>>
    %696 = vector.broadcast %695 : f32 to vector<14x14xf32>
    %697 = arith.mulf %696, %694 : vector<14x14xf32>
    %698 = arith.addf %665, %697 : vector<14x14xf32>
    %c55 = arith.constant 55 : index
    %699 = memref.load %arg3[%c55] : memref<288xf32, #tpu.memory_space<smem>>
    %700 = vector.broadcast %699 : f32 to vector<14x14xf32>
    %701 = arith.mulf %700, %694 : vector<14x14xf32>
    %702 = arith.addf %669, %701 : vector<14x14xf32>
    %c91 = arith.constant 91 : index
    %703 = memref.load %arg3[%c91] : memref<288xf32, #tpu.memory_space<smem>>
    %704 = vector.broadcast %703 : f32 to vector<14x14xf32>
    %705 = arith.mulf %704, %694 : vector<14x14xf32>
    %706 = arith.addf %673, %705 : vector<14x14xf32>
    %c127 = arith.constant 127 : index
    %707 = memref.load %arg3[%c127] : memref<288xf32, #tpu.memory_space<smem>>
    %708 = vector.broadcast %707 : f32 to vector<14x14xf32>
    %709 = arith.mulf %708, %694 : vector<14x14xf32>
    %710 = arith.addf %677, %709 : vector<14x14xf32>
    %c163 = arith.constant 163 : index
    %711 = memref.load %arg3[%c163] : memref<288xf32, #tpu.memory_space<smem>>
    %712 = vector.broadcast %711 : f32 to vector<14x14xf32>
    %713 = arith.mulf %712, %694 : vector<14x14xf32>
    %714 = arith.addf %681, %713 : vector<14x14xf32>
    %c199 = arith.constant 199 : index
    %715 = memref.load %arg3[%c199] : memref<288xf32, #tpu.memory_space<smem>>
    %716 = vector.broadcast %715 : f32 to vector<14x14xf32>
    %717 = arith.mulf %716, %694 : vector<14x14xf32>
    %718 = arith.addf %685, %717 : vector<14x14xf32>
    %c235 = arith.constant 235 : index
    %719 = memref.load %arg3[%c235] : memref<288xf32, #tpu.memory_space<smem>>
    %720 = vector.broadcast %719 : f32 to vector<14x14xf32>
    %721 = arith.mulf %720, %694 : vector<14x14xf32>
    %722 = arith.addf %689, %721 : vector<14x14xf32>
    %c271 = arith.constant 271 : index
    %723 = memref.load %arg3[%c271] : memref<288xf32, #tpu.memory_space<smem>>
    %724 = vector.broadcast %723 : f32 to vector<14x14xf32>
    %725 = arith.mulf %724, %694 : vector<14x14xf32>
    %726 = arith.addf %693, %725 : vector<14x14xf32>
    %727 = vector.extract_strided_slice %660 {offsets = [0, 2], sizes = [14, 14], strides = [1, 1]} : vector<14x16xf32> to vector<14x14xf32>
    %c20 = arith.constant 20 : index
    %728 = memref.load %arg3[%c20] : memref<288xf32, #tpu.memory_space<smem>>
    %729 = vector.broadcast %728 : f32 to vector<14x14xf32>
    %730 = arith.mulf %729, %727 : vector<14x14xf32>
    %731 = arith.addf %698, %730 : vector<14x14xf32>
    %c56 = arith.constant 56 : index
    %732 = memref.load %arg3[%c56] : memref<288xf32, #tpu.memory_space<smem>>
    %733 = vector.broadcast %732 : f32 to vector<14x14xf32>
    %734 = arith.mulf %733, %727 : vector<14x14xf32>
    %735 = arith.addf %702, %734 : vector<14x14xf32>
    %c92 = arith.constant 92 : index
    %736 = memref.load %arg3[%c92] : memref<288xf32, #tpu.memory_space<smem>>
    %737 = vector.broadcast %736 : f32 to vector<14x14xf32>
    %738 = arith.mulf %737, %727 : vector<14x14xf32>
    %739 = arith.addf %706, %738 : vector<14x14xf32>
    %c128 = arith.constant 128 : index
    %740 = memref.load %arg3[%c128] : memref<288xf32, #tpu.memory_space<smem>>
    %741 = vector.broadcast %740 : f32 to vector<14x14xf32>
    %742 = arith.mulf %741, %727 : vector<14x14xf32>
    %743 = arith.addf %710, %742 : vector<14x14xf32>
    %c164 = arith.constant 164 : index
    %744 = memref.load %arg3[%c164] : memref<288xf32, #tpu.memory_space<smem>>
    %745 = vector.broadcast %744 : f32 to vector<14x14xf32>
    %746 = arith.mulf %745, %727 : vector<14x14xf32>
    %747 = arith.addf %714, %746 : vector<14x14xf32>
    %c200 = arith.constant 200 : index
    %748 = memref.load %arg3[%c200] : memref<288xf32, #tpu.memory_space<smem>>
    %749 = vector.broadcast %748 : f32 to vector<14x14xf32>
    %750 = arith.mulf %749, %727 : vector<14x14xf32>
    %751 = arith.addf %718, %750 : vector<14x14xf32>
    %c236 = arith.constant 236 : index
    %752 = memref.load %arg3[%c236] : memref<288xf32, #tpu.memory_space<smem>>
    %753 = vector.broadcast %752 : f32 to vector<14x14xf32>
    %754 = arith.mulf %753, %727 : vector<14x14xf32>
    %755 = arith.addf %722, %754 : vector<14x14xf32>
    %c272 = arith.constant 272 : index
    %756 = memref.load %arg3[%c272] : memref<288xf32, #tpu.memory_space<smem>>
    %757 = vector.broadcast %756 : f32 to vector<14x14xf32>
    %758 = arith.mulf %757, %727 : vector<14x14xf32>
    %759 = arith.addf %726, %758 : vector<14x14xf32>
    %760 = vector.extract_strided_slice %659 {offsets = [1, 0], sizes = [14, 16], strides = [1, 1]} : vector<16x16xf32> to vector<14x16xf32>
    %761 = vector.extract_strided_slice %760 {offsets = [0, 0], sizes = [14, 14], strides = [1, 1]} : vector<14x16xf32> to vector<14x14xf32>
    %c21 = arith.constant 21 : index
    %762 = memref.load %arg3[%c21] : memref<288xf32, #tpu.memory_space<smem>>
    %763 = vector.broadcast %762 : f32 to vector<14x14xf32>
    %764 = arith.mulf %763, %761 : vector<14x14xf32>
    %765 = arith.addf %731, %764 : vector<14x14xf32>
    %c57 = arith.constant 57 : index
    %766 = memref.load %arg3[%c57] : memref<288xf32, #tpu.memory_space<smem>>
    %767 = vector.broadcast %766 : f32 to vector<14x14xf32>
    %768 = arith.mulf %767, %761 : vector<14x14xf32>
    %769 = arith.addf %735, %768 : vector<14x14xf32>
    %c93 = arith.constant 93 : index
    %770 = memref.load %arg3[%c93] : memref<288xf32, #tpu.memory_space<smem>>
    %771 = vector.broadcast %770 : f32 to vector<14x14xf32>
    %772 = arith.mulf %771, %761 : vector<14x14xf32>
    %773 = arith.addf %739, %772 : vector<14x14xf32>
    %c129 = arith.constant 129 : index
    %774 = memref.load %arg3[%c129] : memref<288xf32, #tpu.memory_space<smem>>
    %775 = vector.broadcast %774 : f32 to vector<14x14xf32>
    %776 = arith.mulf %775, %761 : vector<14x14xf32>
    %777 = arith.addf %743, %776 : vector<14x14xf32>
    %c165 = arith.constant 165 : index
    %778 = memref.load %arg3[%c165] : memref<288xf32, #tpu.memory_space<smem>>
    %779 = vector.broadcast %778 : f32 to vector<14x14xf32>
    %780 = arith.mulf %779, %761 : vector<14x14xf32>
    %781 = arith.addf %747, %780 : vector<14x14xf32>
    %c201 = arith.constant 201 : index
    %782 = memref.load %arg3[%c201] : memref<288xf32, #tpu.memory_space<smem>>
    %783 = vector.broadcast %782 : f32 to vector<14x14xf32>
    %784 = arith.mulf %783, %761 : vector<14x14xf32>
    %785 = arith.addf %751, %784 : vector<14x14xf32>
    %c237 = arith.constant 237 : index
    %786 = memref.load %arg3[%c237] : memref<288xf32, #tpu.memory_space<smem>>
    %787 = vector.broadcast %786 : f32 to vector<14x14xf32>
    %788 = arith.mulf %787, %761 : vector<14x14xf32>
    %789 = arith.addf %755, %788 : vector<14x14xf32>
    %c273 = arith.constant 273 : index
    %790 = memref.load %arg3[%c273] : memref<288xf32, #tpu.memory_space<smem>>
    %791 = vector.broadcast %790 : f32 to vector<14x14xf32>
    %792 = arith.mulf %791, %761 : vector<14x14xf32>
    %793 = arith.addf %759, %792 : vector<14x14xf32>
    %794 = vector.extract_strided_slice %760 {offsets = [0, 1], sizes = [14, 14], strides = [1, 1]} : vector<14x16xf32> to vector<14x14xf32>
    %c22 = arith.constant 22 : index
    %795 = memref.load %arg3[%c22] : memref<288xf32, #tpu.memory_space<smem>>
    %796 = vector.broadcast %795 : f32 to vector<14x14xf32>
    %797 = arith.mulf %796, %794 : vector<14x14xf32>
    %798 = arith.addf %765, %797 : vector<14x14xf32>
    %c58 = arith.constant 58 : index
    %799 = memref.load %arg3[%c58] : memref<288xf32, #tpu.memory_space<smem>>
    %800 = vector.broadcast %799 : f32 to vector<14x14xf32>
    %801 = arith.mulf %800, %794 : vector<14x14xf32>
    %802 = arith.addf %769, %801 : vector<14x14xf32>
    %c94 = arith.constant 94 : index
    %803 = memref.load %arg3[%c94] : memref<288xf32, #tpu.memory_space<smem>>
    %804 = vector.broadcast %803 : f32 to vector<14x14xf32>
    %805 = arith.mulf %804, %794 : vector<14x14xf32>
    %806 = arith.addf %773, %805 : vector<14x14xf32>
    %c130 = arith.constant 130 : index
    %807 = memref.load %arg3[%c130] : memref<288xf32, #tpu.memory_space<smem>>
    %808 = vector.broadcast %807 : f32 to vector<14x14xf32>
    %809 = arith.mulf %808, %794 : vector<14x14xf32>
    %810 = arith.addf %777, %809 : vector<14x14xf32>
    %c166 = arith.constant 166 : index
    %811 = memref.load %arg3[%c166] : memref<288xf32, #tpu.memory_space<smem>>
    %812 = vector.broadcast %811 : f32 to vector<14x14xf32>
    %813 = arith.mulf %812, %794 : vector<14x14xf32>
    %814 = arith.addf %781, %813 : vector<14x14xf32>
    %c202 = arith.constant 202 : index
    %815 = memref.load %arg3[%c202] : memref<288xf32, #tpu.memory_space<smem>>
    %816 = vector.broadcast %815 : f32 to vector<14x14xf32>
    %817 = arith.mulf %816, %794 : vector<14x14xf32>
    %818 = arith.addf %785, %817 : vector<14x14xf32>
    %c238 = arith.constant 238 : index
    %819 = memref.load %arg3[%c238] : memref<288xf32, #tpu.memory_space<smem>>
    %820 = vector.broadcast %819 : f32 to vector<14x14xf32>
    %821 = arith.mulf %820, %794 : vector<14x14xf32>
    %822 = arith.addf %789, %821 : vector<14x14xf32>
    %c274 = arith.constant 274 : index
    %823 = memref.load %arg3[%c274] : memref<288xf32, #tpu.memory_space<smem>>
    %824 = vector.broadcast %823 : f32 to vector<14x14xf32>
    %825 = arith.mulf %824, %794 : vector<14x14xf32>
    %826 = arith.addf %793, %825 : vector<14x14xf32>
    %827 = vector.extract_strided_slice %760 {offsets = [0, 2], sizes = [14, 14], strides = [1, 1]} : vector<14x16xf32> to vector<14x14xf32>
    %c23 = arith.constant 23 : index
    %828 = memref.load %arg3[%c23] : memref<288xf32, #tpu.memory_space<smem>>
    %829 = vector.broadcast %828 : f32 to vector<14x14xf32>
    %830 = arith.mulf %829, %827 : vector<14x14xf32>
    %831 = arith.addf %798, %830 : vector<14x14xf32>
    %c59 = arith.constant 59 : index
    %832 = memref.load %arg3[%c59] : memref<288xf32, #tpu.memory_space<smem>>
    %833 = vector.broadcast %832 : f32 to vector<14x14xf32>
    %834 = arith.mulf %833, %827 : vector<14x14xf32>
    %835 = arith.addf %802, %834 : vector<14x14xf32>
    %c95 = arith.constant 95 : index
    %836 = memref.load %arg3[%c95] : memref<288xf32, #tpu.memory_space<smem>>
    %837 = vector.broadcast %836 : f32 to vector<14x14xf32>
    %838 = arith.mulf %837, %827 : vector<14x14xf32>
    %839 = arith.addf %806, %838 : vector<14x14xf32>
    %c131 = arith.constant 131 : index
    %840 = memref.load %arg3[%c131] : memref<288xf32, #tpu.memory_space<smem>>
    %841 = vector.broadcast %840 : f32 to vector<14x14xf32>
    %842 = arith.mulf %841, %827 : vector<14x14xf32>
    %843 = arith.addf %810, %842 : vector<14x14xf32>
    %c167 = arith.constant 167 : index
    %844 = memref.load %arg3[%c167] : memref<288xf32, #tpu.memory_space<smem>>
    %845 = vector.broadcast %844 : f32 to vector<14x14xf32>
    %846 = arith.mulf %845, %827 : vector<14x14xf32>
    %847 = arith.addf %814, %846 : vector<14x14xf32>
    %c203 = arith.constant 203 : index
    %848 = memref.load %arg3[%c203] : memref<288xf32, #tpu.memory_space<smem>>
    %849 = vector.broadcast %848 : f32 to vector<14x14xf32>
    %850 = arith.mulf %849, %827 : vector<14x14xf32>
    %851 = arith.addf %818, %850 : vector<14x14xf32>
    %c239 = arith.constant 239 : index
    %852 = memref.load %arg3[%c239] : memref<288xf32, #tpu.memory_space<smem>>
    %853 = vector.broadcast %852 : f32 to vector<14x14xf32>
    %854 = arith.mulf %853, %827 : vector<14x14xf32>
    %855 = arith.addf %822, %854 : vector<14x14xf32>
    %c275 = arith.constant 275 : index
    %856 = memref.load %arg3[%c275] : memref<288xf32, #tpu.memory_space<smem>>
    %857 = vector.broadcast %856 : f32 to vector<14x14xf32>
    %858 = arith.mulf %857, %827 : vector<14x14xf32>
    %859 = arith.addf %826, %858 : vector<14x14xf32>
    %860 = vector.extract_strided_slice %659 {offsets = [2, 0], sizes = [14, 16], strides = [1, 1]} : vector<16x16xf32> to vector<14x16xf32>
    %861 = vector.extract_strided_slice %860 {offsets = [0, 0], sizes = [14, 14], strides = [1, 1]} : vector<14x16xf32> to vector<14x14xf32>
    %c24 = arith.constant 24 : index
    %862 = memref.load %arg3[%c24] : memref<288xf32, #tpu.memory_space<smem>>
    %863 = vector.broadcast %862 : f32 to vector<14x14xf32>
    %864 = arith.mulf %863, %861 : vector<14x14xf32>
    %865 = arith.addf %831, %864 : vector<14x14xf32>
    %c60 = arith.constant 60 : index
    %866 = memref.load %arg3[%c60] : memref<288xf32, #tpu.memory_space<smem>>
    %867 = vector.broadcast %866 : f32 to vector<14x14xf32>
    %868 = arith.mulf %867, %861 : vector<14x14xf32>
    %869 = arith.addf %835, %868 : vector<14x14xf32>
    %c96 = arith.constant 96 : index
    %870 = memref.load %arg3[%c96] : memref<288xf32, #tpu.memory_space<smem>>
    %871 = vector.broadcast %870 : f32 to vector<14x14xf32>
    %872 = arith.mulf %871, %861 : vector<14x14xf32>
    %873 = arith.addf %839, %872 : vector<14x14xf32>
    %c132 = arith.constant 132 : index
    %874 = memref.load %arg3[%c132] : memref<288xf32, #tpu.memory_space<smem>>
    %875 = vector.broadcast %874 : f32 to vector<14x14xf32>
    %876 = arith.mulf %875, %861 : vector<14x14xf32>
    %877 = arith.addf %843, %876 : vector<14x14xf32>
    %c168 = arith.constant 168 : index
    %878 = memref.load %arg3[%c168] : memref<288xf32, #tpu.memory_space<smem>>
    %879 = vector.broadcast %878 : f32 to vector<14x14xf32>
    %880 = arith.mulf %879, %861 : vector<14x14xf32>
    %881 = arith.addf %847, %880 : vector<14x14xf32>
    %c204 = arith.constant 204 : index
    %882 = memref.load %arg3[%c204] : memref<288xf32, #tpu.memory_space<smem>>
    %883 = vector.broadcast %882 : f32 to vector<14x14xf32>
    %884 = arith.mulf %883, %861 : vector<14x14xf32>
    %885 = arith.addf %851, %884 : vector<14x14xf32>
    %c240 = arith.constant 240 : index
    %886 = memref.load %arg3[%c240] : memref<288xf32, #tpu.memory_space<smem>>
    %887 = vector.broadcast %886 : f32 to vector<14x14xf32>
    %888 = arith.mulf %887, %861 : vector<14x14xf32>
    %889 = arith.addf %855, %888 : vector<14x14xf32>
    %c276 = arith.constant 276 : index
    %890 = memref.load %arg3[%c276] : memref<288xf32, #tpu.memory_space<smem>>
    %891 = vector.broadcast %890 : f32 to vector<14x14xf32>
    %892 = arith.mulf %891, %861 : vector<14x14xf32>
    %893 = arith.addf %859, %892 : vector<14x14xf32>
    %894 = vector.extract_strided_slice %860 {offsets = [0, 1], sizes = [14, 14], strides = [1, 1]} : vector<14x16xf32> to vector<14x14xf32>
    %c25 = arith.constant 25 : index
    %895 = memref.load %arg3[%c25] : memref<288xf32, #tpu.memory_space<smem>>
    %896 = vector.broadcast %895 : f32 to vector<14x14xf32>
    %897 = arith.mulf %896, %894 : vector<14x14xf32>
    %898 = arith.addf %865, %897 : vector<14x14xf32>
    %c61 = arith.constant 61 : index
    %899 = memref.load %arg3[%c61] : memref<288xf32, #tpu.memory_space<smem>>
    %900 = vector.broadcast %899 : f32 to vector<14x14xf32>
    %901 = arith.mulf %900, %894 : vector<14x14xf32>
    %902 = arith.addf %869, %901 : vector<14x14xf32>
    %c97 = arith.constant 97 : index
    %903 = memref.load %arg3[%c97] : memref<288xf32, #tpu.memory_space<smem>>
    %904 = vector.broadcast %903 : f32 to vector<14x14xf32>
    %905 = arith.mulf %904, %894 : vector<14x14xf32>
    %906 = arith.addf %873, %905 : vector<14x14xf32>
    %c133 = arith.constant 133 : index
    %907 = memref.load %arg3[%c133] : memref<288xf32, #tpu.memory_space<smem>>
    %908 = vector.broadcast %907 : f32 to vector<14x14xf32>
    %909 = arith.mulf %908, %894 : vector<14x14xf32>
    %910 = arith.addf %877, %909 : vector<14x14xf32>
    %c169 = arith.constant 169 : index
    %911 = memref.load %arg3[%c169] : memref<288xf32, #tpu.memory_space<smem>>
    %912 = vector.broadcast %911 : f32 to vector<14x14xf32>
    %913 = arith.mulf %912, %894 : vector<14x14xf32>
    %914 = arith.addf %881, %913 : vector<14x14xf32>
    %c205 = arith.constant 205 : index
    %915 = memref.load %arg3[%c205] : memref<288xf32, #tpu.memory_space<smem>>
    %916 = vector.broadcast %915 : f32 to vector<14x14xf32>
    %917 = arith.mulf %916, %894 : vector<14x14xf32>
    %918 = arith.addf %885, %917 : vector<14x14xf32>
    %c241 = arith.constant 241 : index
    %919 = memref.load %arg3[%c241] : memref<288xf32, #tpu.memory_space<smem>>
    %920 = vector.broadcast %919 : f32 to vector<14x14xf32>
    %921 = arith.mulf %920, %894 : vector<14x14xf32>
    %922 = arith.addf %889, %921 : vector<14x14xf32>
    %c277 = arith.constant 277 : index
    %923 = memref.load %arg3[%c277] : memref<288xf32, #tpu.memory_space<smem>>
    %924 = vector.broadcast %923 : f32 to vector<14x14xf32>
    %925 = arith.mulf %924, %894 : vector<14x14xf32>
    %926 = arith.addf %893, %925 : vector<14x14xf32>
    %927 = vector.extract_strided_slice %860 {offsets = [0, 2], sizes = [14, 14], strides = [1, 1]} : vector<14x16xf32> to vector<14x14xf32>
    %c26 = arith.constant 26 : index
    %928 = memref.load %arg3[%c26] : memref<288xf32, #tpu.memory_space<smem>>
    %929 = vector.broadcast %928 : f32 to vector<14x14xf32>
    %930 = arith.mulf %929, %927 : vector<14x14xf32>
    %931 = arith.addf %898, %930 : vector<14x14xf32>
    %c62 = arith.constant 62 : index
    %932 = memref.load %arg3[%c62] : memref<288xf32, #tpu.memory_space<smem>>
    %933 = vector.broadcast %932 : f32 to vector<14x14xf32>
    %934 = arith.mulf %933, %927 : vector<14x14xf32>
    %935 = arith.addf %902, %934 : vector<14x14xf32>
    %c98 = arith.constant 98 : index
    %936 = memref.load %arg3[%c98] : memref<288xf32, #tpu.memory_space<smem>>
    %937 = vector.broadcast %936 : f32 to vector<14x14xf32>
    %938 = arith.mulf %937, %927 : vector<14x14xf32>
    %939 = arith.addf %906, %938 : vector<14x14xf32>
    %c134 = arith.constant 134 : index
    %940 = memref.load %arg3[%c134] : memref<288xf32, #tpu.memory_space<smem>>
    %941 = vector.broadcast %940 : f32 to vector<14x14xf32>
    %942 = arith.mulf %941, %927 : vector<14x14xf32>
    %943 = arith.addf %910, %942 : vector<14x14xf32>
    %c170 = arith.constant 170 : index
    %944 = memref.load %arg3[%c170] : memref<288xf32, #tpu.memory_space<smem>>
    %945 = vector.broadcast %944 : f32 to vector<14x14xf32>
    %946 = arith.mulf %945, %927 : vector<14x14xf32>
    %947 = arith.addf %914, %946 : vector<14x14xf32>
    %c206 = arith.constant 206 : index
    %948 = memref.load %arg3[%c206] : memref<288xf32, #tpu.memory_space<smem>>
    %949 = vector.broadcast %948 : f32 to vector<14x14xf32>
    %950 = arith.mulf %949, %927 : vector<14x14xf32>
    %951 = arith.addf %918, %950 : vector<14x14xf32>
    %c242 = arith.constant 242 : index
    %952 = memref.load %arg3[%c242] : memref<288xf32, #tpu.memory_space<smem>>
    %953 = vector.broadcast %952 : f32 to vector<14x14xf32>
    %954 = arith.mulf %953, %927 : vector<14x14xf32>
    %955 = arith.addf %922, %954 : vector<14x14xf32>
    %c278 = arith.constant 278 : index
    %956 = memref.load %arg3[%c278] : memref<288xf32, #tpu.memory_space<smem>>
    %957 = vector.broadcast %956 : f32 to vector<14x14xf32>
    %958 = arith.mulf %957, %927 : vector<14x14xf32>
    %959 = arith.addf %926, %958 : vector<14x14xf32>
    %960 = vector.extract_strided_slice %7 {offsets = [3, 0, 0], sizes = [1, 16, 16], strides = [1, 1, 1]} : vector<4x16x16xf32> to vector<1x16x16xf32>
    %961 = vector.shape_cast %960 : vector<1x16x16xf32> to vector<16x16xf32>
    %962 = arith.mulf %961, %16 : vector<16x16xf32>
    %c3_22 = arith.constant 3 : index
    %963 = memref.load %arg1[%c3_22] : memref<4xf32, #tpu.memory_space<smem>>
    %964 = vector.broadcast %963 : f32 to vector<16x16xf32>
    %965 = arith.mulf %962, %964 : vector<16x16xf32>
    %c3_23 = arith.constant 3 : index
    %966 = memref.load %arg2[%c3_23] : memref<4xf32, #tpu.memory_space<smem>>
    %967 = vector.broadcast %966 : f32 to vector<16x16xf32>
    %968 = arith.addf %965, %967 : vector<16x16xf32>
    %969 = vector.extract_strided_slice %968 {offsets = [0, 0], sizes = [14, 16], strides = [1, 1]} : vector<16x16xf32> to vector<14x16xf32>
    %970 = vector.extract_strided_slice %969 {offsets = [0, 0], sizes = [14, 14], strides = [1, 1]} : vector<14x16xf32> to vector<14x14xf32>
    %c27 = arith.constant 27 : index
    %971 = memref.load %arg3[%c27] : memref<288xf32, #tpu.memory_space<smem>>
    %972 = vector.broadcast %971 : f32 to vector<14x14xf32>
    %973 = arith.mulf %972, %970 : vector<14x14xf32>
    %974 = arith.addf %931, %973 : vector<14x14xf32>
    %c63 = arith.constant 63 : index
    %975 = memref.load %arg3[%c63] : memref<288xf32, #tpu.memory_space<smem>>
    %976 = vector.broadcast %975 : f32 to vector<14x14xf32>
    %977 = arith.mulf %976, %970 : vector<14x14xf32>
    %978 = arith.addf %935, %977 : vector<14x14xf32>
    %c99 = arith.constant 99 : index
    %979 = memref.load %arg3[%c99] : memref<288xf32, #tpu.memory_space<smem>>
    %980 = vector.broadcast %979 : f32 to vector<14x14xf32>
    %981 = arith.mulf %980, %970 : vector<14x14xf32>
    %982 = arith.addf %939, %981 : vector<14x14xf32>
    %c135 = arith.constant 135 : index
    %983 = memref.load %arg3[%c135] : memref<288xf32, #tpu.memory_space<smem>>
    %984 = vector.broadcast %983 : f32 to vector<14x14xf32>
    %985 = arith.mulf %984, %970 : vector<14x14xf32>
    %986 = arith.addf %943, %985 : vector<14x14xf32>
    %c171 = arith.constant 171 : index
    %987 = memref.load %arg3[%c171] : memref<288xf32, #tpu.memory_space<smem>>
    %988 = vector.broadcast %987 : f32 to vector<14x14xf32>
    %989 = arith.mulf %988, %970 : vector<14x14xf32>
    %990 = arith.addf %947, %989 : vector<14x14xf32>
    %c207 = arith.constant 207 : index
    %991 = memref.load %arg3[%c207] : memref<288xf32, #tpu.memory_space<smem>>
    %992 = vector.broadcast %991 : f32 to vector<14x14xf32>
    %993 = arith.mulf %992, %970 : vector<14x14xf32>
    %994 = arith.addf %951, %993 : vector<14x14xf32>
    %c243 = arith.constant 243 : index
    %995 = memref.load %arg3[%c243] : memref<288xf32, #tpu.memory_space<smem>>
    %996 = vector.broadcast %995 : f32 to vector<14x14xf32>
    %997 = arith.mulf %996, %970 : vector<14x14xf32>
    %998 = arith.addf %955, %997 : vector<14x14xf32>
    %c279 = arith.constant 279 : index
    %999 = memref.load %arg3[%c279] : memref<288xf32, #tpu.memory_space<smem>>
    %1000 = vector.broadcast %999 : f32 to vector<14x14xf32>
    %1001 = arith.mulf %1000, %970 : vector<14x14xf32>
    %1002 = arith.addf %959, %1001 : vector<14x14xf32>
    %1003 = vector.extract_strided_slice %969 {offsets = [0, 1], sizes = [14, 14], strides = [1, 1]} : vector<14x16xf32> to vector<14x14xf32>
    %c28 = arith.constant 28 : index
    %1004 = memref.load %arg3[%c28] : memref<288xf32, #tpu.memory_space<smem>>
    %1005 = vector.broadcast %1004 : f32 to vector<14x14xf32>
    %1006 = arith.mulf %1005, %1003 : vector<14x14xf32>
    %1007 = arith.addf %974, %1006 : vector<14x14xf32>
    %c64 = arith.constant 64 : index
    %1008 = memref.load %arg3[%c64] : memref<288xf32, #tpu.memory_space<smem>>
    %1009 = vector.broadcast %1008 : f32 to vector<14x14xf32>
    %1010 = arith.mulf %1009, %1003 : vector<14x14xf32>
    %1011 = arith.addf %978, %1010 : vector<14x14xf32>
    %c100 = arith.constant 100 : index
    %1012 = memref.load %arg3[%c100] : memref<288xf32, #tpu.memory_space<smem>>
    %1013 = vector.broadcast %1012 : f32 to vector<14x14xf32>
    %1014 = arith.mulf %1013, %1003 : vector<14x14xf32>
    %1015 = arith.addf %982, %1014 : vector<14x14xf32>
    %c136 = arith.constant 136 : index
    %1016 = memref.load %arg3[%c136] : memref<288xf32, #tpu.memory_space<smem>>
    %1017 = vector.broadcast %1016 : f32 to vector<14x14xf32>
    %1018 = arith.mulf %1017, %1003 : vector<14x14xf32>
    %1019 = arith.addf %986, %1018 : vector<14x14xf32>
    %c172 = arith.constant 172 : index
    %1020 = memref.load %arg3[%c172] : memref<288xf32, #tpu.memory_space<smem>>
    %1021 = vector.broadcast %1020 : f32 to vector<14x14xf32>
    %1022 = arith.mulf %1021, %1003 : vector<14x14xf32>
    %1023 = arith.addf %990, %1022 : vector<14x14xf32>
    %c208 = arith.constant 208 : index
    %1024 = memref.load %arg3[%c208] : memref<288xf32, #tpu.memory_space<smem>>
    %1025 = vector.broadcast %1024 : f32 to vector<14x14xf32>
    %1026 = arith.mulf %1025, %1003 : vector<14x14xf32>
    %1027 = arith.addf %994, %1026 : vector<14x14xf32>
    %c244 = arith.constant 244 : index
    %1028 = memref.load %arg3[%c244] : memref<288xf32, #tpu.memory_space<smem>>
    %1029 = vector.broadcast %1028 : f32 to vector<14x14xf32>
    %1030 = arith.mulf %1029, %1003 : vector<14x14xf32>
    %1031 = arith.addf %998, %1030 : vector<14x14xf32>
    %c280 = arith.constant 280 : index
    %1032 = memref.load %arg3[%c280] : memref<288xf32, #tpu.memory_space<smem>>
    %1033 = vector.broadcast %1032 : f32 to vector<14x14xf32>
    %1034 = arith.mulf %1033, %1003 : vector<14x14xf32>
    %1035 = arith.addf %1002, %1034 : vector<14x14xf32>
    %1036 = vector.extract_strided_slice %969 {offsets = [0, 2], sizes = [14, 14], strides = [1, 1]} : vector<14x16xf32> to vector<14x14xf32>
    %c29 = arith.constant 29 : index
    %1037 = memref.load %arg3[%c29] : memref<288xf32, #tpu.memory_space<smem>>
    %1038 = vector.broadcast %1037 : f32 to vector<14x14xf32>
    %1039 = arith.mulf %1038, %1036 : vector<14x14xf32>
    %1040 = arith.addf %1007, %1039 : vector<14x14xf32>
    %c65 = arith.constant 65 : index
    %1041 = memref.load %arg3[%c65] : memref<288xf32, #tpu.memory_space<smem>>
    %1042 = vector.broadcast %1041 : f32 to vector<14x14xf32>
    %1043 = arith.mulf %1042, %1036 : vector<14x14xf32>
    %1044 = arith.addf %1011, %1043 : vector<14x14xf32>
    %c101 = arith.constant 101 : index
    %1045 = memref.load %arg3[%c101] : memref<288xf32, #tpu.memory_space<smem>>
    %1046 = vector.broadcast %1045 : f32 to vector<14x14xf32>
    %1047 = arith.mulf %1046, %1036 : vector<14x14xf32>
    %1048 = arith.addf %1015, %1047 : vector<14x14xf32>
    %c137 = arith.constant 137 : index
    %1049 = memref.load %arg3[%c137] : memref<288xf32, #tpu.memory_space<smem>>
    %1050 = vector.broadcast %1049 : f32 to vector<14x14xf32>
    %1051 = arith.mulf %1050, %1036 : vector<14x14xf32>
    %1052 = arith.addf %1019, %1051 : vector<14x14xf32>
    %c173 = arith.constant 173 : index
    %1053 = memref.load %arg3[%c173] : memref<288xf32, #tpu.memory_space<smem>>
    %1054 = vector.broadcast %1053 : f32 to vector<14x14xf32>
    %1055 = arith.mulf %1054, %1036 : vector<14x14xf32>
    %1056 = arith.addf %1023, %1055 : vector<14x14xf32>
    %c209 = arith.constant 209 : index
    %1057 = memref.load %arg3[%c209] : memref<288xf32, #tpu.memory_space<smem>>
    %1058 = vector.broadcast %1057 : f32 to vector<14x14xf32>
    %1059 = arith.mulf %1058, %1036 : vector<14x14xf32>
    %1060 = arith.addf %1027, %1059 : vector<14x14xf32>
    %c245 = arith.constant 245 : index
    %1061 = memref.load %arg3[%c245] : memref<288xf32, #tpu.memory_space<smem>>
    %1062 = vector.broadcast %1061 : f32 to vector<14x14xf32>
    %1063 = arith.mulf %1062, %1036 : vector<14x14xf32>
    %1064 = arith.addf %1031, %1063 : vector<14x14xf32>
    %c281 = arith.constant 281 : index
    %1065 = memref.load %arg3[%c281] : memref<288xf32, #tpu.memory_space<smem>>
    %1066 = vector.broadcast %1065 : f32 to vector<14x14xf32>
    %1067 = arith.mulf %1066, %1036 : vector<14x14xf32>
    %1068 = arith.addf %1035, %1067 : vector<14x14xf32>
    %1069 = vector.extract_strided_slice %968 {offsets = [1, 0], sizes = [14, 16], strides = [1, 1]} : vector<16x16xf32> to vector<14x16xf32>
    %1070 = vector.extract_strided_slice %1069 {offsets = [0, 0], sizes = [14, 14], strides = [1, 1]} : vector<14x16xf32> to vector<14x14xf32>
    %c30 = arith.constant 30 : index
    %1071 = memref.load %arg3[%c30] : memref<288xf32, #tpu.memory_space<smem>>
    %1072 = vector.broadcast %1071 : f32 to vector<14x14xf32>
    %1073 = arith.mulf %1072, %1070 : vector<14x14xf32>
    %1074 = arith.addf %1040, %1073 : vector<14x14xf32>
    %c66 = arith.constant 66 : index
    %1075 = memref.load %arg3[%c66] : memref<288xf32, #tpu.memory_space<smem>>
    %1076 = vector.broadcast %1075 : f32 to vector<14x14xf32>
    %1077 = arith.mulf %1076, %1070 : vector<14x14xf32>
    %1078 = arith.addf %1044, %1077 : vector<14x14xf32>
    %c102 = arith.constant 102 : index
    %1079 = memref.load %arg3[%c102] : memref<288xf32, #tpu.memory_space<smem>>
    %1080 = vector.broadcast %1079 : f32 to vector<14x14xf32>
    %1081 = arith.mulf %1080, %1070 : vector<14x14xf32>
    %1082 = arith.addf %1048, %1081 : vector<14x14xf32>
    %c138 = arith.constant 138 : index
    %1083 = memref.load %arg3[%c138] : memref<288xf32, #tpu.memory_space<smem>>
    %1084 = vector.broadcast %1083 : f32 to vector<14x14xf32>
    %1085 = arith.mulf %1084, %1070 : vector<14x14xf32>
    %1086 = arith.addf %1052, %1085 : vector<14x14xf32>
    %c174 = arith.constant 174 : index
    %1087 = memref.load %arg3[%c174] : memref<288xf32, #tpu.memory_space<smem>>
    %1088 = vector.broadcast %1087 : f32 to vector<14x14xf32>
    %1089 = arith.mulf %1088, %1070 : vector<14x14xf32>
    %1090 = arith.addf %1056, %1089 : vector<14x14xf32>
    %c210 = arith.constant 210 : index
    %1091 = memref.load %arg3[%c210] : memref<288xf32, #tpu.memory_space<smem>>
    %1092 = vector.broadcast %1091 : f32 to vector<14x14xf32>
    %1093 = arith.mulf %1092, %1070 : vector<14x14xf32>
    %1094 = arith.addf %1060, %1093 : vector<14x14xf32>
    %c246 = arith.constant 246 : index
    %1095 = memref.load %arg3[%c246] : memref<288xf32, #tpu.memory_space<smem>>
    %1096 = vector.broadcast %1095 : f32 to vector<14x14xf32>
    %1097 = arith.mulf %1096, %1070 : vector<14x14xf32>
    %1098 = arith.addf %1064, %1097 : vector<14x14xf32>
    %c282 = arith.constant 282 : index
    %1099 = memref.load %arg3[%c282] : memref<288xf32, #tpu.memory_space<smem>>
    %1100 = vector.broadcast %1099 : f32 to vector<14x14xf32>
    %1101 = arith.mulf %1100, %1070 : vector<14x14xf32>
    %1102 = arith.addf %1068, %1101 : vector<14x14xf32>
    %1103 = vector.extract_strided_slice %1069 {offsets = [0, 1], sizes = [14, 14], strides = [1, 1]} : vector<14x16xf32> to vector<14x14xf32>
    %c31 = arith.constant 31 : index
    %1104 = memref.load %arg3[%c31] : memref<288xf32, #tpu.memory_space<smem>>
    %1105 = vector.broadcast %1104 : f32 to vector<14x14xf32>
    %1106 = arith.mulf %1105, %1103 : vector<14x14xf32>
    %1107 = arith.addf %1074, %1106 : vector<14x14xf32>
    %c67 = arith.constant 67 : index
    %1108 = memref.load %arg3[%c67] : memref<288xf32, #tpu.memory_space<smem>>
    %1109 = vector.broadcast %1108 : f32 to vector<14x14xf32>
    %1110 = arith.mulf %1109, %1103 : vector<14x14xf32>
    %1111 = arith.addf %1078, %1110 : vector<14x14xf32>
    %c103 = arith.constant 103 : index
    %1112 = memref.load %arg3[%c103] : memref<288xf32, #tpu.memory_space<smem>>
    %1113 = vector.broadcast %1112 : f32 to vector<14x14xf32>
    %1114 = arith.mulf %1113, %1103 : vector<14x14xf32>
    %1115 = arith.addf %1082, %1114 : vector<14x14xf32>
    %c139 = arith.constant 139 : index
    %1116 = memref.load %arg3[%c139] : memref<288xf32, #tpu.memory_space<smem>>
    %1117 = vector.broadcast %1116 : f32 to vector<14x14xf32>
    %1118 = arith.mulf %1117, %1103 : vector<14x14xf32>
    %1119 = arith.addf %1086, %1118 : vector<14x14xf32>
    %c175 = arith.constant 175 : index
    %1120 = memref.load %arg3[%c175] : memref<288xf32, #tpu.memory_space<smem>>
    %1121 = vector.broadcast %1120 : f32 to vector<14x14xf32>
    %1122 = arith.mulf %1121, %1103 : vector<14x14xf32>
    %1123 = arith.addf %1090, %1122 : vector<14x14xf32>
    %c211 = arith.constant 211 : index
    %1124 = memref.load %arg3[%c211] : memref<288xf32, #tpu.memory_space<smem>>
    %1125 = vector.broadcast %1124 : f32 to vector<14x14xf32>
    %1126 = arith.mulf %1125, %1103 : vector<14x14xf32>
    %1127 = arith.addf %1094, %1126 : vector<14x14xf32>
    %c247 = arith.constant 247 : index
    %1128 = memref.load %arg3[%c247] : memref<288xf32, #tpu.memory_space<smem>>
    %1129 = vector.broadcast %1128 : f32 to vector<14x14xf32>
    %1130 = arith.mulf %1129, %1103 : vector<14x14xf32>
    %1131 = arith.addf %1098, %1130 : vector<14x14xf32>
    %c283 = arith.constant 283 : index
    %1132 = memref.load %arg3[%c283] : memref<288xf32, #tpu.memory_space<smem>>
    %1133 = vector.broadcast %1132 : f32 to vector<14x14xf32>
    %1134 = arith.mulf %1133, %1103 : vector<14x14xf32>
    %1135 = arith.addf %1102, %1134 : vector<14x14xf32>
    %1136 = vector.extract_strided_slice %1069 {offsets = [0, 2], sizes = [14, 14], strides = [1, 1]} : vector<14x16xf32> to vector<14x14xf32>
    %c32 = arith.constant 32 : index
    %1137 = memref.load %arg3[%c32] : memref<288xf32, #tpu.memory_space<smem>>
    %1138 = vector.broadcast %1137 : f32 to vector<14x14xf32>
    %1139 = arith.mulf %1138, %1136 : vector<14x14xf32>
    %1140 = arith.addf %1107, %1139 : vector<14x14xf32>
    %c68 = arith.constant 68 : index
    %1141 = memref.load %arg3[%c68] : memref<288xf32, #tpu.memory_space<smem>>
    %1142 = vector.broadcast %1141 : f32 to vector<14x14xf32>
    %1143 = arith.mulf %1142, %1136 : vector<14x14xf32>
    %1144 = arith.addf %1111, %1143 : vector<14x14xf32>
    %c104 = arith.constant 104 : index
    %1145 = memref.load %arg3[%c104] : memref<288xf32, #tpu.memory_space<smem>>
    %1146 = vector.broadcast %1145 : f32 to vector<14x14xf32>
    %1147 = arith.mulf %1146, %1136 : vector<14x14xf32>
    %1148 = arith.addf %1115, %1147 : vector<14x14xf32>
    %c140 = arith.constant 140 : index
    %1149 = memref.load %arg3[%c140] : memref<288xf32, #tpu.memory_space<smem>>
    %1150 = vector.broadcast %1149 : f32 to vector<14x14xf32>
    %1151 = arith.mulf %1150, %1136 : vector<14x14xf32>
    %1152 = arith.addf %1119, %1151 : vector<14x14xf32>
    %c176 = arith.constant 176 : index
    %1153 = memref.load %arg3[%c176] : memref<288xf32, #tpu.memory_space<smem>>
    %1154 = vector.broadcast %1153 : f32 to vector<14x14xf32>
    %1155 = arith.mulf %1154, %1136 : vector<14x14xf32>
    %1156 = arith.addf %1123, %1155 : vector<14x14xf32>
    %c212 = arith.constant 212 : index
    %1157 = memref.load %arg3[%c212] : memref<288xf32, #tpu.memory_space<smem>>
    %1158 = vector.broadcast %1157 : f32 to vector<14x14xf32>
    %1159 = arith.mulf %1158, %1136 : vector<14x14xf32>
    %1160 = arith.addf %1127, %1159 : vector<14x14xf32>
    %c248 = arith.constant 248 : index
    %1161 = memref.load %arg3[%c248] : memref<288xf32, #tpu.memory_space<smem>>
    %1162 = vector.broadcast %1161 : f32 to vector<14x14xf32>
    %1163 = arith.mulf %1162, %1136 : vector<14x14xf32>
    %1164 = arith.addf %1131, %1163 : vector<14x14xf32>
    %c284 = arith.constant 284 : index
    %1165 = memref.load %arg3[%c284] : memref<288xf32, #tpu.memory_space<smem>>
    %1166 = vector.broadcast %1165 : f32 to vector<14x14xf32>
    %1167 = arith.mulf %1166, %1136 : vector<14x14xf32>
    %1168 = arith.addf %1135, %1167 : vector<14x14xf32>
    %1169 = vector.extract_strided_slice %968 {offsets = [2, 0], sizes = [14, 16], strides = [1, 1]} : vector<16x16xf32> to vector<14x16xf32>
    %1170 = vector.extract_strided_slice %1169 {offsets = [0, 0], sizes = [14, 14], strides = [1, 1]} : vector<14x16xf32> to vector<14x14xf32>
    %c33 = arith.constant 33 : index
    %1171 = memref.load %arg3[%c33] : memref<288xf32, #tpu.memory_space<smem>>
    %1172 = vector.broadcast %1171 : f32 to vector<14x14xf32>
    %1173 = arith.mulf %1172, %1170 : vector<14x14xf32>
    %1174 = arith.addf %1140, %1173 : vector<14x14xf32>
    %c69 = arith.constant 69 : index
    %1175 = memref.load %arg3[%c69] : memref<288xf32, #tpu.memory_space<smem>>
    %1176 = vector.broadcast %1175 : f32 to vector<14x14xf32>
    %1177 = arith.mulf %1176, %1170 : vector<14x14xf32>
    %1178 = arith.addf %1144, %1177 : vector<14x14xf32>
    %c105 = arith.constant 105 : index
    %1179 = memref.load %arg3[%c105] : memref<288xf32, #tpu.memory_space<smem>>
    %1180 = vector.broadcast %1179 : f32 to vector<14x14xf32>
    %1181 = arith.mulf %1180, %1170 : vector<14x14xf32>
    %1182 = arith.addf %1148, %1181 : vector<14x14xf32>
    %c141 = arith.constant 141 : index
    %1183 = memref.load %arg3[%c141] : memref<288xf32, #tpu.memory_space<smem>>
    %1184 = vector.broadcast %1183 : f32 to vector<14x14xf32>
    %1185 = arith.mulf %1184, %1170 : vector<14x14xf32>
    %1186 = arith.addf %1152, %1185 : vector<14x14xf32>
    %c177 = arith.constant 177 : index
    %1187 = memref.load %arg3[%c177] : memref<288xf32, #tpu.memory_space<smem>>
    %1188 = vector.broadcast %1187 : f32 to vector<14x14xf32>
    %1189 = arith.mulf %1188, %1170 : vector<14x14xf32>
    %1190 = arith.addf %1156, %1189 : vector<14x14xf32>
    %c213 = arith.constant 213 : index
    %1191 = memref.load %arg3[%c213] : memref<288xf32, #tpu.memory_space<smem>>
    %1192 = vector.broadcast %1191 : f32 to vector<14x14xf32>
    %1193 = arith.mulf %1192, %1170 : vector<14x14xf32>
    %1194 = arith.addf %1160, %1193 : vector<14x14xf32>
    %c249 = arith.constant 249 : index
    %1195 = memref.load %arg3[%c249] : memref<288xf32, #tpu.memory_space<smem>>
    %1196 = vector.broadcast %1195 : f32 to vector<14x14xf32>
    %1197 = arith.mulf %1196, %1170 : vector<14x14xf32>
    %1198 = arith.addf %1164, %1197 : vector<14x14xf32>
    %c285 = arith.constant 285 : index
    %1199 = memref.load %arg3[%c285] : memref<288xf32, #tpu.memory_space<smem>>
    %1200 = vector.broadcast %1199 : f32 to vector<14x14xf32>
    %1201 = arith.mulf %1200, %1170 : vector<14x14xf32>
    %1202 = arith.addf %1168, %1201 : vector<14x14xf32>
    %1203 = vector.extract_strided_slice %1169 {offsets = [0, 1], sizes = [14, 14], strides = [1, 1]} : vector<14x16xf32> to vector<14x14xf32>
    %c34 = arith.constant 34 : index
    %1204 = memref.load %arg3[%c34] : memref<288xf32, #tpu.memory_space<smem>>
    %1205 = vector.broadcast %1204 : f32 to vector<14x14xf32>
    %1206 = arith.mulf %1205, %1203 : vector<14x14xf32>
    %1207 = arith.addf %1174, %1206 : vector<14x14xf32>
    %c70 = arith.constant 70 : index
    %1208 = memref.load %arg3[%c70] : memref<288xf32, #tpu.memory_space<smem>>
    %1209 = vector.broadcast %1208 : f32 to vector<14x14xf32>
    %1210 = arith.mulf %1209, %1203 : vector<14x14xf32>
    %1211 = arith.addf %1178, %1210 : vector<14x14xf32>
    %c106 = arith.constant 106 : index
    %1212 = memref.load %arg3[%c106] : memref<288xf32, #tpu.memory_space<smem>>
    %1213 = vector.broadcast %1212 : f32 to vector<14x14xf32>
    %1214 = arith.mulf %1213, %1203 : vector<14x14xf32>
    %1215 = arith.addf %1182, %1214 : vector<14x14xf32>
    %c142 = arith.constant 142 : index
    %1216 = memref.load %arg3[%c142] : memref<288xf32, #tpu.memory_space<smem>>
    %1217 = vector.broadcast %1216 : f32 to vector<14x14xf32>
    %1218 = arith.mulf %1217, %1203 : vector<14x14xf32>
    %1219 = arith.addf %1186, %1218 : vector<14x14xf32>
    %c178 = arith.constant 178 : index
    %1220 = memref.load %arg3[%c178] : memref<288xf32, #tpu.memory_space<smem>>
    %1221 = vector.broadcast %1220 : f32 to vector<14x14xf32>
    %1222 = arith.mulf %1221, %1203 : vector<14x14xf32>
    %1223 = arith.addf %1190, %1222 : vector<14x14xf32>
    %c214 = arith.constant 214 : index
    %1224 = memref.load %arg3[%c214] : memref<288xf32, #tpu.memory_space<smem>>
    %1225 = vector.broadcast %1224 : f32 to vector<14x14xf32>
    %1226 = arith.mulf %1225, %1203 : vector<14x14xf32>
    %1227 = arith.addf %1194, %1226 : vector<14x14xf32>
    %c250 = arith.constant 250 : index
    %1228 = memref.load %arg3[%c250] : memref<288xf32, #tpu.memory_space<smem>>
    %1229 = vector.broadcast %1228 : f32 to vector<14x14xf32>
    %1230 = arith.mulf %1229, %1203 : vector<14x14xf32>
    %1231 = arith.addf %1198, %1230 : vector<14x14xf32>
    %c286 = arith.constant 286 : index
    %1232 = memref.load %arg3[%c286] : memref<288xf32, #tpu.memory_space<smem>>
    %1233 = vector.broadcast %1232 : f32 to vector<14x14xf32>
    %1234 = arith.mulf %1233, %1203 : vector<14x14xf32>
    %1235 = arith.addf %1202, %1234 : vector<14x14xf32>
    %1236 = vector.extract_strided_slice %1169 {offsets = [0, 2], sizes = [14, 14], strides = [1, 1]} : vector<14x16xf32> to vector<14x14xf32>
    %c35 = arith.constant 35 : index
    %1237 = memref.load %arg3[%c35] : memref<288xf32, #tpu.memory_space<smem>>
    %1238 = vector.broadcast %1237 : f32 to vector<14x14xf32>
    %1239 = arith.mulf %1238, %1236 : vector<14x14xf32>
    %1240 = arith.addf %1207, %1239 : vector<14x14xf32>
    %c71 = arith.constant 71 : index
    %1241 = memref.load %arg3[%c71] : memref<288xf32, #tpu.memory_space<smem>>
    %1242 = vector.broadcast %1241 : f32 to vector<14x14xf32>
    %1243 = arith.mulf %1242, %1236 : vector<14x14xf32>
    %1244 = arith.addf %1211, %1243 : vector<14x14xf32>
    %c107 = arith.constant 107 : index
    %1245 = memref.load %arg3[%c107] : memref<288xf32, #tpu.memory_space<smem>>
    %1246 = vector.broadcast %1245 : f32 to vector<14x14xf32>
    %1247 = arith.mulf %1246, %1236 : vector<14x14xf32>
    %1248 = arith.addf %1215, %1247 : vector<14x14xf32>
    %c143 = arith.constant 143 : index
    %1249 = memref.load %arg3[%c143] : memref<288xf32, #tpu.memory_space<smem>>
    %1250 = vector.broadcast %1249 : f32 to vector<14x14xf32>
    %1251 = arith.mulf %1250, %1236 : vector<14x14xf32>
    %1252 = arith.addf %1219, %1251 : vector<14x14xf32>
    %c179 = arith.constant 179 : index
    %1253 = memref.load %arg3[%c179] : memref<288xf32, #tpu.memory_space<smem>>
    %1254 = vector.broadcast %1253 : f32 to vector<14x14xf32>
    %1255 = arith.mulf %1254, %1236 : vector<14x14xf32>
    %1256 = arith.addf %1223, %1255 : vector<14x14xf32>
    %c215 = arith.constant 215 : index
    %1257 = memref.load %arg3[%c215] : memref<288xf32, #tpu.memory_space<smem>>
    %1258 = vector.broadcast %1257 : f32 to vector<14x14xf32>
    %1259 = arith.mulf %1258, %1236 : vector<14x14xf32>
    %1260 = arith.addf %1227, %1259 : vector<14x14xf32>
    %c251 = arith.constant 251 : index
    %1261 = memref.load %arg3[%c251] : memref<288xf32, #tpu.memory_space<smem>>
    %1262 = vector.broadcast %1261 : f32 to vector<14x14xf32>
    %1263 = arith.mulf %1262, %1236 : vector<14x14xf32>
    %1264 = arith.addf %1231, %1263 : vector<14x14xf32>
    %c287 = arith.constant 287 : index
    %1265 = memref.load %arg3[%c287] : memref<288xf32, #tpu.memory_space<smem>>
    %1266 = vector.broadcast %1265 : f32 to vector<14x14xf32>
    %1267 = arith.mulf %1266, %1236 : vector<14x14xf32>
    %1268 = arith.addf %1235, %1267 : vector<14x14xf32>
    %1269 = vector.shape_cast %1240 : vector<14x14xf32> to vector<1x14x14xf32>
    %1270 = vector.shape_cast %1244 : vector<14x14xf32> to vector<1x14x14xf32>
    %1271 = vector.shape_cast %1248 : vector<14x14xf32> to vector<1x14x14xf32>
    %1272 = vector.shape_cast %1252 : vector<14x14xf32> to vector<1x14x14xf32>
    %1273 = vector.shape_cast %1256 : vector<14x14xf32> to vector<1x14x14xf32>
    %1274 = vector.shape_cast %1260 : vector<14x14xf32> to vector<1x14x14xf32>
    %1275 = vector.shape_cast %1264 : vector<14x14xf32> to vector<1x14x14xf32>
    %1276 = vector.shape_cast %1268 : vector<14x14xf32> to vector<1x14x14xf32>
    %1277 = tpu.concatenate %1269, %1270, %1271, %1272, %1273, %1274, %1275, %1276 in 0 : vector<1x14x14xf32>, vector<1x14x14xf32>, vector<1x14x14xf32>, vector<1x14x14xf32>, vector<1x14x14xf32>, vector<1x14x14xf32>, vector<1x14x14xf32>, vector<1x14x14xf32> -> vector<8x14x14xf32>
    %c0_24 = arith.constant 0 : index
    %c0_25 = arith.constant 0 : index
    %c0_26 = arith.constant 0 : index
    %c0_27 = arith.constant 0 : index
    %1278 = vector.load %arg5[%c0_24, %c0_25, %c0_26, %c0_27] : memref<2x8x14x14xf32, #tpu.memory_space<vmem>>, vector<1x8x14x14xf32>
    %1279 = vector.shape_cast %1278 : vector<1x8x14x14xf32> to vector<8x14x14xf32>
    %1280 = vector.shape_cast %1277 : vector<8x14x14xf32> to vector<1x8x14x14xf32>
    tpu.vector_store %arg5[%c0_24, %c0_25, %c0_26, %c0_27], %1280 {strides = array<i32>} : memref<2x8x14x14xf32, #tpu.memory_space<vmem>>, vector<1x8x14x14xf32>,
    %c1_28 = arith.constant 1 : index
    %c0_29 = arith.constant 0 : index
    %c0_30 = arith.constant 0 : index
    %c0_31 = arith.constant 0 : index
    %1281 = vector.load %arg0[%c1_28, %c0_29, %c0_30, %c0_31] : memref<2x4x16x16xf32, #tpu.memory_space<vmem>>, vector<1x4x16x16xf32>
    %1282 = vector.shape_cast %1281 : vector<1x4x16x16xf32> to vector<4x16x16xf32>
    %cst_32 = arith.constant dense<0.000000e+00> : vector<16x16xf32>
    %1283 = vector.multi_reduction <add>, %1282, %cst_32 [0] : vector<4x16x16xf32> to vector<16x16xf32>
    %1284 = vector.shape_cast %1283 : vector<16x16xf32> to vector<1x16x16xf32>
    %cst_33 = arith.constant 4.000000e+00 : f32
    %1285 = vector.broadcast %cst_33 : f32 to vector<1x16x16xf32>
    %1286 = arith.divf %1284, %1285 : vector<1x16x16xf32>
    %1287 = vector.broadcast %1286 : vector<1x16x16xf32> to vector<4x16x16xf32>
    %1288 = arith.subf %1282, %1287 : vector<4x16x16xf32>
    %1289 = arith.mulf %1288, %1288 : vector<4x16x16xf32>
    %cst_34 = arith.constant dense<0.000000e+00> : vector<16x16xf32>
    %1290 = vector.multi_reduction <add>, %1289, %cst_34 [0] : vector<4x16x16xf32> to vector<16x16xf32>
    %1291 = vector.shape_cast %1290 : vector<16x16xf32> to vector<1x16x16xf32>
    %cst_35 = arith.constant 4.000000e+00 : f32
    %1292 = vector.broadcast %cst_35 : f32 to vector<1x16x16xf32>
    %1293 = arith.divf %1291, %1292 : vector<1x16x16xf32>
    %cst_36 = arith.constant 9.99999997E-7 : f32
    %1294 = vector.broadcast %cst_36 : f32 to vector<1x16x16xf32>
    %1295 = arith.addf %1293, %1294 : vector<1x16x16xf32>
    %1296 = math.rsqrt %1295 : vector<1x16x16xf32>
    %1297 = vector.shape_cast %1296 : vector<1x16x16xf32> to vector<16x16xf32>
    %c0_37 = arith.constant 0 : index
    %1298 = memref.load %arg4[%c0_37] : memref<8xf32, #tpu.memory_space<smem>>
    %1299 = vector.broadcast %1298 : f32 to vector<14x14xf32>
    %c1_38 = arith.constant 1 : index
    %1300 = memref.load %arg4[%c1_38] : memref<8xf32, #tpu.memory_space<smem>>
    %1301 = vector.broadcast %1300 : f32 to vector<14x14xf32>
    %c2_39 = arith.constant 2 : index
    %1302 = memref.load %arg4[%c2_39] : memref<8xf32, #tpu.memory_space<smem>>
    %1303 = vector.broadcast %1302 : f32 to vector<14x14xf32>
    %c3_40 = arith.constant 3 : index
    %1304 = memref.load %arg4[%c3_40] : memref<8xf32, #tpu.memory_space<smem>>
    %1305 = vector.broadcast %1304 : f32 to vector<14x14xf32>
    %c4_41 = arith.constant 4 : index
    %1306 = memref.load %arg4[%c4_41] : memref<8xf32, #tpu.memory_space<smem>>
    %1307 = vector.broadcast %1306 : f32 to vector<14x14xf32>
    %c5_42 = arith.constant 5 : index
    %1308 = memref.load %arg4[%c5_42] : memref<8xf32, #tpu.memory_space<smem>>
    %1309 = vector.broadcast %1308 : f32 to vector<14x14xf32>
    %c6_43 = arith.constant 6 : index
    %1310 = memref.load %arg4[%c6_43] : memref<8xf32, #tpu.memory_space<smem>>
    %1311 = vector.broadcast %1310 : f32 to vector<14x14xf32>
    %c7_44 = arith.constant 7 : index
    %1312 = memref.load %arg4[%c7_44] : memref<8xf32, #tpu.memory_space<smem>>
    %1313 = vector.broadcast %1312 : f32 to vector<14x14xf32>
    %1314 = vector.extract_strided_slice %1288 {offsets = [0, 0, 0], sizes = [1, 16, 16], strides = [1, 1, 1]} : vector<4x16x16xf32> to vector<1x16x16xf32>
    %1315 = vector.shape_cast %1314 : vector<1x16x16xf32> to vector<16x16xf32>
    %1316 = arith.mulf %1315, %1297 : vector<16x16xf32>
    %c0_45 = arith.constant 0 : index
    %1317 = memref.load %arg1[%c0_45] : memref<4xf32, #tpu.memory_space<smem>>
    %1318 = vector.broadcast %1317 : f32 to vector<16x16xf32>
    %1319 = arith.mulf %1316, %1318 : vector<16x16xf32>
    %c0_46 = arith.constant 0 : index
    %1320 = memref.load %arg2[%c0_46] : memref<4xf32, #tpu.memory_space<smem>>
    %1321 = vector.broadcast %1320 : f32 to vector<16x16xf32>
    %1322 = arith.addf %1319, %1321 : vector<16x16xf32>
    %1323 = vector.extract_strided_slice %1322 {offsets = [0, 0], sizes = [14, 16], strides = [1, 1]} : vector<16x16xf32> to vector<14x16xf32>
    %1324 = vector.extract_strided_slice %1323 {offsets = [0, 0], sizes = [14, 14], strides = [1, 1]} : vector<14x16xf32> to vector<14x14xf32>
    %c0_47 = arith.constant 0 : index
    %1325 = memref.load %arg3[%c0_47] : memref<288xf32, #tpu.memory_space<smem>>
    %1326 = vector.broadcast %1325 : f32 to vector<14x14xf32>
    %1327 = arith.mulf %1326, %1324 : vector<14x14xf32>
    %1328 = arith.addf %1299, %1327 : vector<14x14xf32>
    %c36_48 = arith.constant 36 : index
    %1329 = memref.load %arg3[%c36_48] : memref<288xf32, #tpu.memory_space<smem>>
    %1330 = vector.broadcast %1329 : f32 to vector<14x14xf32>
    %1331 = arith.mulf %1330, %1324 : vector<14x14xf32>
    %1332 = arith.addf %1301, %1331 : vector<14x14xf32>
    %c72_49 = arith.constant 72 : index
    %1333 = memref.load %arg3[%c72_49] : memref<288xf32, #tpu.memory_space<smem>>
    %1334 = vector.broadcast %1333 : f32 to vector<14x14xf32>
    %1335 = arith.mulf %1334, %1324 : vector<14x14xf32>
    %1336 = arith.addf %1303, %1335 : vector<14x14xf32>
    %c108_50 = arith.constant 108 : index
    %1337 = memref.load %arg3[%c108_50] : memref<288xf32, #tpu.memory_space<smem>>
    %1338 = vector.broadcast %1337 : f32 to vector<14x14xf32>
    %1339 = arith.mulf %1338, %1324 : vector<14x14xf32>
    %1340 = arith.addf %1305, %1339 : vector<14x14xf32>
    %c144_51 = arith.constant 144 : index
    %1341 = memref.load %arg3[%c144_51] : memref<288xf32, #tpu.memory_space<smem>>
    %1342 = vector.broadcast %1341 : f32 to vector<14x14xf32>
    %1343 = arith.mulf %1342, %1324 : vector<14x14xf32>
    %1344 = arith.addf %1307, %1343 : vector<14x14xf32>
    %c180_52 = arith.constant 180 : index
    %1345 = memref.load %arg3[%c180_52] : memref<288xf32, #tpu.memory_space<smem>>
    %1346 = vector.broadcast %1345 : f32 to vector<14x14xf32>
    %1347 = arith.mulf %1346, %1324 : vector<14x14xf32>
    %1348 = arith.addf %1309, %1347 : vector<14x14xf32>
    %c216_53 = arith.constant 216 : index
    %1349 = memref.load %arg3[%c216_53] : memref<288xf32, #tpu.memory_space<smem>>
    %1350 = vector.broadcast %1349 : f32 to vector<14x14xf32>
    %1351 = arith.mulf %1350, %1324 : vector<14x14xf32>
    %1352 = arith.addf %1311, %1351 : vector<14x14xf32>
    %c252_54 = arith.constant 252 : index
    %1353 = memref.load %arg3[%c252_54] : memref<288xf32, #tpu.memory_space<smem>>
    %1354 = vector.broadcast %1353 : f32 to vector<14x14xf32>
    %1355 = arith.mulf %1354, %1324 : vector<14x14xf32>
    %1356 = arith.addf %1313, %1355 : vector<14x14xf32>
    %1357 = vector.extract_strided_slice %1323 {offsets = [0, 1], sizes = [14, 14], strides = [1, 1]} : vector<14x16xf32> to vector<14x14xf32>
    %c1_55 = arith.constant 1 : index
    %1358 = memref.load %arg3[%c1_55] : memref<288xf32, #tpu.memory_space<smem>>
    %1359 = vector.broadcast %1358 : f32 to vector<14x14xf32>
    %1360 = arith.mulf %1359, %1357 : vector<14x14xf32>
    %1361 = arith.addf %1328, %1360 : vector<14x14xf32>
    %c37_56 = arith.constant 37 : index
    %1362 = memref.load %arg3[%c37_56] : memref<288xf32, #tpu.memory_space<smem>>
    %1363 = vector.broadcast %1362 : f32 to vector<14x14xf32>
    %1364 = arith.mulf %1363, %1357 : vector<14x14xf32>
    %1365 = arith.addf %1332, %1364 : vector<14x14xf32>
    %c73_57 = arith.constant 73 : index
    %1366 = memref.load %arg3[%c73_57] : memref<288xf32, #tpu.memory_space<smem>>
    %1367 = vector.broadcast %1366 : f32 to vector<14x14xf32>
    %1368 = arith.mulf %1367, %1357 : vector<14x14xf32>
    %1369 = arith.addf %1336, %1368 : vector<14x14xf32>
    %c109_58 = arith.constant 109 : index
    %1370 = memref.load %arg3[%c109_58] : memref<288xf32, #tpu.memory_space<smem>>
    %1371 = vector.broadcast %1370 : f32 to vector<14x14xf32>
    %1372 = arith.mulf %1371, %1357 : vector<14x14xf32>
    %1373 = arith.addf %1340, %1372 : vector<14x14xf32>
    %c145_59 = arith.constant 145 : index
    %1374 = memref.load %arg3[%c145_59] : memref<288xf32, #tpu.memory_space<smem>>
    %1375 = vector.broadcast %1374 : f32 to vector<14x14xf32>
    %1376 = arith.mulf %1375, %1357 : vector<14x14xf32>
    %1377 = arith.addf %1344, %1376 : vector<14x14xf32>
    %c181_60 = arith.constant 181 : index
    %1378 = memref.load %arg3[%c181_60] : memref<288xf32, #tpu.memory_space<smem>>
    %1379 = vector.broadcast %1378 : f32 to vector<14x14xf32>
    %1380 = arith.mulf %1379, %1357 : vector<14x14xf32>
    %1381 = arith.addf %1348, %1380 : vector<14x14xf32>
    %c217_61 = arith.constant 217 : index
    %1382 = memref.load %arg3[%c217_61] : memref<288xf32, #tpu.memory_space<smem>>
    %1383 = vector.broadcast %1382 : f32 to vector<14x14xf32>
    %1384 = arith.mulf %1383, %1357 : vector<14x14xf32>
    %1385 = arith.addf %1352, %1384 : vector<14x14xf32>
    %c253_62 = arith.constant 253 : index
    %1386 = memref.load %arg3[%c253_62] : memref<288xf32, #tpu.memory_space<smem>>
    %1387 = vector.broadcast %1386 : f32 to vector<14x14xf32>
    %1388 = arith.mulf %1387, %1357 : vector<14x14xf32>
    %1389 = arith.addf %1356, %1388 : vector<14x14xf32>
    %1390 = vector.extract_strided_slice %1323 {offsets = [0, 2], sizes = [14, 14], strides = [1, 1]} : vector<14x16xf32> to vector<14x14xf32>
    %c2_63 = arith.constant 2 : index
    %1391 = memref.load %arg3[%c2_63] : memref<288xf32, #tpu.memory_space<smem>>
    %1392 = vector.broadcast %1391 : f32 to vector<14x14xf32>
    %1393 = arith.mulf %1392, %1390 : vector<14x14xf32>
    %1394 = arith.addf %1361, %1393 : vector<14x14xf32>
    %c38_64 = arith.constant 38 : index
    %1395 = memref.load %arg3[%c38_64] : memref<288xf32, #tpu.memory_space<smem>>
    %1396 = vector.broadcast %1395 : f32 to vector<14x14xf32>
    %1397 = arith.mulf %1396, %1390 : vector<14x14xf32>
    %1398 = arith.addf %1365, %1397 : vector<14x14xf32>
    %c74_65 = arith.constant 74 : index
    %1399 = memref.load %arg3[%c74_65] : memref<288xf32, #tpu.memory_space<smem>>
    %1400 = vector.broadcast %1399 : f32 to vector<14x14xf32>
    %1401 = arith.mulf %1400, %1390 : vector<14x14xf32>
    %1402 = arith.addf %1369, %1401 : vector<14x14xf32>
    %c110_66 = arith.constant 110 : index
    %1403 = memref.load %arg3[%c110_66] : memref<288xf32, #tpu.memory_space<smem>>
    %1404 = vector.broadcast %1403 : f32 to vector<14x14xf32>
    %1405 = arith.mulf %1404, %1390 : vector<14x14xf32>
    %1406 = arith.addf %1373, %1405 : vector<14x14xf32>
    %c146_67 = arith.constant 146 : index
    %1407 = memref.load %arg3[%c146_67] : memref<288xf32, #tpu.memory_space<smem>>
    %1408 = vector.broadcast %1407 : f32 to vector<14x14xf32>
    %1409 = arith.mulf %1408, %1390 : vector<14x14xf32>
    %1410 = arith.addf %1377, %1409 : vector<14x14xf32>
    %c182_68 = arith.constant 182 : index
    %1411 = memref.load %arg3[%c182_68] : memref<288xf32, #tpu.memory_space<smem>>
    %1412 = vector.broadcast %1411 : f32 to vector<14x14xf32>
    %1413 = arith.mulf %1412, %1390 : vector<14x14xf32>
    %1414 = arith.addf %1381, %1413 : vector<14x14xf32>
    %c218_69 = arith.constant 218 : index
    %1415 = memref.load %arg3[%c218_69] : memref<288xf32, #tpu.memory_space<smem>>
    %1416 = vector.broadcast %1415 : f32 to vector<14x14xf32>
    %1417 = arith.mulf %1416, %1390 : vector<14x14xf32>
    %1418 = arith.addf %1385, %1417 : vector<14x14xf32>
    %c254_70 = arith.constant 254 : index
    %1419 = memref.load %arg3[%c254_70] : memref<288xf32, #tpu.memory_space<smem>>
    %1420 = vector.broadcast %1419 : f32 to vector<14x14xf32>
    %1421 = arith.mulf %1420, %1390 : vector<14x14xf32>
    %1422 = arith.addf %1389, %1421 : vector<14x14xf32>
    %1423 = vector.extract_strided_slice %1322 {offsets = [1, 0], sizes = [14, 16], strides = [1, 1]} : vector<16x16xf32> to vector<14x16xf32>
    %1424 = vector.extract_strided_slice %1423 {offsets = [0, 0], sizes = [14, 14], strides = [1, 1]} : vector<14x16xf32> to vector<14x14xf32>
    %c3_71 = arith.constant 3 : index
    %1425 = memref.load %arg3[%c3_71] : memref<288xf32, #tpu.memory_space<smem>>
    %1426 = vector.broadcast %1425 : f32 to vector<14x14xf32>
    %1427 = arith.mulf %1426, %1424 : vector<14x14xf32>
    %1428 = arith.addf %1394, %1427 : vector<14x14xf32>
    %c39_72 = arith.constant 39 : index
    %1429 = memref.load %arg3[%c39_72] : memref<288xf32, #tpu.memory_space<smem>>
    %1430 = vector.broadcast %1429 : f32 to vector<14x14xf32>
    %1431 = arith.mulf %1430, %1424 : vector<14x14xf32>
    %1432 = arith.addf %1398, %1431 : vector<14x14xf32>
    %c75_73 = arith.constant 75 : index
    %1433 = memref.load %arg3[%c75_73] : memref<288xf32, #tpu.memory_space<smem>>
    %1434 = vector.broadcast %1433 : f32 to vector<14x14xf32>
    %1435 = arith.mulf %1434, %1424 : vector<14x14xf32>
    %1436 = arith.addf %1402, %1435 : vector<14x14xf32>
    %c111_74 = arith.constant 111 : index
    %1437 = memref.load %arg3[%c111_74] : memref<288xf32, #tpu.memory_space<smem>>
    %1438 = vector.broadcast %1437 : f32 to vector<14x14xf32>
    %1439 = arith.mulf %1438, %1424 : vector<14x14xf32>
    %1440 = arith.addf %1406, %1439 : vector<14x14xf32>
    %c147_75 = arith.constant 147 : index
    %1441 = memref.load %arg3[%c147_75] : memref<288xf32, #tpu.memory_space<smem>>
    %1442 = vector.broadcast %1441 : f32 to vector<14x14xf32>
    %1443 = arith.mulf %1442, %1424 : vector<14x14xf32>
    %1444 = arith.addf %1410, %1443 : vector<14x14xf32>
    %c183_76 = arith.constant 183 : index
    %1445 = memref.load %arg3[%c183_76] : memref<288xf32, #tpu.memory_space<smem>>
    %1446 = vector.broadcast %1445 : f32 to vector<14x14xf32>
    %1447 = arith.mulf %1446, %1424 : vector<14x14xf32>
    %1448 = arith.addf %1414, %1447 : vector<14x14xf32>
    %c219_77 = arith.constant 219 : index
    %1449 = memref.load %arg3[%c219_77] : memref<288xf32, #tpu.memory_space<smem>>
    %1450 = vector.broadcast %1449 : f32 to vector<14x14xf32>
    %1451 = arith.mulf %1450, %1424 : vector<14x14xf32>
    %1452 = arith.addf %1418, %1451 : vector<14x14xf32>
    %c255_78 = arith.constant 255 : index
    %1453 = memref.load %arg3[%c255_78] : memref<288xf32, #tpu.memory_space<smem>>
    %1454 = vector.broadcast %1453 : f32 to vector<14x14xf32>
    %1455 = arith.mulf %1454, %1424 : vector<14x14xf32>
    %1456 = arith.addf %1422, %1455 : vector<14x14xf32>
    %1457 = vector.extract_strided_slice %1423 {offsets = [0, 1], sizes = [14, 14], strides = [1, 1]} : vector<14x16xf32> to vector<14x14xf32>
    %c4_79 = arith.constant 4 : index
    %1458 = memref.load %arg3[%c4_79] : memref<288xf32, #tpu.memory_space<smem>>
    %1459 = vector.broadcast %1458 : f32 to vector<14x14xf32>
    %1460 = arith.mulf %1459, %1457 : vector<14x14xf32>
    %1461 = arith.addf %1428, %1460 : vector<14x14xf32>
    %c40_80 = arith.constant 40 : index
    %1462 = memref.load %arg3[%c40_80] : memref<288xf32, #tpu.memory_space<smem>>
    %1463 = vector.broadcast %1462 : f32 to vector<14x14xf32>
    %1464 = arith.mulf %1463, %1457 : vector<14x14xf32>
    %1465 = arith.addf %1432, %1464 : vector<14x14xf32>
    %c76_81 = arith.constant 76 : index
    %1466 = memref.load %arg3[%c76_81] : memref<288xf32, #tpu.memory_space<smem>>
    %1467 = vector.broadcast %1466 : f32 to vector<14x14xf32>
    %1468 = arith.mulf %1467, %1457 : vector<14x14xf32>
    %1469 = arith.addf %1436, %1468 : vector<14x14xf32>
    %c112_82 = arith.constant 112 : index
    %1470 = memref.load %arg3[%c112_82] : memref<288xf32, #tpu.memory_space<smem>>
    %1471 = vector.broadcast %1470 : f32 to vector<14x14xf32>
    %1472 = arith.mulf %1471, %1457 : vector<14x14xf32>
    %1473 = arith.addf %1440, %1472 : vector<14x14xf32>
    %c148_83 = arith.constant 148 : index
    %1474 = memref.load %arg3[%c148_83] : memref<288xf32, #tpu.memory_space<smem>>
    %1475 = vector.broadcast %1474 : f32 to vector<14x14xf32>
    %1476 = arith.mulf %1475, %1457 : vector<14x14xf32>
    %1477 = arith.addf %1444, %1476 : vector<14x14xf32>
    %c184_84 = arith.constant 184 : index
    %1478 = memref.load %arg3[%c184_84] : memref<288xf32, #tpu.memory_space<smem>>
    %1479 = vector.broadcast %1478 : f32 to vector<14x14xf32>
    %1480 = arith.mulf %1479, %1457 : vector<14x14xf32>
    %1481 = arith.addf %1448, %1480 : vector<14x14xf32>
    %c220_85 = arith.constant 220 : index
    %1482 = memref.load %arg3[%c220_85] : memref<288xf32, #tpu.memory_space<smem>>
    %1483 = vector.broadcast %1482 : f32 to vector<14x14xf32>
    %1484 = arith.mulf %1483, %1457 : vector<14x14xf32>
    %1485 = arith.addf %1452, %1484 : vector<14x14xf32>
    %c256_86 = arith.constant 256 : index
    %1486 = memref.load %arg3[%c256_86] : memref<288xf32, #tpu.memory_space<smem>>
    %1487 = vector.broadcast %1486 : f32 to vector<14x14xf32>
    %1488 = arith.mulf %1487, %1457 : vector<14x14xf32>
    %1489 = arith.addf %1456, %1488 : vector<14x14xf32>
    %1490 = vector.extract_strided_slice %1423 {offsets = [0, 2], sizes = [14, 14], strides = [1, 1]} : vector<14x16xf32> to vector<14x14xf32>
    %c5_87 = arith.constant 5 : index
    %1491 = memref.load %arg3[%c5_87] : memref<288xf32, #tpu.memory_space<smem>>
    %1492 = vector.broadcast %1491 : f32 to vector<14x14xf32>
    %1493 = arith.mulf %1492, %1490 : vector<14x14xf32>
    %1494 = arith.addf %1461, %1493 : vector<14x14xf32>
    %c41_88 = arith.constant 41 : index
    %1495 = memref.load %arg3[%c41_88] : memref<288xf32, #tpu.memory_space<smem>>
    %1496 = vector.broadcast %1495 : f32 to vector<14x14xf32>
    %1497 = arith.mulf %1496, %1490 : vector<14x14xf32>
    %1498 = arith.addf %1465, %1497 : vector<14x14xf32>
    %c77_89 = arith.constant 77 : index
    %1499 = memref.load %arg3[%c77_89] : memref<288xf32, #tpu.memory_space<smem>>
    %1500 = vector.broadcast %1499 : f32 to vector<14x14xf32>
    %1501 = arith.mulf %1500, %1490 : vector<14x14xf32>
    %1502 = arith.addf %1469, %1501 : vector<14x14xf32>
    %c113_90 = arith.constant 113 : index
    %1503 = memref.load %arg3[%c113_90] : memref<288xf32, #tpu.memory_space<smem>>
    %1504 = vector.broadcast %1503 : f32 to vector<14x14xf32>
    %1505 = arith.mulf %1504, %1490 : vector<14x14xf32>
    %1506 = arith.addf %1473, %1505 : vector<14x14xf32>
    %c149_91 = arith.constant 149 : index
    %1507 = memref.load %arg3[%c149_91] : memref<288xf32, #tpu.memory_space<smem>>
    %1508 = vector.broadcast %1507 : f32 to vector<14x14xf32>
    %1509 = arith.mulf %1508, %1490 : vector<14x14xf32>
    %1510 = arith.addf %1477, %1509 : vector<14x14xf32>
    %c185_92 = arith.constant 185 : index
    %1511 = memref.load %arg3[%c185_92] : memref<288xf32, #tpu.memory_space<smem>>
    %1512 = vector.broadcast %1511 : f32 to vector<14x14xf32>
    %1513 = arith.mulf %1512, %1490 : vector<14x14xf32>
    %1514 = arith.addf %1481, %1513 : vector<14x14xf32>
    %c221_93 = arith.constant 221 : index
    %1515 = memref.load %arg3[%c221_93] : memref<288xf32, #tpu.memory_space<smem>>
    %1516 = vector.broadcast %1515 : f32 to vector<14x14xf32>
    %1517 = arith.mulf %1516, %1490 : vector<14x14xf32>
    %1518 = arith.addf %1485, %1517 : vector<14x14xf32>
    %c257_94 = arith.constant 257 : index
    %1519 = memref.load %arg3[%c257_94] : memref<288xf32, #tpu.memory_space<smem>>
    %1520 = vector.broadcast %1519 : f32 to vector<14x14xf32>
    %1521 = arith.mulf %1520, %1490 : vector<14x14xf32>
    %1522 = arith.addf %1489, %1521 : vector<14x14xf32>
    %1523 = vector.extract_strided_slice %1322 {offsets = [2, 0], sizes = [14, 16], strides = [1, 1]} : vector<16x16xf32> to vector<14x16xf32>
    %1524 = vector.extract_strided_slice %1523 {offsets = [0, 0], sizes = [14, 14], strides = [1, 1]} : vector<14x16xf32> to vector<14x14xf32>
    %c6_95 = arith.constant 6 : index
    %1525 = memref.load %arg3[%c6_95] : memref<288xf32, #tpu.memory_space<smem>>
    %1526 = vector.broadcast %1525 : f32 to vector<14x14xf32>
    %1527 = arith.mulf %1526, %1524 : vector<14x14xf32>
    %1528 = arith.addf %1494, %1527 : vector<14x14xf32>
    %c42_96 = arith.constant 42 : index
    %1529 = memref.load %arg3[%c42_96] : memref<288xf32, #tpu.memory_space<smem>>
    %1530 = vector.broadcast %1529 : f32 to vector<14x14xf32>
    %1531 = arith.mulf %1530, %1524 : vector<14x14xf32>
    %1532 = arith.addf %1498, %1531 : vector<14x14xf32>
    %c78_97 = arith.constant 78 : index
    %1533 = memref.load %arg3[%c78_97] : memref<288xf32, #tpu.memory_space<smem>>
    %1534 = vector.broadcast %1533 : f32 to vector<14x14xf32>
    %1535 = arith.mulf %1534, %1524 : vector<14x14xf32>
    %1536 = arith.addf %1502, %1535 : vector<14x14xf32>
    %c114_98 = arith.constant 114 : index
    %1537 = memref.load %arg3[%c114_98] : memref<288xf32, #tpu.memory_space<smem>>
    %1538 = vector.broadcast %1537 : f32 to vector<14x14xf32>
    %1539 = arith.mulf %1538, %1524 : vector<14x14xf32>
    %1540 = arith.addf %1506, %1539 : vector<14x14xf32>
    %c150_99 = arith.constant 150 : index
    %1541 = memref.load %arg3[%c150_99] : memref<288xf32, #tpu.memory_space<smem>>
    %1542 = vector.broadcast %1541 : f32 to vector<14x14xf32>
    %1543 = arith.mulf %1542, %1524 : vector<14x14xf32>
    %1544 = arith.addf %1510, %1543 : vector<14x14xf32>
    %c186_100 = arith.constant 186 : index
    %1545 = memref.load %arg3[%c186_100] : memref<288xf32, #tpu.memory_space<smem>>
    %1546 = vector.broadcast %1545 : f32 to vector<14x14xf32>
    %1547 = arith.mulf %1546, %1524 : vector<14x14xf32>
    %1548 = arith.addf %1514, %1547 : vector<14x14xf32>
    %c222_101 = arith.constant 222 : index
    %1549 = memref.load %arg3[%c222_101] : memref<288xf32, #tpu.memory_space<smem>>
    %1550 = vector.broadcast %1549 : f32 to vector<14x14xf32>
    %1551 = arith.mulf %1550, %1524 : vector<14x14xf32>
    %1552 = arith.addf %1518, %1551 : vector<14x14xf32>
    %c258_102 = arith.constant 258 : index
    %1553 = memref.load %arg3[%c258_102] : memref<288xf32, #tpu.memory_space<smem>>
    %1554 = vector.broadcast %1553 : f32 to vector<14x14xf32>
    %1555 = arith.mulf %1554, %1524 : vector<14x14xf32>
    %1556 = arith.addf %1522, %1555 : vector<14x14xf32>
    %1557 = vector.extract_strided_slice %1523 {offsets = [0, 1], sizes = [14, 14], strides = [1, 1]} : vector<14x16xf32> to vector<14x14xf32>
    %c7_103 = arith.constant 7 : index
    %1558 = memref.load %arg3[%c7_103] : memref<288xf32, #tpu.memory_space<smem>>
    %1559 = vector.broadcast %1558 : f32 to vector<14x14xf32>
    %1560 = arith.mulf %1559, %1557 : vector<14x14xf32>
    %1561 = arith.addf %1528, %1560 : vector<14x14xf32>
    %c43_104 = arith.constant 43 : index
    %1562 = memref.load %arg3[%c43_104] : memref<288xf32, #tpu.memory_space<smem>>
    %1563 = vector.broadcast %1562 : f32 to vector<14x14xf32>
    %1564 = arith.mulf %1563, %1557 : vector<14x14xf32>
    %1565 = arith.addf %1532, %1564 : vector<14x14xf32>
    %c79_105 = arith.constant 79 : index
    %1566 = memref.load %arg3[%c79_105] : memref<288xf32, #tpu.memory_space<smem>>
    %1567 = vector.broadcast %1566 : f32 to vector<14x14xf32>
    %1568 = arith.mulf %1567, %1557 : vector<14x14xf32>
    %1569 = arith.addf %1536, %1568 : vector<14x14xf32>
    %c115_106 = arith.constant 115 : index
    %1570 = memref.load %arg3[%c115_106] : memref<288xf32, #tpu.memory_space<smem>>
    %1571 = vector.broadcast %1570 : f32 to vector<14x14xf32>
    %1572 = arith.mulf %1571, %1557 : vector<14x14xf32>
    %1573 = arith.addf %1540, %1572 : vector<14x14xf32>
    %c151_107 = arith.constant 151 : index
    %1574 = memref.load %arg3[%c151_107] : memref<288xf32, #tpu.memory_space<smem>>
    %1575 = vector.broadcast %1574 : f32 to vector<14x14xf32>
    %1576 = arith.mulf %1575, %1557 : vector<14x14xf32>
    %1577 = arith.addf %1544, %1576 : vector<14x14xf32>
    %c187_108 = arith.constant 187 : index
    %1578 = memref.load %arg3[%c187_108] : memref<288xf32, #tpu.memory_space<smem>>
    %1579 = vector.broadcast %1578 : f32 to vector<14x14xf32>
    %1580 = arith.mulf %1579, %1557 : vector<14x14xf32>
    %1581 = arith.addf %1548, %1580 : vector<14x14xf32>
    %c223_109 = arith.constant 223 : index
    %1582 = memref.load %arg3[%c223_109] : memref<288xf32, #tpu.memory_space<smem>>
    %1583 = vector.broadcast %1582 : f32 to vector<14x14xf32>
    %1584 = arith.mulf %1583, %1557 : vector<14x14xf32>
    %1585 = arith.addf %1552, %1584 : vector<14x14xf32>
    %c259_110 = arith.constant 259 : index
    %1586 = memref.load %arg3[%c259_110] : memref<288xf32, #tpu.memory_space<smem>>
    %1587 = vector.broadcast %1586 : f32 to vector<14x14xf32>
    %1588 = arith.mulf %1587, %1557 : vector<14x14xf32>
    %1589 = arith.addf %1556, %1588 : vector<14x14xf32>
    %1590 = vector.extract_strided_slice %1523 {offsets = [0, 2], sizes = [14, 14], strides = [1, 1]} : vector<14x16xf32> to vector<14x14xf32>
    %c8_111 = arith.constant 8 : index
    %1591 = memref.load %arg3[%c8_111] : memref<288xf32, #tpu.memory_space<smem>>
    %1592 = vector.broadcast %1591 : f32 to vector<14x14xf32>
    %1593 = arith.mulf %1592, %1590 : vector<14x14xf32>
    %1594 = arith.addf %1561, %1593 : vector<14x14xf32>
    %c44_112 = arith.constant 44 : index
    %1595 = memref.load %arg3[%c44_112] : memref<288xf32, #tpu.memory_space<smem>>
    %1596 = vector.broadcast %1595 : f32 to vector<14x14xf32>
    %1597 = arith.mulf %1596, %1590 : vector<14x14xf32>
    %1598 = arith.addf %1565, %1597 : vector<14x14xf32>
    %c80_113 = arith.constant 80 : index
    %1599 = memref.load %arg3[%c80_113] : memref<288xf32, #tpu.memory_space<smem>>
    %1600 = vector.broadcast %1599 : f32 to vector<14x14xf32>
    %1601 = arith.mulf %1600, %1590 : vector<14x14xf32>
    %1602 = arith.addf %1569, %1601 : vector<14x14xf32>
    %c116_114 = arith.constant 116 : index
    %1603 = memref.load %arg3[%c116_114] : memref<288xf32, #tpu.memory_space<smem>>
    %1604 = vector.broadcast %1603 : f32 to vector<14x14xf32>
    %1605 = arith.mulf %1604, %1590 : vector<14x14xf32>
    %1606 = arith.addf %1573, %1605 : vector<14x14xf32>
    %c152_115 = arith.constant 152 : index
    %1607 = memref.load %arg3[%c152_115] : memref<288xf32, #tpu.memory_space<smem>>
    %1608 = vector.broadcast %1607 : f32 to vector<14x14xf32>
    %1609 = arith.mulf %1608, %1590 : vector<14x14xf32>
    %1610 = arith.addf %1577, %1609 : vector<14x14xf32>
    %c188_116 = arith.constant 188 : index
    %1611 = memref.load %arg3[%c188_116] : memref<288xf32, #tpu.memory_space<smem>>
    %1612 = vector.broadcast %1611 : f32 to vector<14x14xf32>
    %1613 = arith.mulf %1612, %1590 : vector<14x14xf32>
    %1614 = arith.addf %1581, %1613 : vector<14x14xf32>
    %c224_117 = arith.constant 224 : index
    %1615 = memref.load %arg3[%c224_117] : memref<288xf32, #tpu.memory_space<smem>>
    %1616 = vector.broadcast %1615 : f32 to vector<14x14xf32>
    %1617 = arith.mulf %1616, %1590 : vector<14x14xf32>
    %1618 = arith.addf %1585, %1617 : vector<14x14xf32>
    %c260_118 = arith.constant 260 : index
    %1619 = memref.load %arg3[%c260_118] : memref<288xf32, #tpu.memory_space<smem>>
    %1620 = vector.broadcast %1619 : f32 to vector<14x14xf32>
    %1621 = arith.mulf %1620, %1590 : vector<14x14xf32>
    %1622 = arith.addf %1589, %1621 : vector<14x14xf32>
    %1623 = vector.extract_strided_slice %1288 {offsets = [1, 0, 0], sizes = [1, 16, 16], strides = [1, 1, 1]} : vector<4x16x16xf32> to vector<1x16x16xf32>
    %1624 = vector.shape_cast %1623 : vector<1x16x16xf32> to vector<16x16xf32>
    %1625 = arith.mulf %1624, %1297 : vector<16x16xf32>
    %c1_119 = arith.constant 1 : index
    %1626 = memref.load %arg1[%c1_119] : memref<4xf32, #tpu.memory_space<smem>>
    %1627 = vector.broadcast %1626 : f32 to vector<16x16xf32>
    %1628 = arith.mulf %1625, %1627 : vector<16x16xf32>
    %c1_120 = arith.constant 1 : index
    %1629 = memref.load %arg2[%c1_120] : memref<4xf32, #tpu.memory_space<smem>>
    %1630 = vector.broadcast %1629 : f32 to vector<16x16xf32>
    %1631 = arith.addf %1628, %1630 : vector<16x16xf32>
    %1632 = vector.extract_strided_slice %1631 {offsets = [0, 0], sizes = [14, 16], strides = [1, 1]} : vector<16x16xf32> to vector<14x16xf32>
    %1633 = vector.extract_strided_slice %1632 {offsets = [0, 0], sizes = [14, 14], strides = [1, 1]} : vector<14x16xf32> to vector<14x14xf32>
    %c9_121 = arith.constant 9 : index
    %1634 = memref.load %arg3[%c9_121] : memref<288xf32, #tpu.memory_space<smem>>
    %1635 = vector.broadcast %1634 : f32 to vector<14x14xf32>
    %1636 = arith.mulf %1635, %1633 : vector<14x14xf32>
    %1637 = arith.addf %1594, %1636 : vector<14x14xf32>
    %c45_122 = arith.constant 45 : index
    %1638 = memref.load %arg3[%c45_122] : memref<288xf32, #tpu.memory_space<smem>>
    %1639 = vector.broadcast %1638 : f32 to vector<14x14xf32>
    %1640 = arith.mulf %1639, %1633 : vector<14x14xf32>
    %1641 = arith.addf %1598, %1640 : vector<14x14xf32>
    %c81_123 = arith.constant 81 : index
    %1642 = memref.load %arg3[%c81_123] : memref<288xf32, #tpu.memory_space<smem>>
    %1643 = vector.broadcast %1642 : f32 to vector<14x14xf32>
    %1644 = arith.mulf %1643, %1633 : vector<14x14xf32>
    %1645 = arith.addf %1602, %1644 : vector<14x14xf32>
    %c117_124 = arith.constant 117 : index
    %1646 = memref.load %arg3[%c117_124] : memref<288xf32, #tpu.memory_space<smem>>
    %1647 = vector.broadcast %1646 : f32 to vector<14x14xf32>
    %1648 = arith.mulf %1647, %1633 : vector<14x14xf32>
    %1649 = arith.addf %1606, %1648 : vector<14x14xf32>
    %c153_125 = arith.constant 153 : index
    %1650 = memref.load %arg3[%c153_125] : memref<288xf32, #tpu.memory_space<smem>>
    %1651 = vector.broadcast %1650 : f32 to vector<14x14xf32>
    %1652 = arith.mulf %1651, %1633 : vector<14x14xf32>
    %1653 = arith.addf %1610, %1652 : vector<14x14xf32>
    %c189_126 = arith.constant 189 : index
    %1654 = memref.load %arg3[%c189_126] : memref<288xf32, #tpu.memory_space<smem>>
    %1655 = vector.broadcast %1654 : f32 to vector<14x14xf32>
    %1656 = arith.mulf %1655, %1633 : vector<14x14xf32>
    %1657 = arith.addf %1614, %1656 : vector<14x14xf32>
    %c225_127 = arith.constant 225 : index
    %1658 = memref.load %arg3[%c225_127] : memref<288xf32, #tpu.memory_space<smem>>
    %1659 = vector.broadcast %1658 : f32 to vector<14x14xf32>
    %1660 = arith.mulf %1659, %1633 : vector<14x14xf32>
    %1661 = arith.addf %1618, %1660 : vector<14x14xf32>
    %c261_128 = arith.constant 261 : index
    %1662 = memref.load %arg3[%c261_128] : memref<288xf32, #tpu.memory_space<smem>>
    %1663 = vector.broadcast %1662 : f32 to vector<14x14xf32>
    %1664 = arith.mulf %1663, %1633 : vector<14x14xf32>
    %1665 = arith.addf %1622, %1664 : vector<14x14xf32>
    %1666 = vector.extract_strided_slice %1632 {offsets = [0, 1], sizes = [14, 14], strides = [1, 1]} : vector<14x16xf32> to vector<14x14xf32>
    %c10_129 = arith.constant 10 : index
    %1667 = memref.load %arg3[%c10_129] : memref<288xf32, #tpu.memory_space<smem>>
    %1668 = vector.broadcast %1667 : f32 to vector<14x14xf32>
    %1669 = arith.mulf %1668, %1666 : vector<14x14xf32>
    %1670 = arith.addf %1637, %1669 : vector<14x14xf32>
    %c46_130 = arith.constant 46 : index
    %1671 = memref.load %arg3[%c46_130] : memref<288xf32, #tpu.memory_space<smem>>
    %1672 = vector.broadcast %1671 : f32 to vector<14x14xf32>
    %1673 = arith.mulf %1672, %1666 : vector<14x14xf32>
    %1674 = arith.addf %1641, %1673 : vector<14x14xf32>
    %c82_131 = arith.constant 82 : index
    %1675 = memref.load %arg3[%c82_131] : memref<288xf32, #tpu.memory_space<smem>>
    %1676 = vector.broadcast %1675 : f32 to vector<14x14xf32>
    %1677 = arith.mulf %1676, %1666 : vector<14x14xf32>
    %1678 = arith.addf %1645, %1677 : vector<14x14xf32>
    %c118_132 = arith.constant 118 : index
    %1679 = memref.load %arg3[%c118_132] : memref<288xf32, #tpu.memory_space<smem>>
    %1680 = vector.broadcast %1679 : f32 to vector<14x14xf32>
    %1681 = arith.mulf %1680, %1666 : vector<14x14xf32>
    %1682 = arith.addf %1649, %1681 : vector<14x14xf32>
    %c154_133 = arith.constant 154 : index
    %1683 = memref.load %arg3[%c154_133] : memref<288xf32, #tpu.memory_space<smem>>
    %1684 = vector.broadcast %1683 : f32 to vector<14x14xf32>
    %1685 = arith.mulf %1684, %1666 : vector<14x14xf32>
    %1686 = arith.addf %1653, %1685 : vector<14x14xf32>
    %c190_134 = arith.constant 190 : index
    %1687 = memref.load %arg3[%c190_134] : memref<288xf32, #tpu.memory_space<smem>>
    %1688 = vector.broadcast %1687 : f32 to vector<14x14xf32>
    %1689 = arith.mulf %1688, %1666 : vector<14x14xf32>
    %1690 = arith.addf %1657, %1689 : vector<14x14xf32>
    %c226_135 = arith.constant 226 : index
    %1691 = memref.load %arg3[%c226_135] : memref<288xf32, #tpu.memory_space<smem>>
    %1692 = vector.broadcast %1691 : f32 to vector<14x14xf32>
    %1693 = arith.mulf %1692, %1666 : vector<14x14xf32>
    %1694 = arith.addf %1661, %1693 : vector<14x14xf32>
    %c262_136 = arith.constant 262 : index
    %1695 = memref.load %arg3[%c262_136] : memref<288xf32, #tpu.memory_space<smem>>
    %1696 = vector.broadcast %1695 : f32 to vector<14x14xf32>
    %1697 = arith.mulf %1696, %1666 : vector<14x14xf32>
    %1698 = arith.addf %1665, %1697 : vector<14x14xf32>
    %1699 = vector.extract_strided_slice %1632 {offsets = [0, 2], sizes = [14, 14], strides = [1, 1]} : vector<14x16xf32> to vector<14x14xf32>
    %c11_137 = arith.constant 11 : index
    %1700 = memref.load %arg3[%c11_137] : memref<288xf32, #tpu.memory_space<smem>>
    %1701 = vector.broadcast %1700 : f32 to vector<14x14xf32>
    %1702 = arith.mulf %1701, %1699 : vector<14x14xf32>
    %1703 = arith.addf %1670, %1702 : vector<14x14xf32>
    %c47_138 = arith.constant 47 : index
    %1704 = memref.load %arg3[%c47_138] : memref<288xf32, #tpu.memory_space<smem>>
    %1705 = vector.broadcast %1704 : f32 to vector<14x14xf32>
    %1706 = arith.mulf %1705, %1699 : vector<14x14xf32>
    %1707 = arith.addf %1674, %1706 : vector<14x14xf32>
    %c83_139 = arith.constant 83 : index
    %1708 = memref.load %arg3[%c83_139] : memref<288xf32, #tpu.memory_space<smem>>
    %1709 = vector.broadcast %1708 : f32 to vector<14x14xf32>
    %1710 = arith.mulf %1709, %1699 : vector<14x14xf32>
    %1711 = arith.addf %1678, %1710 : vector<14x14xf32>
    %c119_140 = arith.constant 119 : index
    %1712 = memref.load %arg3[%c119_140] : memref<288xf32, #tpu.memory_space<smem>>
    %1713 = vector.broadcast %1712 : f32 to vector<14x14xf32>
    %1714 = arith.mulf %1713, %1699 : vector<14x14xf32>
    %1715 = arith.addf %1682, %1714 : vector<14x14xf32>
    %c155_141 = arith.constant 155 : index
    %1716 = memref.load %arg3[%c155_141] : memref<288xf32, #tpu.memory_space<smem>>
    %1717 = vector.broadcast %1716 : f32 to vector<14x14xf32>
    %1718 = arith.mulf %1717, %1699 : vector<14x14xf32>
    %1719 = arith.addf %1686, %1718 : vector<14x14xf32>
    %c191_142 = arith.constant 191 : index
    %1720 = memref.load %arg3[%c191_142] : memref<288xf32, #tpu.memory_space<smem>>
    %1721 = vector.broadcast %1720 : f32 to vector<14x14xf32>
    %1722 = arith.mulf %1721, %1699 : vector<14x14xf32>
    %1723 = arith.addf %1690, %1722 : vector<14x14xf32>
    %c227_143 = arith.constant 227 : index
    %1724 = memref.load %arg3[%c227_143] : memref<288xf32, #tpu.memory_space<smem>>
    %1725 = vector.broadcast %1724 : f32 to vector<14x14xf32>
    %1726 = arith.mulf %1725, %1699 : vector<14x14xf32>
    %1727 = arith.addf %1694, %1726 : vector<14x14xf32>
    %c263_144 = arith.constant 263 : index
    %1728 = memref.load %arg3[%c263_144] : memref<288xf32, #tpu.memory_space<smem>>
    %1729 = vector.broadcast %1728 : f32 to vector<14x14xf32>
    %1730 = arith.mulf %1729, %1699 : vector<14x14xf32>
    %1731 = arith.addf %1698, %1730 : vector<14x14xf32>
    %1732 = vector.extract_strided_slice %1631 {offsets = [1, 0], sizes = [14, 16], strides = [1, 1]} : vector<16x16xf32> to vector<14x16xf32>
    %1733 = vector.extract_strided_slice %1732 {offsets = [0, 0], sizes = [14, 14], strides = [1, 1]} : vector<14x16xf32> to vector<14x14xf32>
    %c12_145 = arith.constant 12 : index
    %1734 = memref.load %arg3[%c12_145] : memref<288xf32, #tpu.memory_space<smem>>
    %1735 = vector.broadcast %1734 : f32 to vector<14x14xf32>
    %1736 = arith.mulf %1735, %1733 : vector<14x14xf32>
    %1737 = arith.addf %1703, %1736 : vector<14x14xf32>
    %c48_146 = arith.constant 48 : index
    %1738 = memref.load %arg3[%c48_146] : memref<288xf32, #tpu.memory_space<smem>>
    %1739 = vector.broadcast %1738 : f32 to vector<14x14xf32>
    %1740 = arith.mulf %1739, %1733 : vector<14x14xf32>
    %1741 = arith.addf %1707, %1740 : vector<14x14xf32>
    %c84_147 = arith.constant 84 : index
    %1742 = memref.load %arg3[%c84_147] : memref<288xf32, #tpu.memory_space<smem>>
    %1743 = vector.broadcast %1742 : f32 to vector<14x14xf32>
    %1744 = arith.mulf %1743, %1733 : vector<14x14xf32>
    %1745 = arith.addf %1711, %1744 : vector<14x14xf32>
    %c120_148 = arith.constant 120 : index
    %1746 = memref.load %arg3[%c120_148] : memref<288xf32, #tpu.memory_space<smem>>
    %1747 = vector.broadcast %1746 : f32 to vector<14x14xf32>
    %1748 = arith.mulf %1747, %1733 : vector<14x14xf32>
    %1749 = arith.addf %1715, %1748 : vector<14x14xf32>
    %c156_149 = arith.constant 156 : index
    %1750 = memref.load %arg3[%c156_149] : memref<288xf32, #tpu.memory_space<smem>>
    %1751 = vector.broadcast %1750 : f32 to vector<14x14xf32>
    %1752 = arith.mulf %1751, %1733 : vector<14x14xf32>
    %1753 = arith.addf %1719, %1752 : vector<14x14xf32>
    %c192_150 = arith.constant 192 : index
    %1754 = memref.load %arg3[%c192_150] : memref<288xf32, #tpu.memory_space<smem>>
    %1755 = vector.broadcast %1754 : f32 to vector<14x14xf32>
    %1756 = arith.mulf %1755, %1733 : vector<14x14xf32>
    %1757 = arith.addf %1723, %1756 : vector<14x14xf32>
    %c228_151 = arith.constant 228 : index
    %1758 = memref.load %arg3[%c228_151] : memref<288xf32, #tpu.memory_space<smem>>
    %1759 = vector.broadcast %1758 : f32 to vector<14x14xf32>
    %1760 = arith.mulf %1759, %1733 : vector<14x14xf32>
    %1761 = arith.addf %1727, %1760 : vector<14x14xf32>
    %c264_152 = arith.constant 264 : index
    %1762 = memref.load %arg3[%c264_152] : memref<288xf32, #tpu.memory_space<smem>>
    %1763 = vector.broadcast %1762 : f32 to vector<14x14xf32>
    %1764 = arith.mulf %1763, %1733 : vector<14x14xf32>
    %1765 = arith.addf %1731, %1764 : vector<14x14xf32>
    %1766 = vector.extract_strided_slice %1732 {offsets = [0, 1], sizes = [14, 14], strides = [1, 1]} : vector<14x16xf32> to vector<14x14xf32>
    %c13_153 = arith.constant 13 : index
    %1767 = memref.load %arg3[%c13_153] : memref<288xf32, #tpu.memory_space<smem>>
    %1768 = vector.broadcast %1767 : f32 to vector<14x14xf32>
    %1769 = arith.mulf %1768, %1766 : vector<14x14xf32>
    %1770 = arith.addf %1737, %1769 : vector<14x14xf32>
    %c49_154 = arith.constant 49 : index
    %1771 = memref.load %arg3[%c49_154] : memref<288xf32, #tpu.memory_space<smem>>
    %1772 = vector.broadcast %1771 : f32 to vector<14x14xf32>
    %1773 = arith.mulf %1772, %1766 : vector<14x14xf32>
    %1774 = arith.addf %1741, %1773 : vector<14x14xf32>
    %c85_155 = arith.constant 85 : index
    %1775 = memref.load %arg3[%c85_155] : memref<288xf32, #tpu.memory_space<smem>>
    %1776 = vector.broadcast %1775 : f32 to vector<14x14xf32>
    %1777 = arith.mulf %1776, %1766 : vector<14x14xf32>
    %1778 = arith.addf %1745, %1777 : vector<14x14xf32>
    %c121_156 = arith.constant 121 : index
    %1779 = memref.load %arg3[%c121_156] : memref<288xf32, #tpu.memory_space<smem>>
    %1780 = vector.broadcast %1779 : f32 to vector<14x14xf32>
    %1781 = arith.mulf %1780, %1766 : vector<14x14xf32>
    %1782 = arith.addf %1749, %1781 : vector<14x14xf32>
    %c157_157 = arith.constant 157 : index
    %1783 = memref.load %arg3[%c157_157] : memref<288xf32, #tpu.memory_space<smem>>
    %1784 = vector.broadcast %1783 : f32 to vector<14x14xf32>
    %1785 = arith.mulf %1784, %1766 : vector<14x14xf32>
    %1786 = arith.addf %1753, %1785 : vector<14x14xf32>
    %c193_158 = arith.constant 193 : index
    %1787 = memref.load %arg3[%c193_158] : memref<288xf32, #tpu.memory_space<smem>>
    %1788 = vector.broadcast %1787 : f32 to vector<14x14xf32>
    %1789 = arith.mulf %1788, %1766 : vector<14x14xf32>
    %1790 = arith.addf %1757, %1789 : vector<14x14xf32>
    %c229_159 = arith.constant 229 : index
    %1791 = memref.load %arg3[%c229_159] : memref<288xf32, #tpu.memory_space<smem>>
    %1792 = vector.broadcast %1791 : f32 to vector<14x14xf32>
    %1793 = arith.mulf %1792, %1766 : vector<14x14xf32>
    %1794 = arith.addf %1761, %1793 : vector<14x14xf32>
    %c265_160 = arith.constant 265 : index
    %1795 = memref.load %arg3[%c265_160] : memref<288xf32, #tpu.memory_space<smem>>
    %1796 = vector.broadcast %1795 : f32 to vector<14x14xf32>
    %1797 = arith.mulf %1796, %1766 : vector<14x14xf32>
    %1798 = arith.addf %1765, %1797 : vector<14x14xf32>
    %1799 = vector.extract_strided_slice %1732 {offsets = [0, 2], sizes = [14, 14], strides = [1, 1]} : vector<14x16xf32> to vector<14x14xf32>
    %c14_161 = arith.constant 14 : index
    %1800 = memref.load %arg3[%c14_161] : memref<288xf32, #tpu.memory_space<smem>>
    %1801 = vector.broadcast %1800 : f32 to vector<14x14xf32>
    %1802 = arith.mulf %1801, %1799 : vector<14x14xf32>
    %1803 = arith.addf %1770, %1802 : vector<14x14xf32>
    %c50_162 = arith.constant 50 : index
    %1804 = memref.load %arg3[%c50_162] : memref<288xf32, #tpu.memory_space<smem>>
    %1805 = vector.broadcast %1804 : f32 to vector<14x14xf32>
    %1806 = arith.mulf %1805, %1799 : vector<14x14xf32>
    %1807 = arith.addf %1774, %1806 : vector<14x14xf32>
    %c86_163 = arith.constant 86 : index
    %1808 = memref.load %arg3[%c86_163] : memref<288xf32, #tpu.memory_space<smem>>
    %1809 = vector.broadcast %1808 : f32 to vector<14x14xf32>
    %1810 = arith.mulf %1809, %1799 : vector<14x14xf32>
    %1811 = arith.addf %1778, %1810 : vector<14x14xf32>
    %c122_164 = arith.constant 122 : index
    %1812 = memref.load %arg3[%c122_164] : memref<288xf32, #tpu.memory_space<smem>>
    %1813 = vector.broadcast %1812 : f32 to vector<14x14xf32>
    %1814 = arith.mulf %1813, %1799 : vector<14x14xf32>
    %1815 = arith.addf %1782, %1814 : vector<14x14xf32>
    %c158_165 = arith.constant 158 : index
    %1816 = memref.load %arg3[%c158_165] : memref<288xf32, #tpu.memory_space<smem>>
    %1817 = vector.broadcast %1816 : f32 to vector<14x14xf32>
    %1818 = arith.mulf %1817, %1799 : vector<14x14xf32>
    %1819 = arith.addf %1786, %1818 : vector<14x14xf32>
    %c194_166 = arith.constant 194 : index
    %1820 = memref.load %arg3[%c194_166] : memref<288xf32, #tpu.memory_space<smem>>
    %1821 = vector.broadcast %1820 : f32 to vector<14x14xf32>
    %1822 = arith.mulf %1821, %1799 : vector<14x14xf32>
    %1823 = arith.addf %1790, %1822 : vector<14x14xf32>
    %c230_167 = arith.constant 230 : index
    %1824 = memref.load %arg3[%c230_167] : memref<288xf32, #tpu.memory_space<smem>>
    %1825 = vector.broadcast %1824 : f32 to vector<14x14xf32>
    %1826 = arith.mulf %1825, %1799 : vector<14x14xf32>
    %1827 = arith.addf %1794, %1826 : vector<14x14xf32>
    %c266_168 = arith.constant 266 : index
    %1828 = memref.load %arg3[%c266_168] : memref<288xf32, #tpu.memory_space<smem>>
    %1829 = vector.broadcast %1828 : f32 to vector<14x14xf32>
    %1830 = arith.mulf %1829, %1799 : vector<14x14xf32>
    %1831 = arith.addf %1798, %1830 : vector<14x14xf32>
    %1832 = vector.extract_strided_slice %1631 {offsets = [2, 0], sizes = [14, 16], strides = [1, 1]} : vector<16x16xf32> to vector<14x16xf32>
    %1833 = vector.extract_strided_slice %1832 {offsets = [0, 0], sizes = [14, 14], strides = [1, 1]} : vector<14x16xf32> to vector<14x14xf32>
    %c15_169 = arith.constant 15 : index
    %1834 = memref.load %arg3[%c15_169] : memref<288xf32, #tpu.memory_space<smem>>
    %1835 = vector.broadcast %1834 : f32 to vector<14x14xf32>
    %1836 = arith.mulf %1835, %1833 : vector<14x14xf32>
    %1837 = arith.addf %1803, %1836 : vector<14x14xf32>
    %c51_170 = arith.constant 51 : index
    %1838 = memref.load %arg3[%c51_170] : memref<288xf32, #tpu.memory_space<smem>>
    %1839 = vector.broadcast %1838 : f32 to vector<14x14xf32>
    %1840 = arith.mulf %1839, %1833 : vector<14x14xf32>
    %1841 = arith.addf %1807, %1840 : vector<14x14xf32>
    %c87_171 = arith.constant 87 : index
    %1842 = memref.load %arg3[%c87_171] : memref<288xf32, #tpu.memory_space<smem>>
    %1843 = vector.broadcast %1842 : f32 to vector<14x14xf32>
    %1844 = arith.mulf %1843, %1833 : vector<14x14xf32>
    %1845 = arith.addf %1811, %1844 : vector<14x14xf32>
    %c123_172 = arith.constant 123 : index
    %1846 = memref.load %arg3[%c123_172] : memref<288xf32, #tpu.memory_space<smem>>
    %1847 = vector.broadcast %1846 : f32 to vector<14x14xf32>
    %1848 = arith.mulf %1847, %1833 : vector<14x14xf32>
    %1849 = arith.addf %1815, %1848 : vector<14x14xf32>
    %c159_173 = arith.constant 159 : index
    %1850 = memref.load %arg3[%c159_173] : memref<288xf32, #tpu.memory_space<smem>>
    %1851 = vector.broadcast %1850 : f32 to vector<14x14xf32>
    %1852 = arith.mulf %1851, %1833 : vector<14x14xf32>
    %1853 = arith.addf %1819, %1852 : vector<14x14xf32>
    %c195_174 = arith.constant 195 : index
    %1854 = memref.load %arg3[%c195_174] : memref<288xf32, #tpu.memory_space<smem>>
    %1855 = vector.broadcast %1854 : f32 to vector<14x14xf32>
    %1856 = arith.mulf %1855, %1833 : vector<14x14xf32>
    %1857 = arith.addf %1823, %1856 : vector<14x14xf32>
    %c231_175 = arith.constant 231 : index
    %1858 = memref.load %arg3[%c231_175] : memref<288xf32, #tpu.memory_space<smem>>
    %1859 = vector.broadcast %1858 : f32 to vector<14x14xf32>
    %1860 = arith.mulf %1859, %1833 : vector<14x14xf32>
    %1861 = arith.addf %1827, %1860 : vector<14x14xf32>
    %c267_176 = arith.constant 267 : index
    %1862 = memref.load %arg3[%c267_176] : memref<288xf32, #tpu.memory_space<smem>>
    %1863 = vector.broadcast %1862 : f32 to vector<14x14xf32>
    %1864 = arith.mulf %1863, %1833 : vector<14x14xf32>
    %1865 = arith.addf %1831, %1864 : vector<14x14xf32>
    %1866 = vector.extract_strided_slice %1832 {offsets = [0, 1], sizes = [14, 14], strides = [1, 1]} : vector<14x16xf32> to vector<14x14xf32>
    %c16_177 = arith.constant 16 : index
    %1867 = memref.load %arg3[%c16_177] : memref<288xf32, #tpu.memory_space<smem>>
    %1868 = vector.broadcast %1867 : f32 to vector<14x14xf32>
    %1869 = arith.mulf %1868, %1866 : vector<14x14xf32>
    %1870 = arith.addf %1837, %1869 : vector<14x14xf32>
    %c52_178 = arith.constant 52 : index
    %1871 = memref.load %arg3[%c52_178] : memref<288xf32, #tpu.memory_space<smem>>
    %1872 = vector.broadcast %1871 : f32 to vector<14x14xf32>
    %1873 = arith.mulf %1872, %1866 : vector<14x14xf32>
    %1874 = arith.addf %1841, %1873 : vector<14x14xf32>
    %c88_179 = arith.constant 88 : index
    %1875 = memref.load %arg3[%c88_179] : memref<288xf32, #tpu.memory_space<smem>>
    %1876 = vector.broadcast %1875 : f32 to vector<14x14xf32>
    %1877 = arith.mulf %1876, %1866 : vector<14x14xf32>
    %1878 = arith.addf %1845, %1877 : vector<14x14xf32>
    %c124_180 = arith.constant 124 : index
    %1879 = memref.load %arg3[%c124_180] : memref<288xf32, #tpu.memory_space<smem>>
    %1880 = vector.broadcast %1879 : f32 to vector<14x14xf32>
    %1881 = arith.mulf %1880, %1866 : vector<14x14xf32>
    %1882 = arith.addf %1849, %1881 : vector<14x14xf32>
    %c160_181 = arith.constant 160 : index
    %1883 = memref.load %arg3[%c160_181] : memref<288xf32, #tpu.memory_space<smem>>
    %1884 = vector.broadcast %1883 : f32 to vector<14x14xf32>
    %1885 = arith.mulf %1884, %1866 : vector<14x14xf32>
    %1886 = arith.addf %1853, %1885 : vector<14x14xf32>
    %c196_182 = arith.constant 196 : index
    %1887 = memref.load %arg3[%c196_182] : memref<288xf32, #tpu.memory_space<smem>>
    %1888 = vector.broadcast %1887 : f32 to vector<14x14xf32>
    %1889 = arith.mulf %1888, %1866 : vector<14x14xf32>
    %1890 = arith.addf %1857, %1889 : vector<14x14xf32>
    %c232_183 = arith.constant 232 : index
    %1891 = memref.load %arg3[%c232_183] : memref<288xf32, #tpu.memory_space<smem>>
    %1892 = vector.broadcast %1891 : f32 to vector<14x14xf32>
    %1893 = arith.mulf %1892, %1866 : vector<14x14xf32>
    %1894 = arith.addf %1861, %1893 : vector<14x14xf32>
    %c268_184 = arith.constant 268 : index
    %1895 = memref.load %arg3[%c268_184] : memref<288xf32, #tpu.memory_space<smem>>
    %1896 = vector.broadcast %1895 : f32 to vector<14x14xf32>
    %1897 = arith.mulf %1896, %1866 : vector<14x14xf32>
    %1898 = arith.addf %1865, %1897 : vector<14x14xf32>
    %1899 = vector.extract_strided_slice %1832 {offsets = [0, 2], sizes = [14, 14], strides = [1, 1]} : vector<14x16xf32> to vector<14x14xf32>
    %c17_185 = arith.constant 17 : index
    %1900 = memref.load %arg3[%c17_185] : memref<288xf32, #tpu.memory_space<smem>>
    %1901 = vector.broadcast %1900 : f32 to vector<14x14xf32>
    %1902 = arith.mulf %1901, %1899 : vector<14x14xf32>
    %1903 = arith.addf %1870, %1902 : vector<14x14xf32>
    %c53_186 = arith.constant 53 : index
    %1904 = memref.load %arg3[%c53_186] : memref<288xf32, #tpu.memory_space<smem>>
    %1905 = vector.broadcast %1904 : f32 to vector<14x14xf32>
    %1906 = arith.mulf %1905, %1899 : vector<14x14xf32>
    %1907 = arith.addf %1874, %1906 : vector<14x14xf32>
    %c89_187 = arith.constant 89 : index
    %1908 = memref.load %arg3[%c89_187] : memref<288xf32, #tpu.memory_space<smem>>
    %1909 = vector.broadcast %1908 : f32 to vector<14x14xf32>
    %1910 = arith.mulf %1909, %1899 : vector<14x14xf32>
    %1911 = arith.addf %1878, %1910 : vector<14x14xf32>
    %c125_188 = arith.constant 125 : index
    %1912 = memref.load %arg3[%c125_188] : memref<288xf32, #tpu.memory_space<smem>>
    %1913 = vector.broadcast %1912 : f32 to vector<14x14xf32>
    %1914 = arith.mulf %1913, %1899 : vector<14x14xf32>
    %1915 = arith.addf %1882, %1914 : vector<14x14xf32>
    %c161_189 = arith.constant 161 : index
    %1916 = memref.load %arg3[%c161_189] : memref<288xf32, #tpu.memory_space<smem>>
    %1917 = vector.broadcast %1916 : f32 to vector<14x14xf32>
    %1918 = arith.mulf %1917, %1899 : vector<14x14xf32>
    %1919 = arith.addf %1886, %1918 : vector<14x14xf32>
    %c197_190 = arith.constant 197 : index
    %1920 = memref.load %arg3[%c197_190] : memref<288xf32, #tpu.memory_space<smem>>
    %1921 = vector.broadcast %1920 : f32 to vector<14x14xf32>
    %1922 = arith.mulf %1921, %1899 : vector<14x14xf32>
    %1923 = arith.addf %1890, %1922 : vector<14x14xf32>
    %c233_191 = arith.constant 233 : index
    %1924 = memref.load %arg3[%c233_191] : memref<288xf32, #tpu.memory_space<smem>>
    %1925 = vector.broadcast %1924 : f32 to vector<14x14xf32>
    %1926 = arith.mulf %1925, %1899 : vector<14x14xf32>
    %1927 = arith.addf %1894, %1926 : vector<14x14xf32>
    %c269_192 = arith.constant 269 : index
    %1928 = memref.load %arg3[%c269_192] : memref<288xf32, #tpu.memory_space<smem>>
    %1929 = vector.broadcast %1928 : f32 to vector<14x14xf32>
    %1930 = arith.mulf %1929, %1899 : vector<14x14xf32>
    %1931 = arith.addf %1898, %1930 : vector<14x14xf32>
    %1932 = vector.extract_strided_slice %1288 {offsets = [2, 0, 0], sizes = [1, 16, 16], strides = [1, 1, 1]} : vector<4x16x16xf32> to vector<1x16x16xf32>
    %1933 = vector.shape_cast %1932 : vector<1x16x16xf32> to vector<16x16xf32>
    %1934 = arith.mulf %1933, %1297 : vector<16x16xf32>
    %c2_193 = arith.constant 2 : index
    %1935 = memref.load %arg1[%c2_193] : memref<4xf32, #tpu.memory_space<smem>>
    %1936 = vector.broadcast %1935 : f32 to vector<16x16xf32>
    %1937 = arith.mulf %1934, %1936 : vector<16x16xf32>
    %c2_194 = arith.constant 2 : index
    %1938 = memref.load %arg2[%c2_194] : memref<4xf32, #tpu.memory_space<smem>>
    %1939 = vector.broadcast %1938 : f32 to vector<16x16xf32>
    %1940 = arith.addf %1937, %1939 : vector<16x16xf32>
    %1941 = vector.extract_strided_slice %1940 {offsets = [0, 0], sizes = [14, 16], strides = [1, 1]} : vector<16x16xf32> to vector<14x16xf32>
    %1942 = vector.extract_strided_slice %1941 {offsets = [0, 0], sizes = [14, 14], strides = [1, 1]} : vector<14x16xf32> to vector<14x14xf32>
    %c18_195 = arith.constant 18 : index
    %1943 = memref.load %arg3[%c18_195] : memref<288xf32, #tpu.memory_space<smem>>
    %1944 = vector.broadcast %1943 : f32 to vector<14x14xf32>
    %1945 = arith.mulf %1944, %1942 : vector<14x14xf32>
    %1946 = arith.addf %1903, %1945 : vector<14x14xf32>
    %c54_196 = arith.constant 54 : index
    %1947 = memref.load %arg3[%c54_196] : memref<288xf32, #tpu.memory_space<smem>>
    %1948 = vector.broadcast %1947 : f32 to vector<14x14xf32>
    %1949 = arith.mulf %1948, %1942 : vector<14x14xf32>
    %1950 = arith.addf %1907, %1949 : vector<14x14xf32>
    %c90_197 = arith.constant 90 : index
    %1951 = memref.load %arg3[%c90_197] : memref<288xf32, #tpu.memory_space<smem>>
    %1952 = vector.broadcast %1951 : f32 to vector<14x14xf32>
    %1953 = arith.mulf %1952, %1942 : vector<14x14xf32>
    %1954 = arith.addf %1911, %1953 : vector<14x14xf32>
    %c126_198 = arith.constant 126 : index
    %1955 = memref.load %arg3[%c126_198] : memref<288xf32, #tpu.memory_space<smem>>
    %1956 = vector.broadcast %1955 : f32 to vector<14x14xf32>
    %1957 = arith.mulf %1956, %1942 : vector<14x14xf32>
    %1958 = arith.addf %1915, %1957 : vector<14x14xf32>
    %c162_199 = arith.constant 162 : index
    %1959 = memref.load %arg3[%c162_199] : memref<288xf32, #tpu.memory_space<smem>>
    %1960 = vector.broadcast %1959 : f32 to vector<14x14xf32>
    %1961 = arith.mulf %1960, %1942 : vector<14x14xf32>
    %1962 = arith.addf %1919, %1961 : vector<14x14xf32>
    %c198_200 = arith.constant 198 : index
    %1963 = memref.load %arg3[%c198_200] : memref<288xf32, #tpu.memory_space<smem>>
    %1964 = vector.broadcast %1963 : f32 to vector<14x14xf32>
    %1965 = arith.mulf %1964, %1942 : vector<14x14xf32>
    %1966 = arith.addf %1923, %1965 : vector<14x14xf32>
    %c234_201 = arith.constant 234 : index
    %1967 = memref.load %arg3[%c234_201] : memref<288xf32, #tpu.memory_space<smem>>
    %1968 = vector.broadcast %1967 : f32 to vector<14x14xf32>
    %1969 = arith.mulf %1968, %1942 : vector<14x14xf32>
    %1970 = arith.addf %1927, %1969 : vector<14x14xf32>
    %c270_202 = arith.constant 270 : index
    %1971 = memref.load %arg3[%c270_202] : memref<288xf32, #tpu.memory_space<smem>>
    %1972 = vector.broadcast %1971 : f32 to vector<14x14xf32>
    %1973 = arith.mulf %1972, %1942 : vector<14x14xf32>
    %1974 = arith.addf %1931, %1973 : vector<14x14xf32>
    %1975 = vector.extract_strided_slice %1941 {offsets = [0, 1], sizes = [14, 14], strides = [1, 1]} : vector<14x16xf32> to vector<14x14xf32>
    %c19_203 = arith.constant 19 : index
    %1976 = memref.load %arg3[%c19_203] : memref<288xf32, #tpu.memory_space<smem>>
    %1977 = vector.broadcast %1976 : f32 to vector<14x14xf32>
    %1978 = arith.mulf %1977, %1975 : vector<14x14xf32>
    %1979 = arith.addf %1946, %1978 : vector<14x14xf32>
    %c55_204 = arith.constant 55 : index
    %1980 = memref.load %arg3[%c55_204] : memref<288xf32, #tpu.memory_space<smem>>
    %1981 = vector.broadcast %1980 : f32 to vector<14x14xf32>
    %1982 = arith.mulf %1981, %1975 : vector<14x14xf32>
    %1983 = arith.addf %1950, %1982 : vector<14x14xf32>
    %c91_205 = arith.constant 91 : index
    %1984 = memref.load %arg3[%c91_205] : memref<288xf32, #tpu.memory_space<smem>>
    %1985 = vector.broadcast %1984 : f32 to vector<14x14xf32>
    %1986 = arith.mulf %1985, %1975 : vector<14x14xf32>
    %1987 = arith.addf %1954, %1986 : vector<14x14xf32>
    %c127_206 = arith.constant 127 : index
    %1988 = memref.load %arg3[%c127_206] : memref<288xf32, #tpu.memory_space<smem>>
    %1989 = vector.broadcast %1988 : f32 to vector<14x14xf32>
    %1990 = arith.mulf %1989, %1975 : vector<14x14xf32>
    %1991 = arith.addf %1958, %1990 : vector<14x14xf32>
    %c163_207 = arith.constant 163 : index
    %1992 = memref.load %arg3[%c163_207] : memref<288xf32, #tpu.memory_space<smem>>
    %1993 = vector.broadcast %1992 : f32 to vector<14x14xf32>
    %1994 = arith.mulf %1993, %1975 : vector<14x14xf32>
    %1995 = arith.addf %1962, %1994 : vector<14x14xf32>
    %c199_208 = arith.constant 199 : index
    %1996 = memref.load %arg3[%c199_208] : memref<288xf32, #tpu.memory_space<smem>>
    %1997 = vector.broadcast %1996 : f32 to vector<14x14xf32>
    %1998 = arith.mulf %1997, %1975 : vector<14x14xf32>
    %1999 = arith.addf %1966, %1998 : vector<14x14xf32>
    %c235_209 = arith.constant 235 : index
    %2000 = memref.load %arg3[%c235_209] : memref<288xf32, #tpu.memory_space<smem>>
    %2001 = vector.broadcast %2000 : f32 to vector<14x14xf32>
    %2002 = arith.mulf %2001, %1975 : vector<14x14xf32>
    %2003 = arith.addf %1970, %2002 : vector<14x14xf32>
    %c271_210 = arith.constant 271 : index
    %2004 = memref.load %arg3[%c271_210] : memref<288xf32, #tpu.memory_space<smem>>
    %2005 = vector.broadcast %2004 : f32 to vector<14x14xf32>
    %2006 = arith.mulf %2005, %1975 : vector<14x14xf32>
    %2007 = arith.addf %1974, %2006 : vector<14x14xf32>
    %2008 = vector.extract_strided_slice %1941 {offsets = [0, 2], sizes = [14, 14], strides = [1, 1]} : vector<14x16xf32> to vector<14x14xf32>
    %c20_211 = arith.constant 20 : index
    %2009 = memref.load %arg3[%c20_211] : memref<288xf32, #tpu.memory_space<smem>>
    %2010 = vector.broadcast %2009 : f32 to vector<14x14xf32>
    %2011 = arith.mulf %2010, %2008 : vector<14x14xf32>
    %2012 = arith.addf %1979, %2011 : vector<14x14xf32>
    %c56_212 = arith.constant 56 : index
    %2013 = memref.load %arg3[%c56_212] : memref<288xf32, #tpu.memory_space<smem>>
    %2014 = vector.broadcast %2013 : f32 to vector<14x14xf32>
    %2015 = arith.mulf %2014, %2008 : vector<14x14xf32>
    %2016 = arith.addf %1983, %2015 : vector<14x14xf32>
    %c92_213 = arith.constant 92 : index
    %2017 = memref.load %arg3[%c92_213] : memref<288xf32, #tpu.memory_space<smem>>
    %2018 = vector.broadcast %2017 : f32 to vector<14x14xf32>
    %2019 = arith.mulf %2018, %2008 : vector<14x14xf32>
    %2020 = arith.addf %1987, %2019 : vector<14x14xf32>
    %c128_214 = arith.constant 128 : index
    %2021 = memref.load %arg3[%c128_214] : memref<288xf32, #tpu.memory_space<smem>>
    %2022 = vector.broadcast %2021 : f32 to vector<14x14xf32>
    %2023 = arith.mulf %2022, %2008 : vector<14x14xf32>
    %2024 = arith.addf %1991, %2023 : vector<14x14xf32>
    %c164_215 = arith.constant 164 : index
    %2025 = memref.load %arg3[%c164_215] : memref<288xf32, #tpu.memory_space<smem>>
    %2026 = vector.broadcast %2025 : f32 to vector<14x14xf32>
    %2027 = arith.mulf %2026, %2008 : vector<14x14xf32>
    %2028 = arith.addf %1995, %2027 : vector<14x14xf32>
    %c200_216 = arith.constant 200 : index
    %2029 = memref.load %arg3[%c200_216] : memref<288xf32, #tpu.memory_space<smem>>
    %2030 = vector.broadcast %2029 : f32 to vector<14x14xf32>
    %2031 = arith.mulf %2030, %2008 : vector<14x14xf32>
    %2032 = arith.addf %1999, %2031 : vector<14x14xf32>
    %c236_217 = arith.constant 236 : index
    %2033 = memref.load %arg3[%c236_217] : memref<288xf32, #tpu.memory_space<smem>>
    %2034 = vector.broadcast %2033 : f32 to vector<14x14xf32>
    %2035 = arith.mulf %2034, %2008 : vector<14x14xf32>
    %2036 = arith.addf %2003, %2035 : vector<14x14xf32>
    %c272_218 = arith.constant 272 : index
    %2037 = memref.load %arg3[%c272_218] : memref<288xf32, #tpu.memory_space<smem>>
    %2038 = vector.broadcast %2037 : f32 to vector<14x14xf32>
    %2039 = arith.mulf %2038, %2008 : vector<14x14xf32>
    %2040 = arith.addf %2007, %2039 : vector<14x14xf32>
    %2041 = vector.extract_strided_slice %1940 {offsets = [1, 0], sizes = [14, 16], strides = [1, 1]} : vector<16x16xf32> to vector<14x16xf32>
    %2042 = vector.extract_strided_slice %2041 {offsets = [0, 0], sizes = [14, 14], strides = [1, 1]} : vector<14x16xf32> to vector<14x14xf32>
    %c21_219 = arith.constant 21 : index
    %2043 = memref.load %arg3[%c21_219] : memref<288xf32, #tpu.memory_space<smem>>
    %2044 = vector.broadcast %2043 : f32 to vector<14x14xf32>
    %2045 = arith.mulf %2044, %2042 : vector<14x14xf32>
    %2046 = arith.addf %2012, %2045 : vector<14x14xf32>
    %c57_220 = arith.constant 57 : index
    %2047 = memref.load %arg3[%c57_220] : memref<288xf32, #tpu.memory_space<smem>>
    %2048 = vector.broadcast %2047 : f32 to vector<14x14xf32>
    %2049 = arith.mulf %2048, %2042 : vector<14x14xf32>
    %2050 = arith.addf %2016, %2049 : vector<14x14xf32>
    %c93_221 = arith.constant 93 : index
    %2051 = memref.load %arg3[%c93_221] : memref<288xf32, #tpu.memory_space<smem>>
    %2052 = vector.broadcast %2051 : f32 to vector<14x14xf32>
    %2053 = arith.mulf %2052, %2042 : vector<14x14xf32>
    %2054 = arith.addf %2020, %2053 : vector<14x14xf32>
    %c129_222 = arith.constant 129 : index
    %2055 = memref.load %arg3[%c129_222] : memref<288xf32, #tpu.memory_space<smem>>
    %2056 = vector.broadcast %2055 : f32 to vector<14x14xf32>
    %2057 = arith.mulf %2056, %2042 : vector<14x14xf32>
    %2058 = arith.addf %2024, %2057 : vector<14x14xf32>
    %c165_223 = arith.constant 165 : index
    %2059 = memref.load %arg3[%c165_223] : memref<288xf32, #tpu.memory_space<smem>>
    %2060 = vector.broadcast %2059 : f32 to vector<14x14xf32>
    %2061 = arith.mulf %2060, %2042 : vector<14x14xf32>
    %2062 = arith.addf %2028, %2061 : vector<14x14xf32>
    %c201_224 = arith.constant 201 : index
    %2063 = memref.load %arg3[%c201_224] : memref<288xf32, #tpu.memory_space<smem>>
    %2064 = vector.broadcast %2063 : f32 to vector<14x14xf32>
    %2065 = arith.mulf %2064, %2042 : vector<14x14xf32>
    %2066 = arith.addf %2032, %2065 : vector<14x14xf32>
    %c237_225 = arith.constant 237 : index
    %2067 = memref.load %arg3[%c237_225] : memref<288xf32, #tpu.memory_space<smem>>
    %2068 = vector.broadcast %2067 : f32 to vector<14x14xf32>
    %2069 = arith.mulf %2068, %2042 : vector<14x14xf32>
    %2070 = arith.addf %2036, %2069 : vector<14x14xf32>
    %c273_226 = arith.constant 273 : index
    %2071 = memref.load %arg3[%c273_226] : memref<288xf32, #tpu.memory_space<smem>>
    %2072 = vector.broadcast %2071 : f32 to vector<14x14xf32>
    %2073 = arith.mulf %2072, %2042 : vector<14x14xf32>
    %2074 = arith.addf %2040, %2073 : vector<14x14xf32>
    %2075 = vector.extract_strided_slice %2041 {offsets = [0, 1], sizes = [14, 14], strides = [1, 1]} : vector<14x16xf32> to vector<14x14xf32>
    %c22_227 = arith.constant 22 : index
    %2076 = memref.load %arg3[%c22_227] : memref<288xf32, #tpu.memory_space<smem>>
    %2077 = vector.broadcast %2076 : f32 to vector<14x14xf32>
    %2078 = arith.mulf %2077, %2075 : vector<14x14xf32>
    %2079 = arith.addf %2046, %2078 : vector<14x14xf32>
    %c58_228 = arith.constant 58 : index
    %2080 = memref.load %arg3[%c58_228] : memref<288xf32, #tpu.memory_space<smem>>
    %2081 = vector.broadcast %2080 : f32 to vector<14x14xf32>
    %2082 = arith.mulf %2081, %2075 : vector<14x14xf32>
    %2083 = arith.addf %2050, %2082 : vector<14x14xf32>
    %c94_229 = arith.constant 94 : index
    %2084 = memref.load %arg3[%c94_229] : memref<288xf32, #tpu.memory_space<smem>>
    %2085 = vector.broadcast %2084 : f32 to vector<14x14xf32>
    %2086 = arith.mulf %2085, %2075 : vector<14x14xf32>
    %2087 = arith.addf %2054, %2086 : vector<14x14xf32>
    %c130_230 = arith.constant 130 : index
    %2088 = memref.load %arg3[%c130_230] : memref<288xf32, #tpu.memory_space<smem>>
    %2089 = vector.broadcast %2088 : f32 to vector<14x14xf32>
    %2090 = arith.mulf %2089, %2075 : vector<14x14xf32>
    %2091 = arith.addf %2058, %2090 : vector<14x14xf32>
    %c166_231 = arith.constant 166 : index
    %2092 = memref.load %arg3[%c166_231] : memref<288xf32, #tpu.memory_space<smem>>
    %2093 = vector.broadcast %2092 : f32 to vector<14x14xf32>
    %2094 = arith.mulf %2093, %2075 : vector<14x14xf32>
    %2095 = arith.addf %2062, %2094 : vector<14x14xf32>
    %c202_232 = arith.constant 202 : index
    %2096 = memref.load %arg3[%c202_232] : memref<288xf32, #tpu.memory_space<smem>>
    %2097 = vector.broadcast %2096 : f32 to vector<14x14xf32>
    %2098 = arith.mulf %2097, %2075 : vector<14x14xf32>
    %2099 = arith.addf %2066, %2098 : vector<14x14xf32>
    %c238_233 = arith.constant 238 : index
    %2100 = memref.load %arg3[%c238_233] : memref<288xf32, #tpu.memory_space<smem>>
    %2101 = vector.broadcast %2100 : f32 to vector<14x14xf32>
    %2102 = arith.mulf %2101, %2075 : vector<14x14xf32>
    %2103 = arith.addf %2070, %2102 : vector<14x14xf32>
    %c274_234 = arith.constant 274 : index
    %2104 = memref.load %arg3[%c274_234] : memref<288xf32, #tpu.memory_space<smem>>
    %2105 = vector.broadcast %2104 : f32 to vector<14x14xf32>
    %2106 = arith.mulf %2105, %2075 : vector<14x14xf32>
    %2107 = arith.addf %2074, %2106 : vector<14x14xf32>
    %2108 = vector.extract_strided_slice %2041 {offsets = [0, 2], sizes = [14, 14], strides = [1, 1]} : vector<14x16xf32> to vector<14x14xf32>
    %c23_235 = arith.constant 23 : index
    %2109 = memref.load %arg3[%c23_235] : memref<288xf32, #tpu.memory_space<smem>>
    %2110 = vector.broadcast %2109 : f32 to vector<14x14xf32>
    %2111 = arith.mulf %2110, %2108 : vector<14x14xf32>
    %2112 = arith.addf %2079, %2111 : vector<14x14xf32>
    %c59_236 = arith.constant 59 : index
    %2113 = memref.load %arg3[%c59_236] : memref<288xf32, #tpu.memory_space<smem>>
    %2114 = vector.broadcast %2113 : f32 to vector<14x14xf32>
    %2115 = arith.mulf %2114, %2108 : vector<14x14xf32>
    %2116 = arith.addf %2083, %2115 : vector<14x14xf32>
    %c95_237 = arith.constant 95 : index
    %2117 = memref.load %arg3[%c95_237] : memref<288xf32, #tpu.memory_space<smem>>
    %2118 = vector.broadcast %2117 : f32 to vector<14x14xf32>
    %2119 = arith.mulf %2118, %2108 : vector<14x14xf32>
    %2120 = arith.addf %2087, %2119 : vector<14x14xf32>
    %c131_238 = arith.constant 131 : index
    %2121 = memref.load %arg3[%c131_238] : memref<288xf32, #tpu.memory_space<smem>>
    %2122 = vector.broadcast %2121 : f32 to vector<14x14xf32>
    %2123 = arith.mulf %2122, %2108 : vector<14x14xf32>
    %2124 = arith.addf %2091, %2123 : vector<14x14xf32>
    %c167_239 = arith.constant 167 : index
    %2125 = memref.load %arg3[%c167_239] : memref<288xf32, #tpu.memory_space<smem>>
    %2126 = vector.broadcast %2125 : f32 to vector<14x14xf32>
    %2127 = arith.mulf %2126, %2108 : vector<14x14xf32>
    %2128 = arith.addf %2095, %2127 : vector<14x14xf32>
    %c203_240 = arith.constant 203 : index
    %2129 = memref.load %arg3[%c203_240] : memref<288xf32, #tpu.memory_space<smem>>
    %2130 = vector.broadcast %2129 : f32 to vector<14x14xf32>
    %2131 = arith.mulf %2130, %2108 : vector<14x14xf32>
    %2132 = arith.addf %2099, %2131 : vector<14x14xf32>
    %c239_241 = arith.constant 239 : index
    %2133 = memref.load %arg3[%c239_241] : memref<288xf32, #tpu.memory_space<smem>>
    %2134 = vector.broadcast %2133 : f32 to vector<14x14xf32>
    %2135 = arith.mulf %2134, %2108 : vector<14x14xf32>
    %2136 = arith.addf %2103, %2135 : vector<14x14xf32>
    %c275_242 = arith.constant 275 : index
    %2137 = memref.load %arg3[%c275_242] : memref<288xf32, #tpu.memory_space<smem>>
    %2138 = vector.broadcast %2137 : f32 to vector<14x14xf32>
    %2139 = arith.mulf %2138, %2108 : vector<14x14xf32>
    %2140 = arith.addf %2107, %2139 : vector<14x14xf32>
    %2141 = vector.extract_strided_slice %1940 {offsets = [2, 0], sizes = [14, 16], strides = [1, 1]} : vector<16x16xf32> to vector<14x16xf32>
    %2142 = vector.extract_strided_slice %2141 {offsets = [0, 0], sizes = [14, 14], strides = [1, 1]} : vector<14x16xf32> to vector<14x14xf32>
    %c24_243 = arith.constant 24 : index
    %2143 = memref.load %arg3[%c24_243] : memref<288xf32, #tpu.memory_space<smem>>
    %2144 = vector.broadcast %2143 : f32 to vector<14x14xf32>
    %2145 = arith.mulf %2144, %2142 : vector<14x14xf32>
    %2146 = arith.addf %2112, %2145 : vector<14x14xf32>
    %c60_244 = arith.constant 60 : index
    %2147 = memref.load %arg3[%c60_244] : memref<288xf32, #tpu.memory_space<smem>>
    %2148 = vector.broadcast %2147 : f32 to vector<14x14xf32>
    %2149 = arith.mulf %2148, %2142 : vector<14x14xf32>
    %2150 = arith.addf %2116, %2149 : vector<14x14xf32>
    %c96_245 = arith.constant 96 : index
    %2151 = memref.load %arg3[%c96_245] : memref<288xf32, #tpu.memory_space<smem>>
    %2152 = vector.broadcast %2151 : f32 to vector<14x14xf32>
    %2153 = arith.mulf %2152, %2142 : vector<14x14xf32>
    %2154 = arith.addf %2120, %2153 : vector<14x14xf32>
    %c132_246 = arith.constant 132 : index
    %2155 = memref.load %arg3[%c132_246] : memref<288xf32, #tpu.memory_space<smem>>
    %2156 = vector.broadcast %2155 : f32 to vector<14x14xf32>
    %2157 = arith.mulf %2156, %2142 : vector<14x14xf32>
    %2158 = arith.addf %2124, %2157 : vector<14x14xf32>
    %c168_247 = arith.constant 168 : index
    %2159 = memref.load %arg3[%c168_247] : memref<288xf32, #tpu.memory_space<smem>>
    %2160 = vector.broadcast %2159 : f32 to vector<14x14xf32>
    %2161 = arith.mulf %2160, %2142 : vector<14x14xf32>
    %2162 = arith.addf %2128, %2161 : vector<14x14xf32>
    %c204_248 = arith.constant 204 : index
    %2163 = memref.load %arg3[%c204_248] : memref<288xf32, #tpu.memory_space<smem>>
    %2164 = vector.broadcast %2163 : f32 to vector<14x14xf32>
    %2165 = arith.mulf %2164, %2142 : vector<14x14xf32>
    %2166 = arith.addf %2132, %2165 : vector<14x14xf32>
    %c240_249 = arith.constant 240 : index
    %2167 = memref.load %arg3[%c240_249] : memref<288xf32, #tpu.memory_space<smem>>
    %2168 = vector.broadcast %2167 : f32 to vector<14x14xf32>
    %2169 = arith.mulf %2168, %2142 : vector<14x14xf32>
    %2170 = arith.addf %2136, %2169 : vector<14x14xf32>
    %c276_250 = arith.constant 276 : index
    %2171 = memref.load %arg3[%c276_250] : memref<288xf32, #tpu.memory_space<smem>>
    %2172 = vector.broadcast %2171 : f32 to vector<14x14xf32>
    %2173 = arith.mulf %2172, %2142 : vector<14x14xf32>
    %2174 = arith.addf %2140, %2173 : vector<14x14xf32>
    %2175 = vector.extract_strided_slice %2141 {offsets = [0, 1], sizes = [14, 14], strides = [1, 1]} : vector<14x16xf32> to vector<14x14xf32>
    %c25_251 = arith.constant 25 : index
    %2176 = memref.load %arg3[%c25_251] : memref<288xf32, #tpu.memory_space<smem>>
    %2177 = vector.broadcast %2176 : f32 to vector<14x14xf32>
    %2178 = arith.mulf %2177, %2175 : vector<14x14xf32>
    %2179 = arith.addf %2146, %2178 : vector<14x14xf32>
    %c61_252 = arith.constant 61 : index
    %2180 = memref.load %arg3[%c61_252] : memref<288xf32, #tpu.memory_space<smem>>
    %2181 = vector.broadcast %2180 : f32 to vector<14x14xf32>
    %2182 = arith.mulf %2181, %2175 : vector<14x14xf32>
    %2183 = arith.addf %2150, %2182 : vector<14x14xf32>
    %c97_253 = arith.constant 97 : index
    %2184 = memref.load %arg3[%c97_253] : memref<288xf32, #tpu.memory_space<smem>>
    %2185 = vector.broadcast %2184 : f32 to vector<14x14xf32>
    %2186 = arith.mulf %2185, %2175 : vector<14x14xf32>
    %2187 = arith.addf %2154, %2186 : vector<14x14xf32>
    %c133_254 = arith.constant 133 : index
    %2188 = memref.load %arg3[%c133_254] : memref<288xf32, #tpu.memory_space<smem>>
    %2189 = vector.broadcast %2188 : f32 to vector<14x14xf32>
    %2190 = arith.mulf %2189, %2175 : vector<14x14xf32>
    %2191 = arith.addf %2158, %2190 : vector<14x14xf32>
    %c169_255 = arith.constant 169 : index
    %2192 = memref.load %arg3[%c169_255] : memref<288xf32, #tpu.memory_space<smem>>
    %2193 = vector.broadcast %2192 : f32 to vector<14x14xf32>
    %2194 = arith.mulf %2193, %2175 : vector<14x14xf32>
    %2195 = arith.addf %2162, %2194 : vector<14x14xf32>
    %c205_256 = arith.constant 205 : index
    %2196 = memref.load %arg3[%c205_256] : memref<288xf32, #tpu.memory_space<smem>>
    %2197 = vector.broadcast %2196 : f32 to vector<14x14xf32>
    %2198 = arith.mulf %2197, %2175 : vector<14x14xf32>
    %2199 = arith.addf %2166, %2198 : vector<14x14xf32>
    %c241_257 = arith.constant 241 : index
    %2200 = memref.load %arg3[%c241_257] : memref<288xf32, #tpu.memory_space<smem>>
    %2201 = vector.broadcast %2200 : f32 to vector<14x14xf32>
    %2202 = arith.mulf %2201, %2175 : vector<14x14xf32>
    %2203 = arith.addf %2170, %2202 : vector<14x14xf32>
    %c277_258 = arith.constant 277 : index
    %2204 = memref.load %arg3[%c277_258] : memref<288xf32, #tpu.memory_space<smem>>
    %2205 = vector.broadcast %2204 : f32 to vector<14x14xf32>
    %2206 = arith.mulf %2205, %2175 : vector<14x14xf32>
    %2207 = arith.addf %2174, %2206 : vector<14x14xf32>
    %2208 = vector.extract_strided_slice %2141 {offsets = [0, 2], sizes = [14, 14], strides = [1, 1]} : vector<14x16xf32> to vector<14x14xf32>
    %c26_259 = arith.constant 26 : index
    %2209 = memref.load %arg3[%c26_259] : memref<288xf32, #tpu.memory_space<smem>>
    %2210 = vector.broadcast %2209 : f32 to vector<14x14xf32>
    %2211 = arith.mulf %2210, %2208 : vector<14x14xf32>
    %2212 = arith.addf %2179, %2211 : vector<14x14xf32>
    %c62_260 = arith.constant 62 : index
    %2213 = memref.load %arg3[%c62_260] : memref<288xf32, #tpu.memory_space<smem>>
    %2214 = vector.broadcast %2213 : f32 to vector<14x14xf32>
    %2215 = arith.mulf %2214, %2208 : vector<14x14xf32>
    %2216 = arith.addf %2183, %2215 : vector<14x14xf32>
    %c98_261 = arith.constant 98 : index
    %2217 = memref.load %arg3[%c98_261] : memref<288xf32, #tpu.memory_space<smem>>
    %2218 = vector.broadcast %2217 : f32 to vector<14x14xf32>
    %2219 = arith.mulf %2218, %2208 : vector<14x14xf32>
    %2220 = arith.addf %2187, %2219 : vector<14x14xf32>
    %c134_262 = arith.constant 134 : index
    %2221 = memref.load %arg3[%c134_262] : memref<288xf32, #tpu.memory_space<smem>>
    %2222 = vector.broadcast %2221 : f32 to vector<14x14xf32>
    %2223 = arith.mulf %2222, %2208 : vector<14x14xf32>
    %2224 = arith.addf %2191, %2223 : vector<14x14xf32>
    %c170_263 = arith.constant 170 : index
    %2225 = memref.load %arg3[%c170_263] : memref<288xf32, #tpu.memory_space<smem>>
    %2226 = vector.broadcast %2225 : f32 to vector<14x14xf32>
    %2227 = arith.mulf %2226, %2208 : vector<14x14xf32>
    %2228 = arith.addf %2195, %2227 : vector<14x14xf32>
    %c206_264 = arith.constant 206 : index
    %2229 = memref.load %arg3[%c206_264] : memref<288xf32, #tpu.memory_space<smem>>
    %2230 = vector.broadcast %2229 : f32 to vector<14x14xf32>
    %2231 = arith.mulf %2230, %2208 : vector<14x14xf32>
    %2232 = arith.addf %2199, %2231 : vector<14x14xf32>
    %c242_265 = arith.constant 242 : index
    %2233 = memref.load %arg3[%c242_265] : memref<288xf32, #tpu.memory_space<smem>>
    %2234 = vector.broadcast %2233 : f32 to vector<14x14xf32>
    %2235 = arith.mulf %2234, %2208 : vector<14x14xf32>
    %2236 = arith.addf %2203, %2235 : vector<14x14xf32>
    %c278_266 = arith.constant 278 : index
    %2237 = memref.load %arg3[%c278_266] : memref<288xf32, #tpu.memory_space<smem>>
    %2238 = vector.broadcast %2237 : f32 to vector<14x14xf32>
    %2239 = arith.mulf %2238, %2208 : vector<14x14xf32>
    %2240 = arith.addf %2207, %2239 : vector<14x14xf32>
    %2241 = vector.extract_strided_slice %1288 {offsets = [3, 0, 0], sizes = [1, 16, 16], strides = [1, 1, 1]} : vector<4x16x16xf32> to vector<1x16x16xf32>
    %2242 = vector.shape_cast %2241 : vector<1x16x16xf32> to vector<16x16xf32>
    %2243 = arith.mulf %2242, %1297 : vector<16x16xf32>
    %c3_267 = arith.constant 3 : index
    %2244 = memref.load %arg1[%c3_267] : memref<4xf32, #tpu.memory_space<smem>>
    %2245 = vector.broadcast %2244 : f32 to vector<16x16xf32>
    %2246 = arith.mulf %2243, %2245 : vector<16x16xf32>
    %c3_268 = arith.constant 3 : index
    %2247 = memref.load %arg2[%c3_268] : memref<4xf32, #tpu.memory_space<smem>>
    %2248 = vector.broadcast %2247 : f32 to vector<16x16xf32>
    %2249 = arith.addf %2246, %2248 : vector<16x16xf32>
    %2250 = vector.extract_strided_slice %2249 {offsets = [0, 0], sizes = [14, 16], strides = [1, 1]} : vector<16x16xf32> to vector<14x16xf32>
    %2251 = vector.extract_strided_slice %2250 {offsets = [0, 0], sizes = [14, 14], strides = [1, 1]} : vector<14x16xf32> to vector<14x14xf32>
    %c27_269 = arith.constant 27 : index
    %2252 = memref.load %arg3[%c27_269] : memref<288xf32, #tpu.memory_space<smem>>
    %2253 = vector.broadcast %2252 : f32 to vector<14x14xf32>
    %2254 = arith.mulf %2253, %2251 : vector<14x14xf32>
    %2255 = arith.addf %2212, %2254 : vector<14x14xf32>
    %c63_270 = arith.constant 63 : index
    %2256 = memref.load %arg3[%c63_270] : memref<288xf32, #tpu.memory_space<smem>>
    %2257 = vector.broadcast %2256 : f32 to vector<14x14xf32>
    %2258 = arith.mulf %2257, %2251 : vector<14x14xf32>
    %2259 = arith.addf %2216, %2258 : vector<14x14xf32>
    %c99_271 = arith.constant 99 : index
    %2260 = memref.load %arg3[%c99_271] : memref<288xf32, #tpu.memory_space<smem>>
    %2261 = vector.broadcast %2260 : f32 to vector<14x14xf32>
    %2262 = arith.mulf %2261, %2251 : vector<14x14xf32>
    %2263 = arith.addf %2220, %2262 : vector<14x14xf32>
    %c135_272 = arith.constant 135 : index
    %2264 = memref.load %arg3[%c135_272] : memref<288xf32, #tpu.memory_space<smem>>
    %2265 = vector.broadcast %2264 : f32 to vector<14x14xf32>
    %2266 = arith.mulf %2265, %2251 : vector<14x14xf32>
    %2267 = arith.addf %2224, %2266 : vector<14x14xf32>
    %c171_273 = arith.constant 171 : index
    %2268 = memref.load %arg3[%c171_273] : memref<288xf32, #tpu.memory_space<smem>>
    %2269 = vector.broadcast %2268 : f32 to vector<14x14xf32>
    %2270 = arith.mulf %2269, %2251 : vector<14x14xf32>
    %2271 = arith.addf %2228, %2270 : vector<14x14xf32>
    %c207_274 = arith.constant 207 : index
    %2272 = memref.load %arg3[%c207_274] : memref<288xf32, #tpu.memory_space<smem>>
    %2273 = vector.broadcast %2272 : f32 to vector<14x14xf32>
    %2274 = arith.mulf %2273, %2251 : vector<14x14xf32>
    %2275 = arith.addf %2232, %2274 : vector<14x14xf32>
    %c243_275 = arith.constant 243 : index
    %2276 = memref.load %arg3[%c243_275] : memref<288xf32, #tpu.memory_space<smem>>
    %2277 = vector.broadcast %2276 : f32 to vector<14x14xf32>
    %2278 = arith.mulf %2277, %2251 : vector<14x14xf32>
    %2279 = arith.addf %2236, %2278 : vector<14x14xf32>
    %c279_276 = arith.constant 279 : index
    %2280 = memref.load %arg3[%c279_276] : memref<288xf32, #tpu.memory_space<smem>>
    %2281 = vector.broadcast %2280 : f32 to vector<14x14xf32>
    %2282 = arith.mulf %2281, %2251 : vector<14x14xf32>
    %2283 = arith.addf %2240, %2282 : vector<14x14xf32>
    %2284 = vector.extract_strided_slice %2250 {offsets = [0, 1], sizes = [14, 14], strides = [1, 1]} : vector<14x16xf32> to vector<14x14xf32>
    %c28_277 = arith.constant 28 : index
    %2285 = memref.load %arg3[%c28_277] : memref<288xf32, #tpu.memory_space<smem>>
    %2286 = vector.broadcast %2285 : f32 to vector<14x14xf32>
    %2287 = arith.mulf %2286, %2284 : vector<14x14xf32>
    %2288 = arith.addf %2255, %2287 : vector<14x14xf32>
    %c64_278 = arith.constant 64 : index
    %2289 = memref.load %arg3[%c64_278] : memref<288xf32, #tpu.memory_space<smem>>
    %2290 = vector.broadcast %2289 : f32 to vector<14x14xf32>
    %2291 = arith.mulf %2290, %2284 : vector<14x14xf32>
    %2292 = arith.addf %2259, %2291 : vector<14x14xf32>
    %c100_279 = arith.constant 100 : index
    %2293 = memref.load %arg3[%c100_279] : memref<288xf32, #tpu.memory_space<smem>>
    %2294 = vector.broadcast %2293 : f32 to vector<14x14xf32>
    %2295 = arith.mulf %2294, %2284 : vector<14x14xf32>
    %2296 = arith.addf %2263, %2295 : vector<14x14xf32>
    %c136_280 = arith.constant 136 : index
    %2297 = memref.load %arg3[%c136_280] : memref<288xf32, #tpu.memory_space<smem>>
    %2298 = vector.broadcast %2297 : f32 to vector<14x14xf32>
    %2299 = arith.mulf %2298, %2284 : vector<14x14xf32>
    %2300 = arith.addf %2267, %2299 : vector<14x14xf32>
    %c172_281 = arith.constant 172 : index
    %2301 = memref.load %arg3[%c172_281] : memref<288xf32, #tpu.memory_space<smem>>
    %2302 = vector.broadcast %2301 : f32 to vector<14x14xf32>
    %2303 = arith.mulf %2302, %2284 : vector<14x14xf32>
    %2304 = arith.addf %2271, %2303 : vector<14x14xf32>
    %c208_282 = arith.constant 208 : index
    %2305 = memref.load %arg3[%c208_282] : memref<288xf32, #tpu.memory_space<smem>>
    %2306 = vector.broadcast %2305 : f32 to vector<14x14xf32>
    %2307 = arith.mulf %2306, %2284 : vector<14x14xf32>
    %2308 = arith.addf %2275, %2307 : vector<14x14xf32>
    %c244_283 = arith.constant 244 : index
    %2309 = memref.load %arg3[%c244_283] : memref<288xf32, #tpu.memory_space<smem>>
    %2310 = vector.broadcast %2309 : f32 to vector<14x14xf32>
    %2311 = arith.mulf %2310, %2284 : vector<14x14xf32>
    %2312 = arith.addf %2279, %2311 : vector<14x14xf32>
    %c280_284 = arith.constant 280 : index
    %2313 = memref.load %arg3[%c280_284] : memref<288xf32, #tpu.memory_space<smem>>
    %2314 = vector.broadcast %2313 : f32 to vector<14x14xf32>
    %2315 = arith.mulf %2314, %2284 : vector<14x14xf32>
    %2316 = arith.addf %2283, %2315 : vector<14x14xf32>
    %2317 = vector.extract_strided_slice %2250 {offsets = [0, 2], sizes = [14, 14], strides = [1, 1]} : vector<14x16xf32> to vector<14x14xf32>
    %c29_285 = arith.constant 29 : index
    %2318 = memref.load %arg3[%c29_285] : memref<288xf32, #tpu.memory_space<smem>>
    %2319 = vector.broadcast %2318 : f32 to vector<14x14xf32>
    %2320 = arith.mulf %2319, %2317 : vector<14x14xf32>
    %2321 = arith.addf %2288, %2320 : vector<14x14xf32>
    %c65_286 = arith.constant 65 : index
    %2322 = memref.load %arg3[%c65_286] : memref<288xf32, #tpu.memory_space<smem>>
    %2323 = vector.broadcast %2322 : f32 to vector<14x14xf32>
    %2324 = arith.mulf %2323, %2317 : vector<14x14xf32>
    %2325 = arith.addf %2292, %2324 : vector<14x14xf32>
    %c101_287 = arith.constant 101 : index
    %2326 = memref.load %arg3[%c101_287] : memref<288xf32, #tpu.memory_space<smem>>
    %2327 = vector.broadcast %2326 : f32 to vector<14x14xf32>
    %2328 = arith.mulf %2327, %2317 : vector<14x14xf32>
    %2329 = arith.addf %2296, %2328 : vector<14x14xf32>
    %c137_288 = arith.constant 137 : index
    %2330 = memref.load %arg3[%c137_288] : memref<288xf32, #tpu.memory_space<smem>>
    %2331 = vector.broadcast %2330 : f32 to vector<14x14xf32>
    %2332 = arith.mulf %2331, %2317 : vector<14x14xf32>
    %2333 = arith.addf %2300, %2332 : vector<14x14xf32>
    %c173_289 = arith.constant 173 : index
    %2334 = memref.load %arg3[%c173_289] : memref<288xf32, #tpu.memory_space<smem>>
    %2335 = vector.broadcast %2334 : f32 to vector<14x14xf32>
    %2336 = arith.mulf %2335, %2317 : vector<14x14xf32>
    %2337 = arith.addf %2304, %2336 : vector<14x14xf32>
    %c209_290 = arith.constant 209 : index
    %2338 = memref.load %arg3[%c209_290] : memref<288xf32, #tpu.memory_space<smem>>
    %2339 = vector.broadcast %2338 : f32 to vector<14x14xf32>
    %2340 = arith.mulf %2339, %2317 : vector<14x14xf32>
    %2341 = arith.addf %2308, %2340 : vector<14x14xf32>
    %c245_291 = arith.constant 245 : index
    %2342 = memref.load %arg3[%c245_291] : memref<288xf32, #tpu.memory_space<smem>>
    %2343 = vector.broadcast %2342 : f32 to vector<14x14xf32>
    %2344 = arith.mulf %2343, %2317 : vector<14x14xf32>
    %2345 = arith.addf %2312, %2344 : vector<14x14xf32>
    %c281_292 = arith.constant 281 : index
    %2346 = memref.load %arg3[%c281_292] : memref<288xf32, #tpu.memory_space<smem>>
    %2347 = vector.broadcast %2346 : f32 to vector<14x14xf32>
    %2348 = arith.mulf %2347, %2317 : vector<14x14xf32>
    %2349 = arith.addf %2316, %2348 : vector<14x14xf32>
    %2350 = vector.extract_strided_slice %2249 {offsets = [1, 0], sizes = [14, 16], strides = [1, 1]} : vector<16x16xf32> to vector<14x16xf32>
    %2351 = vector.extract_strided_slice %2350 {offsets = [0, 0], sizes = [14, 14], strides = [1, 1]} : vector<14x16xf32> to vector<14x14xf32>
    %c30_293 = arith.constant 30 : index
    %2352 = memref.load %arg3[%c30_293] : memref<288xf32, #tpu.memory_space<smem>>
    %2353 = vector.broadcast %2352 : f32 to vector<14x14xf32>
    %2354 = arith.mulf %2353, %2351 : vector<14x14xf32>
    %2355 = arith.addf %2321, %2354 : vector<14x14xf32>
    %c66_294 = arith.constant 66 : index
    %2356 = memref.load %arg3[%c66_294] : memref<288xf32, #tpu.memory_space<smem>>
    %2357 = vector.broadcast %2356 : f32 to vector<14x14xf32>
    %2358 = arith.mulf %2357, %2351 : vector<14x14xf32>
    %2359 = arith.addf %2325, %2358 : vector<14x14xf32>
    %c102_295 = arith.constant 102 : index
    %2360 = memref.load %arg3[%c102_295] : memref<288xf32, #tpu.memory_space<smem>>
    %2361 = vector.broadcast %2360 : f32 to vector<14x14xf32>
    %2362 = arith.mulf %2361, %2351 : vector<14x14xf32>
    %2363 = arith.addf %2329, %2362 : vector<14x14xf32>
    %c138_296 = arith.constant 138 : index
    %2364 = memref.load %arg3[%c138_296] : memref<288xf32, #tpu.memory_space<smem>>
    %2365 = vector.broadcast %2364 : f32 to vector<14x14xf32>
    %2366 = arith.mulf %2365, %2351 : vector<14x14xf32>
    %2367 = arith.addf %2333, %2366 : vector<14x14xf32>
    %c174_297 = arith.constant 174 : index
    %2368 = memref.load %arg3[%c174_297] : memref<288xf32, #tpu.memory_space<smem>>
    %2369 = vector.broadcast %2368 : f32 to vector<14x14xf32>
    %2370 = arith.mulf %2369, %2351 : vector<14x14xf32>
    %2371 = arith.addf %2337, %2370 : vector<14x14xf32>
    %c210_298 = arith.constant 210 : index
    %2372 = memref.load %arg3[%c210_298] : memref<288xf32, #tpu.memory_space<smem>>
    %2373 = vector.broadcast %2372 : f32 to vector<14x14xf32>
    %2374 = arith.mulf %2373, %2351 : vector<14x14xf32>
    %2375 = arith.addf %2341, %2374 : vector<14x14xf32>
    %c246_299 = arith.constant 246 : index
    %2376 = memref.load %arg3[%c246_299] : memref<288xf32, #tpu.memory_space<smem>>
    %2377 = vector.broadcast %2376 : f32 to vector<14x14xf32>
    %2378 = arith.mulf %2377, %2351 : vector<14x14xf32>
    %2379 = arith.addf %2345, %2378 : vector<14x14xf32>
    %c282_300 = arith.constant 282 : index
    %2380 = memref.load %arg3[%c282_300] : memref<288xf32, #tpu.memory_space<smem>>
    %2381 = vector.broadcast %2380 : f32 to vector<14x14xf32>
    %2382 = arith.mulf %2381, %2351 : vector<14x14xf32>
    %2383 = arith.addf %2349, %2382 : vector<14x14xf32>
    %2384 = vector.extract_strided_slice %2350 {offsets = [0, 1], sizes = [14, 14], strides = [1, 1]} : vector<14x16xf32> to vector<14x14xf32>
    %c31_301 = arith.constant 31 : index
    %2385 = memref.load %arg3[%c31_301] : memref<288xf32, #tpu.memory_space<smem>>
    %2386 = vector.broadcast %2385 : f32 to vector<14x14xf32>
    %2387 = arith.mulf %2386, %2384 : vector<14x14xf32>
    %2388 = arith.addf %2355, %2387 : vector<14x14xf32>
    %c67_302 = arith.constant 67 : index
    %2389 = memref.load %arg3[%c67_302] : memref<288xf32, #tpu.memory_space<smem>>
    %2390 = vector.broadcast %2389 : f32 to vector<14x14xf32>
    %2391 = arith.mulf %2390, %2384 : vector<14x14xf32>
    %2392 = arith.addf %2359, %2391 : vector<14x14xf32>
    %c103_303 = arith.constant 103 : index
    %2393 = memref.load %arg3[%c103_303] : memref<288xf32, #tpu.memory_space<smem>>
    %2394 = vector.broadcast %2393 : f32 to vector<14x14xf32>
    %2395 = arith.mulf %2394, %2384 : vector<14x14xf32>
    %2396 = arith.addf %2363, %2395 : vector<14x14xf32>
    %c139_304 = arith.constant 139 : index
    %2397 = memref.load %arg3[%c139_304] : memref<288xf32, #tpu.memory_space<smem>>
    %2398 = vector.broadcast %2397 : f32 to vector<14x14xf32>
    %2399 = arith.mulf %2398, %2384 : vector<14x14xf32>
    %2400 = arith.addf %2367, %2399 : vector<14x14xf32>
    %c175_305 = arith.constant 175 : index
    %2401 = memref.load %arg3[%c175_305] : memref<288xf32, #tpu.memory_space<smem>>
    %2402 = vector.broadcast %2401 : f32 to vector<14x14xf32>
    %2403 = arith.mulf %2402, %2384 : vector<14x14xf32>
    %2404 = arith.addf %2371, %2403 : vector<14x14xf32>
    %c211_306 = arith.constant 211 : index
    %2405 = memref.load %arg3[%c211_306] : memref<288xf32, #tpu.memory_space<smem>>
    %2406 = vector.broadcast %2405 : f32 to vector<14x14xf32>
    %2407 = arith.mulf %2406, %2384 : vector<14x14xf32>
    %2408 = arith.addf %2375, %2407 : vector<14x14xf32>
    %c247_307 = arith.constant 247 : index
    %2409 = memref.load %arg3[%c247_307] : memref<288xf32, #tpu.memory_space<smem>>
    %2410 = vector.broadcast %2409 : f32 to vector<14x14xf32>
    %2411 = arith.mulf %2410, %2384 : vector<14x14xf32>
    %2412 = arith.addf %2379, %2411 : vector<14x14xf32>
    %c283_308 = arith.constant 283 : index
    %2413 = memref.load %arg3[%c283_308] : memref<288xf32, #tpu.memory_space<smem>>
    %2414 = vector.broadcast %2413 : f32 to vector<14x14xf32>
    %2415 = arith.mulf %2414, %2384 : vector<14x14xf32>
    %2416 = arith.addf %2383, %2415 : vector<14x14xf32>
    %2417 = vector.extract_strided_slice %2350 {offsets = [0, 2], sizes = [14, 14], strides = [1, 1]} : vector<14x16xf32> to vector<14x14xf32>
    %c32_309 = arith.constant 32 : index
    %2418 = memref.load %arg3[%c32_309] : memref<288xf32, #tpu.memory_space<smem>>
    %2419 = vector.broadcast %2418 : f32 to vector<14x14xf32>
    %2420 = arith.mulf %2419, %2417 : vector<14x14xf32>
    %2421 = arith.addf %2388, %2420 : vector<14x14xf32>
    %c68_310 = arith.constant 68 : index
    %2422 = memref.load %arg3[%c68_310] : memref<288xf32, #tpu.memory_space<smem>>
    %2423 = vector.broadcast %2422 : f32 to vector<14x14xf32>
    %2424 = arith.mulf %2423, %2417 : vector<14x14xf32>
    %2425 = arith.addf %2392, %2424 : vector<14x14xf32>
    %c104_311 = arith.constant 104 : index
    %2426 = memref.load %arg3[%c104_311] : memref<288xf32, #tpu.memory_space<smem>>
    %2427 = vector.broadcast %2426 : f32 to vector<14x14xf32>
    %2428 = arith.mulf %2427, %2417 : vector<14x14xf32>
    %2429 = arith.addf %2396, %2428 : vector<14x14xf32>
    %c140_312 = arith.constant 140 : index
    %2430 = memref.load %arg3[%c140_312] : memref<288xf32, #tpu.memory_space<smem>>
    %2431 = vector.broadcast %2430 : f32 to vector<14x14xf32>
    %2432 = arith.mulf %2431, %2417 : vector<14x14xf32>
    %2433 = arith.addf %2400, %2432 : vector<14x14xf32>
    %c176_313 = arith.constant 176 : index
    %2434 = memref.load %arg3[%c176_313] : memref<288xf32, #tpu.memory_space<smem>>
    %2435 = vector.broadcast %2434 : f32 to vector<14x14xf32>
    %2436 = arith.mulf %2435, %2417 : vector<14x14xf32>
    %2437 = arith.addf %2404, %2436 : vector<14x14xf32>
    %c212_314 = arith.constant 212 : index
    %2438 = memref.load %arg3[%c212_314] : memref<288xf32, #tpu.memory_space<smem>>
    %2439 = vector.broadcast %2438 : f32 to vector<14x14xf32>
    %2440 = arith.mulf %2439, %2417 : vector<14x14xf32>
    %2441 = arith.addf %2408, %2440 : vector<14x14xf32>
    %c248_315 = arith.constant 248 : index
    %2442 = memref.load %arg3[%c248_315] : memref<288xf32, #tpu.memory_space<smem>>
    %2443 = vector.broadcast %2442 : f32 to vector<14x14xf32>
    %2444 = arith.mulf %2443, %2417 : vector<14x14xf32>
    %2445 = arith.addf %2412, %2444 : vector<14x14xf32>
    %c284_316 = arith.constant 284 : index
    %2446 = memref.load %arg3[%c284_316] : memref<288xf32, #tpu.memory_space<smem>>
    %2447 = vector.broadcast %2446 : f32 to vector<14x14xf32>
    %2448 = arith.mulf %2447, %2417 : vector<14x14xf32>
    %2449 = arith.addf %2416, %2448 : vector<14x14xf32>
    %2450 = vector.extract_strided_slice %2249 {offsets = [2, 0], sizes = [14, 16], strides = [1, 1]} : vector<16x16xf32> to vector<14x16xf32>
    %2451 = vector.extract_strided_slice %2450 {offsets = [0, 0], sizes = [14, 14], strides = [1, 1]} : vector<14x16xf32> to vector<14x14xf32>
    %c33_317 = arith.constant 33 : index
    %2452 = memref.load %arg3[%c33_317] : memref<288xf32, #tpu.memory_space<smem>>
    %2453 = vector.broadcast %2452 : f32 to vector<14x14xf32>
    %2454 = arith.mulf %2453, %2451 : vector<14x14xf32>
    %2455 = arith.addf %2421, %2454 : vector<14x14xf32>
    %c69_318 = arith.constant 69 : index
    %2456 = memref.load %arg3[%c69_318] : memref<288xf32, #tpu.memory_space<smem>>
    %2457 = vector.broadcast %2456 : f32 to vector<14x14xf32>
    %2458 = arith.mulf %2457, %2451 : vector<14x14xf32>
    %2459 = arith.addf %2425, %2458 : vector<14x14xf32>
    %c105_319 = arith.constant 105 : index
    %2460 = memref.load %arg3[%c105_319] : memref<288xf32, #tpu.memory_space<smem>>
    %2461 = vector.broadcast %2460 : f32 to vector<14x14xf32>
    %2462 = arith.mulf %2461, %2451 : vector<14x14xf32>
    %2463 = arith.addf %2429, %2462 : vector<14x14xf32>
    %c141_320 = arith.constant 141 : index
    %2464 = memref.load %arg3[%c141_320] : memref<288xf32, #tpu.memory_space<smem>>
    %2465 = vector.broadcast %2464 : f32 to vector<14x14xf32>
    %2466 = arith.mulf %2465, %2451 : vector<14x14xf32>
    %2467 = arith.addf %2433, %2466 : vector<14x14xf32>
    %c177_321 = arith.constant 177 : index
    %2468 = memref.load %arg3[%c177_321] : memref<288xf32, #tpu.memory_space<smem>>
    %2469 = vector.broadcast %2468 : f32 to vector<14x14xf32>
    %2470 = arith.mulf %2469, %2451 : vector<14x14xf32>
    %2471 = arith.addf %2437, %2470 : vector<14x14xf32>
    %c213_322 = arith.constant 213 : index
    %2472 = memref.load %arg3[%c213_322] : memref<288xf32, #tpu.memory_space<smem>>
    %2473 = vector.broadcast %2472 : f32 to vector<14x14xf32>
    %2474 = arith.mulf %2473, %2451 : vector<14x14xf32>
    %2475 = arith.addf %2441, %2474 : vector<14x14xf32>
    %c249_323 = arith.constant 249 : index
    %2476 = memref.load %arg3[%c249_323] : memref<288xf32, #tpu.memory_space<smem>>
    %2477 = vector.broadcast %2476 : f32 to vector<14x14xf32>
    %2478 = arith.mulf %2477, %2451 : vector<14x14xf32>
    %2479 = arith.addf %2445, %2478 : vector<14x14xf32>
    %c285_324 = arith.constant 285 : index
    %2480 = memref.load %arg3[%c285_324] : memref<288xf32, #tpu.memory_space<smem>>
    %2481 = vector.broadcast %2480 : f32 to vector<14x14xf32>
    %2482 = arith.mulf %2481, %2451 : vector<14x14xf32>
    %2483 = arith.addf %2449, %2482 : vector<14x14xf32>
    %2484 = vector.extract_strided_slice %2450 {offsets = [0, 1], sizes = [14, 14], strides = [1, 1]} : vector<14x16xf32> to vector<14x14xf32>
    %c34_325 = arith.constant 34 : index
    %2485 = memref.load %arg3[%c34_325] : memref<288xf32, #tpu.memory_space<smem>>
    %2486 = vector.broadcast %2485 : f32 to vector<14x14xf32>
    %2487 = arith.mulf %2486, %2484 : vector<14x14xf32>
    %2488 = arith.addf %2455, %2487 : vector<14x14xf32>
    %c70_326 = arith.constant 70 : index
    %2489 = memref.load %arg3[%c70_326] : memref<288xf32, #tpu.memory_space<smem>>
    %2490 = vector.broadcast %2489 : f32 to vector<14x14xf32>
    %2491 = arith.mulf %2490, %2484 : vector<14x14xf32>
    %2492 = arith.addf %2459, %2491 : vector<14x14xf32>
    %c106_327 = arith.constant 106 : index
    %2493 = memref.load %arg3[%c106_327] : memref<288xf32, #tpu.memory_space<smem>>
    %2494 = vector.broadcast %2493 : f32 to vector<14x14xf32>
    %2495 = arith.mulf %2494, %2484 : vector<14x14xf32>
    %2496 = arith.addf %2463, %2495 : vector<14x14xf32>
    %c142_328 = arith.constant 142 : index
    %2497 = memref.load %arg3[%c142_328] : memref<288xf32, #tpu.memory_space<smem>>
    %2498 = vector.broadcast %2497 : f32 to vector<14x14xf32>
    %2499 = arith.mulf %2498, %2484 : vector<14x14xf32>
    %2500 = arith.addf %2467, %2499 : vector<14x14xf32>
    %c178_329 = arith.constant 178 : index
    %2501 = memref.load %arg3[%c178_329] : memref<288xf32, #tpu.memory_space<smem>>
    %2502 = vector.broadcast %2501 : f32 to vector<14x14xf32>
    %2503 = arith.mulf %2502, %2484 : vector<14x14xf32>
    %2504 = arith.addf %2471, %2503 : vector<14x14xf32>
    %c214_330 = arith.constant 214 : index
    %2505 = memref.load %arg3[%c214_330] : memref<288xf32, #tpu.memory_space<smem>>
    %2506 = vector.broadcast %2505 : f32 to vector<14x14xf32>
    %2507 = arith.mulf %2506, %2484 : vector<14x14xf32>
    %2508 = arith.addf %2475, %2507 : vector<14x14xf32>
    %c250_331 = arith.constant 250 : index
    %2509 = memref.load %arg3[%c250_331] : memref<288xf32, #tpu.memory_space<smem>>
    %2510 = vector.broadcast %2509 : f32 to vector<14x14xf32>
    %2511 = arith.mulf %2510, %2484 : vector<14x14xf32>
    %2512 = arith.addf %2479, %2511 : vector<14x14xf32>
    %c286_332 = arith.constant 286 : index
    %2513 = memref.load %arg3[%c286_332] : memref<288xf32, #tpu.memory_space<smem>>
    %2514 = vector.broadcast %2513 : f32 to vector<14x14xf32>
    %2515 = arith.mulf %2514, %2484 : vector<14x14xf32>
    %2516 = arith.addf %2483, %2515 : vector<14x14xf32>
    %2517 = vector.extract_strided_slice %2450 {offsets = [0, 2], sizes = [14, 14], strides = [1, 1]} : vector<14x16xf32> to vector<14x14xf32>
    %c35_333 = arith.constant 35 : index
    %2518 = memref.load %arg3[%c35_333] : memref<288xf32, #tpu.memory_space<smem>>
    %2519 = vector.broadcast %2518 : f32 to vector<14x14xf32>
    %2520 = arith.mulf %2519, %2517 : vector<14x14xf32>
    %2521 = arith.addf %2488, %2520 : vector<14x14xf32>
    %c71_334 = arith.constant 71 : index
    %2522 = memref.load %arg3[%c71_334] : memref<288xf32, #tpu.memory_space<smem>>
    %2523 = vector.broadcast %2522 : f32 to vector<14x14xf32>
    %2524 = arith.mulf %2523, %2517 : vector<14x14xf32>
    %2525 = arith.addf %2492, %2524 : vector<14x14xf32>
    %c107_335 = arith.constant 107 : index
    %2526 = memref.load %arg3[%c107_335] : memref<288xf32, #tpu.memory_space<smem>>
    %2527 = vector.broadcast %2526 : f32 to vector<14x14xf32>
    %2528 = arith.mulf %2527, %2517 : vector<14x14xf32>
    %2529 = arith.addf %2496, %2528 : vector<14x14xf32>
    %c143_336 = arith.constant 143 : index
    %2530 = memref.load %arg3[%c143_336] : memref<288xf32, #tpu.memory_space<smem>>
    %2531 = vector.broadcast %2530 : f32 to vector<14x14xf32>
    %2532 = arith.mulf %2531, %2517 : vector<14x14xf32>
    %2533 = arith.addf %2500, %2532 : vector<14x14xf32>
    %c179_337 = arith.constant 179 : index
    %2534 = memref.load %arg3[%c179_337] : memref<288xf32, #tpu.memory_space<smem>>
    %2535 = vector.broadcast %2534 : f32 to vector<14x14xf32>
    %2536 = arith.mulf %2535, %2517 : vector<14x14xf32>
    %2537 = arith.addf %2504, %2536 : vector<14x14xf32>
    %c215_338 = arith.constant 215 : index
    %2538 = memref.load %arg3[%c215_338] : memref<288xf32, #tpu.memory_space<smem>>
    %2539 = vector.broadcast %2538 : f32 to vector<14x14xf32>
    %2540 = arith.mulf %2539, %2517 : vector<14x14xf32>
    %2541 = arith.addf %2508, %2540 : vector<14x14xf32>
    %c251_339 = arith.constant 251 : index
    %2542 = memref.load %arg3[%c251_339] : memref<288xf32, #tpu.memory_space<smem>>
    %2543 = vector.broadcast %2542 : f32 to vector<14x14xf32>
    %2544 = arith.mulf %2543, %2517 : vector<14x14xf32>
    %2545 = arith.addf %2512, %2544 : vector<14x14xf32>
    %c287_340 = arith.constant 287 : index
    %2546 = memref.load %arg3[%c287_340] : memref<288xf32, #tpu.memory_space<smem>>
    %2547 = vector.broadcast %2546 : f32 to vector<14x14xf32>
    %2548 = arith.mulf %2547, %2517 : vector<14x14xf32>
    %2549 = arith.addf %2516, %2548 : vector<14x14xf32>
    %2550 = vector.shape_cast %2521 : vector<14x14xf32> to vector<1x14x14xf32>
    %2551 = vector.shape_cast %2525 : vector<14x14xf32> to vector<1x14x14xf32>
    %2552 = vector.shape_cast %2529 : vector<14x14xf32> to vector<1x14x14xf32>
    %2553 = vector.shape_cast %2533 : vector<14x14xf32> to vector<1x14x14xf32>
    %2554 = vector.shape_cast %2537 : vector<14x14xf32> to vector<1x14x14xf32>
    %2555 = vector.shape_cast %2541 : vector<14x14xf32> to vector<1x14x14xf32>
    %2556 = vector.shape_cast %2545 : vector<14x14xf32> to vector<1x14x14xf32>
    %2557 = vector.shape_cast %2549 : vector<14x14xf32> to vector<1x14x14xf32>
    %2558 = tpu.concatenate %2550, %2551, %2552, %2553, %2554, %2555, %2556, %2557 in 0 : vector<1x14x14xf32>, vector<1x14x14xf32>, vector<1x14x14xf32>, vector<1x14x14xf32>, vector<1x14x14xf32>, vector<1x14x14xf32>, vector<1x14x14xf32>, vector<1x14x14xf32> -> vector<8x14x14xf32>
    %c1_341 = arith.constant 1 : index
    %c0_342 = arith.constant 0 : index
    %c0_343 = arith.constant 0 : index
    %c0_344 = arith.constant 0 : index
    %2559 = vector.load %arg5[%c1_341, %c0_342, %c0_343, %c0_344] : memref<2x8x14x14xf32, #tpu.memory_space<vmem>>, vector<1x8x14x14xf32>
    %2560 = vector.shape_cast %2559 : vector<1x8x14x14xf32> to vector<8x14x14xf32>
    %2561 = vector.shape_cast %2558 : vector<8x14x14xf32> to vector<1x8x14x14xf32>
    tpu.vector_store %arg5[%c1_341, %c0_342, %c0_343, %c0_344], %2561 {strides = array<i32>} : memref<2x8x14x14xf32, #tpu.memory_space<vmem>>, vector<1x8x14x14xf32>,
    return
  }
}

</mosaic_0001>

<llo_original>
// kernel: tpu_custom_call.1
$region0: #{tpu_custom_call.1}
  #allocation0 [shape = 'u32[]', space=smem, size = 0x4, offset = 0x4, fixed_abs, tag = 'smem constant byte address 0x4 - core index']
  #allocation1 [shape = 'u32[144,128]{1,0:T(1,128)}', space=vmem, size = 0x12000, scoped, tag = 'internal scratch']
  %s0 = inlined_call_operand.hbm [shape: f32[2,4,16,16], index: 0, kind: input, shape index: {}]
  %s1 = inlined_call_operand.vmem [shape: f32[4], index: 1, kind: input, shape index: {}]
  %s2 = inlined_call_operand.vmem [shape: f32[4], index: 2, kind: input, shape index: {}]
  %s3 = inlined_call_operand.vmem [shape: f32[288], index: 3, kind: input, shape index: {}]
  %s4 = inlined_call_operand.vmem [shape: f32[8], index: 4, kind: input, shape index: {}]
  %s5 = inlined_call_operand.vmem [shape: f32[2,8,14,14], index: 5, kind: output, shape index: {}]
  %s6 = sld [smem:[#allocation0]]
  $region50: #{tpu_custom_call.1} parent=0
    _
  %s8 = ssub.s32 1, %s6
  %s9 = scalar_select 0, %s8, %s6
  $region1: #{tpu_custom_call.1} parent=0
    #allocation2 [shape = 'u8[65536]{0}', space=vmem, size = 0x10000, scoped, tag = 'input window, operand 0, single buffered']
    #allocation3 [shape = 's32[1]{0}', space=sflag, size = 0x4, scoped, tag = 'scoped memory for tpu_custom_call.1']
    #allocation4 [shape = 's32[1]{0}', space=sflag, size = 0x4, scoped, tag = 'scoped memory for tpu_custom_call.1']
    #allocation5 [shape = 'u8[512]{0}', space=smem, size = 0x200, scoped, tag = 'input window, operand 1, single buffered']
    #allocation6 [shape = 'u8[512]{0}', space=smem, size = 0x200, scoped, tag = 'input window, operand 2, single buffered']
    #allocation7 [shape = 's32[1]{0}', space=sflag, size = 0x4, scoped, tag = 'scoped memory for tpu_custom_call.1']
    #allocation8 [shape = 'u8[1536]{0}', space=smem, size = 0x600, scoped, tag = 'input window, operand 3, single buffered']
    #allocation9 [shape = 'u8[512]{0}', space=smem, size = 0x200, scoped, tag = 'input window, operand 4, single buffered']
    #allocation10 [shape = 's32[1]{0}', space=sflag, size = 0x4, scoped, tag = 'scoped memory for tpu_custom_call.1']
    %10 = vsyncpa [#allocation3], 0
    %11 = vsyncpa [#allocation4], 0
    %12 = vsyncpa [#allocation7], 0
    %13 = vsyncpa [#allocation10], 0
    // Predicated region
    $region2: #{tpu_custom_call.1} parent=1 // pred_check
      _
    $region3: #{tpu_custom_call.1} parent=1 // pred_check_branch
      %15 = sbr.rel (0) target = $region5
    $region4: #{tpu_custom_call.1} parent=1 // pred_region
      %s17 = ssub.s32 2048, 2048
      %18 = vsyncadd [#allocation3], %s17
      %s19 = sshll.u32 [#allocation2], 4
      %s20 = int_to_ptr.vmem [resolvable:$true] %s19
      %25 = dma.hbm_to_vmem [thread:$0]  %s0, 2048, %s20, [#allocation3], 128, 128, 8
    $region5: #{tpu_custom_call.1} parent=1 // pred_fallthru
      _
    // Predicated region
    $region6: #{tpu_custom_call.1} parent=1 // pred_check
      _
    $region7: #{tpu_custom_call.1} parent=1 // pred_check_branch
      %27 = sbr.rel (0) target = $region9
    $region8: #{tpu_custom_call.1} parent=1 // pred_region
      %s29 = ssub.s32 16, 16
      %30 = vsyncadd [#allocation4], %s29
      %s32 = sshll.u32 %s1, 4
      %s33 = int_to_ptr.vmem [resolvable:$true] %s32
      %35 = dma.vmem_to_smem %s33, 16, [#allocation5], [#allocation4]
    $region9: #{tpu_custom_call.1} parent=1 // pred_fallthru
      _
    // Predicated region
    $region10: #{tpu_custom_call.1} parent=1 // pred_check
      _
    $region11: #{tpu_custom_call.1} parent=1 // pred_check_branch
      %37 = sbr.rel (0) target = $region13
    $region12: #{tpu_custom_call.1} parent=1 // pred_region
      %s39 = ssub.s32 16, 16
      %40 = vsyncadd [#allocation7], %s39
      %s42 = sshll.u32 %s2, 4
      %s43 = int_to_ptr.vmem [resolvable:$true] %s42
      %45 = dma.vmem_to_smem %s43, 16, [#allocation6], [#allocation7]
    $region13: #{tpu_custom_call.1} parent=1 // pred_fallthru
      _
    // Predicated region
    $region14: #{tpu_custom_call.1} parent=1 // pred_check
      _
    $region15: #{tpu_custom_call.1} parent=1 // pred_check_branch
      %47 = sbr.rel (0) target = $region17
    $region16: #{tpu_custom_call.1} parent=1 // pred_region
      %s49 = ssub.s32 48, 48
      %50 = vsyncadd [#allocation7], %s49
      %s52 = sshll.u32 %s3, 4
      %s53 = int_to_ptr.vmem [resolvable:$true] %s52
      %55 = dma.vmem_to_smem %s53, 48, [#allocation8], [#allocation7]
    $region17: #{tpu_custom_call.1} parent=1 // pred_fallthru
      _
    // Predicated region
    $region18: #{tpu_custom_call.1} parent=1 // pred_check
      _
    $region19: #{tpu_custom_call.1} parent=1 // pred_check_branch
      %57 = sbr.rel (0) target = $region21
    $region20: #{tpu_custom_call.1} parent=1 // pred_region
      %s59 = ssub.s32 16, 16
      %60 = vsyncadd [#allocation10], %s59
      %s62 = sshll.u32 %s4, 4
      %s63 = int_to_ptr.vmem [resolvable:$true] %s62
      %65 = dma.vmem_to_smem %s63, 16, [#allocation9], [#allocation10]
    $region21: #{tpu_custom_call.1} parent=1 // pred_fallthru
      _
    // Predicated region
    $region22: #{tpu_custom_call.1} parent=1 // pred_check
      _
    $region23: #{tpu_custom_call.1} parent=1 // pred_check_branch
      %67 = sbr.rel (0) target = $region25
    $region24: #{tpu_custom_call.1} parent=1 // pred_region
      %68 = dma.done [#allocation3], 2048
    $region25: #{tpu_custom_call.1} parent=1 // pred_fallthru
      _
    // Predicated region
    $region26: #{tpu_custom_call.1} parent=1 // pred_check
      _
    $region27: #{tpu_custom_call.1} parent=1 // pred_check_branch
      %70 = sbr.rel (0) target = $region29
    $region28: #{tpu_custom_call.1} parent=1 // pred_region
      %71 = dma.done [#allocation4], 16
    $region29: #{tpu_custom_call.1} parent=1 // pred_fallthru
      _
    // Predicated region
    $region30: #{tpu_custom_call.1} parent=1 // pred_check
      _
    $region31: #{tpu_custom_call.1} parent=1 // pred_check_branch
      %73 = sbr.rel (0) target = $region33
    $region32: #{tpu_custom_call.1} parent=1 // pred_region
      %74 = dma.done [#allocation7], 16
    $region33: #{tpu_custom_call.1} parent=1 // pred_fallthru
      _
    // Predicated region
    $region34: #{tpu_custom_call.1} parent=1 // pred_check
      _
    $region35: #{tpu_custom_call.1} parent=1 // pred_check_branch
      %76 = sbr.rel (0) target = $region37
    $region36: #{tpu_custom_call.1} parent=1 // pred_region
      %77 = dma.done [#allocation7], 48
    $region37: #{tpu_custom_call.1} parent=1 // pred_fallthru
      _
    // Predicated region
    $region38: #{tpu_custom_call.1} parent=1 // pred_check
      _
    $region39: #{tpu_custom_call.1} parent=1 // pred_check_branch
      %79 = sbr.rel (0) target = $region41
    $region40: #{tpu_custom_call.1} parent=1 // pred_region
      %80 = dma.done [#allocation10], 16
    $region41: #{tpu_custom_call.1} parent=1 // pred_fallthru
      _
    %81 = sfence
    %v82 = vld [vmem:[#allocation2] sm:$0xff]
    %v83 = vld [vmem:[#allocation2 + $0x8] sm:$0xff]
    %v84 = vld [vmem:[#allocation2 + $0x10] sm:$0xff]
    %v85 = vld [vmem:[#allocation2 + $0x18] sm:$0xff]
    %v86 = vld [vmem:[#allocation2 + $0x20] sm:$0xff]
    %v87 = vld [vmem:[#allocation2 + $0x28] sm:$0xff]
    %v88 = vld [vmem:[#allocation2 + $0x30] sm:$0xff]
    %v89 = vld [vmem:[#allocation2 + $0x38] sm:$0xff]
    %vm90 = vcmask 130048
    %v91 = vsel %vm90, %v82, 0.0
    %v92 = vsel %vm90, %v84, 0.0
    %v93 = vadd.f32 %v91, %v92
    %v94 = vsel %vm90, %v86, 0.0
    %v95 = vadd.f32 %v93, %v94
    %v96 = vsel %vm90, %v88, 0.0
    %v97 = vadd.f32 %v95, %v96
    %v98 = vsel %vm90, %v83, 0.0
    %v99 = vsel %vm90, %v85, 0.0
    %v100 = vadd.f32 %v98, %v99
    %v101 = vsel %vm90, %v87, 0.0
    %v102 = vadd.f32 %v100, %v101
    %v103 = vsel %vm90, %v89, 0.0
    %v104 = vadd.f32 %v102, %v103
    %v105 = vrcp.pop 4.0
    %v106 = vmul.f32 %v97, %v105
    %v107 = vmul.f32 %v104, %v105
    %v108 = vsub.f32 %v82, %v106
    %v109 = vsub.f32 %v83, %v107
    %v110 = vsub.f32 %v84, %v106
    %v111 = vsub.f32 %v85, %v107
    %v112 = vsub.f32 %v86, %v106
    %v113 = vsub.f32 %v87, %v107
    %v114 = vsub.f32 %v88, %v106
    %v115 = vsub.f32 %v89, %v107
    %v116 = vmul.f32 %v108, %v108
    %v117 = vmul.f32 %v109, %v109
    %v118 = vmul.f32 %v110, %v110
    %v119 = vmul.f32 %v111, %v111
    %v120 = vmul.f32 %v112, %v112
    %v121 = vmul.f32 %v113, %v113
    %v122 = vmul.f32 %v114, %v114
    %v123 = vmul.f32 %v115, %v115
    %v124 = vsel %vm90, %v116, 0.0
    %v125 = vsel %vm90, %v118, 0.0
    %v126 = vadd.f32 %v124, %v125
    %v127 = vsel %vm90, %v120, 0.0
    %v128 = vadd.f32 %v126, %v127
    %v129 = vsel %vm90, %v122, 0.0
    %v130 = vadd.f32 %v128, %v129
    %v131 = vsel %vm90, %v117, 0.0
    %v132 = vsel %vm90, %v119, 0.0
    %v133 = vadd.f32 %v131, %v132
    %v134 = vsel %vm90, %v121, 0.0
    %v135 = vadd.f32 %v133, %v134
    %v136 = vsel %vm90, %v123, 0.0
    %v137 = vadd.f32 %v135, %v136
    %v138 = vmul.f32 %v130, %v105
    %v139 = vmul.f32 %v137, %v105
    %v140 = vadd.f32 %v138, 1e-06
    %v141 = vadd.f32 %v139, 1e-06
    %v142 = vrsqrt.pop %v140
    %v143 = vrsqrt.pop %v141
    %s144 = sld [smem:[#allocation9]]
    %v145 = vstv %s144
    %s146 = sld [smem:[#allocation9 + $0x1]]
    %v147 = vstv %s146
    %s148 = sld [smem:[#allocation9 + $0x2]]
    %v149 = vstv %s148
    %s150 = sld [smem:[#allocation9 + $0x3]]
    %v151 = vstv %s150
    %s152 = sld [smem:[#allocation9 + $0x4]]
    %v153 = vstv %s152
    %s154 = sld [smem:[#allocation9 + $0x5]]
    %v155 = vstv %s154
    %s156 = sld [smem:[#allocation9 + $0x6]]
    %v157 = vstv %s156
    %s158 = sld [smem:[#allocation9 + $0x7]]
    %v159 = vstv %s158
    %v160 = vmul.f32 %v108, %v142
    %v161 = vmul.f32 %v109, %v143
    %s162 = sld [smem:[#allocation5]]
    %v163 = vstv %s162
    %v164 = vmul.f32 %v160, %v163
    %v165 = vmul.f32 %v161, %v163
    %s166 = sld [smem:[#allocation6]]
    %v167 = vstv %s166
    %v168 = vadd.f32 %v164, %v167
    %v169 = vadd.f32 %v165, %v167
    %s170 = sld [smem:[#allocation8]]
    %v171 = vstv %s170
    %v172 = vmul.f32 %v171, %v168
    %v173 = vmul.f32 %v171, %v169
    %v174 = vadd.f32 %v145, %v172
    %v175 = vadd.f32 %v145, %v173
    %s176 = sld [smem:[#allocation8 + $0x24]]
    %v177 = vstv %s176
    %v178 = vmul.f32 %v177, %v168
    %v179 = vmul.f32 %v177, %v169
    %v180 = vadd.f32 %v147, %v178
    %v181 = vadd.f32 %v147, %v179
    %s182 = sld [smem:[#allocation8 + $0x48]]
    %v183 = vstv %s182
    %v184 = vmul.f32 %v183, %v168
    %v185 = vmul.f32 %v183, %v169
    %v186 = vadd.f32 %v149, %v184
    %v187 = vadd.f32 %v149, %v185
    %s188 = sld [smem:[#allocation8 + $0x6c]]
    %v189 = vstv %s188
    %v190 = vmul.f32 %v189, %v168
    %v191 = vmul.f32 %v189, %v169
    %v192 = vadd.f32 %v151, %v190
    %v193 = vadd.f32 %v151, %v191
    %s194 = sld [smem:[#allocation8 + $0x90]]
    %v195 = vstv %s194
    %v196 = vmul.f32 %v195, %v168
    %v197 = vmul.f32 %v195, %v169
    %v198 = vadd.f32 %v153, %v196
    %v199 = vadd.f32 %v153, %v197
    %s200 = sld [smem:[#allocation8 + $0xb4]]
    %v201 = vstv %s200
    %v202 = vmul.f32 %v201, %v168
    %v203 = vmul.f32 %v201, %v169
    %v204 = vadd.f32 %v155, %v202
    %v205 = vadd.f32 %v155, %v203
    %s206 = sld [smem:[#allocation8 + $0xd8]]
    %v207 = vstv %s206
    %v208 = vmul.f32 %v207, %v168
    %v209 = vmul.f32 %v207, %v169
    %v210 = vadd.f32 %v157, %v208
    %v211 = vadd.f32 %v157, %v209
    %s212 = sld [smem:[#allocation8 + $0xfc]]
    %v213 = vstv %s212
    %v214 = vmul.f32 %v213, %v168
    %v215 = vmul.f32 %v213, %v169
    %v216 = vadd.f32 %v159, %v214
    %v217 = vadd.f32 %v159, %v215
    %s218 = sld [smem:[#allocation8 + $0x1]]
    %v219 = vstv %s218
    %v220 = vmul.f32 %v219, %v168
    %v221 = vmul.f32 %v219, %v169
    %224 = vrot.lane.b32.xlu0 %v220, 127
    %v225 = vpop.permute.xlu0 %224
    %226 = vrot.lane.b32.xlu0 %v221, 127
    %v227 = vpop.permute.xlu0 %226
    %v230 = vadd.f32 %v174, %v225
    %v231 = vadd.f32 %v175, %v227
    %s232 = sld [smem:[#allocation8 + $0x25]]
    %v233 = vstv %s232
    %v234 = vmul.f32 %v233, %v168
    %v235 = vmul.f32 %v233, %v169
    %238 = vrot.lane.b32.xlu0 %v234, 127
    %v239 = vpop.permute.xlu0 %238
    %240 = vrot.lane.b32.xlu0 %v235, 127
    %v241 = vpop.permute.xlu0 %240
    %v244 = vadd.f32 %v180, %v239
    %v245 = vadd.f32 %v181, %v241
    %s246 = sld [smem:[#allocation8 + $0x49]]
    %v247 = vstv %s246
    %v248 = vmul.f32 %v247, %v168
    %v249 = vmul.f32 %v247, %v169
    %252 = vrot.lane.b32.xlu0 %v248, 127
    %v253 = vpop.permute.xlu0 %252
    %254 = vrot.lane.b32.xlu0 %v249, 127
    %v255 = vpop.permute.xlu0 %254
    %v258 = vadd.f32 %v186, %v253
    %v259 = vadd.f32 %v187, %v255
    %s260 = sld [smem:[#allocation8 + $0x6d]]
    %v261 = vstv %s260
    %v262 = vmul.f32 %v261, %v168
    %v263 = vmul.f32 %v261, %v169
    %266 = vrot.lane.b32.xlu0 %v262, 127
    %v267 = vpop.permute.xlu0 %266
    %268 = vrot.lane.b32.xlu0 %v263, 127
    %v269 = vpop.permute.xlu0 %268
    %v272 = vadd.f32 %v192, %v267
    %v273 = vadd.f32 %v193, %v269
    %s274 = sld [smem:[#allocation8 + $0x91]]
    %v275 = vstv %s274
    %v276 = vmul.f32 %v275, %v168
    %v277 = vmul.f32 %v275, %v169
    %280 = vrot.lane.b32.xlu0 %v276, 127
    %v281 = vpop.permute.xlu0 %280
    %282 = vrot.lane.b32.xlu0 %v277, 127
    %v283 = vpop.permute.xlu0 %282
    %v286 = vadd.f32 %v198, %v281
    %v287 = vadd.f32 %v199, %v283
    %s288 = sld [smem:[#allocation8 + $0xb5]]
    %v289 = vstv %s288
    %v290 = vmul.f32 %v289, %v168
    %v291 = vmul.f32 %v289, %v169
    %294 = vrot.lane.b32.xlu0 %v290, 127
    %v295 = vpop.permute.xlu0 %294
    %296 = vrot.lane.b32.xlu0 %v291, 127
    %v297 = vpop.permute.xlu0 %296
    %v300 = vadd.f32 %v204, %v295
    %v301 = vadd.f32 %v205, %v297
    %s302 = sld [smem:[#allocation8 + $0xd9]]
    %v303 = vstv %s302
    %v304 = vmul.f32 %v303, %v168
    %v305 = vmul.f32 %v303, %v169
    %308 = vrot.lane.b32.xlu0 %v304, 127
    %v309 = vpop.permute.xlu0 %308
    %310 = vrot.lane.b32.xlu0 %v305, 127
    %v311 = vpop.permute.xlu0 %310
    %v314 = vadd.f32 %v210, %v309
    %v315 = vadd.f32 %v211, %v311
    %s316 = sld [smem:[#allocation8 + $0xfd]]
    %v317 = vstv %s316
    %v318 = vmul.f32 %v317, %v168
    %v319 = vmul.f32 %v317, %v169
    %322 = vrot.lane.b32.xlu0 %v318, 127
    %v323 = vpop.permute.xlu0 %322
    %324 = vrot.lane.b32.xlu0 %v319, 127
    %v325 = vpop.permute.xlu0 %324
    %v328 = vadd.f32 %v216, %v323
    %v329 = vadd.f32 %v217, %v325
    %s330 = sld [smem:[#allocation8 + $0x2]]
    %v331 = vstv %s330
    %v332 = vmul.f32 %v331, %v168
    %v333 = vmul.f32 %v331, %v169
    %336 = vrot.lane.b32.xlu0 %v332, 126
    %v337 = vpop.permute.xlu0 %336
    %338 = vrot.lane.b32.xlu0 %v333, 126
    %v339 = vpop.permute.xlu0 %338
    %v342 = vadd.f32 %v230, %v337
    %v343 = vadd.f32 %v231, %v339
    %s344 = sld [smem:[#allocation8 + $0x26]]
    %v345 = vstv %s344
    %v346 = vmul.f32 %v345, %v168
    %v347 = vmul.f32 %v345, %v169
    %350 = vrot.lane.b32.xlu0 %v346, 126
    %v351 = vpop.permute.xlu0 %350
    %352 = vrot.lane.b32.xlu0 %v347, 126
    %v353 = vpop.permute.xlu0 %352
    %v356 = vadd.f32 %v244, %v351
    %v357 = vadd.f32 %v245, %v353
    %s358 = sld [smem:[#allocation8 + $0x4a]]
    %v359 = vstv %s358
    %v360 = vmul.f32 %v359, %v168
    %v361 = vmul.f32 %v359, %v169
    %364 = vrot.lane.b32.xlu0 %v360, 126
    %v365 = vpop.permute.xlu0 %364
    %366 = vrot.lane.b32.xlu0 %v361, 126
    %v367 = vpop.permute.xlu0 %366
    %v370 = vadd.f32 %v258, %v365
    %v371 = vadd.f32 %v259, %v367
    %s372 = sld [smem:[#allocation8 + $0x6e]]
    %v373 = vstv %s372
    %v374 = vmul.f32 %v373, %v168
    %v375 = vmul.f32 %v373, %v169
    %378 = vrot.lane.b32.xlu0 %v374, 126
    %v379 = vpop.permute.xlu0 %378
    %380 = vrot.lane.b32.xlu0 %v375, 126
    %v381 = vpop.permute.xlu0 %380
    %v384 = vadd.f32 %v272, %v379
    %v385 = vadd.f32 %v273, %v381
    %s386 = sld [smem:[#allocation8 + $0x92]]
    %v387 = vstv %s386
    %v388 = vmul.f32 %v387, %v168
    %v389 = vmul.f32 %v387, %v169
    %392 = vrot.lane.b32.xlu0 %v388, 126
    %v393 = vpop.permute.xlu0 %392
    %394 = vrot.lane.b32.xlu0 %v389, 126
    %v395 = vpop.permute.xlu0 %394
    %v398 = vadd.f32 %v286, %v393
    %v399 = vadd.f32 %v287, %v395
    %s400 = sld [smem:[#allocation8 + $0xb6]]
    %v401 = vstv %s400
    %v402 = vmul.f32 %v401, %v168
    %v403 = vmul.f32 %v401, %v169
    %406 = vrot.lane.b32.xlu0 %v402, 126
    %v407 = vpop.permute.xlu0 %406
    %408 = vrot.lane.b32.xlu0 %v403, 126
    %v409 = vpop.permute.xlu0 %408
    %v412 = vadd.f32 %v300, %v407
    %v413 = vadd.f32 %v301, %v409
    %s414 = sld [smem:[#allocation8 + $0xda]]
    %v415 = vstv %s414
    %v416 = vmul.f32 %v415, %v168
    %v417 = vmul.f32 %v415, %v169
    %420 = vrot.lane.b32.xlu0 %v416, 126
    %v421 = vpop.permute.xlu0 %420
    %422 = vrot.lane.b32.xlu0 %v417, 126
    %v423 = vpop.permute.xlu0 %422
    %v426 = vadd.f32 %v314, %v421
    %v427 = vadd.f32 %v315, %v423
    %s428 = sld [smem:[#allocation8 + $0xfe]]
    %v429 = vstv %s428
    %v430 = vmul.f32 %v429, %v168
    %v431 = vmul.f32 %v429, %v169
    %434 = vrot.lane.b32.xlu0 %v430, 126
    %v435 = vpop.permute.xlu0 %434
    %436 = vrot.lane.b32.xlu0 %v431, 126
    %v437 = vpop.permute.xlu0 %436
    %v440 = vadd.f32 %v328, %v435
    %v441 = vadd.f32 %v329, %v437
    %s442 = sld [smem:[#allocation8 + $0x3]]
    %v443 = vstv %s442
    %v444 = vmul.f32 %v443, %v168
    %v445 = vmul.f32 %v443, %v169
    %vm448 = vcmask 1046528
    %v449 = vrot.slane %v444, 1
    %v450 = vrot.slane %v445, 1
    %v451 = vsel %vm448, %v449, %v450
    %v454 = vadd.f32 %v342, %v451
    %v455 = vadd.f32 %v343, %v450
    %s456 = sld [smem:[#allocation8 + $0x27]]
    %v457 = vstv %s456
    %v458 = vmul.f32 %v457, %v168
    %v459 = vmul.f32 %v457, %v169
    %v462 = vrot.slane %v458, 1
    %v463 = vrot.slane %v459, 1
    %v464 = vsel %vm448, %v462, %v463
    %v467 = vadd.f32 %v356, %v464
    %v468 = vadd.f32 %v357, %v463
    %s469 = sld [smem:[#allocation8 + $0x4b]]
    %v470 = vstv %s469
    %v471 = vmul.f32 %v470, %v168
    %v472 = vmul.f32 %v470, %v169
    %v475 = vrot.slane %v471, 1
    %v476 = vrot.slane %v472, 1
    %v477 = vsel %vm448, %v475, %v476
    %v480 = vadd.f32 %v370, %v477
    %v481 = vadd.f32 %v371, %v476
    %s482 = sld [smem:[#allocation8 + $0x6f]]
    %v483 = vstv %s482
    %v484 = vmul.f32 %v483, %v168
    %v485 = vmul.f32 %v483, %v169
    %v488 = vrot.slane %v484, 1
    %v489 = vrot.slane %v485, 1
    %v490 = vsel %vm448, %v488, %v489
    %v493 = vadd.f32 %v384, %v490
    %v494 = vadd.f32 %v385, %v489
    %s495 = sld [smem:[#allocation8 + $0x93]]
    %v496 = vstv %s495
    %v497 = vmul.f32 %v496, %v168
    %v498 = vmul.f32 %v496, %v169
    %v501 = vrot.slane %v497, 1
    %v502 = vrot.slane %v498, 1
    %v503 = vsel %vm448, %v501, %v502
    %v506 = vadd.f32 %v398, %v503
    %v507 = vadd.f32 %v399, %v502
    %s508 = sld [smem:[#allocation8 + $0xb7]]
    %v509 = vstv %s508
    %v510 = vmul.f32 %v509, %v168
    %v511 = vmul.f32 %v509, %v169
    %v514 = vrot.slane %v510, 1
    %v515 = vrot.slane %v511, 1
    %v516 = vsel %vm448, %v514, %v515
    %v519 = vadd.f32 %v412, %v516
    %v520 = vadd.f32 %v413, %v515
    %s521 = sld [smem:[#allocation8 + $0xdb]]
    %v522 = vstv %s521
    %v523 = vmul.f32 %v522, %v168
    %v524 = vmul.f32 %v522, %v169
    %v527 = vrot.slane %v523, 1
    %v528 = vrot.slane %v524, 1
    %v529 = vsel %vm448, %v527, %v528
    %v532 = vadd.f32 %v426, %v529
    %v533 = vadd.f32 %v427, %v528
    %s534 = sld [smem:[#allocation8 + $0xff]]
    %v535 = vstv %s534
    %v536 = vmul.f32 %v535, %v168
    %v537 = vmul.f32 %v535, %v169
    %v540 = vrot.slane %v536, 1
    %v541 = vrot.slane %v537, 1
    %v542 = vsel %vm448, %v540, %v541
    %v545 = vadd.f32 %v440, %v542
    %v546 = vadd.f32 %v441, %v541
    %s547 = sld [smem:[#allocation8 + $0x4]]
    %v548 = vstv %s547
    %v549 = vmul.f32 %v548, %v168
    %v550 = vmul.f32 %v548, %v169
    %v553 = vrot.slane %v549, 1
    %v554 = vrot.slane %v550, 1
    %v555 = vsel %vm448, %v553, %v554
    %556 = vrot.lane.b32.xlu0 %v555, 127
    %v557 = vpop.permute.xlu0 %556
    %558 = vrot.lane.b32.xlu0 %v554, 127
    %v559 = vpop.permute.xlu0 %558
    %v562 = vadd.f32 %v454, %v557
    %v563 = vadd.f32 %v455, %v559
    %s564 = sld [smem:[#allocation8 + $0x28]]
    %v565 = vstv %s564
    %v566 = vmul.f32 %v565, %v168
    %v567 = vmul.f32 %v565, %v169
    %v570 = vrot.slane %v566, 1
    %v571 = vrot.slane %v567, 1
    %v572 = vsel %vm448, %v570, %v571
    %573 = vrot.lane.b32.xlu0 %v572, 127
    %v574 = vpop.permute.xlu0 %573
    %575 = vrot.lane.b32.xlu0 %v571, 127
    %v576 = vpop.permute.xlu0 %575
    %v579 = vadd.f32 %v467, %v574
    %v580 = vadd.f32 %v468, %v576
    %s581 = sld [smem:[#allocation8 + $0x4c]]
    %v582 = vstv %s581
    %v583 = vmul.f32 %v582, %v168
    %v584 = vmul.f32 %v582, %v169
    %v587 = vrot.slane %v583, 1
    %v588 = vrot.slane %v584, 1
    %v589 = vsel %vm448, %v587, %v588
    %590 = vrot.lane.b32.xlu0 %v589, 127
    %v591 = vpop.permute.xlu0 %590
    %592 = vrot.lane.b32.xlu0 %v588, 127
    %v593 = vpop.permute.xlu0 %592
    %v596 = vadd.f32 %v480, %v591
    %v597 = vadd.f32 %v481, %v593
    %s598 = sld [smem:[#allocation8 + $0x70]]
    %v599 = vstv %s598
    %v600 = vmul.f32 %v599, %v168
    %v601 = vmul.f32 %v599, %v169
    %v604 = vrot.slane %v600, 1
    %v605 = vrot.slane %v601, 1
    %v606 = vsel %vm448, %v604, %v605
    %607 = vrot.lane.b32.xlu0 %v606, 127
    %v608 = vpop.permute.xlu0 %607
    %609 = vrot.lane.b32.xlu0 %v605, 127
    %v610 = vpop.permute.xlu0 %609
    %v613 = vadd.f32 %v493, %v608
    %v614 = vadd.f32 %v494, %v610
    %s615 = sld [smem:[#allocation8 + $0x94]]
    %v616 = vstv %s615
    %v617 = vmul.f32 %v616, %v168
    %v618 = vmul.f32 %v616, %v169
    %v621 = vrot.slane %v617, 1
    %v622 = vrot.slane %v618, 1
    %v623 = vsel %vm448, %v621, %v622
    %624 = vrot.lane.b32.xlu0 %v623, 127
    %v625 = vpop.permute.xlu0 %624
    %626 = vrot.lane.b32.xlu0 %v622, 127
    %v627 = vpop.permute.xlu0 %626
    %v630 = vadd.f32 %v506, %v625
    %v631 = vadd.f32 %v507, %v627
    %s632 = sld [smem:[#allocation8 + $0xb8]]
    %v633 = vstv %s632
    %v634 = vmul.f32 %v633, %v168
    %v635 = vmul.f32 %v633, %v169
    %v638 = vrot.slane %v634, 1
    %v639 = vrot.slane %v635, 1
    %v640 = vsel %vm448, %v638, %v639
    %641 = vrot.lane.b32.xlu0 %v640, 127
    %v642 = vpop.permute.xlu0 %641
    %643 = vrot.lane.b32.xlu0 %v639, 127
    %v644 = vpop.permute.xlu0 %643
    %v647 = vadd.f32 %v519, %v642
    %v648 = vadd.f32 %v520, %v644
    %s649 = sld [smem:[#allocation8 + $0xdc]]
    %v650 = vstv %s649
    %v651 = vmul.f32 %v650, %v168
    %v652 = vmul.f32 %v650, %v169
    %v655 = vrot.slane %v651, 1
    %v656 = vrot.slane %v652, 1
    %v657 = vsel %vm448, %v655, %v656
    %658 = vrot.lane.b32.xlu0 %v657, 127
    %v659 = vpop.permute.xlu0 %658
    %660 = vrot.lane.b32.xlu0 %v656, 127
    %v661 = vpop.permute.xlu0 %660
    %v664 = vadd.f32 %v532, %v659
    %v665 = vadd.f32 %v533, %v661
    %s666 = sld [smem:[#allocation8 + $0x100]]
    %v667 = vstv %s666
    %v668 = vmul.f32 %v667, %v168
    %v669 = vmul.f32 %v667, %v169
    %v672 = vrot.slane %v668, 1
    %v673 = vrot.slane %v669, 1
    %v674 = vsel %vm448, %v672, %v673
    %675 = vrot.lane.b32.xlu0 %v674, 127
    %v676 = vpop.permute.xlu0 %675
    %677 = vrot.lane.b32.xlu0 %v673, 127
    %v678 = vpop.permute.xlu0 %677
    %v681 = vadd.f32 %v545, %v676
    %v682 = vadd.f32 %v546, %v678
    %s683 = sld [smem:[#allocation8 + $0x5]]
    %v684 = vstv %s683
    %v685 = vmul.f32 %v684, %v168
    %v686 = vmul.f32 %v684, %v169
    %v689 = vrot.slane %v685, 1
    %v690 = vrot.slane %v686, 1
    %v691 = vsel %vm448, %v689, %v690
    %692 = vrot.lane.b32.xlu0 %v691, 126
    %v693 = vpop.permute.xlu0 %692
    %694 = vrot.lane.b32.xlu0 %v690, 126
    %v695 = vpop.permute.xlu0 %694
    %v698 = vadd.f32 %v562, %v693
    %v699 = vadd.f32 %v563, %v695
    %s700 = sld [smem:[#allocation8 + $0x29]]
    %v701 = vstv %s700
    %v702 = vmul.f32 %v701, %v168
    %v703 = vmul.f32 %v701, %v169
    %v706 = vrot.slane %v702, 1
    %v707 = vrot.slane %v703, 1
    %v708 = vsel %vm448, %v706, %v707
    %709 = vrot.lane.b32.xlu0 %v708, 126
    %v710 = vpop.permute.xlu0 %709
    %711 = vrot.lane.b32.xlu0 %v707, 126
    %v712 = vpop.permute.xlu0 %711
    %v715 = vadd.f32 %v579, %v710
    %v716 = vadd.f32 %v580, %v712
    %s717 = sld [smem:[#allocation8 + $0x4d]]
    %v718 = vstv %s717
    %v719 = vmul.f32 %v718, %v168
    %v720 = vmul.f32 %v718, %v169
    %v723 = vrot.slane %v719, 1
    %v724 = vrot.slane %v720, 1
    %v725 = vsel %vm448, %v723, %v724
    %726 = vrot.lane.b32.xlu0 %v725, 126
    %v727 = vpop.permute.xlu0 %726
    %728 = vrot.lane.b32.xlu0 %v724, 126
    %v729 = vpop.permute.xlu0 %728
    %v732 = vadd.f32 %v596, %v727
    %v733 = vadd.f32 %v597, %v729
    %s734 = sld [smem:[#allocation8 + $0x71]]
    %v735 = vstv %s734
    %v736 = vmul.f32 %v735, %v168
    %v737 = vmul.f32 %v735, %v169
    %v740 = vrot.slane %v736, 1
    %v741 = vrot.slane %v737, 1
    %v742 = vsel %vm448, %v740, %v741
    %743 = vrot.lane.b32.xlu0 %v742, 126
    %v744 = vpop.permute.xlu0 %743
    %745 = vrot.lane.b32.xlu0 %v741, 126
    %v746 = vpop.permute.xlu0 %745
    %v749 = vadd.f32 %v613, %v744
    %v750 = vadd.f32 %v614, %v746
    %s751 = sld [smem:[#allocation8 + $0x95]]
    %v752 = vstv %s751
    %v753 = vmul.f32 %v752, %v168
    %v754 = vmul.f32 %v752, %v169
    %v757 = vrot.slane %v753, 1
    %v758 = vrot.slane %v754, 1
    %v759 = vsel %vm448, %v757, %v758
    %760 = vrot.lane.b32.xlu0 %v759, 126
    %v761 = vpop.permute.xlu0 %760
    %762 = vrot.lane.b32.xlu0 %v758, 126
    %v763 = vpop.permute.xlu0 %762
    %v766 = vadd.f32 %v630, %v761
    %v767 = vadd.f32 %v631, %v763
    %s768 = sld [smem:[#allocation8 + $0xb9]]
    %v769 = vstv %s768
    %v770 = vmul.f32 %v769, %v168
    %v771 = vmul.f32 %v769, %v169
    %v774 = vrot.slane %v770, 1
    %v775 = vrot.slane %v771, 1
    %v776 = vsel %vm448, %v774, %v775
    %777 = vrot.lane.b32.xlu0 %v776, 126
    %v778 = vpop.permute.xlu0 %777
    %779 = vrot.lane.b32.xlu0 %v775, 126
    %v780 = vpop.permute.xlu0 %779
    %v783 = vadd.f32 %v647, %v778
    %v784 = vadd.f32 %v648, %v780
    %s785 = sld [smem:[#allocation8 + $0xdd]]
    %v786 = vstv %s785
    %v787 = vmul.f32 %v786, %v168
    %v788 = vmul.f32 %v786, %v169
    %v791 = vrot.slane %v787, 1
    %v792 = vrot.slane %v788, 1
    %v793 = vsel %vm448, %v791, %v792
    %794 = vrot.lane.b32.xlu0 %v793, 126
    %v795 = vpop.permute.xlu0 %794
    %796 = vrot.lane.b32.xlu0 %v792, 126
    %v797 = vpop.permute.xlu0 %796
    %v800 = vadd.f32 %v664, %v795
    %v801 = vadd.f32 %v665, %v797
    %s802 = sld [smem:[#allocation8 + $0x101]]
    %v803 = vstv %s802
    %v804 = vmul.f32 %v803, %v168
    %v805 = vmul.f32 %v803, %v169
    %v808 = vrot.slane %v804, 1
    %v809 = vrot.slane %v805, 1
    %v810 = vsel %vm448, %v808, %v809
    %811 = vrot.lane.b32.xlu0 %v810, 126
    %v812 = vpop.permute.xlu0 %811
    %813 = vrot.lane.b32.xlu0 %v809, 126
    %v814 = vpop.permute.xlu0 %813
    %v817 = vadd.f32 %v681, %v812
    %v818 = vadd.f32 %v682, %v814
    %s819 = sld [smem:[#allocation8 + $0x6]]
    %v820 = vstv %s819
    %v821 = vmul.f32 %v820, %v168
    %v822 = vmul.f32 %v820, %v169
    %vm825 = vcmask 1045504
    %v826 = vrot.slane %v821, 2
    %v827 = vrot.slane %v822, 2
    %v828 = vsel %vm825, %v826, %v827
    %v831 = vadd.f32 %v698, %v828
    %v832 = vadd.f32 %v699, %v827
    %s833 = sld [smem:[#allocation8 + $0x2a]]
    %v834 = vstv %s833
    %v835 = vmul.f32 %v834, %v168
    %v836 = vmul.f32 %v834, %v169
    %v839 = vrot.slane %v835, 2
    %v840 = vrot.slane %v836, 2
    %v841 = vsel %vm825, %v839, %v840
    %v844 = vadd.f32 %v715, %v841
    %v845 = vadd.f32 %v716, %v840
    %s846 = sld [smem:[#allocation8 + $0x4e]]
    %v847 = vstv %s846
    %v848 = vmul.f32 %v847, %v168
    %v849 = vmul.f32 %v847, %v169
    %v852 = vrot.slane %v848, 2
    %v853 = vrot.slane %v849, 2
    %v854 = vsel %vm825, %v852, %v853
    %v857 = vadd.f32 %v732, %v854
    %v858 = vadd.f32 %v733, %v853
    %s859 = sld [smem:[#allocation8 + $0x72]]
    %v860 = vstv %s859
    %v861 = vmul.f32 %v860, %v168
    %v862 = vmul.f32 %v860, %v169
    %v865 = vrot.slane %v861, 2
    %v866 = vrot.slane %v862, 2
    %v867 = vsel %vm825, %v865, %v866
    %v870 = vadd.f32 %v749, %v867
    %v871 = vadd.f32 %v750, %v866
    %s872 = sld [smem:[#allocation8 + $0x96]]
    %v873 = vstv %s872
    %v874 = vmul.f32 %v873, %v168
    %v875 = vmul.f32 %v873, %v169
    %v878 = vrot.slane %v874, 2
    %v879 = vrot.slane %v875, 2
    %v880 = vsel %vm825, %v878, %v879
    %v883 = vadd.f32 %v766, %v880
    %v884 = vadd.f32 %v767, %v879
    %s885 = sld [smem:[#allocation8 + $0xba]]
    %v886 = vstv %s885
    %v887 = vmul.f32 %v886, %v168
    %v888 = vmul.f32 %v886, %v169
    %v891 = vrot.slane %v887, 2
    %v892 = vrot.slane %v888, 2
    %v893 = vsel %vm825, %v891, %v892
    %v896 = vadd.f32 %v783, %v893
    %v897 = vadd.f32 %v784, %v892
    %s898 = sld [smem:[#allocation8 + $0xde]]
    %v899 = vstv %s898
    %v900 = vmul.f32 %v899, %v168
    %v901 = vmul.f32 %v899, %v169
    %v904 = vrot.slane %v900, 2
    %v905 = vrot.slane %v901, 2
    %v906 = vsel %vm825, %v904, %v905
    %v909 = vadd.f32 %v800, %v906
    %v910 = vadd.f32 %v801, %v905
    %s911 = sld [smem:[#allocation8 + $0x102]]
    %v912 = vstv %s911
    %v913 = vmul.f32 %v912, %v168
    %v914 = vmul.f32 %v912, %v169
    %v917 = vrot.slane %v913, 2
    %v918 = vrot.slane %v914, 2
    %v919 = vsel %vm825, %v917, %v918
    %v922 = vadd.f32 %v817, %v919
    %v923 = vadd.f32 %v818, %v918
    %s924 = sld [smem:[#allocation8 + $0x7]]
    %v925 = vstv %s924
    %v926 = vmul.f32 %v925, %v168
    %v927 = vmul.f32 %v925, %v169
    %v930 = vrot.slane %v926, 2
    %v931 = vrot.slane %v927, 2
    %v932 = vsel %vm825, %v930, %v931
    %933 = vrot.lane.b32.xlu0 %v932, 127
    %v934 = vpop.permute.xlu0 %933
    %935 = vrot.lane.b32.xlu0 %v931, 127
    %v936 = vpop.permute.xlu0 %935
    %v939 = vadd.f32 %v831, %v934
    %v940 = vadd.f32 %v832, %v936
    %s941 = sld [smem:[#allocation8 + $0x2b]]
    %v942 = vstv %s941
    %v943 = vmul.f32 %v942, %v168
    %v944 = vmul.f32 %v942, %v169
    %v947 = vrot.slane %v943, 2
    %v948 = vrot.slane %v944, 2
    %v949 = vsel %vm825, %v947, %v948
    %950 = vrot.lane.b32.xlu0 %v949, 127
    %v951 = vpop.permute.xlu0 %950
    %952 = vrot.lane.b32.xlu0 %v948, 127
    %v953 = vpop.permute.xlu0 %952
    %v956 = vadd.f32 %v844, %v951
    %v957 = vadd.f32 %v845, %v953
    %s958 = sld [smem:[#allocation8 + $0x4f]]
    %v959 = vstv %s958
    %v960 = vmul.f32 %v959, %v168
    %v961 = vmul.f32 %v959, %v169
    %v964 = vrot.slane %v960, 2
    %v965 = vrot.slane %v961, 2
    %v966 = vsel %vm825, %v964, %v965
    %967 = vrot.lane.b32.xlu0 %v966, 127
    %v968 = vpop.permute.xlu0 %967
    %969 = vrot.lane.b32.xlu0 %v965, 127
    %v970 = vpop.permute.xlu0 %969
    %v973 = vadd.f32 %v857, %v968
    %v974 = vadd.f32 %v858, %v970
    %s975 = sld [smem:[#allocation8 + $0x73]]
    %v976 = vstv %s975
    %v977 = vmul.f32 %v976, %v168
    %v978 = vmul.f32 %v976, %v169
    %v981 = vrot.slane %v977, 2
    %v982 = vrot.slane %v978, 2
    %v983 = vsel %vm825, %v981, %v982
    %984 = vrot.lane.b32.xlu0 %v983, 127
    %v985 = vpop.permute.xlu0 %984
    %986 = vrot.lane.b32.xlu0 %v982, 127
    %v987 = vpop.permute.xlu0 %986
    %v990 = vadd.f32 %v870, %v985
    %v991 = vadd.f32 %v871, %v987
    %s992 = sld [smem:[#allocation8 + $0x97]]
    %v993 = vstv %s992
    %v994 = vmul.f32 %v993, %v168
    %v995 = vmul.f32 %v993, %v169
    %v998 = vrot.slane %v994, 2
    %v999 = vrot.slane %v995, 2
    %v1000 = vsel %vm825, %v998, %v999
    %1001 = vrot.lane.b32.xlu0 %v1000, 127
    %v1002 = vpop.permute.xlu0 %1001
    %1003 = vrot.lane.b32.xlu0 %v999, 127
    %v1004 = vpop.permute.xlu0 %1003
    %v1007 = vadd.f32 %v883, %v1002
    %v1008 = vadd.f32 %v884, %v1004
    %s1009 = sld [smem:[#allocation8 + $0xbb]]
    %v1010 = vstv %s1009
    %v1011 = vmul.f32 %v1010, %v168
    %v1012 = vmul.f32 %v1010, %v169
    %v1015 = vrot.slane %v1011, 2
    %v1016 = vrot.slane %v1012, 2
    %v1017 = vsel %vm825, %v1015, %v1016
    %1018 = vrot.lane.b32.xlu0 %v1017, 127
    %v1019 = vpop.permute.xlu0 %1018
    %1020 = vrot.lane.b32.xlu0 %v1016, 127
    %v1021 = vpop.permute.xlu0 %1020
    %v1024 = vadd.f32 %v896, %v1019
    %v1025 = vadd.f32 %v897, %v1021
    %s1026 = sld [smem:[#allocation8 + $0xdf]]
    %v1027 = vstv %s1026
    %v1028 = vmul.f32 %v1027, %v168
    %v1029 = vmul.f32 %v1027, %v169
    %v1032 = vrot.slane %v1028, 2
    %v1033 = vrot.slane %v1029, 2
    %v1034 = vsel %vm825, %v1032, %v1033
    %1035 = vrot.lane.b32.xlu0 %v1034, 127
    %v1036 = vpop.permute.xlu0 %1035
    %1037 = vrot.lane.b32.xlu0 %v1033, 127
    %v1038 = vpop.permute.xlu0 %1037
    %v1041 = vadd.f32 %v909, %v1036
    %v1042 = vadd.f32 %v910, %v1038
    %s1043 = sld [smem:[#allocation8 + $0x103]]
    %v1044 = vstv %s1043
    %v1045 = vmul.f32 %v1044, %v168
    %v1046 = vmul.f32 %v1044, %v169
    %v1049 = vrot.slane %v1045, 2
    %v1050 = vrot.slane %v1046, 2
    %v1051 = vsel %vm825, %v1049, %v1050
    %1052 = vrot.lane.b32.xlu0 %v1051, 127
    %v1053 = vpop.permute.xlu0 %1052
    %1054 = vrot.lane.b32.xlu0 %v1050, 127
    %v1055 = vpop.permute.xlu0 %1054
    %v1058 = vadd.f32 %v922, %v1053
    %v1059 = vadd.f32 %v923, %v1055
    %s1060 = sld [smem:[#allocation8 + $0x8]]
    %v1061 = vstv %s1060
    %v1062 = vmul.f32 %v1061, %v168
    %v1063 = vmul.f32 %v1061, %v169
    %v1066 = vrot.slane %v1062, 2
    %v1067 = vrot.slane %v1063, 2
    %v1068 = vsel %vm825, %v1066, %v1067
    %1069 = vrot.lane.b32.xlu0 %v1068, 126
    %v1070 = vpop.permute.xlu0 %1069
    %1071 = vrot.lane.b32.xlu0 %v1067, 126
    %v1072 = vpop.permute.xlu0 %1071
    %v1075 = vadd.f32 %v939, %v1070
    %v1076 = vadd.f32 %v940, %v1072
    %s1077 = sld [smem:[#allocation8 + $0x2c]]
    %v1078 = vstv %s1077
    %v1079 = vmul.f32 %v1078, %v168
    %v1080 = vmul.f32 %v1078, %v169
    %v1083 = vrot.slane %v1079, 2
    %v1084 = vrot.slane %v1080, 2
    %v1085 = vsel %vm825, %v1083, %v1084
    %1086 = vrot.lane.b32.xlu0 %v1085, 126
    %v1087 = vpop.permute.xlu0 %1086
    %1088 = vrot.lane.b32.xlu0 %v1084, 126
    %v1089 = vpop.permute.xlu0 %1088
    %v1092 = vadd.f32 %v956, %v1087
    %v1093 = vadd.f32 %v957, %v1089
    %s1094 = sld [smem:[#allocation8 + $0x50]]
    %v1095 = vstv %s1094
    %v1096 = vmul.f32 %v1095, %v168
    %v1097 = vmul.f32 %v1095, %v169
    %v1100 = vrot.slane %v1096, 2
    %v1101 = vrot.slane %v1097, 2
    %v1102 = vsel %vm825, %v1100, %v1101
    %1103 = vrot.lane.b32.xlu0 %v1102, 126
    %v1104 = vpop.permute.xlu0 %1103
    %1105 = vrot.lane.b32.xlu0 %v1101, 126
    %v1106 = vpop.permute.xlu0 %1105
    %v1109 = vadd.f32 %v973, %v1104
    %v1110 = vadd.f32 %v974, %v1106
    %s1111 = sld [smem:[#allocation8 + $0x74]]
    %v1112 = vstv %s1111
    %v1113 = vmul.f32 %v1112, %v168
    %v1114 = vmul.f32 %v1112, %v169
    %v1117 = vrot.slane %v1113, 2
    %v1118 = vrot.slane %v1114, 2
    %v1119 = vsel %vm825, %v1117, %v1118
    %1120 = vrot.lane.b32.xlu0 %v1119, 126
    %v1121 = vpop.permute.xlu0 %1120
    %1122 = vrot.lane.b32.xlu0 %v1118, 126
    %v1123 = vpop.permute.xlu0 %1122
    %v1126 = vadd.f32 %v990, %v1121
    %v1127 = vadd.f32 %v991, %v1123
    %s1128 = sld [smem:[#allocation8 + $0x98]]
    %v1129 = vstv %s1128
    %v1130 = vmul.f32 %v1129, %v168
    %v1131 = vmul.f32 %v1129, %v169
    %v1134 = vrot.slane %v1130, 2
    %v1135 = vrot.slane %v1131, 2
    %v1136 = vsel %vm825, %v1134, %v1135
    %1137 = vrot.lane.b32.xlu0 %v1136, 126
    %v1138 = vpop.permute.xlu0 %1137
    %1139 = vrot.lane.b32.xlu0 %v1135, 126
    %v1140 = vpop.permute.xlu0 %1139
    %v1143 = vadd.f32 %v1007, %v1138
    %v1144 = vadd.f32 %v1008, %v1140
    %s1145 = sld [smem:[#allocation8 + $0xbc]]
    %v1146 = vstv %s1145
    %v1147 = vmul.f32 %v1146, %v168
    %v1148 = vmul.f32 %v1146, %v169
    %v1151 = vrot.slane %v1147, 2
    %v1152 = vrot.slane %v1148, 2
    %v1153 = vsel %vm825, %v1151, %v1152
    %1154 = vrot.lane.b32.xlu0 %v1153, 126
    %v1155 = vpop.permute.xlu0 %1154
    %1156 = vrot.lane.b32.xlu0 %v1152, 126
    %v1157 = vpop.permute.xlu0 %1156
    %v1160 = vadd.f32 %v1024, %v1155
    %v1161 = vadd.f32 %v1025, %v1157
    %s1162 = sld [smem:[#allocation8 + $0xe0]]
    %v1163 = vstv %s1162
    %v1164 = vmul.f32 %v1163, %v168
    %v1165 = vmul.f32 %v1163, %v169
    %v1168 = vrot.slane %v1164, 2
    %v1169 = vrot.slane %v1165, 2
    %v1170 = vsel %vm825, %v1168, %v1169
    %1171 = vrot.lane.b32.xlu0 %v1170, 126
    %v1172 = vpop.permute.xlu0 %1171
    %1173 = vrot.lane.b32.xlu0 %v1169, 126
    %v1174 = vpop.permute.xlu0 %1173
    %v1177 = vadd.f32 %v1041, %v1172
    %v1178 = vadd.f32 %v1042, %v1174
    %s1179 = sld [smem:[#allocation8 + $0x104]]
    %v1180 = vstv %s1179
    %v1181 = vmul.f32 %v1180, %v168
    %v1182 = vmul.f32 %v1180, %v169
    %v1185 = vrot.slane %v1181, 2
    %v1186 = vrot.slane %v1182, 2
    %v1187 = vsel %vm825, %v1185, %v1186
    %1188 = vrot.lane.b32.xlu0 %v1187, 126
    %v1189 = vpop.permute.xlu0 %1188
    %1190 = vrot.lane.b32.xlu0 %v1186, 126
    %v1191 = vpop.permute.xlu0 %1190
    %v1194 = vadd.f32 %v1058, %v1189
    %v1195 = vadd.f32 %v1059, %v1191
    %v1196 = vmul.f32 %v110, %v142
    %v1197 = vmul.f32 %v111, %v143
    %s1198 = sld [smem:[#allocation5 + $0x1]]
    %v1199 = vstv %s1198
    %v1200 = vmul.f32 %v1196, %v1199
    %v1201 = vmul.f32 %v1197, %v1199
    %s1202 = sld [smem:[#allocation6 + $0x1]]
    %v1203 = vstv %s1202
    %v1204 = vadd.f32 %v1200, %v1203
    %v1205 = vadd.f32 %v1201, %v1203
    %s1206 = sld [smem:[#allocation8 + $0x9]]
    %v1207 = vstv %s1206
    %v1208 = vmul.f32 %v1207, %v1204
    %v1209 = vmul.f32 %v1207, %v1205
    %v1210 = vadd.f32 %v1075, %v1208
    %v1211 = vadd.f32 %v1076, %v1209
    %s1212 = sld [smem:[#allocation8 + $0x2d]]
    %v1213 = vstv %s1212
    %v1214 = vmul.f32 %v1213, %v1204
    %v1215 = vmul.f32 %v1213, %v1205
    %v1216 = vadd.f32 %v1092, %v1214
    %v1217 = vadd.f32 %v1093, %v1215
    %s1218 = sld [smem:[#allocation8 + $0x51]]
    %v1219 = vstv %s1218
    %v1220 = vmul.f32 %v1219, %v1204
    %v1221 = vmul.f32 %v1219, %v1205
    %v1222 = vadd.f32 %v1109, %v1220
    %v1223 = vadd.f32 %v1110, %v1221
    %s1224 = sld [smem:[#allocation8 + $0x75]]
    %v1225 = vstv %s1224
    %v1226 = vmul.f32 %v1225, %v1204
    %v1227 = vmul.f32 %v1225, %v1205
    %v1228 = vadd.f32 %v1126, %v1226
    %v1229 = vadd.f32 %v1127, %v1227
    %s1230 = sld [smem:[#allocation8 + $0x99]]
    %v1231 = vstv %s1230
    %v1232 = vmul.f32 %v1231, %v1204
    %v1233 = vmul.f32 %v1231, %v1205
    %v1234 = vadd.f32 %v1143, %v1232
    %v1235 = vadd.f32 %v1144, %v1233
    %s1236 = sld [smem:[#allocation8 + $0xbd]]
    %v1237 = vstv %s1236
    %v1238 = vmul.f32 %v1237, %v1204
    %v1239 = vmul.f32 %v1237, %v1205
    %v1240 = vadd.f32 %v1160, %v1238
    %v1241 = vadd.f32 %v1161, %v1239
    %s1242 = sld [smem:[#allocation8 + $0xe1]]
    %v1243 = vstv %s1242
    %v1244 = vmul.f32 %v1243, %v1204
    %v1245 = vmul.f32 %v1243, %v1205
    %v1246 = vadd.f32 %v1177, %v1244
    %v1247 = vadd.f32 %v1178, %v1245
    %s1248 = sld [smem:[#allocation8 + $0x105]]
    %v1249 = vstv %s1248
    %v1250 = vmul.f32 %v1249, %v1204
    %v1251 = vmul.f32 %v1249, %v1205
    %v1252 = vadd.f32 %v1194, %v1250
    %v1253 = vadd.f32 %v1195, %v1251
    %s1254 = sld [smem:[#allocation8 + $0xa]]
    %v1255 = vstv %s1254
    %v1256 = vmul.f32 %v1255, %v1204
    %v1257 = vmul.f32 %v1255, %v1205
    %1260 = vrot.lane.b32.xlu0 %v1256, 127
    %v1261 = vpop.permute.xlu0 %1260
    %1262 = vrot.lane.b32.xlu0 %v1257, 127
    %v1263 = vpop.permute.xlu0 %1262
    %v1266 = vadd.f32 %v1210, %v1261
    %v1267 = vadd.f32 %v1211, %v1263
    %s1268 = sld [smem:[#allocation8 + $0x2e]]
    %v1269 = vstv %s1268
    %v1270 = vmul.f32 %v1269, %v1204
    %v1271 = vmul.f32 %v1269, %v1205
    %1274 = vrot.lane.b32.xlu0 %v1270, 127
    %v1275 = vpop.permute.xlu0 %1274
    %1276 = vrot.lane.b32.xlu0 %v1271, 127
    %v1277 = vpop.permute.xlu0 %1276
    %v1280 = vadd.f32 %v1216, %v1275
    %v1281 = vadd.f32 %v1217, %v1277
    %s1282 = sld [smem:[#allocation8 + $0x52]]
    %v1283 = vstv %s1282
    %v1284 = vmul.f32 %v1283, %v1204
    %v1285 = vmul.f32 %v1283, %v1205
    %1288 = vrot.lane.b32.xlu0 %v1284, 127
    %v1289 = vpop.permute.xlu0 %1288
    %1290 = vrot.lane.b32.xlu0 %v1285, 127
    %v1291 = vpop.permute.xlu0 %1290
    %v1294 = vadd.f32 %v1222, %v1289
    %v1295 = vadd.f32 %v1223, %v1291
    %s1296 = sld [smem:[#allocation8 + $0x76]]
    %v1297 = vstv %s1296
    %v1298 = vmul.f32 %v1297, %v1204
    %v1299 = vmul.f32 %v1297, %v1205
    %1302 = vrot.lane.b32.xlu0 %v1298, 127
    %v1303 = vpop.permute.xlu0 %1302
    %1304 = vrot.lane.b32.xlu0 %v1299, 127
    %v1305 = vpop.permute.xlu0 %1304
    %v1308 = vadd.f32 %v1228, %v1303
    %v1309 = vadd.f32 %v1229, %v1305
    %s1310 = sld [smem:[#allocation8 + $0x9a]]
    %v1311 = vstv %s1310
    %v1312 = vmul.f32 %v1311, %v1204
    %v1313 = vmul.f32 %v1311, %v1205
    %1316 = vrot.lane.b32.xlu0 %v1312, 127
    %v1317 = vpop.permute.xlu0 %1316
    %1318 = vrot.lane.b32.xlu0 %v1313, 127
    %v1319 = vpop.permute.xlu0 %1318
    %v1322 = vadd.f32 %v1234, %v1317
    %v1323 = vadd.f32 %v1235, %v1319
    %s1324 = sld [smem:[#allocation8 + $0xbe]]
    %v1325 = vstv %s1324
    %v1326 = vmul.f32 %v1325, %v1204
    %v1327 = vmul.f32 %v1325, %v1205
    %1330 = vrot.lane.b32.xlu0 %v1326, 127
    %v1331 = vpop.permute.xlu0 %1330
    %1332 = vrot.lane.b32.xlu0 %v1327, 127
    %v1333 = vpop.permute.xlu0 %1332
    %v1336 = vadd.f32 %v1240, %v1331
    %v1337 = vadd.f32 %v1241, %v1333
    %s1338 = sld [smem:[#allocation8 + $0xe2]]
    %v1339 = vstv %s1338
    %v1340 = vmul.f32 %v1339, %v1204
    %v1341 = vmul.f32 %v1339, %v1205
    %1344 = vrot.lane.b32.xlu0 %v1340, 127
    %v1345 = vpop.permute.xlu0 %1344
    %1346 = vrot.lane.b32.xlu0 %v1341, 127
    %v1347 = vpop.permute.xlu0 %1346
    %v1350 = vadd.f32 %v1246, %v1345
    %v1351 = vadd.f32 %v1247, %v1347
    %s1352 = sld [smem:[#allocation8 + $0x106]]
    %v1353 = vstv %s1352
    %v1354 = vmul.f32 %v1353, %v1204
    %v1355 = vmul.f32 %v1353, %v1205
    %1358 = vrot.lane.b32.xlu0 %v1354, 127
    %v1359 = vpop.permute.xlu0 %1358
    %1360 = vrot.lane.b32.xlu0 %v1355, 127
    %v1361 = vpop.permute.xlu0 %1360
    %v1364 = vadd.f32 %v1252, %v1359
    %v1365 = vadd.f32 %v1253, %v1361
    %s1366 = sld [smem:[#allocation8 + $0xb]]
    %v1367 = vstv %s1366
    %v1368 = vmul.f32 %v1367, %v1204
    %v1369 = vmul.f32 %v1367, %v1205
    %1372 = vrot.lane.b32.xlu0 %v1368, 126
    %v1373 = vpop.permute.xlu0 %1372
    %1374 = vrot.lane.b32.xlu0 %v1369, 126
    %v1375 = vpop.permute.xlu0 %1374
    %v1378 = vadd.f32 %v1266, %v1373
    %v1379 = vadd.f32 %v1267, %v1375
    %s1380 = sld [smem:[#allocation8 + $0x2f]]
    %v1381 = vstv %s1380
    %v1382 = vmul.f32 %v1381, %v1204
    %v1383 = vmul.f32 %v1381, %v1205
    %1386 = vrot.lane.b32.xlu0 %v1382, 126
    %v1387 = vpop.permute.xlu0 %1386
    %1388 = vrot.lane.b32.xlu0 %v1383, 126
    %v1389 = vpop.permute.xlu0 %1388
    %v1392 = vadd.f32 %v1280, %v1387
    %v1393 = vadd.f32 %v1281, %v1389
    %s1394 = sld [smem:[#allocation8 + $0x53]]
    %v1395 = vstv %s1394
    %v1396 = vmul.f32 %v1395, %v1204
    %v1397 = vmul.f32 %v1395, %v1205
    %1400 = vrot.lane.b32.xlu0 %v1396, 126
    %v1401 = vpop.permute.xlu0 %1400
    %1402 = vrot.lane.b32.xlu0 %v1397, 126
    %v1403 = vpop.permute.xlu0 %1402
    %v1406 = vadd.f32 %v1294, %v1401
    %v1407 = vadd.f32 %v1295, %v1403
    %s1408 = sld [smem:[#allocation8 + $0x77]]
    %v1409 = vstv %s1408
    %v1410 = vmul.f32 %v1409, %v1204
    %v1411 = vmul.f32 %v1409, %v1205
    %1414 = vrot.lane.b32.xlu0 %v1410, 126
    %v1415 = vpop.permute.xlu0 %1414
    %1416 = vrot.lane.b32.xlu0 %v1411, 126
    %v1417 = vpop.permute.xlu0 %1416
    %v1420 = vadd.f32 %v1308, %v1415
    %v1421 = vadd.f32 %v1309, %v1417
    %s1422 = sld [smem:[#allocation8 + $0x9b]]
    %v1423 = vstv %s1422
    %v1424 = vmul.f32 %v1423, %v1204
    %v1425 = vmul.f32 %v1423, %v1205
    %1428 = vrot.lane.b32.xlu0 %v1424, 126
    %v1429 = vpop.permute.xlu0 %1428
    %1430 = vrot.lane.b32.xlu0 %v1425, 126
    %v1431 = vpop.permute.xlu0 %1430
    %v1434 = vadd.f32 %v1322, %v1429
    %v1435 = vadd.f32 %v1323, %v1431
    %s1436 = sld [smem:[#allocation8 + $0xbf]]
    %v1437 = vstv %s1436
    %v1438 = vmul.f32 %v1437, %v1204
    %v1439 = vmul.f32 %v1437, %v1205
    %1442 = vrot.lane.b32.xlu0 %v1438, 126
    %v1443 = vpop.permute.xlu0 %1442
    %1444 = vrot.lane.b32.xlu0 %v1439, 126
    %v1445 = vpop.permute.xlu0 %1444
    %v1448 = vadd.f32 %v1336, %v1443
    %v1449 = vadd.f32 %v1337, %v1445
    %s1450 = sld [smem:[#allocation8 + $0xe3]]
    %v1451 = vstv %s1450
    %v1452 = vmul.f32 %v1451, %v1204
    %v1453 = vmul.f32 %v1451, %v1205
    %1456 = vrot.lane.b32.xlu0 %v1452, 126
    %v1457 = vpop.permute.xlu0 %1456
    %1458 = vrot.lane.b32.xlu0 %v1453, 126
    %v1459 = vpop.permute.xlu0 %1458
    %v1462 = vadd.f32 %v1350, %v1457
    %v1463 = vadd.f32 %v1351, %v1459
    %s1464 = sld [smem:[#allocation8 + $0x107]]
    %v1465 = vstv %s1464
    %v1466 = vmul.f32 %v1465, %v1204
    %v1467 = vmul.f32 %v1465, %v1205
    %1470 = vrot.lane.b32.xlu0 %v1466, 126
    %v1471 = vpop.permute.xlu0 %1470
    %1472 = vrot.lane.b32.xlu0 %v1467, 126
    %v1473 = vpop.permute.xlu0 %1472
    %v1476 = vadd.f32 %v1364, %v1471
    %v1477 = vadd.f32 %v1365, %v1473
    %s1478 = sld [smem:[#allocation8 + $0xc]]
    %v1479 = vstv %s1478
    %v1480 = vmul.f32 %v1479, %v1204
    %v1481 = vmul.f32 %v1479, %v1205
    %v1484 = vrot.slane %v1480, 1
    %v1485 = vrot.slane %v1481, 1
    %v1486 = vsel %vm448, %v1484, %v1485
    %v1489 = vadd.f32 %v1378, %v1486
    %v1490 = vadd.f32 %v1379, %v1485
    %s1491 = sld [smem:[#allocation8 + $0x30]]
    %v1492 = vstv %s1491
    %v1493 = vmul.f32 %v1492, %v1204
    %v1494 = vmul.f32 %v1492, %v1205
    %v1497 = vrot.slane %v1493, 1
    %v1498 = vrot.slane %v1494, 1
    %v1499 = vsel %vm448, %v1497, %v1498
    %v1502 = vadd.f32 %v1392, %v1499
    %v1503 = vadd.f32 %v1393, %v1498
    %s1504 = sld [smem:[#allocation8 + $0x54]]
    %v1505 = vstv %s1504
    %v1506 = vmul.f32 %v1505, %v1204
    %v1507 = vmul.f32 %v1505, %v1205
    %v1510 = vrot.slane %v1506, 1
    %v1511 = vrot.slane %v1507, 1
    %v1512 = vsel %vm448, %v1510, %v1511
    %v1515 = vadd.f32 %v1406, %v1512
    %v1516 = vadd.f32 %v1407, %v1511
    %s1517 = sld [smem:[#allocation8 + $0x78]]
    %v1518 = vstv %s1517
    %v1519 = vmul.f32 %v1518, %v1204
    %v1520 = vmul.f32 %v1518, %v1205
    %v1523 = vrot.slane %v1519, 1
    %v1524 = vrot.slane %v1520, 1
    %v1525 = vsel %vm448, %v1523, %v1524
    %v1528 = vadd.f32 %v1420, %v1525
    %v1529 = vadd.f32 %v1421, %v1524
    %s1530 = sld [smem:[#allocation8 + $0x9c]]
    %v1531 = vstv %s1530
    %v1532 = vmul.f32 %v1531, %v1204
    %v1533 = vmul.f32 %v1531, %v1205
    %v1536 = vrot.slane %v1532, 1
    %v1537 = vrot.slane %v1533, 1
    %v1538 = vsel %vm448, %v1536, %v1537
    %v1541 = vadd.f32 %v1434, %v1538
    %v1542 = vadd.f32 %v1435, %v1537
    %s1543 = sld [smem:[#allocation8 + $0xc0]]
    %v1544 = vstv %s1543
    %v1545 = vmul.f32 %v1544, %v1204
    %v1546 = vmul.f32 %v1544, %v1205
    %v1549 = vrot.slane %v1545, 1
    %v1550 = vrot.slane %v1546, 1
    %v1551 = vsel %vm448, %v1549, %v1550
    %v1554 = vadd.f32 %v1448, %v1551
    %v1555 = vadd.f32 %v1449, %v1550
    %s1556 = sld [smem:[#allocation8 + $0xe4]]
    %v1557 = vstv %s1556
    %v1558 = vmul.f32 %v1557, %v1204
    %v1559 = vmul.f32 %v1557, %v1205
    %v1562 = vrot.slane %v1558, 1
    %v1563 = vrot.slane %v1559, 1
    %v1564 = vsel %vm448, %v1562, %v1563
    %v1567 = vadd.f32 %v1462, %v1564
    %v1568 = vadd.f32 %v1463, %v1563
    %s1569 = sld [smem:[#allocation8 + $0x108]]
    %v1570 = vstv %s1569
    %v1571 = vmul.f32 %v1570, %v1204
    %v1572 = vmul.f32 %v1570, %v1205
    %v1575 = vrot.slane %v1571, 1
    %v1576 = vrot.slane %v1572, 1
    %v1577 = vsel %vm448, %v1575, %v1576
    %v1580 = vadd.f32 %v1476, %v1577
    %v1581 = vadd.f32 %v1477, %v1576
    %s1582 = sld [smem:[#allocation8 + $0xd]]
    %v1583 = vstv %s1582
    %v1584 = vmul.f32 %v1583, %v1204
    %v1585 = vmul.f32 %v1583, %v1205
    %v1588 = vrot.slane %v1584, 1
    %v1589 = vrot.slane %v1585, 1
    %v1590 = vsel %vm448, %v1588, %v1589
    %1591 = vrot.lane.b32.xlu0 %v1590, 127
    %v1592 = vpop.permute.xlu0 %1591
    %1593 = vrot.lane.b32.xlu0 %v1589, 127
    %v1594 = vpop.permute.xlu0 %1593
    %v1597 = vadd.f32 %v1489, %v1592
    %v1598 = vadd.f32 %v1490, %v1594
    %s1599 = sld [smem:[#allocation8 + $0x31]]
    %v1600 = vstv %s1599
    %v1601 = vmul.f32 %v1600, %v1204
    %v1602 = vmul.f32 %v1600, %v1205
    %v1605 = vrot.slane %v1601, 1
    %v1606 = vrot.slane %v1602, 1
    %v1607 = vsel %vm448, %v1605, %v1606
    %1608 = vrot.lane.b32.xlu0 %v1607, 127
    %v1609 = vpop.permute.xlu0 %1608
    %1610 = vrot.lane.b32.xlu0 %v1606, 127
    %v1611 = vpop.permute.xlu0 %1610
    %v1614 = vadd.f32 %v1502, %v1609
    %v1615 = vadd.f32 %v1503, %v1611
    %s1616 = sld [smem:[#allocation8 + $0x55]]
    %v1617 = vstv %s1616
    %v1618 = vmul.f32 %v1617, %v1204
    %v1619 = vmul.f32 %v1617, %v1205
    %v1622 = vrot.slane %v1618, 1
    %v1623 = vrot.slane %v1619, 1
    %v1624 = vsel %vm448, %v1622, %v1623
    %1625 = vrot.lane.b32.xlu0 %v1624, 127
    %v1626 = vpop.permute.xlu0 %1625
    %1627 = vrot.lane.b32.xlu0 %v1623, 127
    %v1628 = vpop.permute.xlu0 %1627
    %v1631 = vadd.f32 %v1515, %v1626
    %v1632 = vadd.f32 %v1516, %v1628
    %s1633 = sld [smem:[#allocation8 + $0x79]]
    %v1634 = vstv %s1633
    %v1635 = vmul.f32 %v1634, %v1204
    %v1636 = vmul.f32 %v1634, %v1205
    %v1639 = vrot.slane %v1635, 1
    %v1640 = vrot.slane %v1636, 1
    %v1641 = vsel %vm448, %v1639, %v1640
    %1642 = vrot.lane.b32.xlu0 %v1641, 127
    %v1643 = vpop.permute.xlu0 %1642
    %1644 = vrot.lane.b32.xlu0 %v1640, 127
    %v1645 = vpop.permute.xlu0 %1644
    %v1648 = vadd.f32 %v1528, %v1643
    %v1649 = vadd.f32 %v1529, %v1645
    %s1650 = sld [smem:[#allocation8 + $0x9d]]
    %v1651 = vstv %s1650
    %v1652 = vmul.f32 %v1651, %v1204
    %v1653 = vmul.f32 %v1651, %v1205
    %v1656 = vrot.slane %v1652, 1
    %v1657 = vrot.slane %v1653, 1
    %v1658 = vsel %vm448, %v1656, %v1657
    %1659 = vrot.lane.b32.xlu0 %v1658, 127
    %v1660 = vpop.permute.xlu0 %1659
    %1661 = vrot.lane.b32.xlu0 %v1657, 127
    %v1662 = vpop.permute.xlu0 %1661
    %v1665 = vadd.f32 %v1541, %v1660
    %v1666 = vadd.f32 %v1542, %v1662
    %s1667 = sld [smem:[#allocation8 + $0xc1]]
    %v1668 = vstv %s1667
    %v1669 = vmul.f32 %v1668, %v1204
    %v1670 = vmul.f32 %v1668, %v1205
    %v1673 = vrot.slane %v1669, 1
    %v1674 = vrot.slane %v1670, 1
    %v1675 = vsel %vm448, %v1673, %v1674
    %1676 = vrot.lane.b32.xlu0 %v1675, 127
    %v1677 = vpop.permute.xlu0 %1676
    %1678 = vrot.lane.b32.xlu0 %v1674, 127
    %v1679 = vpop.permute.xlu0 %1678
    %v1682 = vadd.f32 %v1554, %v1677
    %v1683 = vadd.f32 %v1555, %v1679
    %s1684 = sld [smem:[#allocation8 + $0xe5]]
    %v1685 = vstv %s1684
    %v1686 = vmul.f32 %v1685, %v1204
    %v1687 = vmul.f32 %v1685, %v1205
    %v1690 = vrot.slane %v1686, 1
    %v1691 = vrot.slane %v1687, 1
    %v1692 = vsel %vm448, %v1690, %v1691
    %1693 = vrot.lane.b32.xlu0 %v1692, 127
    %v1694 = vpop.permute.xlu0 %1693
    %1695 = vrot.lane.b32.xlu0 %v1691, 127
    %v1696 = vpop.permute.xlu0 %1695
    %v1699 = vadd.f32 %v1567, %v1694
    %v1700 = vadd.f32 %v1568, %v1696
    %s1701 = sld [smem:[#allocation8 + $0x109]]
    %v1702 = vstv %s1701
    %v1703 = vmul.f32 %v1702, %v1204
    %v1704 = vmul.f32 %v1702, %v1205
    %v1707 = vrot.slane %v1703, 1
    %v1708 = vrot.slane %v1704, 1
    %v1709 = vsel %vm448, %v1707, %v1708
    %1710 = vrot.lane.b32.xlu0 %v1709, 127
    %v1711 = vpop.permute.xlu0 %1710
    %1712 = vrot.lane.b32.xlu0 %v1708, 127
    %v1713 = vpop.permute.xlu0 %1712
    %v1716 = vadd.f32 %v1580, %v1711
    %v1717 = vadd.f32 %v1581, %v1713
    %s1718 = sld [smem:[#allocation8 + $0xe]]
    %v1719 = vstv %s1718
    %v1720 = vmul.f32 %v1719, %v1204
    %v1721 = vmul.f32 %v1719, %v1205
    %v1724 = vrot.slane %v1720, 1
    %v1725 = vrot.slane %v1721, 1
    %v1726 = vsel %vm448, %v1724, %v1725
    %1727 = vrot.lane.b32.xlu0 %v1726, 126
    %v1728 = vpop.permute.xlu0 %1727
    %1729 = vrot.lane.b32.xlu0 %v1725, 126
    %v1730 = vpop.permute.xlu0 %1729
    %v1733 = vadd.f32 %v1597, %v1728
    %v1734 = vadd.f32 %v1598, %v1730
    %s1735 = sld [smem:[#allocation8 + $0x32]]
    %v1736 = vstv %s1735
    %v1737 = vmul.f32 %v1736, %v1204
    %v1738 = vmul.f32 %v1736, %v1205
    %v1741 = vrot.slane %v1737, 1
    %v1742 = vrot.slane %v1738, 1
    %v1743 = vsel %vm448, %v1741, %v1742
    %1744 = vrot.lane.b32.xlu0 %v1743, 126
    %v1745 = vpop.permute.xlu0 %1744
    %1746 = vrot.lane.b32.xlu0 %v1742, 126
    %v1747 = vpop.permute.xlu0 %1746
    %v1750 = vadd.f32 %v1614, %v1745
    %v1751 = vadd.f32 %v1615, %v1747
    %s1752 = sld [smem:[#allocation8 + $0x56]]
    %v1753 = vstv %s1752
    %v1754 = vmul.f32 %v1753, %v1204
    %v1755 = vmul.f32 %v1753, %v1205
    %v1758 = vrot.slane %v1754, 1
    %v1759 = vrot.slane %v1755, 1
    %v1760 = vsel %vm448, %v1758, %v1759
    %1761 = vrot.lane.b32.xlu0 %v1760, 126
    %v1762 = vpop.permute.xlu0 %1761
    %1763 = vrot.lane.b32.xlu0 %v1759, 126
    %v1764 = vpop.permute.xlu0 %1763
    %v1767 = vadd.f32 %v1631, %v1762
    %v1768 = vadd.f32 %v1632, %v1764
    %s1769 = sld [smem:[#allocation8 + $0x7a]]
    %v1770 = vstv %s1769
    %v1771 = vmul.f32 %v1770, %v1204
    %v1772 = vmul.f32 %v1770, %v1205
    %v1775 = vrot.slane %v1771, 1
    %v1776 = vrot.slane %v1772, 1
    %v1777 = vsel %vm448, %v1775, %v1776
    %1778 = vrot.lane.b32.xlu0 %v1777, 126
    %v1779 = vpop.permute.xlu0 %1778
    %1780 = vrot.lane.b32.xlu0 %v1776, 126
    %v1781 = vpop.permute.xlu0 %1780
    %v1784 = vadd.f32 %v1648, %v1779
    %v1785 = vadd.f32 %v1649, %v1781
    %s1786 = sld [smem:[#allocation8 + $0x9e]]
    %v1787 = vstv %s1786
    %v1788 = vmul.f32 %v1787, %v1204
    %v1789 = vmul.f32 %v1787, %v1205
    %v1792 = vrot.slane %v1788, 1
    %v1793 = vrot.slane %v1789, 1
    %v1794 = vsel %vm448, %v1792, %v1793
    %1795 = vrot.lane.b32.xlu0 %v1794, 126
    %v1796 = vpop.permute.xlu0 %1795
    %1797 = vrot.lane.b32.xlu0 %v1793, 126
    %v1798 = vpop.permute.xlu0 %1797
    %v1801 = vadd.f32 %v1665, %v1796
    %v1802 = vadd.f32 %v1666, %v1798
    %s1803 = sld [smem:[#allocation8 + $0xc2]]
    %v1804 = vstv %s1803
    %v1805 = vmul.f32 %v1804, %v1204
    %v1806 = vmul.f32 %v1804, %v1205
    %v1809 = vrot.slane %v1805, 1
    %v1810 = vrot.slane %v1806, 1
    %v1811 = vsel %vm448, %v1809, %v1810
    %1812 = vrot.lane.b32.xlu0 %v1811, 126
    %v1813 = vpop.permute.xlu0 %1812
    %1814 = vrot.lane.b32.xlu0 %v1810, 126
    %v1815 = vpop.permute.xlu0 %1814
    %v1818 = vadd.f32 %v1682, %v1813
    %v1819 = vadd.f32 %v1683, %v1815
    %s1820 = sld [smem:[#allocation8 + $0xe6]]
    %v1821 = vstv %s1820
    %v1822 = vmul.f32 %v1821, %v1204
    %v1823 = vmul.f32 %v1821, %v1205
    %v1826 = vrot.slane %v1822, 1
    %v1827 = vrot.slane %v1823, 1
    %v1828 = vsel %vm448, %v1826, %v1827
    %1829 = vrot.lane.b32.xlu0 %v1828, 126
    %v1830 = vpop.permute.xlu0 %1829
    %1831 = vrot.lane.b32.xlu0 %v1827, 126
    %v1832 = vpop.permute.xlu0 %1831
    %v1835 = vadd.f32 %v1699, %v1830
    %v1836 = vadd.f32 %v1700, %v1832
    %s1837 = sld [smem:[#allocation8 + $0x10a]]
    %v1838 = vstv %s1837
    %v1839 = vmul.f32 %v1838, %v1204
    %v1840 = vmul.f32 %v1838, %v1205
    %v1843 = vrot.slane %v1839, 1
    %v1844 = vrot.slane %v1840, 1
    %v1845 = vsel %vm448, %v1843, %v1844
    %1846 = vrot.lane.b32.xlu0 %v1845, 126
    %v1847 = vpop.permute.xlu0 %1846
    %1848 = vrot.lane.b32.xlu0 %v1844, 126
    %v1849 = vpop.permute.xlu0 %1848
    %v1852 = vadd.f32 %v1716, %v1847
    %v1853 = vadd.f32 %v1717, %v1849
    %s1854 = sld [smem:[#allocation8 + $0xf]]
    %v1855 = vstv %s1854
    %v1856 = vmul.f32 %v1855, %v1204
    %v1857 = vmul.f32 %v1855, %v1205
    %v1860 = vrot.slane %v1856, 2
    %v1861 = vrot.slane %v1857, 2
    %v1862 = vsel %vm825, %v1860, %v1861
    %v1865 = vadd.f32 %v1733, %v1862
    %v1866 = vadd.f32 %v1734, %v1861
    %s1867 = sld [smem:[#allocation8 + $0x33]]
    %v1868 = vstv %s1867
    %v1869 = vmul.f32 %v1868, %v1204
    %v1870 = vmul.f32 %v1868, %v1205
    %v1873 = vrot.slane %v1869, 2
    %v1874 = vrot.slane %v1870, 2
    %v1875 = vsel %vm825, %v1873, %v1874
    %v1878 = vadd.f32 %v1750, %v1875
    %v1879 = vadd.f32 %v1751, %v1874
    %s1880 = sld [smem:[#allocation8 + $0x57]]
    %v1881 = vstv %s1880
    %v1882 = vmul.f32 %v1881, %v1204
    %v1883 = vmul.f32 %v1881, %v1205
    %v1886 = vrot.slane %v1882, 2
    %v1887 = vrot.slane %v1883, 2
    %v1888 = vsel %vm825, %v1886, %v1887
    %v1891 = vadd.f32 %v1767, %v1888
    %v1892 = vadd.f32 %v1768, %v1887
    %s1893 = sld [smem:[#allocation8 + $0x7b]]
    %v1894 = vstv %s1893
    %v1895 = vmul.f32 %v1894, %v1204
    %v1896 = vmul.f32 %v1894, %v1205
    %v1899 = vrot.slane %v1895, 2
    %v1900 = vrot.slane %v1896, 2
    %v1901 = vsel %vm825, %v1899, %v1900
    %v1904 = vadd.f32 %v1784, %v1901
    %v1905 = vadd.f32 %v1785, %v1900
    %s1906 = sld [smem:[#allocation8 + $0x9f]]
    %v1907 = vstv %s1906
    %v1908 = vmul.f32 %v1907, %v1204
    %v1909 = vmul.f32 %v1907, %v1205
    %v1912 = vrot.slane %v1908, 2
    %v1913 = vrot.slane %v1909, 2
    %v1914 = vsel %vm825, %v1912, %v1913
    %v1917 = vadd.f32 %v1801, %v1914
    %v1918 = vadd.f32 %v1802, %v1913
    %s1919 = sld [smem:[#allocation8 + $0xc3]]
    %v1920 = vstv %s1919
    %v1921 = vmul.f32 %v1920, %v1204
    %v1922 = vmul.f32 %v1920, %v1205
    %v1925 = vrot.slane %v1921, 2
    %v1926 = vrot.slane %v1922, 2
    %v1927 = vsel %vm825, %v1925, %v1926
    %v1930 = vadd.f32 %v1818, %v1927
    %v1931 = vadd.f32 %v1819, %v1926
    %s1932 = sld [smem:[#allocation8 + $0xe7]]
    %v1933 = vstv %s1932
    %v1934 = vmul.f32 %v1933, %v1204
    %v1935 = vmul.f32 %v1933, %v1205
    %v1938 = vrot.slane %v1934, 2
    %v1939 = vrot.slane %v1935, 2
    %v1940 = vsel %vm825, %v1938, %v1939
    %v1943 = vadd.f32 %v1835, %v1940
    %v1944 = vadd.f32 %v1836, %v1939
    %s1945 = sld [smem:[#allocation8 + $0x10b]]
    %v1946 = vstv %s1945
    %v1947 = vmul.f32 %v1946, %v1204
    %v1948 = vmul.f32 %v1946, %v1205
    %v1951 = vrot.slane %v1947, 2
    %v1952 = vrot.slane %v1948, 2
    %v1953 = vsel %vm825, %v1951, %v1952
    %v1956 = vadd.f32 %v1852, %v1953
    %v1957 = vadd.f32 %v1853, %v1952
    %s1958 = sld [smem:[#allocation8 + $0x10]]
    %v1959 = vstv %s1958
    %v1960 = vmul.f32 %v1959, %v1204
    %v1961 = vmul.f32 %v1959, %v1205
    %v1964 = vrot.slane %v1960, 2
    %v1965 = vrot.slane %v1961, 2
    %v1966 = vsel %vm825, %v1964, %v1965
    %1967 = vrot.lane.b32.xlu0 %v1966, 127
    %v1968 = vpop.permute.xlu0 %1967
    %1969 = vrot.lane.b32.xlu0 %v1965, 127
    %v1970 = vpop.permute.xlu0 %1969
    %v1973 = vadd.f32 %v1865, %v1968
    %v1974 = vadd.f32 %v1866, %v1970
    %s1975 = sld [smem:[#allocation8 + $0x34]]
    %v1976 = vstv %s1975
    %v1977 = vmul.f32 %v1976, %v1204
    %v1978 = vmul.f32 %v1976, %v1205
    %v1981 = vrot.slane %v1977, 2
    %v1982 = vrot.slane %v1978, 2
    %v1983 = vsel %vm825, %v1981, %v1982
    %1984 = vrot.lane.b32.xlu0 %v1983, 127
    %v1985 = vpop.permute.xlu0 %1984
    %1986 = vrot.lane.b32.xlu0 %v1982, 127
    %v1987 = vpop.permute.xlu0 %1986
    %v1990 = vadd.f32 %v1878, %v1985
    %v1991 = vadd.f32 %v1879, %v1987
    %s1992 = sld [smem:[#allocation8 + $0x58]]
    %v1993 = vstv %s1992
    %v1994 = vmul.f32 %v1993, %v1204
    %v1995 = vmul.f32 %v1993, %v1205
    %v1998 = vrot.slane %v1994, 2
    %v1999 = vrot.slane %v1995, 2
    %v2000 = vsel %vm825, %v1998, %v1999
    %2001 = vrot.lane.b32.xlu0 %v2000, 127
    %v2002 = vpop.permute.xlu0 %2001
    %2003 = vrot.lane.b32.xlu0 %v1999, 127
    %v2004 = vpop.permute.xlu0 %2003
    %v2007 = vadd.f32 %v1891, %v2002
    %v2008 = vadd.f32 %v1892, %v2004
    %s2009 = sld [smem:[#allocation8 + $0x7c]]
    %v2010 = vstv %s2009
    %v2011 = vmul.f32 %v2010, %v1204
    %v2012 = vmul.f32 %v2010, %v1205
    %v2015 = vrot.slane %v2011, 2
    %v2016 = vrot.slane %v2012, 2
    %v2017 = vsel %vm825, %v2015, %v2016
    %2018 = vrot.lane.b32.xlu0 %v2017, 127
    %v2019 = vpop.permute.xlu0 %2018
    %2020 = vrot.lane.b32.xlu0 %v2016, 127
    %v2021 = vpop.permute.xlu0 %2020
    %v2024 = vadd.f32 %v1904, %v2019
    %v2025 = vadd.f32 %v1905, %v2021
    %s2026 = sld [smem:[#allocation8 + $0xa0]]
    %v2027 = vstv %s2026
    %v2028 = vmul.f32 %v2027, %v1204
    %v2029 = vmul.f32 %v2027, %v1205
    %v2032 = vrot.slane %v2028, 2
    %v2033 = vrot.slane %v2029, 2
    %v2034 = vsel %vm825, %v2032, %v2033
    %2035 = vrot.lane.b32.xlu0 %v2034, 127
    %v2036 = vpop.permute.xlu0 %2035
    %2037 = vrot.lane.b32.xlu0 %v2033, 127
    %v2038 = vpop.permute.xlu0 %2037
    %v2041 = vadd.f32 %v1917, %v2036
    %v2042 = vadd.f32 %v1918, %v2038
    %s2043 = sld [smem:[#allocation8 + $0xc4]]
    %v2044 = vstv %s2043
    %v2045 = vmul.f32 %v2044, %v1204
    %v2046 = vmul.f32 %v2044, %v1205
    %v2049 = vrot.slane %v2045, 2
    %v2050 = vrot.slane %v2046, 2
    %v2051 = vsel %vm825, %v2049, %v2050
    %2052 = vrot.lane.b32.xlu0 %v2051, 127
    %v2053 = vpop.permute.xlu0 %2052
    %2054 = vrot.lane.b32.xlu0 %v2050, 127
    %v2055 = vpop.permute.xlu0 %2054
    %v2058 = vadd.f32 %v1930, %v2053
    %v2059 = vadd.f32 %v1931, %v2055
    %s2060 = sld [smem:[#allocation8 + $0xe8]]
    %v2061 = vstv %s2060
    %v2062 = vmul.f32 %v2061, %v1204
    %v2063 = vmul.f32 %v2061, %v1205
    %v2066 = vrot.slane %v2062, 2
    %v2067 = vrot.slane %v2063, 2
    %v2068 = vsel %vm825, %v2066, %v2067
    %2069 = vrot.lane.b32.xlu0 %v2068, 127
    %v2070 = vpop.permute.xlu0 %2069
    %2071 = vrot.lane.b32.xlu0 %v2067, 127
    %v2072 = vpop.permute.xlu0 %2071
    %v2075 = vadd.f32 %v1943, %v2070
    %v2076 = vadd.f32 %v1944, %v2072
    %s2077 = sld [smem:[#allocation8 + $0x10c]]
    %v2078 = vstv %s2077
    %v2079 = vmul.f32 %v2078, %v1204
    %v2080 = vmul.f32 %v2078, %v1205
    %v2083 = vrot.slane %v2079, 2
    %v2084 = vrot.slane %v2080, 2
    %v2085 = vsel %vm825, %v2083, %v2084
    %2086 = vrot.lane.b32.xlu0 %v2085, 127
    %v2087 = vpop.permute.xlu0 %2086
    %2088 = vrot.lane.b32.xlu0 %v2084, 127
    %v2089 = vpop.permute.xlu0 %2088
    %v2092 = vadd.f32 %v1956, %v2087
    %v2093 = vadd.f32 %v1957, %v2089
    %s2094 = sld [smem:[#allocation8 + $0x11]]
    %v2095 = vstv %s2094
    %v2096 = vmul.f32 %v2095, %v1204
    %v2097 = vmul.f32 %v2095, %v1205
    %v2100 = vrot.slane %v2096, 2
    %v2101 = vrot.slane %v2097, 2
    %v2102 = vsel %vm825, %v2100, %v2101
    %2103 = vrot.lane.b32.xlu0 %v2102, 126
    %v2104 = vpop.permute.xlu0 %2103
    %2105 = vrot.lane.b32.xlu0 %v2101, 126
    %v2106 = vpop.permute.xlu0 %2105
    %v2109 = vadd.f32 %v1973, %v2104
    %v2110 = vadd.f32 %v1974, %v2106
    %s2111 = sld [smem:[#allocation8 + $0x35]]
    %v2112 = vstv %s2111
    %v2113 = vmul.f32 %v2112, %v1204
    %v2114 = vmul.f32 %v2112, %v1205
    %v2117 = vrot.slane %v2113, 2
    %v2118 = vrot.slane %v2114, 2
    %v2119 = vsel %vm825, %v2117, %v2118
    %2120 = vrot.lane.b32.xlu0 %v2119, 126
    %v2121 = vpop.permute.xlu0 %2120
    %2122 = vrot.lane.b32.xlu0 %v2118, 126
    %v2123 = vpop.permute.xlu0 %2122
    %v2126 = vadd.f32 %v1990, %v2121
    %v2127 = vadd.f32 %v1991, %v2123
    %s2128 = sld [smem:[#allocation8 + $0x59]]
    %v2129 = vstv %s2128
    %v2130 = vmul.f32 %v2129, %v1204
    %v2131 = vmul.f32 %v2129, %v1205
    %v2134 = vrot.slane %v2130, 2
    %v2135 = vrot.slane %v2131, 2
    %v2136 = vsel %vm825, %v2134, %v2135
    %2137 = vrot.lane.b32.xlu0 %v2136, 126
    %v2138 = vpop.permute.xlu0 %2137
    %2139 = vrot.lane.b32.xlu0 %v2135, 126
    %v2140 = vpop.permute.xlu0 %2139
    %v2143 = vadd.f32 %v2007, %v2138
    %v2144 = vadd.f32 %v2008, %v2140
    %s2145 = sld [smem:[#allocation8 + $0x7d]]
    %v2146 = vstv %s2145
    %v2147 = vmul.f32 %v2146, %v1204
    %v2148 = vmul.f32 %v2146, %v1205
    %v2151 = vrot.slane %v2147, 2
    %v2152 = vrot.slane %v2148, 2
    %v2153 = vsel %vm825, %v2151, %v2152
    %2154 = vrot.lane.b32.xlu0 %v2153, 126
    %v2155 = vpop.permute.xlu0 %2154
    %2156 = vrot.lane.b32.xlu0 %v2152, 126
    %v2157 = vpop.permute.xlu0 %2156
    %v2160 = vadd.f32 %v2024, %v2155
    %v2161 = vadd.f32 %v2025, %v2157
    %s2162 = sld [smem:[#allocation8 + $0xa1]]
    %v2163 = vstv %s2162
    %v2164 = vmul.f32 %v2163, %v1204
    %v2165 = vmul.f32 %v2163, %v1205
    %v2168 = vrot.slane %v2164, 2
    %v2169 = vrot.slane %v2165, 2
    %v2170 = vsel %vm825, %v2168, %v2169
    %2171 = vrot.lane.b32.xlu0 %v2170, 126
    %v2172 = vpop.permute.xlu0 %2171
    %2173 = vrot.lane.b32.xlu0 %v2169, 126
    %v2174 = vpop.permute.xlu0 %2173
    %v2177 = vadd.f32 %v2041, %v2172
    %v2178 = vadd.f32 %v2042, %v2174
    %s2179 = sld [smem:[#allocation8 + $0xc5]]
    %v2180 = vstv %s2179
    %v2181 = vmul.f32 %v2180, %v1204
    %v2182 = vmul.f32 %v2180, %v1205
    %v2185 = vrot.slane %v2181, 2
    %v2186 = vrot.slane %v2182, 2
    %v2187 = vsel %vm825, %v2185, %v2186
    %2188 = vrot.lane.b32.xlu0 %v2187, 126
    %v2189 = vpop.permute.xlu0 %2188
    %2190 = vrot.lane.b32.xlu0 %v2186, 126
    %v2191 = vpop.permute.xlu0 %2190
    %v2194 = vadd.f32 %v2058, %v2189
    %v2195 = vadd.f32 %v2059, %v2191
    %s2196 = sld [smem:[#allocation8 + $0xe9]]
    %v2197 = vstv %s2196
    %v2198 = vmul.f32 %v2197, %v1204
    %v2199 = vmul.f32 %v2197, %v1205
    %v2202 = vrot.slane %v2198, 2
    %v2203 = vrot.slane %v2199, 2
    %v2204 = vsel %vm825, %v2202, %v2203
    %2205 = vrot.lane.b32.xlu0 %v2204, 126
    %v2206 = vpop.permute.xlu0 %2205
    %2207 = vrot.lane.b32.xlu0 %v2203, 126
    %v2208 = vpop.permute.xlu0 %2207
    %v2211 = vadd.f32 %v2075, %v2206
    %v2212 = vadd.f32 %v2076, %v2208
    %s2213 = sld [smem:[#allocation8 + $0x10d]]
    %v2214 = vstv %s2213
    %v2215 = vmul.f32 %v2214, %v1204
    %v2216 = vmul.f32 %v2214, %v1205
    %v2219 = vrot.slane %v2215, 2
    %v2220 = vrot.slane %v2216, 2
    %v2221 = vsel %vm825, %v2219, %v2220
    %2222 = vrot.lane.b32.xlu0 %v2221, 126
    %v2223 = vpop.permute.xlu0 %2222
    %2224 = vrot.lane.b32.xlu0 %v2220, 126
    %v2225 = vpop.permute.xlu0 %2224
    %v2228 = vadd.f32 %v2092, %v2223
    %v2229 = vadd.f32 %v2093, %v2225
    %v2230 = vmul.f32 %v112, %v142
    %v2231 = vmul.f32 %v113, %v143
    %s2232 = sld [smem:[#allocation5 + $0x2]]
    %v2233 = vstv %s2232
    %v2234 = vmul.f32 %v2230, %v2233
    %v2235 = vmul.f32 %v2231, %v2233
    %s2236 = sld [smem:[#allocation6 + $0x2]]
    %v2237 = vstv %s2236
    %v2238 = vadd.f32 %v2234, %v2237
    %v2239 = vadd.f32 %v2235, %v2237
    %s2240 = sld [smem:[#allocation8 + $0x12]]
    %v2241 = vstv %s2240
    %v2242 = vmul.f32 %v2241, %v2238
    %v2243 = vmul.f32 %v2241, %v2239
    %v2244 = vadd.f32 %v2109, %v2242
    %v2245 = vadd.f32 %v2110, %v2243
    %s2246 = sld [smem:[#allocation8 + $0x36]]
    %v2247 = vstv %s2246
    %v2248 = vmul.f32 %v2247, %v2238
    %v2249 = vmul.f32 %v2247, %v2239
    %v2250 = vadd.f32 %v2126, %v2248
    %v2251 = vadd.f32 %v2127, %v2249
    %s2252 = sld [smem:[#allocation8 + $0x5a]]
    %v2253 = vstv %s2252
    %v2254 = vmul.f32 %v2253, %v2238
    %v2255 = vmul.f32 %v2253, %v2239
    %v2256 = vadd.f32 %v2143, %v2254
    %v2257 = vadd.f32 %v2144, %v2255
    %s2258 = sld [smem:[#allocation8 + $0x7e]]
    %v2259 = vstv %s2258
    %v2260 = vmul.f32 %v2259, %v2238
    %v2261 = vmul.f32 %v2259, %v2239
    %v2262 = vadd.f32 %v2160, %v2260
    %v2263 = vadd.f32 %v2161, %v2261
    %s2264 = sld [smem:[#allocation8 + $0xa2]]
    %v2265 = vstv %s2264
    %v2266 = vmul.f32 %v2265, %v2238
    %v2267 = vmul.f32 %v2265, %v2239
    %v2268 = vadd.f32 %v2177, %v2266
    %v2269 = vadd.f32 %v2178, %v2267
    %s2270 = sld [smem:[#allocation8 + $0xc6]]
    %v2271 = vstv %s2270
    %v2272 = vmul.f32 %v2271, %v2238
    %v2273 = vmul.f32 %v2271, %v2239
    %v2274 = vadd.f32 %v2194, %v2272
    %v2275 = vadd.f32 %v2195, %v2273
    %s2276 = sld [smem:[#allocation8 + $0xea]]
    %v2277 = vstv %s2276
    %v2278 = vmul.f32 %v2277, %v2238
    %v2279 = vmul.f32 %v2277, %v2239
    %v2280 = vadd.f32 %v2211, %v2278
    %v2281 = vadd.f32 %v2212, %v2279
    %s2282 = sld [smem:[#allocation8 + $0x10e]]
    %v2283 = vstv %s2282
    %v2284 = vmul.f32 %v2283, %v2238
    %v2285 = vmul.f32 %v2283, %v2239
    %v2286 = vadd.f32 %v2228, %v2284
    %v2287 = vadd.f32 %v2229, %v2285
    %s2288 = sld [smem:[#allocation8 + $0x13]]
    %v2289 = vstv %s2288
    %v2290 = vmul.f32 %v2289, %v2238
    %v2291 = vmul.f32 %v2289, %v2239
    %2294 = vrot.lane.b32.xlu0 %v2290, 127
    %v2295 = vpop.permute.xlu0 %2294
    %2296 = vrot.lane.b32.xlu0 %v2291, 127
    %v2297 = vpop.permute.xlu0 %2296
    %v2300 = vadd.f32 %v2244, %v2295
    %v2301 = vadd.f32 %v2245, %v2297
    %s2302 = sld [smem:[#allocation8 + $0x37]]
    %v2303 = vstv %s2302
    %v2304 = vmul.f32 %v2303, %v2238
    %v2305 = vmul.f32 %v2303, %v2239
    %2308 = vrot.lane.b32.xlu0 %v2304, 127
    %v2309 = vpop.permute.xlu0 %2308
    %2310 = vrot.lane.b32.xlu0 %v2305, 127
    %v2311 = vpop.permute.xlu0 %2310
    %v2314 = vadd.f32 %v2250, %v2309
    %v2315 = vadd.f32 %v2251, %v2311
    %s2316 = sld [smem:[#allocation8 + $0x5b]]
    %v2317 = vstv %s2316
    %v2318 = vmul.f32 %v2317, %v2238
    %v2319 = vmul.f32 %v2317, %v2239
    %2322 = vrot.lane.b32.xlu0 %v2318, 127
    %v2323 = vpop.permute.xlu0 %2322
    %2324 = vrot.lane.b32.xlu0 %v2319, 127
    %v2325 = vpop.permute.xlu0 %2324
    %v2328 = vadd.f32 %v2256, %v2323
    %v2329 = vadd.f32 %v2257, %v2325
    %s2330 = sld [smem:[#allocation8 + $0x7f]]
    %v2331 = vstv %s2330
    %v2332 = vmul.f32 %v2331, %v2238
    %v2333 = vmul.f32 %v2331, %v2239
    %2336 = vrot.lane.b32.xlu0 %v2332, 127
    %v2337 = vpop.permute.xlu0 %2336
    %2338 = vrot.lane.b32.xlu0 %v2333, 127
    %v2339 = vpop.permute.xlu0 %2338
    %v2342 = vadd.f32 %v2262, %v2337
    %v2343 = vadd.f32 %v2263, %v2339
    %s2344 = sld [smem:[#allocation8 + $0xa3]]
    %v2345 = vstv %s2344
    %v2346 = vmul.f32 %v2345, %v2238
    %v2347 = vmul.f32 %v2345, %v2239
    %2350 = vrot.lane.b32.xlu0 %v2346, 127
    %v2351 = vpop.permute.xlu0 %2350
    %2352 = vrot.lane.b32.xlu0 %v2347, 127
    %v2353 = vpop.permute.xlu0 %2352
    %v2356 = vadd.f32 %v2268, %v2351
    %v2357 = vadd.f32 %v2269, %v2353
    %s2358 = sld [smem:[#allocation8 + $0xc7]]
    %v2359 = vstv %s2358
    %v2360 = vmul.f32 %v2359, %v2238
    %v2361 = vmul.f32 %v2359, %v2239
    %2364 = vrot.lane.b32.xlu0 %v2360, 127
    %v2365 = vpop.permute.xlu0 %2364
    %2366 = vrot.lane.b32.xlu0 %v2361, 127
    %v2367 = vpop.permute.xlu0 %2366
    %v2370 = vadd.f32 %v2274, %v2365
    %v2371 = vadd.f32 %v2275, %v2367
    %s2372 = sld [smem:[#allocation8 + $0xeb]]
    %v2373 = vstv %s2372
    %v2374 = vmul.f32 %v2373, %v2238
    %v2375 = vmul.f32 %v2373, %v2239
    %2378 = vrot.lane.b32.xlu0 %v2374, 127
    %v2379 = vpop.permute.xlu0 %2378
    %2380 = vrot.lane.b32.xlu0 %v2375, 127
    %v2381 = vpop.permute.xlu0 %2380
    %v2384 = vadd.f32 %v2280, %v2379
    %v2385 = vadd.f32 %v2281, %v2381
    %s2386 = sld [smem:[#allocation8 + $0x10f]]
    %v2387 = vstv %s2386
    %v2388 = vmul.f32 %v2387, %v2238
    %v2389 = vmul.f32 %v2387, %v2239
    %2392 = vrot.lane.b32.xlu0 %v2388, 127
    %v2393 = vpop.permute.xlu0 %2392
    %2394 = vrot.lane.b32.xlu0 %v2389, 127
    %v2395 = vpop.permute.xlu0 %2394
    %v2398 = vadd.f32 %v2286, %v2393
    %v2399 = vadd.f32 %v2287, %v2395
    %s2400 = sld [smem:[#allocation8 + $0x14]]
    %v2401 = vstv %s2400
    %v2402 = vmul.f32 %v2401, %v2238
    %v2403 = vmul.f32 %v2401, %v2239
    %2406 = vrot.lane.b32.xlu0 %v2402, 126
    %v2407 = vpop.permute.xlu0 %2406
    %2408 = vrot.lane.b32.xlu0 %v2403, 126
    %v2409 = vpop.permute.xlu0 %2408
    %v2412 = vadd.f32 %v2300, %v2407
    %v2413 = vadd.f32 %v2301, %v2409
    %s2414 = sld [smem:[#allocation8 + $0x38]]
    %v2415 = vstv %s2414
    %v2416 = vmul.f32 %v2415, %v2238
    %v2417 = vmul.f32 %v2415, %v2239
    %2420 = vrot.lane.b32.xlu0 %v2416, 126
    %v2421 = vpop.permute.xlu0 %2420
    %2422 = vrot.lane.b32.xlu0 %v2417, 126
    %v2423 = vpop.permute.xlu0 %2422
    %v2426 = vadd.f32 %v2314, %v2421
    %v2427 = vadd.f32 %v2315, %v2423
    %s2428 = sld [smem:[#allocation8 + $0x5c]]
    %v2429 = vstv %s2428
    %v2430 = vmul.f32 %v2429, %v2238
    %v2431 = vmul.f32 %v2429, %v2239
    %2434 = vrot.lane.b32.xlu0 %v2430, 126
    %v2435 = vpop.permute.xlu0 %2434
    %2436 = vrot.lane.b32.xlu0 %v2431, 126
    %v2437 = vpop.permute.xlu0 %2436
    %v2440 = vadd.f32 %v2328, %v2435
    %v2441 = vadd.f32 %v2329, %v2437
    %s2442 = sld [smem:[#allocation8 + $0x80]]
    %v2443 = vstv %s2442
    %v2444 = vmul.f32 %v2443, %v2238
    %v2445 = vmul.f32 %v2443, %v2239
    %2448 = vrot.lane.b32.xlu0 %v2444, 126
    %v2449 = vpop.permute.xlu0 %2448
    %2450 = vrot.lane.b32.xlu0 %v2445, 126
    %v2451 = vpop.permute.xlu0 %2450
    %v2454 = vadd.f32 %v2342, %v2449
    %v2455 = vadd.f32 %v2343, %v2451
    %s2456 = sld [smem:[#allocation8 + $0xa4]]
    %v2457 = vstv %s2456
    %v2458 = vmul.f32 %v2457, %v2238
    %v2459 = vmul.f32 %v2457, %v2239
    %2462 = vrot.lane.b32.xlu0 %v2458, 126
    %v2463 = vpop.permute.xlu0 %2462
    %2464 = vrot.lane.b32.xlu0 %v2459, 126
    %v2465 = vpop.permute.xlu0 %2464
    %v2468 = vadd.f32 %v2356, %v2463
    %v2469 = vadd.f32 %v2357, %v2465
    %s2470 = sld [smem:[#allocation8 + $0xc8]]
    %v2471 = vstv %s2470
    %v2472 = vmul.f32 %v2471, %v2238
    %v2473 = vmul.f32 %v2471, %v2239
    %2476 = vrot.lane.b32.xlu0 %v2472, 126
    %v2477 = vpop.permute.xlu0 %2476
    %2478 = vrot.lane.b32.xlu0 %v2473, 126
    %v2479 = vpop.permute.xlu0 %2478
    %v2482 = vadd.f32 %v2370, %v2477
    %v2483 = vadd.f32 %v2371, %v2479
    %s2484 = sld [smem:[#allocation8 + $0xec]]
    %v2485 = vstv %s2484
    %v2486 = vmul.f32 %v2485, %v2238
    %v2487 = vmul.f32 %v2485, %v2239
    %2490 = vrot.lane.b32.xlu0 %v2486, 126
    %v2491 = vpop.permute.xlu0 %2490
    %2492 = vrot.lane.b32.xlu0 %v2487, 126
    %v2493 = vpop.permute.xlu0 %2492
    %v2496 = vadd.f32 %v2384, %v2491
    %v2497 = vadd.f32 %v2385, %v2493
    %s2498 = sld [smem:[#allocation8 + $0x110]]
    %v2499 = vstv %s2498
    %v2500 = vmul.f32 %v2499, %v2238
    %v2501 = vmul.f32 %v2499, %v2239
    %2504 = vrot.lane.b32.xlu0 %v2500, 126
    %v2505 = vpop.permute.xlu0 %2504
    %2506 = vrot.lane.b32.xlu0 %v2501, 126
    %v2507 = vpop.permute.xlu0 %2506
    %v2510 = vadd.f32 %v2398, %v2505
    %v2511 = vadd.f32 %v2399, %v2507
    %s2512 = sld [smem:[#allocation8 + $0x15]]
    %v2513 = vstv %s2512
    %v2514 = vmul.f32 %v2513, %v2238
    %v2515 = vmul.f32 %v2513, %v2239
    %v2518 = vrot.slane %v2514, 1
    %v2519 = vrot.slane %v2515, 1
    %v2520 = vsel %vm448, %v2518, %v2519
    %v2523 = vadd.f32 %v2412, %v2520
    %v2524 = vadd.f32 %v2413, %v2519
    %s2525 = sld [smem:[#allocation8 + $0x39]]
    %v2526 = vstv %s2525
    %v2527 = vmul.f32 %v2526, %v2238
    %v2528 = vmul.f32 %v2526, %v2239
    %v2531 = vrot.slane %v2527, 1
    %v2532 = vrot.slane %v2528, 1
    %v2533 = vsel %vm448, %v2531, %v2532
    %v2536 = vadd.f32 %v2426, %v2533
    %v2537 = vadd.f32 %v2427, %v2532
    %s2538 = sld [smem:[#allocation8 + $0x5d]]
    %v2539 = vstv %s2538
    %v2540 = vmul.f32 %v2539, %v2238
    %v2541 = vmul.f32 %v2539, %v2239
    %v2544 = vrot.slane %v2540, 1
    %v2545 = vrot.slane %v2541, 1
    %v2546 = vsel %vm448, %v2544, %v2545
    %v2549 = vadd.f32 %v2440, %v2546
    %v2550 = vadd.f32 %v2441, %v2545
    %s2551 = sld [smem:[#allocation8 + $0x81]]
    %v2552 = vstv %s2551
    %v2553 = vmul.f32 %v2552, %v2238
    %v2554 = vmul.f32 %v2552, %v2239
    %v2557 = vrot.slane %v2553, 1
    %v2558 = vrot.slane %v2554, 1
    %v2559 = vsel %vm448, %v2557, %v2558
    %v2562 = vadd.f32 %v2454, %v2559
    %v2563 = vadd.f32 %v2455, %v2558
    %s2564 = sld [smem:[#allocation8 + $0xa5]]
    %v2565 = vstv %s2564
    %v2566 = vmul.f32 %v2565, %v2238
    %v2567 = vmul.f32 %v2565, %v2239
    %v2570 = vrot.slane %v2566, 1
    %v2571 = vrot.slane %v2567, 1
    %v2572 = vsel %vm448, %v2570, %v2571
    %v2575 = vadd.f32 %v2468, %v2572
    %v2576 = vadd.f32 %v2469, %v2571
    %s2577 = sld [smem:[#allocation8 + $0xc9]]
    %v2578 = vstv %s2577
    %v2579 = vmul.f32 %v2578, %v2238
    %v2580 = vmul.f32 %v2578, %v2239
    %v2583 = vrot.slane %v2579, 1
    %v2584 = vrot.slane %v2580, 1
    %v2585 = vsel %vm448, %v2583, %v2584
    %v2588 = vadd.f32 %v2482, %v2585
    %v2589 = vadd.f32 %v2483, %v2584
    %s2590 = sld [smem:[#allocation8 + $0xed]]
    %v2591 = vstv %s2590
    %v2592 = vmul.f32 %v2591, %v2238
    %v2593 = vmul.f32 %v2591, %v2239
    %v2596 = vrot.slane %v2592, 1
    %v2597 = vrot.slane %v2593, 1
    %v2598 = vsel %vm448, %v2596, %v2597
    %v2601 = vadd.f32 %v2496, %v2598
    %v2602 = vadd.f32 %v2497, %v2597
    %s2603 = sld [smem:[#allocation8 + $0x111]]
    %v2604 = vstv %s2603
    %v2605 = vmul.f32 %v2604, %v2238
    %v2606 = vmul.f32 %v2604, %v2239
    %v2609 = vrot.slane %v2605, 1
    %v2610 = vrot.slane %v2606, 1
    %v2611 = vsel %vm448, %v2609, %v2610
    %v2614 = vadd.f32 %v2510, %v2611
    %v2615 = vadd.f32 %v2511, %v2610
    %s2616 = sld [smem:[#allocation8 + $0x16]]
    %v2617 = vstv %s2616
    %v2618 = vmul.f32 %v2617, %v2238
    %v2619 = vmul.f32 %v2617, %v2239
    %v2622 = vrot.slane %v2618, 1
    %v2623 = vrot.slane %v2619, 1
    %v2624 = vsel %vm448, %v2622, %v2623
    %2625 = vrot.lane.b32.xlu0 %v2624, 127
    %v2626 = vpop.permute.xlu0 %2625
    %2627 = vrot.lane.b32.xlu0 %v2623, 127
    %v2628 = vpop.permute.xlu0 %2627
    %v2631 = vadd.f32 %v2523, %v2626
    %v2632 = vadd.f32 %v2524, %v2628
    %s2633 = sld [smem:[#allocation8 + $0x3a]]
    %v2634 = vstv %s2633
    %v2635 = vmul.f32 %v2634, %v2238
    %v2636 = vmul.f32 %v2634, %v2239
    %v2639 = vrot.slane %v2635, 1
    %v2640 = vrot.slane %v2636, 1
    %v2641 = vsel %vm448, %v2639, %v2640
    %2642 = vrot.lane.b32.xlu0 %v2641, 127
    %v2643 = vpop.permute.xlu0 %2642
    %2644 = vrot.lane.b32.xlu0 %v2640, 127
    %v2645 = vpop.permute.xlu0 %2644
    %v2648 = vadd.f32 %v2536, %v2643
    %v2649 = vadd.f32 %v2537, %v2645
    %s2650 = sld [smem:[#allocation8 + $0x5e]]
    %v2651 = vstv %s2650
    %v2652 = vmul.f32 %v2651, %v2238
    %v2653 = vmul.f32 %v2651, %v2239
    %v2656 = vrot.slane %v2652, 1
    %v2657 = vrot.slane %v2653, 1
    %v2658 = vsel %vm448, %v2656, %v2657
    %2659 = vrot.lane.b32.xlu0 %v2658, 127
    %v2660 = vpop.permute.xlu0 %2659
    %2661 = vrot.lane.b32.xlu0 %v2657, 127
    %v2662 = vpop.permute.xlu0 %2661
    %v2665 = vadd.f32 %v2549, %v2660
    %v2666 = vadd.f32 %v2550, %v2662
    %s2667 = sld [smem:[#allocation8 + $0x82]]
    %v2668 = vstv %s2667
    %v2669 = vmul.f32 %v2668, %v2238
    %v2670 = vmul.f32 %v2668, %v2239
    %v2673 = vrot.slane %v2669, 1
    %v2674 = vrot.slane %v2670, 1
    %v2675 = vsel %vm448, %v2673, %v2674
    %2676 = vrot.lane.b32.xlu0 %v2675, 127
    %v2677 = vpop.permute.xlu0 %2676
    %2678 = vrot.lane.b32.xlu0 %v2674, 127
    %v2679 = vpop.permute.xlu0 %2678
    %v2682 = vadd.f32 %v2562, %v2677
    %v2683 = vadd.f32 %v2563, %v2679
    %s2684 = sld [smem:[#allocation8 + $0xa6]]
    %v2685 = vstv %s2684
    %v2686 = vmul.f32 %v2685, %v2238
    %v2687 = vmul.f32 %v2685, %v2239
    %v2690 = vrot.slane %v2686, 1
    %v2691 = vrot.slane %v2687, 1
    %v2692 = vsel %vm448, %v2690, %v2691
    %2693 = vrot.lane.b32.xlu0 %v2692, 127
    %v2694 = vpop.permute.xlu0 %2693
    %2695 = vrot.lane.b32.xlu0 %v2691, 127
    %v2696 = vpop.permute.xlu0 %2695
    %v2699 = vadd.f32 %v2575, %v2694
    %v2700 = vadd.f32 %v2576, %v2696
    %s2701 = sld [smem:[#allocation8 + $0xca]]
    %v2702 = vstv %s2701
    %v2703 = vmul.f32 %v2702, %v2238
    %v2704 = vmul.f32 %v2702, %v2239
    %v2707 = vrot.slane %v2703, 1
    %v2708 = vrot.slane %v2704, 1
    %v2709 = vsel %vm448, %v2707, %v2708
    %2710 = vrot.lane.b32.xlu0 %v2709, 127
    %v2711 = vpop.permute.xlu0 %2710
    %2712 = vrot.lane.b32.xlu0 %v2708, 127
    %v2713 = vpop.permute.xlu0 %2712
    %v2716 = vadd.f32 %v2588, %v2711
    %v2717 = vadd.f32 %v2589, %v2713
    %s2718 = sld [smem:[#allocation8 + $0xee]]
    %v2719 = vstv %s2718
    %v2720 = vmul.f32 %v2719, %v2238
    %v2721 = vmul.f32 %v2719, %v2239
    %v2724 = vrot.slane %v2720, 1
    %v2725 = vrot.slane %v2721, 1
    %v2726 = vsel %vm448, %v2724, %v2725
    %2727 = vrot.lane.b32.xlu0 %v2726, 127
    %v2728 = vpop.permute.xlu0 %2727
    %2729 = vrot.lane.b32.xlu0 %v2725, 127
    %v2730 = vpop.permute.xlu0 %2729
    %v2733 = vadd.f32 %v2601, %v2728
    %v2734 = vadd.f32 %v2602, %v2730
    %s2735 = sld [smem:[#allocation8 + $0x112]]
    %v2736 = vstv %s2735
    %v2737 = vmul.f32 %v2736, %v2238
    %v2738 = vmul.f32 %v2736, %v2239
    %v2741 = vrot.slane %v2737, 1
    %v2742 = vrot.slane %v2738, 1
    %v2743 = vsel %vm448, %v2741, %v2742
    %2744 = vrot.lane.b32.xlu0 %v2743, 127
    %v2745 = vpop.permute.xlu0 %2744
    %2746 = vrot.lane.b32.xlu0 %v2742, 127
    %v2747 = vpop.permute.xlu0 %2746
    %v2750 = vadd.f32 %v2614, %v2745
    %v2751 = vadd.f32 %v2615, %v2747
    %s2752 = sld [smem:[#allocation8 + $0x17]]
    %v2753 = vstv %s2752
    %v2754 = vmul.f32 %v2753, %v2238
    %v2755 = vmul.f32 %v2753, %v2239
    %v2758 = vrot.slane %v2754, 1
    %v2759 = vrot.slane %v2755, 1
    %v2760 = vsel %vm448, %v2758, %v2759
    %2761 = vrot.lane.b32.xlu0 %v2760, 126
    %v2762 = vpop.permute.xlu0 %2761
    %2763 = vrot.lane.b32.xlu0 %v2759, 126
    %v2764 = vpop.permute.xlu0 %2763
    %v2767 = vadd.f32 %v2631, %v2762
    %v2768 = vadd.f32 %v2632, %v2764
    %s2769 = sld [smem:[#allocation8 + $0x3b]]
    %v2770 = vstv %s2769
    %v2771 = vmul.f32 %v2770, %v2238
    %v2772 = vmul.f32 %v2770, %v2239
    %v2775 = vrot.slane %v2771, 1
    %v2776 = vrot.slane %v2772, 1
    %v2777 = vsel %vm448, %v2775, %v2776
    %2778 = vrot.lane.b32.xlu0 %v2777, 126
    %v2779 = vpop.permute.xlu0 %2778
    %2780 = vrot.lane.b32.xlu0 %v2776, 126
    %v2781 = vpop.permute.xlu0 %2780
    %v2784 = vadd.f32 %v2648, %v2779
    %v2785 = vadd.f32 %v2649, %v2781
    %s2786 = sld [smem:[#allocation8 + $0x5f]]
    %v2787 = vstv %s2786
    %v2788 = vmul.f32 %v2787, %v2238
    %v2789 = vmul.f32 %v2787, %v2239
    %v2792 = vrot.slane %v2788, 1
    %v2793 = vrot.slane %v2789, 1
    %v2794 = vsel %vm448, %v2792, %v2793
    %2795 = vrot.lane.b32.xlu0 %v2794, 126
    %v2796 = vpop.permute.xlu0 %2795
    %2797 = vrot.lane.b32.xlu0 %v2793, 126
    %v2798 = vpop.permute.xlu0 %2797
    %v2801 = vadd.f32 %v2665, %v2796
    %v2802 = vadd.f32 %v2666, %v2798
    %s2803 = sld [smem:[#allocation8 + $0x83]]
    %v2804 = vstv %s2803
    %v2805 = vmul.f32 %v2804, %v2238
    %v2806 = vmul.f32 %v2804, %v2239
    %v2809 = vrot.slane %v2805, 1
    %v2810 = vrot.slane %v2806, 1
    %v2811 = vsel %vm448, %v2809, %v2810
    %2812 = vrot.lane.b32.xlu0 %v2811, 126
    %v2813 = vpop.permute.xlu0 %2812
    %2814 = vrot.lane.b32.xlu0 %v2810, 126
    %v2815 = vpop.permute.xlu0 %2814
    %v2818 = vadd.f32 %v2682, %v2813
    %v2819 = vadd.f32 %v2683, %v2815
    %s2820 = sld [smem:[#allocation8 + $0xa7]]
    %v2821 = vstv %s2820
    %v2822 = vmul.f32 %v2821, %v2238
    %v2823 = vmul.f32 %v2821, %v2239
    %v2826 = vrot.slane %v2822, 1
    %v2827 = vrot.slane %v2823, 1
    %v2828 = vsel %vm448, %v2826, %v2827
    %2829 = vrot.lane.b32.xlu0 %v2828, 126
    %v2830 = vpop.permute.xlu0 %2829
    %2831 = vrot.lane.b32.xlu0 %v2827, 126
    %v2832 = vpop.permute.xlu0 %2831
    %v2835 = vadd.f32 %v2699, %v2830
    %v2836 = vadd.f32 %v2700, %v2832
    %s2837 = sld [smem:[#allocation8 + $0xcb]]
    %v2838 = vstv %s2837
    %v2839 = vmul.f32 %v2838, %v2238
    %v2840 = vmul.f32 %v2838, %v2239
    %v2843 = vrot.slane %v2839, 1
    %v2844 = vrot.slane %v2840, 1
    %v2845 = vsel %vm448, %v2843, %v2844
    %2846 = vrot.lane.b32.xlu0 %v2845, 126
    %v2847 = vpop.permute.xlu0 %2846
    %2848 = vrot.lane.b32.xlu0 %v2844, 126
    %v2849 = vpop.permute.xlu0 %2848
    %v2852 = vadd.f32 %v2716, %v2847
    %v2853 = vadd.f32 %v2717, %v2849
    %s2854 = sld [smem:[#allocation8 + $0xef]]
    %v2855 = vstv %s2854
    %v2856 = vmul.f32 %v2855, %v2238
    %v2857 = vmul.f32 %v2855, %v2239
    %v2860 = vrot.slane %v2856, 1
    %v2861 = vrot.slane %v2857, 1
    %v2862 = vsel %vm448, %v2860, %v2861
    %2863 = vrot.lane.b32.xlu0 %v2862, 126
    %v2864 = vpop.permute.xlu0 %2863
    %2865 = vrot.lane.b32.xlu0 %v2861, 126
    %v2866 = vpop.permute.xlu0 %2865
    %v2869 = vadd.f32 %v2733, %v2864
    %v2870 = vadd.f32 %v2734, %v2866
    %s2871 = sld [smem:[#allocation8 + $0x113]]
    %v2872 = vstv %s2871
    %v2873 = vmul.f32 %v2872, %v2238
    %v2874 = vmul.f32 %v2872, %v2239
    %v2877 = vrot.slane %v2873, 1
    %v2878 = vrot.slane %v2874, 1
    %v2879 = vsel %vm448, %v2877, %v2878
    %2880 = vrot.lane.b32.xlu0 %v2879, 126
    %v2881 = vpop.permute.xlu0 %2880
    %2882 = vrot.lane.b32.xlu0 %v2878, 126
    %v2883 = vpop.permute.xlu0 %2882
    %v2886 = vadd.f32 %v2750, %v2881
    %v2887 = vadd.f32 %v2751, %v2883
    %s2888 = sld [smem:[#allocation8 + $0x18]]
    %v2889 = vstv %s2888
    %v2890 = vmul.f32 %v2889, %v2238
    %v2891 = vmul.f32 %v2889, %v2239
    %v2894 = vrot.slane %v2890, 2
    %v2895 = vrot.slane %v2891, 2
    %v2896 = vsel %vm825, %v2894, %v2895
    %v2899 = vadd.f32 %v2767, %v2896
    %v2900 = vadd.f32 %v2768, %v2895
    %s2901 = sld [smem:[#allocation8 + $0x3c]]
    %v2902 = vstv %s2901
    %v2903 = vmul.f32 %v2902, %v2238
    %v2904 = vmul.f32 %v2902, %v2239
    %v2907 = vrot.slane %v2903, 2
    %v2908 = vrot.slane %v2904, 2
    %v2909 = vsel %vm825, %v2907, %v2908
    %v2912 = vadd.f32 %v2784, %v2909
    %v2913 = vadd.f32 %v2785, %v2908
    %s2914 = sld [smem:[#allocation8 + $0x60]]
    %v2915 = vstv %s2914
    %v2916 = vmul.f32 %v2915, %v2238
    %v2917 = vmul.f32 %v2915, %v2239
    %v2920 = vrot.slane %v2916, 2
    %v2921 = vrot.slane %v2917, 2
    %v2922 = vsel %vm825, %v2920, %v2921
    %v2925 = vadd.f32 %v2801, %v2922
    %v2926 = vadd.f32 %v2802, %v2921
    %s2927 = sld [smem:[#allocation8 + $0x84]]
    %v2928 = vstv %s2927
    %v2929 = vmul.f32 %v2928, %v2238
    %v2930 = vmul.f32 %v2928, %v2239
    %v2933 = vrot.slane %v2929, 2
    %v2934 = vrot.slane %v2930, 2
    %v2935 = vsel %vm825, %v2933, %v2934
    %v2938 = vadd.f32 %v2818, %v2935
    %v2939 = vadd.f32 %v2819, %v2934
    %s2940 = sld [smem:[#allocation8 + $0xa8]]
    %v2941 = vstv %s2940
    %v2942 = vmul.f32 %v2941, %v2238
    %v2943 = vmul.f32 %v2941, %v2239
    %v2946 = vrot.slane %v2942, 2
    %v2947 = vrot.slane %v2943, 2
    %v2948 = vsel %vm825, %v2946, %v2947
    %v2951 = vadd.f32 %v2835, %v2948
    %v2952 = vadd.f32 %v2836, %v2947
    %s2953 = sld [smem:[#allocation8 + $0xcc]]
    %v2954 = vstv %s2953
    %v2955 = vmul.f32 %v2954, %v2238
    %v2956 = vmul.f32 %v2954, %v2239
    %v2959 = vrot.slane %v2955, 2
    %v2960 = vrot.slane %v2956, 2
    %v2961 = vsel %vm825, %v2959, %v2960
    %v2964 = vadd.f32 %v2852, %v2961
    %v2965 = vadd.f32 %v2853, %v2960
    %s2966 = sld [smem:[#allocation8 + $0xf0]]
    %v2967 = vstv %s2966
    %v2968 = vmul.f32 %v2967, %v2238
    %v2969 = vmul.f32 %v2967, %v2239
    %v2972 = vrot.slane %v2968, 2
    %v2973 = vrot.slane %v2969, 2
    %v2974 = vsel %vm825, %v2972, %v2973
    %v2977 = vadd.f32 %v2869, %v2974
    %v2978 = vadd.f32 %v2870, %v2973
    %s2979 = sld [smem:[#allocation8 + $0x114]]
    %v2980 = vstv %s2979
    %v2981 = vmul.f32 %v2980, %v2238
    %v2982 = vmul.f32 %v2980, %v2239
    %v2985 = vrot.slane %v2981, 2
    %v2986 = vrot.slane %v2982, 2
    %v2987 = vsel %vm825, %v2985, %v2986
    %v2990 = vadd.f32 %v2886, %v2987
    %v2991 = vadd.f32 %v2887, %v2986
    %s2992 = sld [smem:[#allocation8 + $0x19]]
    %v2993 = vstv %s2992
    %v2994 = vmul.f32 %v2993, %v2238
    %v2995 = vmul.f32 %v2993, %v2239
    %v2998 = vrot.slane %v2994, 2
    %v2999 = vrot.slane %v2995, 2
    %v3000 = vsel %vm825, %v2998, %v2999
    %3001 = vrot.lane.b32.xlu0 %v3000, 127
    %v3002 = vpop.permute.xlu0 %3001
    %3003 = vrot.lane.b32.xlu0 %v2999, 127
    %v3004 = vpop.permute.xlu0 %3003
    %v3007 = vadd.f32 %v2899, %v3002
    %v3008 = vadd.f32 %v2900, %v3004
    %s3009 = sld [smem:[#allocation8 + $0x3d]]
    %v3010 = vstv %s3009
    %v3011 = vmul.f32 %v3010, %v2238
    %v3012 = vmul.f32 %v3010, %v2239
    %v3015 = vrot.slane %v3011, 2
    %v3016 = vrot.slane %v3012, 2
    %v3017 = vsel %vm825, %v3015, %v3016
    %3018 = vrot.lane.b32.xlu0 %v3017, 127
    %v3019 = vpop.permute.xlu0 %3018
    %3020 = vrot.lane.b32.xlu0 %v3016, 127
    %v3021 = vpop.permute.xlu0 %3020
    %v3024 = vadd.f32 %v2912, %v3019
    %v3025 = vadd.f32 %v2913, %v3021
    %s3026 = sld [smem:[#allocation8 + $0x61]]
    %v3027 = vstv %s3026
    %v3028 = vmul.f32 %v3027, %v2238
    %v3029 = vmul.f32 %v3027, %v2239
    %v3032 = vrot.slane %v3028, 2
    %v3033 = vrot.slane %v3029, 2
    %v3034 = vsel %vm825, %v3032, %v3033
    %3035 = vrot.lane.b32.xlu0 %v3034, 127
    %v3036 = vpop.permute.xlu0 %3035
    %3037 = vrot.lane.b32.xlu0 %v3033, 127
    %v3038 = vpop.permute.xlu0 %3037
    %v3041 = vadd.f32 %v2925, %v3036
    %v3042 = vadd.f32 %v2926, %v3038
    %s3043 = sld [smem:[#allocation8 + $0x85]]
    %v3044 = vstv %s3043
    %v3045 = vmul.f32 %v3044, %v2238
    %v3046 = vmul.f32 %v3044, %v2239
    %v3049 = vrot.slane %v3045, 2
    %v3050 = vrot.slane %v3046, 2
    %v3051 = vsel %vm825, %v3049, %v3050
    %3052 = vrot.lane.b32.xlu0 %v3051, 127
    %v3053 = vpop.permute.xlu0 %3052
    %3054 = vrot.lane.b32.xlu0 %v3050, 127
    %v3055 = vpop.permute.xlu0 %3054
    %v3058 = vadd.f32 %v2938, %v3053
    %v3059 = vadd.f32 %v2939, %v3055
    %s3060 = sld [smem:[#allocation8 + $0xa9]]
    %v3061 = vstv %s3060
    %v3062 = vmul.f32 %v3061, %v2238
    %v3063 = vmul.f32 %v3061, %v2239
    %v3066 = vrot.slane %v3062, 2
    %v3067 = vrot.slane %v3063, 2
    %v3068 = vsel %vm825, %v3066, %v3067
    %3069 = vrot.lane.b32.xlu0 %v3068, 127
    %v3070 = vpop.permute.xlu0 %3069
    %3071 = vrot.lane.b32.xlu0 %v3067, 127
    %v3072 = vpop.permute.xlu0 %3071
    %v3075 = vadd.f32 %v2951, %v3070
    %v3076 = vadd.f32 %v2952, %v3072
    %s3077 = sld [smem:[#allocation8 + $0xcd]]
    %v3078 = vstv %s3077
    %v3079 = vmul.f32 %v3078, %v2238
    %v3080 = vmul.f32 %v3078, %v2239
    %v3083 = vrot.slane %v3079, 2
    %v3084 = vrot.slane %v3080, 2
    %v3085 = vsel %vm825, %v3083, %v3084
    %3086 = vrot.lane.b32.xlu0 %v3085, 127
    %v3087 = vpop.permute.xlu0 %3086
    %3088 = vrot.lane.b32.xlu0 %v3084, 127
    %v3089 = vpop.permute.xlu0 %3088
    %v3092 = vadd.f32 %v2964, %v3087
    %v3093 = vadd.f32 %v2965, %v3089
    %s3094 = sld [smem:[#allocation8 + $0xf1]]
    %v3095 = vstv %s3094
    %v3096 = vmul.f32 %v3095, %v2238
    %v3097 = vmul.f32 %v3095, %v2239
    %v3100 = vrot.slane %v3096, 2
    %v3101 = vrot.slane %v3097, 2
    %v3102 = vsel %vm825, %v3100, %v3101
    %3103 = vrot.lane.b32.xlu0 %v3102, 127
    %v3104 = vpop.permute.xlu0 %3103
    %3105 = vrot.lane.b32.xlu0 %v3101, 127
    %v3106 = vpop.permute.xlu0 %3105
    %v3109 = vadd.f32 %v2977, %v3104
    %v3110 = vadd.f32 %v2978, %v3106
    %s3111 = sld [smem:[#allocation8 + $0x115]]
    %v3112 = vstv %s3111
    %v3113 = vmul.f32 %v3112, %v2238
    %v3114 = vmul.f32 %v3112, %v2239
    %v3117 = vrot.slane %v3113, 2
    %v3118 = vrot.slane %v3114, 2
    %v3119 = vsel %vm825, %v3117, %v3118
    %3120 = vrot.lane.b32.xlu0 %v3119, 127
    %v3121 = vpop.permute.xlu0 %3120
    %3122 = vrot.lane.b32.xlu0 %v3118, 127
    %v3123 = vpop.permute.xlu0 %3122
    %v3126 = vadd.f32 %v2990, %v3121
    %v3127 = vadd.f32 %v2991, %v3123
    %s3128 = sld [smem:[#allocation8 + $0x1a]]
    %v3129 = vstv %s3128
    %v3130 = vmul.f32 %v3129, %v2238
    %v3131 = vmul.f32 %v3129, %v2239
    %v3134 = vrot.slane %v3130, 2
    %v3135 = vrot.slane %v3131, 2
    %v3136 = vsel %vm825, %v3134, %v3135
    %3137 = vrot.lane.b32.xlu0 %v3136, 126
    %v3138 = vpop.permute.xlu0 %3137
    %3139 = vrot.lane.b32.xlu0 %v3135, 126
    %v3140 = vpop.permute.xlu0 %3139
    %v3143 = vadd.f32 %v3007, %v3138
    %v3144 = vadd.f32 %v3008, %v3140
    %s3145 = sld [smem:[#allocation8 + $0x3e]]
    %v3146 = vstv %s3145
    %v3147 = vmul.f32 %v3146, %v2238
    %v3148 = vmul.f32 %v3146, %v2239
    %v3151 = vrot.slane %v3147, 2
    %v3152 = vrot.slane %v3148, 2
    %v3153 = vsel %vm825, %v3151, %v3152
    %3154 = vrot.lane.b32.xlu0 %v3153, 126
    %v3155 = vpop.permute.xlu0 %3154
    %3156 = vrot.lane.b32.xlu0 %v3152, 126
    %v3157 = vpop.permute.xlu0 %3156
    %v3160 = vadd.f32 %v3024, %v3155
    %v3161 = vadd.f32 %v3025, %v3157
    %s3162 = sld [smem:[#allocation8 + $0x62]]
    %v3163 = vstv %s3162
    %v3164 = vmul.f32 %v3163, %v2238
    %v3165 = vmul.f32 %v3163, %v2239
    %v3168 = vrot.slane %v3164, 2
    %v3169 = vrot.slane %v3165, 2
    %v3170 = vsel %vm825, %v3168, %v3169
    %3171 = vrot.lane.b32.xlu0 %v3170, 126
    %v3172 = vpop.permute.xlu0 %3171
    %3173 = vrot.lane.b32.xlu0 %v3169, 126
    %v3174 = vpop.permute.xlu0 %3173
    %v3177 = vadd.f32 %v3041, %v3172
    %v3178 = vadd.f32 %v3042, %v3174
    %s3179 = sld [smem:[#allocation8 + $0x86]]
    %v3180 = vstv %s3179
    %v3181 = vmul.f32 %v3180, %v2238
    %v3182 = vmul.f32 %v3180, %v2239
    %v3185 = vrot.slane %v3181, 2
    %v3186 = vrot.slane %v3182, 2
    %v3187 = vsel %vm825, %v3185, %v3186
    %3188 = vrot.lane.b32.xlu0 %v3187, 126
    %v3189 = vpop.permute.xlu0 %3188
    %3190 = vrot.lane.b32.xlu0 %v3186, 126
    %v3191 = vpop.permute.xlu0 %3190
    %v3194 = vadd.f32 %v3058, %v3189
    %v3195 = vadd.f32 %v3059, %v3191
    %s3196 = sld [smem:[#allocation8 + $0xaa]]
    %v3197 = vstv %s3196
    %v3198 = vmul.f32 %v3197, %v2238
    %v3199 = vmul.f32 %v3197, %v2239
    %v3202 = vrot.slane %v3198, 2
    %v3203 = vrot.slane %v3199, 2
    %v3204 = vsel %vm825, %v3202, %v3203
    %3205 = vrot.lane.b32.xlu0 %v3204, 126
    %v3206 = vpop.permute.xlu0 %3205
    %3207 = vrot.lane.b32.xlu0 %v3203, 126
    %v3208 = vpop.permute.xlu0 %3207
    %v3211 = vadd.f32 %v3075, %v3206
    %v3212 = vadd.f32 %v3076, %v3208
    %s3213 = sld [smem:[#allocation8 + $0xce]]
    %v3214 = vstv %s3213
    %v3215 = vmul.f32 %v3214, %v2238
    %v3216 = vmul.f32 %v3214, %v2239
    %v3219 = vrot.slane %v3215, 2
    %v3220 = vrot.slane %v3216, 2
    %v3221 = vsel %vm825, %v3219, %v3220
    %3222 = vrot.lane.b32.xlu0 %v3221, 126
    %v3223 = vpop.permute.xlu0 %3222
    %3224 = vrot.lane.b32.xlu0 %v3220, 126
    %v3225 = vpop.permute.xlu0 %3224
    %v3228 = vadd.f32 %v3092, %v3223
    %v3229 = vadd.f32 %v3093, %v3225
    %s3230 = sld [smem:[#allocation8 + $0xf2]]
    %v3231 = vstv %s3230
    %v3232 = vmul.f32 %v3231, %v2238
    %v3233 = vmul.f32 %v3231, %v2239
    %v3236 = vrot.slane %v3232, 2
    %v3237 = vrot.slane %v3233, 2
    %v3238 = vsel %vm825, %v3236, %v3237
    %3239 = vrot.lane.b32.xlu0 %v3238, 126
    %v3240 = vpop.permute.xlu0 %3239
    %3241 = vrot.lane.b32.xlu0 %v3237, 126
    %v3242 = vpop.permute.xlu0 %3241
    %v3245 = vadd.f32 %v3109, %v3240
    %v3246 = vadd.f32 %v3110, %v3242
    %s3247 = sld [smem:[#allocation8 + $0x116]]
    %v3248 = vstv %s3247
    %v3249 = vmul.f32 %v3248, %v2238
    %v3250 = vmul.f32 %v3248, %v2239
    %v3253 = vrot.slane %v3249, 2
    %v3254 = vrot.slane %v3250, 2
    %v3255 = vsel %vm825, %v3253, %v3254
    %3256 = vrot.lane.b32.xlu0 %v3255, 126
    %v3257 = vpop.permute.xlu0 %3256
    %3258 = vrot.lane.b32.xlu0 %v3254, 126
    %v3259 = vpop.permute.xlu0 %3258
    %v3262 = vadd.f32 %v3126, %v3257
    %v3263 = vadd.f32 %v3127, %v3259
    %v3264 = vmul.f32 %v114, %v142
    %v3265 = vmul.f32 %v115, %v143
    %s3266 = sld [smem:[#allocation5 + $0x3]]
    %v3267 = vstv %s3266
    %v3268 = vmul.f32 %v3264, %v3267
    %v3269 = vmul.f32 %v3265, %v3267
    %s3270 = sld [smem:[#allocation6 + $0x3]]
    %v3271 = vstv %s3270
    %v3272 = vadd.f32 %v3268, %v3271
    %v3273 = vadd.f32 %v3269, %v3271
    %s3274 = sld [smem:[#allocation8 + $0x1b]]
    %v3275 = vstv %s3274
    %v3276 = vmul.f32 %v3275, %v3272
    %v3277 = vmul.f32 %v3275, %v3273
    %v3278 = vadd.f32 %v3143, %v3276
    %v3279 = vadd.f32 %v3144, %v3277
    %s3280 = sld [smem:[#allocation8 + $0x3f]]
    %v3281 = vstv %s3280
    %v3282 = vmul.f32 %v3281, %v3272
    %v3283 = vmul.f32 %v3281, %v3273
    %v3284 = vadd.f32 %v3160, %v3282
    %v3285 = vadd.f32 %v3161, %v3283
    %s3286 = sld [smem:[#allocation8 + $0x63]]
    %v3287 = vstv %s3286
    %v3288 = vmul.f32 %v3287, %v3272
    %v3289 = vmul.f32 %v3287, %v3273
    %v3290 = vadd.f32 %v3177, %v3288
    %v3291 = vadd.f32 %v3178, %v3289
    %s3292 = sld [smem:[#allocation8 + $0x87]]
    %v3293 = vstv %s3292
    %v3294 = vmul.f32 %v3293, %v3272
    %v3295 = vmul.f32 %v3293, %v3273
    %v3296 = vadd.f32 %v3194, %v3294
    %v3297 = vadd.f32 %v3195, %v3295
    %s3298 = sld [smem:[#allocation8 + $0xab]]
    %v3299 = vstv %s3298
    %v3300 = vmul.f32 %v3299, %v3272
    %v3301 = vmul.f32 %v3299, %v3273
    %v3302 = vadd.f32 %v3211, %v3300
    %v3303 = vadd.f32 %v3212, %v3301
    %s3304 = sld [smem:[#allocation8 + $0xcf]]
    %v3305 = vstv %s3304
    %v3306 = vmul.f32 %v3305, %v3272
    %v3307 = vmul.f32 %v3305, %v3273
    %v3308 = vadd.f32 %v3228, %v3306
    %v3309 = vadd.f32 %v3229, %v3307
    %s3310 = sld [smem:[#allocation8 + $0xf3]]
    %v3311 = vstv %s3310
    %v3312 = vmul.f32 %v3311, %v3272
    %v3313 = vmul.f32 %v3311, %v3273
    %v3314 = vadd.f32 %v3245, %v3312
    %v3315 = vadd.f32 %v3246, %v3313
    %s3316 = sld [smem:[#allocation8 + $0x117]]
    %v3317 = vstv %s3316
    %v3318 = vmul.f32 %v3317, %v3272
    %v3319 = vmul.f32 %v3317, %v3273
    %v3320 = vadd.f32 %v3262, %v3318
    %v3321 = vadd.f32 %v3263, %v3319
    %s3322 = sld [smem:[#allocation8 + $0x1c]]
    %v3323 = vstv %s3322
    %v3324 = vmul.f32 %v3323, %v3272
    %v3325 = vmul.f32 %v3323, %v3273
    %3328 = vrot.lane.b32.xlu0 %v3324, 127
    %v3329 = vpop.permute.xlu0 %3328
    %3330 = vrot.lane.b32.xlu0 %v3325, 127
    %v3331 = vpop.permute.xlu0 %3330
    %v3334 = vadd.f32 %v3278, %v3329
    %v3335 = vadd.f32 %v3279, %v3331
    %s3336 = sld [smem:[#allocation8 + $0x40]]
    %v3337 = vstv %s3336
    %v3338 = vmul.f32 %v3337, %v3272
    %v3339 = vmul.f32 %v3337, %v3273
    %3342 = vrot.lane.b32.xlu0 %v3338, 127
    %v3343 = vpop.permute.xlu0 %3342
    %3344 = vrot.lane.b32.xlu0 %v3339, 127
    %v3345 = vpop.permute.xlu0 %3344
    %v3348 = vadd.f32 %v3284, %v3343
    %v3349 = vadd.f32 %v3285, %v3345
    %s3350 = sld [smem:[#allocation8 + $0x64]]
    %v3351 = vstv %s3350
    %v3352 = vmul.f32 %v3351, %v3272
    %v3353 = vmul.f32 %v3351, %v3273
    %3356 = vrot.lane.b32.xlu0 %v3352, 127
    %v3357 = vpop.permute.xlu0 %3356
    %3358 = vrot.lane.b32.xlu0 %v3353, 127
    %v3359 = vpop.permute.xlu0 %3358
    %v3362 = vadd.f32 %v3290, %v3357
    %v3363 = vadd.f32 %v3291, %v3359
    %s3364 = sld [smem:[#allocation8 + $0x88]]
    %v3365 = vstv %s3364
    %v3366 = vmul.f32 %v3365, %v3272
    %v3367 = vmul.f32 %v3365, %v3273
    %3370 = vrot.lane.b32.xlu0 %v3366, 127
    %v3371 = vpop.permute.xlu0 %3370
    %3372 = vrot.lane.b32.xlu0 %v3367, 127
    %v3373 = vpop.permute.xlu0 %3372
    %v3376 = vadd.f32 %v3296, %v3371
    %v3377 = vadd.f32 %v3297, %v3373
    %s3378 = sld [smem:[#allocation8 + $0xac]]
    %v3379 = vstv %s3378
    %v3380 = vmul.f32 %v3379, %v3272
    %v3381 = vmul.f32 %v3379, %v3273
    %3384 = vrot.lane.b32.xlu0 %v3380, 127
    %v3385 = vpop.permute.xlu0 %3384
    %3386 = vrot.lane.b32.xlu0 %v3381, 127
    %v3387 = vpop.permute.xlu0 %3386
    %v3390 = vadd.f32 %v3302, %v3385
    %v3391 = vadd.f32 %v3303, %v3387
    %s3392 = sld [smem:[#allocation8 + $0xd0]]
    %v3393 = vstv %s3392
    %v3394 = vmul.f32 %v3393, %v3272
    %v3395 = vmul.f32 %v3393, %v3273
    %3398 = vrot.lane.b32.xlu0 %v3394, 127
    %v3399 = vpop.permute.xlu0 %3398
    %3400 = vrot.lane.b32.xlu0 %v3395, 127
    %v3401 = vpop.permute.xlu0 %3400
    %v3404 = vadd.f32 %v3308, %v3399
    %v3405 = vadd.f32 %v3309, %v3401
    %s3406 = sld [smem:[#allocation8 + $0xf4]]
    %v3407 = vstv %s3406
    %v3408 = vmul.f32 %v3407, %v3272
    %v3409 = vmul.f32 %v3407, %v3273
    %3412 = vrot.lane.b32.xlu0 %v3408, 127
    %v3413 = vpop.permute.xlu0 %3412
    %3414 = vrot.lane.b32.xlu0 %v3409, 127
    %v3415 = vpop.permute.xlu0 %3414
    %v3418 = vadd.f32 %v3314, %v3413
    %v3419 = vadd.f32 %v3315, %v3415
    %s3420 = sld [smem:[#allocation8 + $0x118]]
    %v3421 = vstv %s3420
    %v3422 = vmul.f32 %v3421, %v3272
    %v3423 = vmul.f32 %v3421, %v3273
    %3426 = vrot.lane.b32.xlu0 %v3422, 127
    %v3427 = vpop.permute.xlu0 %3426
    %3428 = vrot.lane.b32.xlu0 %v3423, 127
    %v3429 = vpop.permute.xlu0 %3428
    %v3432 = vadd.f32 %v3320, %v3427
    %v3433 = vadd.f32 %v3321, %v3429
    %s3434 = sld [smem:[#allocation8 + $0x1d]]
    %v3435 = vstv %s3434
    %v3436 = vmul.f32 %v3435, %v3272
    %v3437 = vmul.f32 %v3435, %v3273
    %3440 = vrot.lane.b32.xlu0 %v3436, 126
    %v3441 = vpop.permute.xlu0 %3440
    %3442 = vrot.lane.b32.xlu0 %v3437, 126
    %v3443 = vpop.permute.xlu0 %3442
    %v3446 = vadd.f32 %v3334, %v3441
    %v3447 = vadd.f32 %v3335, %v3443
    %s3448 = sld [smem:[#allocation8 + $0x41]]
    %v3449 = vstv %s3448
    %v3450 = vmul.f32 %v3449, %v3272
    %v3451 = vmul.f32 %v3449, %v3273
    %3454 = vrot.lane.b32.xlu0 %v3450, 126
    %v3455 = vpop.permute.xlu0 %3454
    %3456 = vrot.lane.b32.xlu0 %v3451, 126
    %v3457 = vpop.permute.xlu0 %3456
    %v3460 = vadd.f32 %v3348, %v3455
    %v3461 = vadd.f32 %v3349, %v3457
    %s3462 = sld [smem:[#allocation8 + $0x65]]
    %v3463 = vstv %s3462
    %v3464 = vmul.f32 %v3463, %v3272
    %v3465 = vmul.f32 %v3463, %v3273
    %3468 = vrot.lane.b32.xlu0 %v3464, 126
    %v3469 = vpop.permute.xlu0 %3468
    %3470 = vrot.lane.b32.xlu0 %v3465, 126
    %v3471 = vpop.permute.xlu0 %3470
    %v3474 = vadd.f32 %v3362, %v3469
    %v3475 = vadd.f32 %v3363, %v3471
    %s3476 = sld [smem:[#allocation8 + $0x89]]
    %v3477 = vstv %s3476
    %v3478 = vmul.f32 %v3477, %v3272
    %v3479 = vmul.f32 %v3477, %v3273
    %3482 = vrot.lane.b32.xlu0 %v3478, 126
    %v3483 = vpop.permute.xlu0 %3482
    %3484 = vrot.lane.b32.xlu0 %v3479, 126
    %v3485 = vpop.permute.xlu0 %3484
    %v3488 = vadd.f32 %v3376, %v3483
    %v3489 = vadd.f32 %v3377, %v3485
    %s3490 = sld [smem:[#allocation8 + $0xad]]
    %v3491 = vstv %s3490
    %v3492 = vmul.f32 %v3491, %v3272
    %v3493 = vmul.f32 %v3491, %v3273
    %3496 = vrot.lane.b32.xlu0 %v3492, 126
    %v3497 = vpop.permute.xlu0 %3496
    %3498 = vrot.lane.b32.xlu0 %v3493, 126
    %v3499 = vpop.permute.xlu0 %3498
    %v3502 = vadd.f32 %v3390, %v3497
    %v3503 = vadd.f32 %v3391, %v3499
    %s3504 = sld [smem:[#allocation8 + $0xd1]]
    %v3505 = vstv %s3504
    %v3506 = vmul.f32 %v3505, %v3272
    %v3507 = vmul.f32 %v3505, %v3273
    %3510 = vrot.lane.b32.xlu0 %v3506, 126
    %v3511 = vpop.permute.xlu0 %3510
    %3512 = vrot.lane.b32.xlu0 %v3507, 126
    %v3513 = vpop.permute.xlu0 %3512
    %v3516 = vadd.f32 %v3404, %v3511
    %v3517 = vadd.f32 %v3405, %v3513
    %s3518 = sld [smem:[#allocation8 + $0xf5]]
    %v3519 = vstv %s3518
    %v3520 = vmul.f32 %v3519, %v3272
    %v3521 = vmul.f32 %v3519, %v3273
    %3524 = vrot.lane.b32.xlu0 %v3520, 126
    %v3525 = vpop.permute.xlu0 %3524
    %3526 = vrot.lane.b32.xlu0 %v3521, 126
    %v3527 = vpop.permute.xlu0 %3526
    %v3530 = vadd.f32 %v3418, %v3525
    %v3531 = vadd.f32 %v3419, %v3527
    %s3532 = sld [smem:[#allocation8 + $0x119]]
    %v3533 = vstv %s3532
    %v3534 = vmul.f32 %v3533, %v3272
    %v3535 = vmul.f32 %v3533, %v3273
    %3538 = vrot.lane.b32.xlu0 %v3534, 126
    %v3539 = vpop.permute.xlu0 %3538
    %3540 = vrot.lane.b32.xlu0 %v3535, 126
    %v3541 = vpop.permute.xlu0 %3540
    %v3544 = vadd.f32 %v3432, %v3539
    %v3545 = vadd.f32 %v3433, %v3541
    %s3546 = sld [smem:[#allocation8 + $0x1e]]
    %v3547 = vstv %s3546
    %v3548 = vmul.f32 %v3547, %v3272
    %v3549 = vmul.f32 %v3547, %v3273
    %v3552 = vrot.slane %v3548, 1
    %v3553 = vrot.slane %v3549, 1
    %v3554 = vsel %vm448, %v3552, %v3553
    %v3557 = vadd.f32 %v3446, %v3554
    %v3558 = vadd.f32 %v3447, %v3553
    %s3559 = sld [smem:[#allocation8 + $0x42]]
    %v3560 = vstv %s3559
    %v3561 = vmul.f32 %v3560, %v3272
    %v3562 = vmul.f32 %v3560, %v3273
    %v3565 = vrot.slane %v3561, 1
    %v3566 = vrot.slane %v3562, 1
    %v3567 = vsel %vm448, %v3565, %v3566
    %v3570 = vadd.f32 %v3460, %v3567
    %v3571 = vadd.f32 %v3461, %v3566
    %s3572 = sld [smem:[#allocation8 + $0x66]]
    %v3573 = vstv %s3572
    %v3574 = vmul.f32 %v3573, %v3272
    %v3575 = vmul.f32 %v3573, %v3273
    %v3578 = vrot.slane %v3574, 1
    %v3579 = vrot.slane %v3575, 1
    %v3580 = vsel %vm448, %v3578, %v3579
    %v3583 = vadd.f32 %v3474, %v3580
    %v3584 = vadd.f32 %v3475, %v3579
    %s3585 = sld [smem:[#allocation8 + $0x8a]]
    %v3586 = vstv %s3585
    %v3587 = vmul.f32 %v3586, %v3272
    %v3588 = vmul.f32 %v3586, %v3273
    %v3591 = vrot.slane %v3587, 1
    %v3592 = vrot.slane %v3588, 1
    %v3593 = vsel %vm448, %v3591, %v3592
    %v3596 = vadd.f32 %v3488, %v3593
    %v3597 = vadd.f32 %v3489, %v3592
    %s3598 = sld [smem:[#allocation8 + $0xae]]
    %v3599 = vstv %s3598
    %v3600 = vmul.f32 %v3599, %v3272
    %v3601 = vmul.f32 %v3599, %v3273
    %v3604 = vrot.slane %v3600, 1
    %v3605 = vrot.slane %v3601, 1
    %v3606 = vsel %vm448, %v3604, %v3605
    %v3609 = vadd.f32 %v3502, %v3606
    %v3610 = vadd.f32 %v3503, %v3605
    %s3611 = sld [smem:[#allocation8 + $0xd2]]
    %v3612 = vstv %s3611
    %v3613 = vmul.f32 %v3612, %v3272
    %v3614 = vmul.f32 %v3612, %v3273
    %v3617 = vrot.slane %v3613, 1
    %v3618 = vrot.slane %v3614, 1
    %v3619 = vsel %vm448, %v3617, %v3618
    %v3622 = vadd.f32 %v3516, %v3619
    %v3623 = vadd.f32 %v3517, %v3618
    %s3624 = sld [smem:[#allocation8 + $0xf6]]
    %v3625 = vstv %s3624
    %v3626 = vmul.f32 %v3625, %v3272
    %v3627 = vmul.f32 %v3625, %v3273
    %v3630 = vrot.slane %v3626, 1
    %v3631 = vrot.slane %v3627, 1
    %v3632 = vsel %vm448, %v3630, %v3631
    %v3635 = vadd.f32 %v3530, %v3632
    %v3636 = vadd.f32 %v3531, %v3631
    %s3637 = sld [smem:[#allocation8 + $0x11a]]
    %v3638 = vstv %s3637
    %v3639 = vmul.f32 %v3638, %v3272
    %v3640 = vmul.f32 %v3638, %v3273
    %v3643 = vrot.slane %v3639, 1
    %v3644 = vrot.slane %v3640, 1
    %v3645 = vsel %vm448, %v3643, %v3644
    %v3648 = vadd.f32 %v3544, %v3645
    %v3649 = vadd.f32 %v3545, %v3644
    %s3650 = sld [smem:[#allocation8 + $0x1f]]
    %v3651 = vstv %s3650
    %v3652 = vmul.f32 %v3651, %v3272
    %v3653 = vmul.f32 %v3651, %v3273
    %v3656 = vrot.slane %v3652, 1
    %v3657 = vrot.slane %v3653, 1
    %v3658 = vsel %vm448, %v3656, %v3657
    %3659 = vrot.lane.b32.xlu0 %v3658, 127
    %v3660 = vpop.permute.xlu0 %3659
    %3661 = vrot.lane.b32.xlu0 %v3657, 127
    %v3662 = vpop.permute.xlu0 %3661
    %v3665 = vadd.f32 %v3557, %v3660
    %v3666 = vadd.f32 %v3558, %v3662
    %s3667 = sld [smem:[#allocation8 + $0x43]]
    %v3668 = vstv %s3667
    %v3669 = vmul.f32 %v3668, %v3272
    %v3670 = vmul.f32 %v3668, %v3273
    %v3673 = vrot.slane %v3669, 1
    %v3674 = vrot.slane %v3670, 1
    %v3675 = vsel %vm448, %v3673, %v3674
    %3676 = vrot.lane.b32.xlu0 %v3675, 127
    %v3677 = vpop.permute.xlu0 %3676
    %3678 = vrot.lane.b32.xlu0 %v3674, 127
    %v3679 = vpop.permute.xlu0 %3678
    %v3682 = vadd.f32 %v3570, %v3677
    %v3683 = vadd.f32 %v3571, %v3679
    %s3684 = sld [smem:[#allocation8 + $0x67]]
    %v3685 = vstv %s3684
    %v3686 = vmul.f32 %v3685, %v3272
    %v3687 = vmul.f32 %v3685, %v3273
    %v3690 = vrot.slane %v3686, 1
    %v3691 = vrot.slane %v3687, 1
    %v3692 = vsel %vm448, %v3690, %v3691
    %3693 = vrot.lane.b32.xlu0 %v3692, 127
    %v3694 = vpop.permute.xlu0 %3693
    %3695 = vrot.lane.b32.xlu0 %v3691, 127
    %v3696 = vpop.permute.xlu0 %3695
    %v3699 = vadd.f32 %v3583, %v3694
    %v3700 = vadd.f32 %v3584, %v3696
    %s3701 = sld [smem:[#allocation8 + $0x8b]]
    %v3702 = vstv %s3701
    %v3703 = vmul.f32 %v3702, %v3272
    %v3704 = vmul.f32 %v3702, %v3273
    %v3707 = vrot.slane %v3703, 1
    %v3708 = vrot.slane %v3704, 1
    %v3709 = vsel %vm448, %v3707, %v3708
    %3710 = vrot.lane.b32.xlu0 %v3709, 127
    %v3711 = vpop.permute.xlu0 %3710
    %3712 = vrot.lane.b32.xlu0 %v3708, 127
    %v3713 = vpop.permute.xlu0 %3712
    %v3716 = vadd.f32 %v3596, %v3711
    %v3717 = vadd.f32 %v3597, %v3713
    %s3718 = sld [smem:[#allocation8 + $0xaf]]
    %v3719 = vstv %s3718
    %v3720 = vmul.f32 %v3719, %v3272
    %v3721 = vmul.f32 %v3719, %v3273
    %v3724 = vrot.slane %v3720, 1
    %v3725 = vrot.slane %v3721, 1
    %v3726 = vsel %vm448, %v3724, %v3725
    %3727 = vrot.lane.b32.xlu0 %v3726, 127
    %v3728 = vpop.permute.xlu0 %3727
    %3729 = vrot.lane.b32.xlu0 %v3725, 127
    %v3730 = vpop.permute.xlu0 %3729
    %v3733 = vadd.f32 %v3609, %v3728
    %v3734 = vadd.f32 %v3610, %v3730
    %s3735 = sld [smem:[#allocation8 + $0xd3]]
    %v3736 = vstv %s3735
    %v3737 = vmul.f32 %v3736, %v3272
    %v3738 = vmul.f32 %v3736, %v3273
    %v3741 = vrot.slane %v3737, 1
    %v3742 = vrot.slane %v3738, 1
    %v3743 = vsel %vm448, %v3741, %v3742
    %3744 = vrot.lane.b32.xlu0 %v3743, 127
    %v3745 = vpop.permute.xlu0 %3744
    %3746 = vrot.lane.b32.xlu0 %v3742, 127
    %v3747 = vpop.permute.xlu0 %3746
    %v3750 = vadd.f32 %v3622, %v3745
    %v3751 = vadd.f32 %v3623, %v3747
    %s3752 = sld [smem:[#allocation8 + $0xf7]]
    %v3753 = vstv %s3752
    %v3754 = vmul.f32 %v3753, %v3272
    %v3755 = vmul.f32 %v3753, %v3273
    %v3758 = vrot.slane %v3754, 1
    %v3759 = vrot.slane %v3755, 1
    %v3760 = vsel %vm448, %v3758, %v3759
    %3761 = vrot.lane.b32.xlu0 %v3760, 127
    %v3762 = vpop.permute.xlu0 %3761
    %3763 = vrot.lane.b32.xlu0 %v3759, 127
    %v3764 = vpop.permute.xlu0 %3763
    %v3767 = vadd.f32 %v3635, %v3762
    %v3768 = vadd.f32 %v3636, %v3764
    %s3769 = sld [smem:[#allocation8 + $0x11b]]
    %v3770 = vstv %s3769
    %v3771 = vmul.f32 %v3770, %v3272
    %v3772 = vmul.f32 %v3770, %v3273
    %v3775 = vrot.slane %v3771, 1
    %v3776 = vrot.slane %v3772, 1
    %v3777 = vsel %vm448, %v3775, %v3776
    %3778 = vrot.lane.b32.xlu0 %v3777, 127
    %v3779 = vpop.permute.xlu0 %3778
    %3780 = vrot.lane.b32.xlu0 %v3776, 127
    %v3781 = vpop.permute.xlu0 %3780
    %v3784 = vadd.f32 %v3648, %v3779
    %v3785 = vadd.f32 %v3649, %v3781
    %s3786 = sld [smem:[#allocation8 + $0x20]]
    %v3787 = vstv %s3786
    %v3788 = vmul.f32 %v3787, %v3272
    %v3789 = vmul.f32 %v3787, %v3273
    %v3792 = vrot.slane %v3788, 1
    %v3793 = vrot.slane %v3789, 1
    %v3794 = vsel %vm448, %v3792, %v3793
    %3795 = vrot.lane.b32.xlu0 %v3794, 126
    %v3796 = vpop.permute.xlu0 %3795
    %3797 = vrot.lane.b32.xlu0 %v3793, 126
    %v3798 = vpop.permute.xlu0 %3797
    %v3801 = vadd.f32 %v3665, %v3796
    %v3802 = vadd.f32 %v3666, %v3798
    %s3803 = sld [smem:[#allocation8 + $0x44]]
    %v3804 = vstv %s3803
    %v3805 = vmul.f32 %v3804, %v3272
    %v3806 = vmul.f32 %v3804, %v3273
    %v3809 = vrot.slane %v3805, 1
    %v3810 = vrot.slane %v3806, 1
    %v3811 = vsel %vm448, %v3809, %v3810
    %3812 = vrot.lane.b32.xlu0 %v3811, 126
    %v3813 = vpop.permute.xlu0 %3812
    %3814 = vrot.lane.b32.xlu0 %v3810, 126
    %v3815 = vpop.permute.xlu0 %3814
    %v3818 = vadd.f32 %v3682, %v3813
    %v3819 = vadd.f32 %v3683, %v3815
    %s3820 = sld [smem:[#allocation8 + $0x68]]
    %v3821 = vstv %s3820
    %v3822 = vmul.f32 %v3821, %v3272
    %v3823 = vmul.f32 %v3821, %v3273
    %v3826 = vrot.slane %v3822, 1
    %v3827 = vrot.slane %v3823, 1
    %v3828 = vsel %vm448, %v3826, %v3827
    %3829 = vrot.lane.b32.xlu0 %v3828, 126
    %v3830 = vpop.permute.xlu0 %3829
    %3831 = vrot.lane.b32.xlu0 %v3827, 126
    %v3832 = vpop.permute.xlu0 %3831
    %v3835 = vadd.f32 %v3699, %v3830
    %v3836 = vadd.f32 %v3700, %v3832
    %s3837 = sld [smem:[#allocation8 + $0x8c]]
    %v3838 = vstv %s3837
    %v3839 = vmul.f32 %v3838, %v3272
    %v3840 = vmul.f32 %v3838, %v3273
    %v3843 = vrot.slane %v3839, 1
    %v3844 = vrot.slane %v3840, 1
    %v3845 = vsel %vm448, %v3843, %v3844
    %3846 = vrot.lane.b32.xlu0 %v3845, 126
    %v3847 = vpop.permute.xlu0 %3846
    %3848 = vrot.lane.b32.xlu0 %v3844, 126
    %v3849 = vpop.permute.xlu0 %3848
    %v3852 = vadd.f32 %v3716, %v3847
    %v3853 = vadd.f32 %v3717, %v3849
    %s3854 = sld [smem:[#allocation8 + $0xb0]]
    %v3855 = vstv %s3854
    %v3856 = vmul.f32 %v3855, %v3272
    %v3857 = vmul.f32 %v3855, %v3273
    %v3860 = vrot.slane %v3856, 1
    %v3861 = vrot.slane %v3857, 1
    %v3862 = vsel %vm448, %v3860, %v3861
    %3863 = vrot.lane.b32.xlu0 %v3862, 126
    %v3864 = vpop.permute.xlu0 %3863
    %3865 = vrot.lane.b32.xlu0 %v3861, 126
    %v3866 = vpop.permute.xlu0 %3865
    %v3869 = vadd.f32 %v3733, %v3864
    %v3870 = vadd.f32 %v3734, %v3866
    %s3871 = sld [smem:[#allocation8 + $0xd4]]
    %v3872 = vstv %s3871
    %v3873 = vmul.f32 %v3872, %v3272
    %v3874 = vmul.f32 %v3872, %v3273
    %v3877 = vrot.slane %v3873, 1
    %v3878 = vrot.slane %v3874, 1
    %v3879 = vsel %vm448, %v3877, %v3878
    %3880 = vrot.lane.b32.xlu0 %v3879, 126
    %v3881 = vpop.permute.xlu0 %3880
    %3882 = vrot.lane.b32.xlu0 %v3878, 126
    %v3883 = vpop.permute.xlu0 %3882
    %v3886 = vadd.f32 %v3750, %v3881
    %v3887 = vadd.f32 %v3751, %v3883
    %s3888 = sld [smem:[#allocation8 + $0xf8]]
    %v3889 = vstv %s3888
    %v3890 = vmul.f32 %v3889, %v3272
    %v3891 = vmul.f32 %v3889, %v3273
    %v3894 = vrot.slane %v3890, 1
    %v3895 = vrot.slane %v3891, 1
    %v3896 = vsel %vm448, %v3894, %v3895
    %3897 = vrot.lane.b32.xlu0 %v3896, 126
    %v3898 = vpop.permute.xlu0 %3897
    %3899 = vrot.lane.b32.xlu0 %v3895, 126
    %v3900 = vpop.permute.xlu0 %3899
    %v3903 = vadd.f32 %v3767, %v3898
    %v3904 = vadd.f32 %v3768, %v3900
    %s3905 = sld [smem:[#allocation8 + $0x11c]]
    %v3906 = vstv %s3905
    %v3907 = vmul.f32 %v3906, %v3272
    %v3908 = vmul.f32 %v3906, %v3273
    %v3911 = vrot.slane %v3907, 1
    %v3912 = vrot.slane %v3908, 1
    %v3913 = vsel %vm448, %v3911, %v3912
    %3914 = vrot.lane.b32.xlu0 %v3913, 126
    %v3915 = vpop.permute.xlu0 %3914
    %3916 = vrot.lane.b32.xlu0 %v3912, 126
    %v3917 = vpop.permute.xlu0 %3916
    %v3920 = vadd.f32 %v3784, %v3915
    %v3921 = vadd.f32 %v3785, %v3917
    %s3922 = sld [smem:[#allocation8 + $0x21]]
    %v3923 = vstv %s3922
    %v3924 = vmul.f32 %v3923, %v3272
    %v3925 = vmul.f32 %v3923, %v3273
    %v3928 = vrot.slane %v3924, 2
    %v3929 = vrot.slane %v3925, 2
    %v3930 = vsel %vm825, %v3928, %v3929
    %v3933 = vadd.f32 %v3801, %v3930
    %v3934 = vadd.f32 %v3802, %v3929
    %s3935 = sld [smem:[#allocation8 + $0x45]]
    %v3936 = vstv %s3935
    %v3937 = vmul.f32 %v3936, %v3272
    %v3938 = vmul.f32 %v3936, %v3273
    %v3941 = vrot.slane %v3937, 2
    %v3942 = vrot.slane %v3938, 2
    %v3943 = vsel %vm825, %v3941, %v3942
    %v3946 = vadd.f32 %v3818, %v3943
    %v3947 = vadd.f32 %v3819, %v3942
    %s3948 = sld [smem:[#allocation8 + $0x69]]
    %v3949 = vstv %s3948
    %v3950 = vmul.f32 %v3949, %v3272
    %v3951 = vmul.f32 %v3949, %v3273
    %v3954 = vrot.slane %v3950, 2
    %v3955 = vrot.slane %v3951, 2
    %v3956 = vsel %vm825, %v3954, %v3955
    %v3959 = vadd.f32 %v3835, %v3956
    %v3960 = vadd.f32 %v3836, %v3955
    %s3961 = sld [smem:[#allocation8 + $0x8d]]
    %v3962 = vstv %s3961
    %v3963 = vmul.f32 %v3962, %v3272
    %v3964 = vmul.f32 %v3962, %v3273
    %v3967 = vrot.slane %v3963, 2
    %v3968 = vrot.slane %v3964, 2
    %v3969 = vsel %vm825, %v3967, %v3968
    %v3972 = vadd.f32 %v3852, %v3969
    %v3973 = vadd.f32 %v3853, %v3968
    %s3974 = sld [smem:[#allocation8 + $0xb1]]
    %v3975 = vstv %s3974
    %v3976 = vmul.f32 %v3975, %v3272
    %v3977 = vmul.f32 %v3975, %v3273
    %v3980 = vrot.slane %v3976, 2
    %v3981 = vrot.slane %v3977, 2
    %v3982 = vsel %vm825, %v3980, %v3981
    %v3985 = vadd.f32 %v3869, %v3982
    %v3986 = vadd.f32 %v3870, %v3981
    %s3987 = sld [smem:[#allocation8 + $0xd5]]
    %v3988 = vstv %s3987
    %v3989 = vmul.f32 %v3988, %v3272
    %v3990 = vmul.f32 %v3988, %v3273
    %v3993 = vrot.slane %v3989, 2
    %v3994 = vrot.slane %v3990, 2
    %v3995 = vsel %vm825, %v3993, %v3994
    %v3998 = vadd.f32 %v3886, %v3995
    %v3999 = vadd.f32 %v3887, %v3994
    %s4000 = sld [smem:[#allocation8 + $0xf9]]
    %v4001 = vstv %s4000
    %v4002 = vmul.f32 %v4001, %v3272
    %v4003 = vmul.f32 %v4001, %v3273
    %v4006 = vrot.slane %v4002, 2
    %v4007 = vrot.slane %v4003, 2
    %v4008 = vsel %vm825, %v4006, %v4007
    %v4011 = vadd.f32 %v3903, %v4008
    %v4012 = vadd.f32 %v3904, %v4007
    %s4013 = sld [smem:[#allocation8 + $0x11d]]
    %v4014 = vstv %s4013
    %v4015 = vmul.f32 %v4014, %v3272
    %v4016 = vmul.f32 %v4014, %v3273
    %v4019 = vrot.slane %v4015, 2
    %v4020 = vrot.slane %v4016, 2
    %v4021 = vsel %vm825, %v4019, %v4020
    %v4024 = vadd.f32 %v3920, %v4021
    %v4025 = vadd.f32 %v3921, %v4020
    %s4026 = sld [smem:[#allocation8 + $0x22]]
    %v4027 = vstv %s4026
    %v4028 = vmul.f32 %v4027, %v3272
    %v4029 = vmul.f32 %v4027, %v3273
    %v4032 = vrot.slane %v4028, 2
    %v4033 = vrot.slane %v4029, 2
    %v4034 = vsel %vm825, %v4032, %v4033
    %4035 = vrot.lane.b32.xlu0 %v4034, 127
    %v4036 = vpop.permute.xlu0 %4035
    %4037 = vrot.lane.b32.xlu0 %v4033, 127
    %v4038 = vpop.permute.xlu0 %4037
    %v4041 = vadd.f32 %v3933, %v4036
    %v4042 = vadd.f32 %v3934, %v4038
    %s4043 = sld [smem:[#allocation8 + $0x46]]
    %v4044 = vstv %s4043
    %v4045 = vmul.f32 %v4044, %v3272
    %v4046 = vmul.f32 %v4044, %v3273
    %v4049 = vrot.slane %v4045, 2
    %v4050 = vrot.slane %v4046, 2
    %v4051 = vsel %vm825, %v4049, %v4050
    %4052 = vrot.lane.b32.xlu0 %v4051, 127
    %v4053 = vpop.permute.xlu0 %4052
    %4054 = vrot.lane.b32.xlu0 %v4050, 127
    %v4055 = vpop.permute.xlu0 %4054
    %v4058 = vadd.f32 %v3946, %v4053
    %v4059 = vadd.f32 %v3947, %v4055
    %s4060 = sld [smem:[#allocation8 + $0x6a]]
    %v4061 = vstv %s4060
    %v4062 = vmul.f32 %v4061, %v3272
    %v4063 = vmul.f32 %v4061, %v3273
    %v4066 = vrot.slane %v4062, 2
    %v4067 = vrot.slane %v4063, 2
    %v4068 = vsel %vm825, %v4066, %v4067
    %4069 = vrot.lane.b32.xlu0 %v4068, 127
    %v4070 = vpop.permute.xlu0 %4069
    %4071 = vrot.lane.b32.xlu0 %v4067, 127
    %v4072 = vpop.permute.xlu0 %4071
    %v4075 = vadd.f32 %v3959, %v4070
    %v4076 = vadd.f32 %v3960, %v4072
    %s4077 = sld [smem:[#allocation8 + $0x8e]]
    %v4078 = vstv %s4077
    %v4079 = vmul.f32 %v4078, %v3272
    %v4080 = vmul.f32 %v4078, %v3273
    %v4083 = vrot.slane %v4079, 2
    %v4084 = vrot.slane %v4080, 2
    %v4085 = vsel %vm825, %v4083, %v4084
    %4086 = vrot.lane.b32.xlu0 %v4085, 127
    %v4087 = vpop.permute.xlu0 %4086
    %4088 = vrot.lane.b32.xlu0 %v4084, 127
    %v4089 = vpop.permute.xlu0 %4088
    %v4092 = vadd.f32 %v3972, %v4087
    %v4093 = vadd.f32 %v3973, %v4089
    %s4094 = sld [smem:[#allocation8 + $0xb2]]
    %v4095 = vstv %s4094
    %v4096 = vmul.f32 %v4095, %v3272
    %v4097 = vmul.f32 %v4095, %v3273
    %v4100 = vrot.slane %v4096, 2
    %v4101 = vrot.slane %v4097, 2
    %v4102 = vsel %vm825, %v4100, %v4101
    %4103 = vrot.lane.b32.xlu0 %v4102, 127
    %v4104 = vpop.permute.xlu0 %4103
    %4105 = vrot.lane.b32.xlu0 %v4101, 127
    %v4106 = vpop.permute.xlu0 %4105
    %v4109 = vadd.f32 %v3985, %v4104
    %v4110 = vadd.f32 %v3986, %v4106
    %s4111 = sld [smem:[#allocation8 + $0xd6]]
    %v4112 = vstv %s4111
    %v4113 = vmul.f32 %v4112, %v3272
    %v4114 = vmul.f32 %v4112, %v3273
    %v4117 = vrot.slane %v4113, 2
    %v4118 = vrot.slane %v4114, 2
    %v4119 = vsel %vm825, %v4117, %v4118
    %4120 = vrot.lane.b32.xlu0 %v4119, 127
    %v4121 = vpop.permute.xlu0 %4120
    %4122 = vrot.lane.b32.xlu0 %v4118, 127
    %v4123 = vpop.permute.xlu0 %4122
    %v4126 = vadd.f32 %v3998, %v4121
    %v4127 = vadd.f32 %v3999, %v4123
    %s4128 = sld [smem:[#allocation8 + $0xfa]]
    %v4129 = vstv %s4128
    %v4130 = vmul.f32 %v4129, %v3272
    %v4131 = vmul.f32 %v4129, %v3273
    %v4134 = vrot.slane %v4130, 2
    %v4135 = vrot.slane %v4131, 2
    %v4136 = vsel %vm825, %v4134, %v4135
    %4137 = vrot.lane.b32.xlu0 %v4136, 127
    %v4138 = vpop.permute.xlu0 %4137
    %4139 = vrot.lane.b32.xlu0 %v4135, 127
    %v4140 = vpop.permute.xlu0 %4139
    %v4143 = vadd.f32 %v4011, %v4138
    %v4144 = vadd.f32 %v4012, %v4140
    %s4145 = sld [smem:[#allocation8 + $0x11e]]
    %v4146 = vstv %s4145
    %v4147 = vmul.f32 %v4146, %v3272
    %v4148 = vmul.f32 %v4146, %v3273
    %v4151 = vrot.slane %v4147, 2
    %v4152 = vrot.slane %v4148, 2
    %v4153 = vsel %vm825, %v4151, %v4152
    %4154 = vrot.lane.b32.xlu0 %v4153, 127
    %v4155 = vpop.permute.xlu0 %4154
    %4156 = vrot.lane.b32.xlu0 %v4152, 127
    %v4157 = vpop.permute.xlu0 %4156
    %v4160 = vadd.f32 %v4024, %v4155
    %v4161 = vadd.f32 %v4025, %v4157
    %s4162 = sld [smem:[#allocation8 + $0x23]]
    %v4163 = vstv %s4162
    %v4164 = vmul.f32 %v4163, %v3272
    %v4165 = vmul.f32 %v4163, %v3273
    %v4168 = vrot.slane %v4164, 2
    %v4169 = vrot.slane %v4165, 2
    %v4170 = vsel %vm825, %v4168, %v4169
    %4171 = vrot.lane.b32.xlu0 %v4170, 126
    %v4172 = vpop.permute.xlu0 %4171
    %4173 = vrot.lane.b32.xlu0 %v4169, 126
    %v4174 = vpop.permute.xlu0 %4173
    %v4177 = vadd.f32 %v4041, %v4172
    %v4178 = vadd.f32 %v4042, %v4174
    %s4179 = sld [smem:[#allocation8 + $0x47]]
    %v4180 = vstv %s4179
    %v4181 = vmul.f32 %v4180, %v3272
    %v4182 = vmul.f32 %v4180, %v3273
    %v4185 = vrot.slane %v4181, 2
    %v4186 = vrot.slane %v4182, 2
    %v4187 = vsel %vm825, %v4185, %v4186
    %4188 = vrot.lane.b32.xlu0 %v4187, 126
    %v4189 = vpop.permute.xlu0 %4188
    %4190 = vrot.lane.b32.xlu0 %v4186, 126
    %v4191 = vpop.permute.xlu0 %4190
    %v4194 = vadd.f32 %v4058, %v4189
    %v4195 = vadd.f32 %v4059, %v4191
    %s4196 = sld [smem:[#allocation8 + $0x6b]]
    %v4197 = vstv %s4196
    %v4198 = vmul.f32 %v4197, %v3272
    %v4199 = vmul.f32 %v4197, %v3273
    %v4202 = vrot.slane %v4198, 2
    %v4203 = vrot.slane %v4199, 2
    %v4204 = vsel %vm825, %v4202, %v4203
    %4205 = vrot.lane.b32.xlu0 %v4204, 126
    %v4206 = vpop.permute.xlu0 %4205
    %4207 = vrot.lane.b32.xlu0 %v4203, 126
    %v4208 = vpop.permute.xlu0 %4207
    %v4211 = vadd.f32 %v4075, %v4206
    %v4212 = vadd.f32 %v4076, %v4208
    %s4213 = sld [smem:[#allocation8 + $0x8f]]
    %v4214 = vstv %s4213
    %v4215 = vmul.f32 %v4214, %v3272
    %v4216 = vmul.f32 %v4214, %v3273
    %v4219 = vrot.slane %v4215, 2
    %v4220 = vrot.slane %v4216, 2
    %v4221 = vsel %vm825, %v4219, %v4220
    %4222 = vrot.lane.b32.xlu0 %v4221, 126
    %v4223 = vpop.permute.xlu0 %4222
    %4224 = vrot.lane.b32.xlu0 %v4220, 126
    %v4225 = vpop.permute.xlu0 %4224
    %v4228 = vadd.f32 %v4092, %v4223
    %v4229 = vadd.f32 %v4093, %v4225
    %s4230 = sld [smem:[#allocation8 + $0xb3]]
    %v4231 = vstv %s4230
    %v4232 = vmul.f32 %v4231, %v3272
    %v4233 = vmul.f32 %v4231, %v3273
    %v4236 = vrot.slane %v4232, 2
    %v4237 = vrot.slane %v4233, 2
    %v4238 = vsel %vm825, %v4236, %v4237
    %4239 = vrot.lane.b32.xlu0 %v4238, 126
    %v4240 = vpop.permute.xlu0 %4239
    %4241 = vrot.lane.b32.xlu0 %v4237, 126
    %v4242 = vpop.permute.xlu0 %4241
    %v4245 = vadd.f32 %v4109, %v4240
    %v4246 = vadd.f32 %v4110, %v4242
    %s4247 = sld [smem:[#allocation8 + $0xd7]]
    %v4248 = vstv %s4247
    %v4249 = vmul.f32 %v4248, %v3272
    %v4250 = vmul.f32 %v4248, %v3273
    %v4253 = vrot.slane %v4249, 2
    %v4254 = vrot.slane %v4250, 2
    %v4255 = vsel %vm825, %v4253, %v4254
    %4256 = vrot.lane.b32.xlu0 %v4255, 126
    %v4257 = vpop.permute.xlu0 %4256
    %4258 = vrot.lane.b32.xlu0 %v4254, 126
    %v4259 = vpop.permute.xlu0 %4258
    %v4262 = vadd.f32 %v4126, %v4257
    %v4263 = vadd.f32 %v4127, %v4259
    %s4264 = sld [smem:[#allocation8 + $0xfb]]
    %v4265 = vstv %s4264
    %v4266 = vmul.f32 %v4265, %v3272
    %v4267 = vmul.f32 %v4265, %v3273
    %v4270 = vrot.slane %v4266, 2
    %v4271 = vrot.slane %v4267, 2
    %v4272 = vsel %vm825, %v4270, %v4271
    %4273 = vrot.lane.b32.xlu0 %v4272, 126
    %v4274 = vpop.permute.xlu0 %4273
    %4275 = vrot.lane.b32.xlu0 %v4271, 126
    %v4276 = vpop.permute.xlu0 %4275
    %v4279 = vadd.f32 %v4143, %v4274
    %v4280 = vadd.f32 %v4144, %v4276
    %s4281 = sld [smem:[#allocation8 + $0x11f]]
    %v4282 = vstv %s4281
    %v4283 = vmul.f32 %v4282, %v3272
    %v4284 = vmul.f32 %v4282, %v3273
    %v4287 = vrot.slane %v4283, 2
    %v4288 = vrot.slane %v4284, 2
    %v4289 = vsel %vm825, %v4287, %v4288
    %4290 = vrot.lane.b32.xlu0 %v4289, 126
    %v4291 = vpop.permute.xlu0 %4290
    %4292 = vrot.lane.b32.xlu0 %v4288, 126
    %v4293 = vpop.permute.xlu0 %4292
    %v4296 = vadd.f32 %v4160, %v4291
    %v4297 = vadd.f32 %v4161, %v4293
    %vm4298 = vcmask 113664
    %4299 = vst.msk [vmem:[%s5] sm:$0xff] %vm4298, %v4177
    %vm4300 = vcmask 111616
    %4301 = vst.msk [vmem:[%s5 + $0x8] sm:$0x3f] %vm4300, %v4178
    %4302 = vst.msk [vmem:[%s5 + $0x10] sm:$0xff] %vm4298, %v4194
    %4303 = vst.msk [vmem:[%s5 + $0x18] sm:$0x3f] %vm4300, %v4195
    %4304 = vst.msk [vmem:[%s5 + $0x20] sm:$0xff] %vm4298, %v4211
    %4305 = vst.msk [vmem:[%s5 + $0x28] sm:$0x3f] %vm4300, %v4212
    %4306 = vst.msk [vmem:[%s5 + $0x30] sm:$0xff] %vm4298, %v4228
    %4307 = vst.msk [vmem:[%s5 + $0x38] sm:$0x3f] %vm4300, %v4229
    %4308 = vst.msk [vmem:[%s5 + $0x40] sm:$0xff] %vm4298, %v4245
    %4309 = vst.msk [vmem:[%s5 + $0x48] sm:$0x3f] %vm4300, %v4246
    %4310 = vst.msk [vmem:[%s5 + $0x50] sm:$0xff] %vm4298, %v4262
    %4311 = vst.msk [vmem:[%s5 + $0x58] sm:$0x3f] %vm4300, %v4263
    %4312 = vst.msk [vmem:[%s5 + $0x60] sm:$0xff] %vm4298, %v4279
    %4313 = vst.msk [vmem:[%s5 + $0x68] sm:$0x3f] %vm4300, %v4280
    %4314 = vst.msk [vmem:[%s5 + $0x70] sm:$0xff] %vm4298, %v4296
    %4315 = vst.msk [vmem:[%s5 + $0x78] sm:$0x3f] %vm4300, %v4297
    %s4316 = scalar_lea.vmem [#allocation2], 64
    %v4317 = vld [vmem:[%s4316] sm:$0xff]
    %v4318 = vld [vmem:[%s4316 + $0x8] sm:$0xff]
    %v4319 = vld [vmem:[%s4316 + $0x10] sm:$0xff]
    %v4320 = vld [vmem:[%s4316 + $0x18] sm:$0xff]
    %v4321 = vld [vmem:[%s4316 + $0x20] sm:$0xff]
    %v4322 = vld [vmem:[%s4316 + $0x28] sm:$0xff]
    %v4323 = vld [vmem:[%s4316 + $0x30] sm:$0xff]
    %v4324 = vld [vmem:[%s4316 + $0x38] sm:$0xff]
    %v4325 = vsel %vm90, %v4317, 0.0
    %v4326 = vsel %vm90, %v4319, 0.0
    %v4327 = vadd.f32 %v4325, %v4326
    %v4328 = vsel %vm90, %v4321, 0.0
    %v4329 = vadd.f32 %v4327, %v4328
    %v4330 = vsel %vm90, %v4323, 0.0
    %v4331 = vadd.f32 %v4329, %v4330
    %v4332 = vsel %vm90, %v4318, 0.0
    %v4333 = vsel %vm90, %v4320, 0.0
    %v4334 = vadd.f32 %v4332, %v4333
    %v4335 = vsel %vm90, %v4322, 0.0
    %v4336 = vadd.f32 %v4334, %v4335
    %v4337 = vsel %vm90, %v4324, 0.0
    %v4338 = vadd.f32 %v4336, %v4337
    %v4339 = vmul.f32 %v4331, %v105
    %v4340 = vmul.f32 %v4338, %v105
    %v4341 = vsub.f32 %v4317, %v4339
    %v4342 = vsub.f32 %v4318, %v4340
    %v4343 = vsub.f32 %v4319, %v4339
    %v4344 = vsub.f32 %v4320, %v4340
    %v4345 = vsub.f32 %v4321, %v4339
    %v4346 = vsub.f32 %v4322, %v4340
    %v4347 = vsub.f32 %v4323, %v4339
    %v4348 = vsub.f32 %v4324, %v4340
    %v4349 = vmul.f32 %v4341, %v4341
    %v4350 = vmul.f32 %v4342, %v4342
    %v4351 = vmul.f32 %v4343, %v4343
    %v4352 = vmul.f32 %v4344, %v4344
    %v4353 = vmul.f32 %v4345, %v4345
    %v4354 = vmul.f32 %v4346, %v4346
    %v4355 = vmul.f32 %v4347, %v4347
    %v4356 = vmul.f32 %v4348, %v4348
    %v4357 = vsel %vm90, %v4349, 0.0
    %v4358 = vsel %vm90, %v4351, 0.0
    %v4359 = vadd.f32 %v4357, %v4358
    %v4360 = vsel %vm90, %v4353, 0.0
    %v4361 = vadd.f32 %v4359, %v4360
    %v4362 = vsel %vm90, %v4355, 0.0
    %v4363 = vadd.f32 %v4361, %v4362
    %v4364 = vsel %vm90, %v4350, 0.0
    %v4365 = vsel %vm90, %v4352, 0.0
    %v4366 = vadd.f32 %v4364, %v4365
    %v4367 = vsel %vm90, %v4354, 0.0
    %v4368 = vadd.f32 %v4366, %v4367
    %v4369 = vsel %vm90, %v4356, 0.0
    %v4370 = vadd.f32 %v4368, %v4369
    %v4371 = vmul.f32 %v4363, %v105
    %v4372 = vmul.f32 %v4370, %v105
    %v4373 = vadd.f32 %v4371, 1e-06
    %v4374 = vadd.f32 %v4372, 1e-06
    %v4375 = vrsqrt.pop %v4373
    %v4376 = vrsqrt.pop %v4374
    %s4377 = sld [smem:[#allocation9]]
    %v4378 = vstv %s4377
    %s4379 = sld [smem:[#allocation9 + $0x1]]
    %v4380 = vstv %s4379
    %s4381 = sld [smem:[#allocation9 + $0x2]]
    %v4382 = vstv %s4381
    %s4383 = sld [smem:[#allocation9 + $0x3]]
    %v4384 = vstv %s4383
    %s4385 = sld [smem:[#allocation9 + $0x4]]
    %v4386 = vstv %s4385
    %s4387 = sld [smem:[#allocation9 + $0x5]]
    %v4388 = vstv %s4387
    %s4389 = sld [smem:[#allocation9 + $0x6]]
    %v4390 = vstv %s4389
    %s4391 = sld [smem:[#allocation9 + $0x7]]
    %v4392 = vstv %s4391
    %v4393 = vmul.f32 %v4341, %v4375
    %v4394 = vmul.f32 %v4342, %v4376
    %s4395 = sld [smem:[#allocation5]]
    %v4396 = vstv %s4395
    %v4397 = vmul.f32 %v4393, %v4396
    %v4398 = vmul.f32 %v4394, %v4396
    %s4399 = sld [smem:[#allocation6]]
    %v4400 = vstv %s4399
    %v4401 = vadd.f32 %v4397, %v4400
    %v4402 = vadd.f32 %v4398, %v4400
    %s4403 = sld [smem:[#allocation8]]
    %v4404 = vstv %s4403
    %v4405 = vmul.f32 %v4404, %v4401
    %v4406 = vmul.f32 %v4404, %v4402
    %v4407 = vadd.f32 %v4378, %v4405
    %v4408 = vadd.f32 %v4378, %v4406
    %s4409 = sld [smem:[#allocation8 + $0x24]]
    %v4410 = vstv %s4409
    %v4411 = vmul.f32 %v4410, %v4401
    %v4412 = vmul.f32 %v4410, %v4402
    %v4413 = vadd.f32 %v4380, %v4411
    %v4414 = vadd.f32 %v4380, %v4412
    %s4415 = sld [smem:[#allocation8 + $0x48]]
    %v4416 = vstv %s4415
    %v4417 = vmul.f32 %v4416, %v4401
    %v4418 = vmul.f32 %v4416, %v4402
    %v4419 = vadd.f32 %v4382, %v4417
    %v4420 = vadd.f32 %v4382, %v4418
    %s4421 = sld [smem:[#allocation8 + $0x6c]]
    %v4422 = vstv %s4421
    %v4423 = vmul.f32 %v4422, %v4401
    %v4424 = vmul.f32 %v4422, %v4402
    %v4425 = vadd.f32 %v4384, %v4423
    %v4426 = vadd.f32 %v4384, %v4424
    %s4427 = sld [smem:[#allocation8 + $0x90]]
    %v4428 = vstv %s4427
    %v4429 = vmul.f32 %v4428, %v4401
    %v4430 = vmul.f32 %v4428, %v4402
    %v4431 = vadd.f32 %v4386, %v4429
    %v4432 = vadd.f32 %v4386, %v4430
    %s4433 = sld [smem:[#allocation8 + $0xb4]]
    %v4434 = vstv %s4433
    %v4435 = vmul.f32 %v4434, %v4401
    %v4436 = vmul.f32 %v4434, %v4402
    %v4437 = vadd.f32 %v4388, %v4435
    %v4438 = vadd.f32 %v4388, %v4436
    %s4439 = sld [smem:[#allocation8 + $0xd8]]
    %v4440 = vstv %s4439
    %v4441 = vmul.f32 %v4440, %v4401
    %v4442 = vmul.f32 %v4440, %v4402
    %v4443 = vadd.f32 %v4390, %v4441
    %v4444 = vadd.f32 %v4390, %v4442
    %s4445 = sld [smem:[#allocation8 + $0xfc]]
    %v4446 = vstv %s4445
    %v4447 = vmul.f32 %v4446, %v4401
    %v4448 = vmul.f32 %v4446, %v4402
    %v4449 = vadd.f32 %v4392, %v4447
    %v4450 = vadd.f32 %v4392, %v4448
    %s4451 = sld [smem:[#allocation8 + $0x1]]
    %v4452 = vstv %s4451
    %v4453 = vmul.f32 %v4452, %v4401
    %v4454 = vmul.f32 %v4452, %v4402
    %4457 = vrot.lane.b32.xlu0 %v4453, 127
    %v4458 = vpop.permute.xlu0 %4457
    %4459 = vrot.lane.b32.xlu0 %v4454, 127
    %v4460 = vpop.permute.xlu0 %4459
    %v4463 = vadd.f32 %v4407, %v4458
    %v4464 = vadd.f32 %v4408, %v4460
    %s4465 = sld [smem:[#allocation8 + $0x25]]
    %v4466 = vstv %s4465
    %v4467 = vmul.f32 %v4466, %v4401
    %v4468 = vmul.f32 %v4466, %v4402
    %4471 = vrot.lane.b32.xlu0 %v4467, 127
    %v4472 = vpop.permute.xlu0 %4471
    %4473 = vrot.lane.b32.xlu0 %v4468, 127
    %v4474 = vpop.permute.xlu0 %4473
    %v4477 = vadd.f32 %v4413, %v4472
    %v4478 = vadd.f32 %v4414, %v4474
    %s4479 = sld [smem:[#allocation8 + $0x49]]
    %v4480 = vstv %s4479
    %v4481 = vmul.f32 %v4480, %v4401
    %v4482 = vmul.f32 %v4480, %v4402
    %4485 = vrot.lane.b32.xlu0 %v4481, 127
    %v4486 = vpop.permute.xlu0 %4485
    %4487 = vrot.lane.b32.xlu0 %v4482, 127
    %v4488 = vpop.permute.xlu0 %4487
    %v4491 = vadd.f32 %v4419, %v4486
    %v4492 = vadd.f32 %v4420, %v4488
    %s4493 = sld [smem:[#allocation8 + $0x6d]]
    %v4494 = vstv %s4493
    %v4495 = vmul.f32 %v4494, %v4401
    %v4496 = vmul.f32 %v4494, %v4402
    %4499 = vrot.lane.b32.xlu0 %v4495, 127
    %v4500 = vpop.permute.xlu0 %4499
    %4501 = vrot.lane.b32.xlu0 %v4496, 127
    %v4502 = vpop.permute.xlu0 %4501
    %v4505 = vadd.f32 %v4425, %v4500
    %v4506 = vadd.f32 %v4426, %v4502
    %s4507 = sld [smem:[#allocation8 + $0x91]]
    %v4508 = vstv %s4507
    %v4509 = vmul.f32 %v4508, %v4401
    %v4510 = vmul.f32 %v4508, %v4402
    %4513 = vrot.lane.b32.xlu0 %v4509, 127
    %v4514 = vpop.permute.xlu0 %4513
    %4515 = vrot.lane.b32.xlu0 %v4510, 127
    %v4516 = vpop.permute.xlu0 %4515
    %v4519 = vadd.f32 %v4431, %v4514
    %v4520 = vadd.f32 %v4432, %v4516
    %s4521 = sld [smem:[#allocation8 + $0xb5]]
    %v4522 = vstv %s4521
    %v4523 = vmul.f32 %v4522, %v4401
    %v4524 = vmul.f32 %v4522, %v4402
    %4527 = vrot.lane.b32.xlu0 %v4523, 127
    %v4528 = vpop.permute.xlu0 %4527
    %4529 = vrot.lane.b32.xlu0 %v4524, 127
    %v4530 = vpop.permute.xlu0 %4529
    %v4533 = vadd.f32 %v4437, %v4528
    %v4534 = vadd.f32 %v4438, %v4530
    %s4535 = sld [smem:[#allocation8 + $0xd9]]
    %v4536 = vstv %s4535
    %v4537 = vmul.f32 %v4536, %v4401
    %v4538 = vmul.f32 %v4536, %v4402
    %4541 = vrot.lane.b32.xlu0 %v4537, 127
    %v4542 = vpop.permute.xlu0 %4541
    %4543 = vrot.lane.b32.xlu0 %v4538, 127
    %v4544 = vpop.permute.xlu0 %4543
    %v4547 = vadd.f32 %v4443, %v4542
    %v4548 = vadd.f32 %v4444, %v4544
    %s4549 = sld [smem:[#allocation8 + $0xfd]]
    %v4550 = vstv %s4549
    %v4551 = vmul.f32 %v4550, %v4401
    %v4552 = vmul.f32 %v4550, %v4402
    %4555 = vrot.lane.b32.xlu0 %v4551, 127
    %v4556 = vpop.permute.xlu0 %4555
    %4557 = vrot.lane.b32.xlu0 %v4552, 127
    %v4558 = vpop.permute.xlu0 %4557
    %v4561 = vadd.f32 %v4449, %v4556
    %v4562 = vadd.f32 %v4450, %v4558
    %s4563 = sld [smem:[#allocation8 + $0x2]]
    %v4564 = vstv %s4563
    %v4565 = vmul.f32 %v4564, %v4401
    %v4566 = vmul.f32 %v4564, %v4402
    %4569 = vrot.lane.b32.xlu0 %v4565, 126
    %v4570 = vpop.permute.xlu0 %4569
    %4571 = vrot.lane.b32.xlu0 %v4566, 126
    %v4572 = vpop.permute.xlu0 %4571
    %v4575 = vadd.f32 %v4463, %v4570
    %v4576 = vadd.f32 %v4464, %v4572
    %s4577 = sld [smem:[#allocation8 + $0x26]]
    %v4578 = vstv %s4577
    %v4579 = vmul.f32 %v4578, %v4401
    %v4580 = vmul.f32 %v4578, %v4402
    %4583 = vrot.lane.b32.xlu0 %v4579, 126
    %v4584 = vpop.permute.xlu0 %4583
    %4585 = vrot.lane.b32.xlu0 %v4580, 126
    %v4586 = vpop.permute.xlu0 %4585
    %v4589 = vadd.f32 %v4477, %v4584
    %v4590 = vadd.f32 %v4478, %v4586
    %s4591 = sld [smem:[#allocation8 + $0x4a]]
    %v4592 = vstv %s4591
    %v4593 = vmul.f32 %v4592, %v4401
    %v4594 = vmul.f32 %v4592, %v4402
    %4597 = vrot.lane.b32.xlu0 %v4593, 126
    %v4598 = vpop.permute.xlu0 %4597
    %4599 = vrot.lane.b32.xlu0 %v4594, 126
    %v4600 = vpop.permute.xlu0 %4599
    %v4603 = vadd.f32 %v4491, %v4598
    %v4604 = vadd.f32 %v4492, %v4600
    %s4605 = sld [smem:[#allocation8 + $0x6e]]
    %v4606 = vstv %s4605
    %v4607 = vmul.f32 %v4606, %v4401
    %v4608 = vmul.f32 %v4606, %v4402
    %4611 = vrot.lane.b32.xlu0 %v4607, 126
    %v4612 = vpop.permute.xlu0 %4611
    %4613 = vrot.lane.b32.xlu0 %v4608, 126
    %v4614 = vpop.permute.xlu0 %4613
    %v4617 = vadd.f32 %v4505, %v4612
    %v4618 = vadd.f32 %v4506, %v4614
    %s4619 = sld [smem:[#allocation8 + $0x92]]
    %v4620 = vstv %s4619
    %v4621 = vmul.f32 %v4620, %v4401
    %v4622 = vmul.f32 %v4620, %v4402
    %4625 = vrot.lane.b32.xlu0 %v4621, 126
    %v4626 = vpop.permute.xlu0 %4625
    %4627 = vrot.lane.b32.xlu0 %v4622, 126
    %v4628 = vpop.permute.xlu0 %4627
    %v4631 = vadd.f32 %v4519, %v4626
    %v4632 = vadd.f32 %v4520, %v4628
    %s4633 = sld [smem:[#allocation8 + $0xb6]]
    %v4634 = vstv %s4633
    %v4635 = vmul.f32 %v4634, %v4401
    %v4636 = vmul.f32 %v4634, %v4402
    %4639 = vrot.lane.b32.xlu0 %v4635, 126
    %v4640 = vpop.permute.xlu0 %4639
    %4641 = vrot.lane.b32.xlu0 %v4636, 126
    %v4642 = vpop.permute.xlu0 %4641
    %v4645 = vadd.f32 %v4533, %v4640
    %v4646 = vadd.f32 %v4534, %v4642
    %s4647 = sld [smem:[#allocation8 + $0xda]]
    %v4648 = vstv %s4647
    %v4649 = vmul.f32 %v4648, %v4401
    %v4650 = vmul.f32 %v4648, %v4402
    %4653 = vrot.lane.b32.xlu0 %v4649, 126
    %v4654 = vpop.permute.xlu0 %4653
    %4655 = vrot.lane.b32.xlu0 %v4650, 126
    %v4656 = vpop.permute.xlu0 %4655
    %v4659 = vadd.f32 %v4547, %v4654
    %v4660 = vadd.f32 %v4548, %v4656
    %s4661 = sld [smem:[#allocation8 + $0xfe]]
    %v4662 = vstv %s4661
    %v4663 = vmul.f32 %v4662, %v4401
    %v4664 = vmul.f32 %v4662, %v4402
    %4667 = vrot.lane.b32.xlu0 %v4663, 126
    %v4668 = vpop.permute.xlu0 %4667
    %4669 = vrot.lane.b32.xlu0 %v4664, 126
    %v4670 = vpop.permute.xlu0 %4669
    %v4673 = vadd.f32 %v4561, %v4668
    %v4674 = vadd.f32 %v4562, %v4670
    %s4675 = sld [smem:[#allocation8 + $0x3]]
    %v4676 = vstv %s4675
    %v4677 = vmul.f32 %v4676, %v4401
    %v4678 = vmul.f32 %v4676, %v4402
    %v4681 = vrot.slane %v4677, 1
    %v4682 = vrot.slane %v4678, 1
    %v4683 = vsel %vm448, %v4681, %v4682
    %v4686 = vadd.f32 %v4575, %v4683
    %v4687 = vadd.f32 %v4576, %v4682
    %s4688 = sld [smem:[#allocation8 + $0x27]]
    %v4689 = vstv %s4688
    %v4690 = vmul.f32 %v4689, %v4401
    %v4691 = vmul.f32 %v4689, %v4402
    %v4694 = vrot.slane %v4690, 1
    %v4695 = vrot.slane %v4691, 1
    %v4696 = vsel %vm448, %v4694, %v4695
    %v4699 = vadd.f32 %v4589, %v4696
    %v4700 = vadd.f32 %v4590, %v4695
    %s4701 = sld [smem:[#allocation8 + $0x4b]]
    %v4702 = vstv %s4701
    %v4703 = vmul.f32 %v4702, %v4401
    %v4704 = vmul.f32 %v4702, %v4402
    %v4707 = vrot.slane %v4703, 1
    %v4708 = vrot.slane %v4704, 1
    %v4709 = vsel %vm448, %v4707, %v4708
    %v4712 = vadd.f32 %v4603, %v4709
    %v4713 = vadd.f32 %v4604, %v4708
    %s4714 = sld [smem:[#allocation8 + $0x6f]]
    %v4715 = vstv %s4714
    %v4716 = vmul.f32 %v4715, %v4401
    %v4717 = vmul.f32 %v4715, %v4402
    %v4720 = vrot.slane %v4716, 1
    %v4721 = vrot.slane %v4717, 1
    %v4722 = vsel %vm448, %v4720, %v4721
    %v4725 = vadd.f32 %v4617, %v4722
    %v4726 = vadd.f32 %v4618, %v4721
    %s4727 = sld [smem:[#allocation8 + $0x93]]
    %v4728 = vstv %s4727
    %v4729 = vmul.f32 %v4728, %v4401
    %v4730 = vmul.f32 %v4728, %v4402
    %v4733 = vrot.slane %v4729, 1
    %v4734 = vrot.slane %v4730, 1
    %v4735 = vsel %vm448, %v4733, %v4734
    %v4738 = vadd.f32 %v4631, %v4735
    %v4739 = vadd.f32 %v4632, %v4734
    %s4740 = sld [smem:[#allocation8 + $0xb7]]
    %v4741 = vstv %s4740
    %v4742 = vmul.f32 %v4741, %v4401
    %v4743 = vmul.f32 %v4741, %v4402
    %v4746 = vrot.slane %v4742, 1
    %v4747 = vrot.slane %v4743, 1
    %v4748 = vsel %vm448, %v4746, %v4747
    %v4751 = vadd.f32 %v4645, %v4748
    %v4752 = vadd.f32 %v4646, %v4747
    %s4753 = sld [smem:[#allocation8 + $0xdb]]
    %v4754 = vstv %s4753
    %v4755 = vmul.f32 %v4754, %v4401
    %v4756 = vmul.f32 %v4754, %v4402
    %v4759 = vrot.slane %v4755, 1
    %v4760 = vrot.slane %v4756, 1
    %v4761 = vsel %vm448, %v4759, %v4760
    %v4764 = vadd.f32 %v4659, %v4761
    %v4765 = vadd.f32 %v4660, %v4760
    %s4766 = sld [smem:[#allocation8 + $0xff]]
    %v4767 = vstv %s4766
    %v4768 = vmul.f32 %v4767, %v4401
    %v4769 = vmul.f32 %v4767, %v4402
    %v4772 = vrot.slane %v4768, 1
    %v4773 = vrot.slane %v4769, 1
    %v4774 = vsel %vm448, %v4772, %v4773
    %v4777 = vadd.f32 %v4673, %v4774
    %v4778 = vadd.f32 %v4674, %v4773
    %s4779 = sld [smem:[#allocation8 + $0x4]]
    %v4780 = vstv %s4779
    %v4781 = vmul.f32 %v4780, %v4401
    %v4782 = vmul.f32 %v4780, %v4402
    %v4785 = vrot.slane %v4781, 1
    %v4786 = vrot.slane %v4782, 1
    %v4787 = vsel %vm448, %v4785, %v4786
    %4788 = vrot.lane.b32.xlu0 %v4787, 127
    %v4789 = vpop.permute.xlu0 %4788
    %4790 = vrot.lane.b32.xlu0 %v4786, 127
    %v4791 = vpop.permute.xlu0 %4790
    %v4794 = vadd.f32 %v4686, %v4789
    %v4795 = vadd.f32 %v4687, %v4791
    %s4796 = sld [smem:[#allocation8 + $0x28]]
    %v4797 = vstv %s4796
    %v4798 = vmul.f32 %v4797, %v4401
    %v4799 = vmul.f32 %v4797, %v4402
    %v4802 = vrot.slane %v4798, 1
    %v4803 = vrot.slane %v4799, 1
    %v4804 = vsel %vm448, %v4802, %v4803
    %4805 = vrot.lane.b32.xlu0 %v4804, 127
    %v4806 = vpop.permute.xlu0 %4805
    %4807 = vrot.lane.b32.xlu0 %v4803, 127
    %v4808 = vpop.permute.xlu0 %4807
    %v4811 = vadd.f32 %v4699, %v4806
    %v4812 = vadd.f32 %v4700, %v4808
    %s4813 = sld [smem:[#allocation8 + $0x4c]]
    %v4814 = vstv %s4813
    %v4815 = vmul.f32 %v4814, %v4401
    %v4816 = vmul.f32 %v4814, %v4402
    %v4819 = vrot.slane %v4815, 1
    %v4820 = vrot.slane %v4816, 1
    %v4821 = vsel %vm448, %v4819, %v4820
    %4822 = vrot.lane.b32.xlu0 %v4821, 127
    %v4823 = vpop.permute.xlu0 %4822
    %4824 = vrot.lane.b32.xlu0 %v4820, 127
    %v4825 = vpop.permute.xlu0 %4824
    %v4828 = vadd.f32 %v4712, %v4823
    %v4829 = vadd.f32 %v4713, %v4825
    %s4830 = sld [smem:[#allocation8 + $0x70]]
    %v4831 = vstv %s4830
    %v4832 = vmul.f32 %v4831, %v4401
    %v4833 = vmul.f32 %v4831, %v4402
    %v4836 = vrot.slane %v4832, 1
    %v4837 = vrot.slane %v4833, 1
    %v4838 = vsel %vm448, %v4836, %v4837
    %4839 = vrot.lane.b32.xlu0 %v4838, 127
    %v4840 = vpop.permute.xlu0 %4839
    %4841 = vrot.lane.b32.xlu0 %v4837, 127
    %v4842 = vpop.permute.xlu0 %4841
    %v4845 = vadd.f32 %v4725, %v4840
    %v4846 = vadd.f32 %v4726, %v4842
    %s4847 = sld [smem:[#allocation8 + $0x94]]
    %v4848 = vstv %s4847
    %v4849 = vmul.f32 %v4848, %v4401
    %v4850 = vmul.f32 %v4848, %v4402
    %v4853 = vrot.slane %v4849, 1
    %v4854 = vrot.slane %v4850, 1
    %v4855 = vsel %vm448, %v4853, %v4854
    %4856 = vrot.lane.b32.xlu0 %v4855, 127
    %v4857 = vpop.permute.xlu0 %4856
    %4858 = vrot.lane.b32.xlu0 %v4854, 127
    %v4859 = vpop.permute.xlu0 %4858
    %v4862 = vadd.f32 %v4738, %v4857
    %v4863 = vadd.f32 %v4739, %v4859
    %s4864 = sld [smem:[#allocation8 + $0xb8]]
    %v4865 = vstv %s4864
    %v4866 = vmul.f32 %v4865, %v4401
    %v4867 = vmul.f32 %v4865, %v4402
    %v4870 = vrot.slane %v4866, 1
    %v4871 = vrot.slane %v4867, 1
    %v4872 = vsel %vm448, %v4870, %v4871
    %4873 = vrot.lane.b32.xlu0 %v4872, 127
    %v4874 = vpop.permute.xlu0 %4873
    %4875 = vrot.lane.b32.xlu0 %v4871, 127
    %v4876 = vpop.permute.xlu0 %4875
    %v4879 = vadd.f32 %v4751, %v4874
    %v4880 = vadd.f32 %v4752, %v4876
    %s4881 = sld [smem:[#allocation8 + $0xdc]]
    %v4882 = vstv %s4881
    %v4883 = vmul.f32 %v4882, %v4401
    %v4884 = vmul.f32 %v4882, %v4402
    %v4887 = vrot.slane %v4883, 1
    %v4888 = vrot.slane %v4884, 1
    %v4889 = vsel %vm448, %v4887, %v4888
    %4890 = vrot.lane.b32.xlu0 %v4889, 127
    %v4891 = vpop.permute.xlu0 %4890
    %4892 = vrot.lane.b32.xlu0 %v4888, 127
    %v4893 = vpop.permute.xlu0 %4892
    %v4896 = vadd.f32 %v4764, %v4891
    %v4897 = vadd.f32 %v4765, %v4893
    %s4898 = sld [smem:[#allocation8 + $0x100]]
    %v4899 = vstv %s4898
    %v4900 = vmul.f32 %v4899, %v4401
    %v4901 = vmul.f32 %v4899, %v4402
    %v4904 = vrot.slane %v4900, 1
    %v4905 = vrot.slane %v4901, 1
    %v4906 = vsel %vm448, %v4904, %v4905
    %4907 = vrot.lane.b32.xlu0 %v4906, 127
    %v4908 = vpop.permute.xlu0 %4907
    %4909 = vrot.lane.b32.xlu0 %v4905, 127
    %v4910 = vpop.permute.xlu0 %4909
    %v4913 = vadd.f32 %v4777, %v4908
    %v4914 = vadd.f32 %v4778, %v4910
    %s4915 = sld [smem:[#allocation8 + $0x5]]
    %v4916 = vstv %s4915
    %v4917 = vmul.f32 %v4916, %v4401
    %v4918 = vmul.f32 %v4916, %v4402
    %v4921 = vrot.slane %v4917, 1
    %v4922 = vrot.slane %v4918, 1
    %v4923 = vsel %vm448, %v4921, %v4922
    %4924 = vrot.lane.b32.xlu0 %v4923, 126
    %v4925 = vpop.permute.xlu0 %4924
    %4926 = vrot.lane.b32.xlu0 %v4922, 126
    %v4927 = vpop.permute.xlu0 %4926
    %v4930 = vadd.f32 %v4794, %v4925
    %v4931 = vadd.f32 %v4795, %v4927
    %s4932 = sld [smem:[#allocation8 + $0x29]]
    %v4933 = vstv %s4932
    %v4934 = vmul.f32 %v4933, %v4401
    %v4935 = vmul.f32 %v4933, %v4402
    %v4938 = vrot.slane %v4934, 1
    %v4939 = vrot.slane %v4935, 1
    %v4940 = vsel %vm448, %v4938, %v4939
    %4941 = vrot.lane.b32.xlu0 %v4940, 126
    %v4942 = vpop.permute.xlu0 %4941
    %4943 = vrot.lane.b32.xlu0 %v4939, 126
    %v4944 = vpop.permute.xlu0 %4943
    %v4947 = vadd.f32 %v4811, %v4942
    %v4948 = vadd.f32 %v4812, %v4944
    %s4949 = sld [smem:[#allocation8 + $0x4d]]
    %v4950 = vstv %s4949
    %v4951 = vmul.f32 %v4950, %v4401
    %v4952 = vmul.f32 %v4950, %v4402
    %v4955 = vrot.slane %v4951, 1
    %v4956 = vrot.slane %v4952, 1
    %v4957 = vsel %vm448, %v4955, %v4956
    %4958 = vrot.lane.b32.xlu0 %v4957, 126
    %v4959 = vpop.permute.xlu0 %4958
    %4960 = vrot.lane.b32.xlu0 %v4956, 126
    %v4961 = vpop.permute.xlu0 %4960
    %v4964 = vadd.f32 %v4828, %v4959
    %v4965 = vadd.f32 %v4829, %v4961
    %s4966 = sld [smem:[#allocation8 + $0x71]]
    %v4967 = vstv %s4966
    %v4968 = vmul.f32 %v4967, %v4401
    %v4969 = vmul.f32 %v4967, %v4402
    %v4972 = vrot.slane %v4968, 1
    %v4973 = vrot.slane %v4969, 1
    %v4974 = vsel %vm448, %v4972, %v4973
    %4975 = vrot.lane.b32.xlu0 %v4974, 126
    %v4976 = vpop.permute.xlu0 %4975
    %4977 = vrot.lane.b32.xlu0 %v4973, 126
    %v4978 = vpop.permute.xlu0 %4977
    %v4981 = vadd.f32 %v4845, %v4976
    %v4982 = vadd.f32 %v4846, %v4978
    %s4983 = sld [smem:[#allocation8 + $0x95]]
    %v4984 = vstv %s4983
    %v4985 = vmul.f32 %v4984, %v4401
    %v4986 = vmul.f32 %v4984, %v4402
    %v4989 = vrot.slane %v4985, 1
    %v4990 = vrot.slane %v4986, 1
    %v4991 = vsel %vm448, %v4989, %v4990
    %4992 = vrot.lane.b32.xlu0 %v4991, 126
    %v4993 = vpop.permute.xlu0 %4992
    %4994 = vrot.lane.b32.xlu0 %v4990, 126
    %v4995 = vpop.permute.xlu0 %4994
    %v4998 = vadd.f32 %v4862, %v4993
    %v4999 = vadd.f32 %v4863, %v4995
    %s5000 = sld [smem:[#allocation8 + $0xb9]]
    %v5001 = vstv %s5000
    %v5002 = vmul.f32 %v5001, %v4401
    %v5003 = vmul.f32 %v5001, %v4402
    %v5006 = vrot.slane %v5002, 1
    %v5007 = vrot.slane %v5003, 1
    %v5008 = vsel %vm448, %v5006, %v5007
    %5009 = vrot.lane.b32.xlu0 %v5008, 126
    %v5010 = vpop.permute.xlu0 %5009
    %5011 = vrot.lane.b32.xlu0 %v5007, 126
    %v5012 = vpop.permute.xlu0 %5011
    %v5015 = vadd.f32 %v4879, %v5010
    %v5016 = vadd.f32 %v4880, %v5012
    %s5017 = sld [smem:[#allocation8 + $0xdd]]
    %v5018 = vstv %s5017
    %v5019 = vmul.f32 %v5018, %v4401
    %v5020 = vmul.f32 %v5018, %v4402
    %v5023 = vrot.slane %v5019, 1
    %v5024 = vrot.slane %v5020, 1
    %v5025 = vsel %vm448, %v5023, %v5024
    %5026 = vrot.lane.b32.xlu0 %v5025, 126
    %v5027 = vpop.permute.xlu0 %5026
    %5028 = vrot.lane.b32.xlu0 %v5024, 126
    %v5029 = vpop.permute.xlu0 %5028
    %v5032 = vadd.f32 %v4896, %v5027
    %v5033 = vadd.f32 %v4897, %v5029
    %s5034 = sld [smem:[#allocation8 + $0x101]]
    %v5035 = vstv %s5034
    %v5036 = vmul.f32 %v5035, %v4401
    %v5037 = vmul.f32 %v5035, %v4402
    %v5040 = vrot.slane %v5036, 1
    %v5041 = vrot.slane %v5037, 1
    %v5042 = vsel %vm448, %v5040, %v5041
    %5043 = vrot.lane.b32.xlu0 %v5042, 126
    %v5044 = vpop.permute.xlu0 %5043
    %5045 = vrot.lane.b32.xlu0 %v5041, 126
    %v5046 = vpop.permute.xlu0 %5045
    %v5049 = vadd.f32 %v4913, %v5044
    %v5050 = vadd.f32 %v4914, %v5046
    %s5051 = sld [smem:[#allocation8 + $0x6]]
    %v5052 = vstv %s5051
    %v5053 = vmul.f32 %v5052, %v4401
    %v5054 = vmul.f32 %v5052, %v4402
    %v5057 = vrot.slane %v5053, 2
    %v5058 = vrot.slane %v5054, 2
    %v5059 = vsel %vm825, %v5057, %v5058
    %v5062 = vadd.f32 %v4930, %v5059
    %v5063 = vadd.f32 %v4931, %v5058
    %s5064 = sld [smem:[#allocation8 + $0x2a]]
    %v5065 = vstv %s5064
    %v5066 = vmul.f32 %v5065, %v4401
    %v5067 = vmul.f32 %v5065, %v4402
    %v5070 = vrot.slane %v5066, 2
    %v5071 = vrot.slane %v5067, 2
    %v5072 = vsel %vm825, %v5070, %v5071
    %v5075 = vadd.f32 %v4947, %v5072
    %v5076 = vadd.f32 %v4948, %v5071
    %s5077 = sld [smem:[#allocation8 + $0x4e]]
    %v5078 = vstv %s5077
    %v5079 = vmul.f32 %v5078, %v4401
    %v5080 = vmul.f32 %v5078, %v4402
    %v5083 = vrot.slane %v5079, 2
    %v5084 = vrot.slane %v5080, 2
    %v5085 = vsel %vm825, %v5083, %v5084
    %v5088 = vadd.f32 %v4964, %v5085
    %v5089 = vadd.f32 %v4965, %v5084
    %s5090 = sld [smem:[#allocation8 + $0x72]]
    %v5091 = vstv %s5090
    %v5092 = vmul.f32 %v5091, %v4401
    %v5093 = vmul.f32 %v5091, %v4402
    %v5096 = vrot.slane %v5092, 2
    %v5097 = vrot.slane %v5093, 2
    %v5098 = vsel %vm825, %v5096, %v5097
    %v5101 = vadd.f32 %v4981, %v5098
    %v5102 = vadd.f32 %v4982, %v5097
    %s5103 = sld [smem:[#allocation8 + $0x96]]
    %v5104 = vstv %s5103
    %v5105 = vmul.f32 %v5104, %v4401
    %v5106 = vmul.f32 %v5104, %v4402
    %v5109 = vrot.slane %v5105, 2
    %v5110 = vrot.slane %v5106, 2
    %v5111 = vsel %vm825, %v5109, %v5110
    %v5114 = vadd.f32 %v4998, %v5111
    %v5115 = vadd.f32 %v4999, %v5110
    %s5116 = sld [smem:[#allocation8 + $0xba]]
    %v5117 = vstv %s5116
    %v5118 = vmul.f32 %v5117, %v4401
    %v5119 = vmul.f32 %v5117, %v4402
    %v5122 = vrot.slane %v5118, 2
    %v5123 = vrot.slane %v5119, 2
    %v5124 = vsel %vm825, %v5122, %v5123
    %v5127 = vadd.f32 %v5015, %v5124
    %v5128 = vadd.f32 %v5016, %v5123
    %s5129 = sld [smem:[#allocation8 + $0xde]]
    %v5130 = vstv %s5129
    %v5131 = vmul.f32 %v5130, %v4401
    %v5132 = vmul.f32 %v5130, %v4402
    %v5135 = vrot.slane %v5131, 2
    %v5136 = vrot.slane %v5132, 2
    %v5137 = vsel %vm825, %v5135, %v5136
    %v5140 = vadd.f32 %v5032, %v5137
    %v5141 = vadd.f32 %v5033, %v5136
    %s5142 = sld [smem:[#allocation8 + $0x102]]
    %v5143 = vstv %s5142
    %v5144 = vmul.f32 %v5143, %v4401
    %v5145 = vmul.f32 %v5143, %v4402
    %v5148 = vrot.slane %v5144, 2
    %v5149 = vrot.slane %v5145, 2
    %v5150 = vsel %vm825, %v5148, %v5149
    %v5153 = vadd.f32 %v5049, %v5150
    %v5154 = vadd.f32 %v5050, %v5149
    %s5155 = sld [smem:[#allocation8 + $0x7]]
    %v5156 = vstv %s5155
    %v5157 = vmul.f32 %v5156, %v4401
    %v5158 = vmul.f32 %v5156, %v4402
    %v5161 = vrot.slane %v5157, 2
    %v5162 = vrot.slane %v5158, 2
    %v5163 = vsel %vm825, %v5161, %v5162
    %5164 = vrot.lane.b32.xlu0 %v5163, 127
    %v5165 = vpop.permute.xlu0 %5164
    %5166 = vrot.lane.b32.xlu0 %v5162, 127
    %v5167 = vpop.permute.xlu0 %5166
    %v5170 = vadd.f32 %v5062, %v5165
    %v5171 = vadd.f32 %v5063, %v5167
    %s5172 = sld [smem:[#allocation8 + $0x2b]]
    %v5173 = vstv %s5172
    %v5174 = vmul.f32 %v5173, %v4401
    %v5175 = vmul.f32 %v5173, %v4402
    %v5178 = vrot.slane %v5174, 2
    %v5179 = vrot.slane %v5175, 2
    %v5180 = vsel %vm825, %v5178, %v5179
    %5181 = vrot.lane.b32.xlu0 %v5180, 127
    %v5182 = vpop.permute.xlu0 %5181
    %5183 = vrot.lane.b32.xlu0 %v5179, 127
    %v5184 = vpop.permute.xlu0 %5183
    %v5187 = vadd.f32 %v5075, %v5182
    %v5188 = vadd.f32 %v5076, %v5184
    %s5189 = sld [smem:[#allocation8 + $0x4f]]
    %v5190 = vstv %s5189
    %v5191 = vmul.f32 %v5190, %v4401
    %v5192 = vmul.f32 %v5190, %v4402
    %v5195 = vrot.slane %v5191, 2
    %v5196 = vrot.slane %v5192, 2
    %v5197 = vsel %vm825, %v5195, %v5196
    %5198 = vrot.lane.b32.xlu0 %v5197, 127
    %v5199 = vpop.permute.xlu0 %5198
    %5200 = vrot.lane.b32.xlu0 %v5196, 127
    %v5201 = vpop.permute.xlu0 %5200
    %v5204 = vadd.f32 %v5088, %v5199
    %v5205 = vadd.f32 %v5089, %v5201
    %s5206 = sld [smem:[#allocation8 + $0x73]]
    %v5207 = vstv %s5206
    %v5208 = vmul.f32 %v5207, %v4401
    %v5209 = vmul.f32 %v5207, %v4402
    %v5212 = vrot.slane %v5208, 2
    %v5213 = vrot.slane %v5209, 2
    %v5214 = vsel %vm825, %v5212, %v5213
    %5215 = vrot.lane.b32.xlu0 %v5214, 127
    %v5216 = vpop.permute.xlu0 %5215
    %5217 = vrot.lane.b32.xlu0 %v5213, 127
    %v5218 = vpop.permute.xlu0 %5217
    %v5221 = vadd.f32 %v5101, %v5216
    %v5222 = vadd.f32 %v5102, %v5218
    %s5223 = sld [smem:[#allocation8 + $0x97]]
    %v5224 = vstv %s5223
    %v5225 = vmul.f32 %v5224, %v4401
    %v5226 = vmul.f32 %v5224, %v4402
    %v5229 = vrot.slane %v5225, 2
    %v5230 = vrot.slane %v5226, 2
    %v5231 = vsel %vm825, %v5229, %v5230
    %5232 = vrot.lane.b32.xlu0 %v5231, 127
    %v5233 = vpop.permute.xlu0 %5232
    %5234 = vrot.lane.b32.xlu0 %v5230, 127
    %v5235 = vpop.permute.xlu0 %5234
    %v5238 = vadd.f32 %v5114, %v5233
    %v5239 = vadd.f32 %v5115, %v5235
    %s5240 = sld [smem:[#allocation8 + $0xbb]]
    %v5241 = vstv %s5240
    %v5242 = vmul.f32 %v5241, %v4401
    %v5243 = vmul.f32 %v5241, %v4402
    %v5246 = vrot.slane %v5242, 2
    %v5247 = vrot.slane %v5243, 2
    %v5248 = vsel %vm825, %v5246, %v5247
    %5249 = vrot.lane.b32.xlu0 %v5248, 127
    %v5250 = vpop.permute.xlu0 %5249
    %5251 = vrot.lane.b32.xlu0 %v5247, 127
    %v5252 = vpop.permute.xlu0 %5251
    %v5255 = vadd.f32 %v5127, %v5250
    %v5256 = vadd.f32 %v5128, %v5252
    %s5257 = sld [smem:[#allocation8 + $0xdf]]
    %v5258 = vstv %s5257
    %v5259 = vmul.f32 %v5258, %v4401
    %v5260 = vmul.f32 %v5258, %v4402
    %v5263 = vrot.slane %v5259, 2
    %v5264 = vrot.slane %v5260, 2
    %v5265 = vsel %vm825, %v5263, %v5264
    %5266 = vrot.lane.b32.xlu0 %v5265, 127
    %v5267 = vpop.permute.xlu0 %5266
    %5268 = vrot.lane.b32.xlu0 %v5264, 127
    %v5269 = vpop.permute.xlu0 %5268
    %v5272 = vadd.f32 %v5140, %v5267
    %v5273 = vadd.f32 %v5141, %v5269
    %s5274 = sld [smem:[#allocation8 + $0x103]]
    %v5275 = vstv %s5274
    %v5276 = vmul.f32 %v5275, %v4401
    %v5277 = vmul.f32 %v5275, %v4402
    %v5280 = vrot.slane %v5276, 2
    %v5281 = vrot.slane %v5277, 2
    %v5282 = vsel %vm825, %v5280, %v5281
    %5283 = vrot.lane.b32.xlu0 %v5282, 127
    %v5284 = vpop.permute.xlu0 %5283
    %5285 = vrot.lane.b32.xlu0 %v5281, 127
    %v5286 = vpop.permute.xlu0 %5285
    %v5289 = vadd.f32 %v5153, %v5284
    %v5290 = vadd.f32 %v5154, %v5286
    %s5291 = sld [smem:[#allocation8 + $0x8]]
    %v5292 = vstv %s5291
    %v5293 = vmul.f32 %v5292, %v4401
    %v5294 = vmul.f32 %v5292, %v4402
    %v5297 = vrot.slane %v5293, 2
    %v5298 = vrot.slane %v5294, 2
    %v5299 = vsel %vm825, %v5297, %v5298
    %5300 = vrot.lane.b32.xlu0 %v5299, 126
    %v5301 = vpop.permute.xlu0 %5300
    %5302 = vrot.lane.b32.xlu0 %v5298, 126
    %v5303 = vpop.permute.xlu0 %5302
    %v5306 = vadd.f32 %v5170, %v5301
    %v5307 = vadd.f32 %v5171, %v5303
    %s5308 = sld [smem:[#allocation8 + $0x2c]]
    %v5309 = vstv %s5308
    %v5310 = vmul.f32 %v5309, %v4401
    %v5311 = vmul.f32 %v5309, %v4402
    %v5314 = vrot.slane %v5310, 2
    %v5315 = vrot.slane %v5311, 2
    %v5316 = vsel %vm825, %v5314, %v5315
    %5317 = vrot.lane.b32.xlu0 %v5316, 126
    %v5318 = vpop.permute.xlu0 %5317
    %5319 = vrot.lane.b32.xlu0 %v5315, 126
    %v5320 = vpop.permute.xlu0 %5319
    %v5323 = vadd.f32 %v5187, %v5318
    %v5324 = vadd.f32 %v5188, %v5320
    %s5325 = sld [smem:[#allocation8 + $0x50]]
    %v5326 = vstv %s5325
    %v5327 = vmul.f32 %v5326, %v4401
    %v5328 = vmul.f32 %v5326, %v4402
    %v5331 = vrot.slane %v5327, 2
    %v5332 = vrot.slane %v5328, 2
    %v5333 = vsel %vm825, %v5331, %v5332
    %5334 = vrot.lane.b32.xlu0 %v5333, 126
    %v5335 = vpop.permute.xlu0 %5334
    %5336 = vrot.lane.b32.xlu0 %v5332, 126
    %v5337 = vpop.permute.xlu0 %5336
    %v5340 = vadd.f32 %v5204, %v5335
    %v5341 = vadd.f32 %v5205, %v5337
    %s5342 = sld [smem:[#allocation8 + $0x74]]
    %v5343 = vstv %s5342
    %v5344 = vmul.f32 %v5343, %v4401
    %v5345 = vmul.f32 %v5343, %v4402
    %v5348 = vrot.slane %v5344, 2
    %v5349 = vrot.slane %v5345, 2
    %v5350 = vsel %vm825, %v5348, %v5349
    %5351 = vrot.lane.b32.xlu0 %v5350, 126
    %v5352 = vpop.permute.xlu0 %5351
    %5353 = vrot.lane.b32.xlu0 %v5349, 126
    %v5354 = vpop.permute.xlu0 %5353
    %v5357 = vadd.f32 %v5221, %v5352
    %v5358 = vadd.f32 %v5222, %v5354
    %s5359 = sld [smem:[#allocation8 + $0x98]]
    %v5360 = vstv %s5359
    %v5361 = vmul.f32 %v5360, %v4401
    %v5362 = vmul.f32 %v5360, %v4402
    %v5365 = vrot.slane %v5361, 2
    %v5366 = vrot.slane %v5362, 2
    %v5367 = vsel %vm825, %v5365, %v5366
    %5368 = vrot.lane.b32.xlu0 %v5367, 126
    %v5369 = vpop.permute.xlu0 %5368
    %5370 = vrot.lane.b32.xlu0 %v5366, 126
    %v5371 = vpop.permute.xlu0 %5370
    %v5374 = vadd.f32 %v5238, %v5369
    %v5375 = vadd.f32 %v5239, %v5371
    %s5376 = sld [smem:[#allocation8 + $0xbc]]
    %v5377 = vstv %s5376
    %v5378 = vmul.f32 %v5377, %v4401
    %v5379 = vmul.f32 %v5377, %v4402
    %v5382 = vrot.slane %v5378, 2
    %v5383 = vrot.slane %v5379, 2
    %v5384 = vsel %vm825, %v5382, %v5383
    %5385 = vrot.lane.b32.xlu0 %v5384, 126
    %v5386 = vpop.permute.xlu0 %5385
    %5387 = vrot.lane.b32.xlu0 %v5383, 126
    %v5388 = vpop.permute.xlu0 %5387
    %v5391 = vadd.f32 %v5255, %v5386
    %v5392 = vadd.f32 %v5256, %v5388
    %s5393 = sld [smem:[#allocation8 + $0xe0]]
    %v5394 = vstv %s5393
    %v5395 = vmul.f32 %v5394, %v4401
    %v5396 = vmul.f32 %v5394, %v4402
    %v5399 = vrot.slane %v5395, 2
    %v5400 = vrot.slane %v5396, 2
    %v5401 = vsel %vm825, %v5399, %v5400
    %5402 = vrot.lane.b32.xlu0 %v5401, 126
    %v5403 = vpop.permute.xlu0 %5402
    %5404 = vrot.lane.b32.xlu0 %v5400, 126
    %v5405 = vpop.permute.xlu0 %5404
    %v5408 = vadd.f32 %v5272, %v5403
    %v5409 = vadd.f32 %v5273, %v5405
    %s5410 = sld [smem:[#allocation8 + $0x104]]
    %v5411 = vstv %s5410
    %v5412 = vmul.f32 %v5411, %v4401
    %v5413 = vmul.f32 %v5411, %v4402
    %v5416 = vrot.slane %v5412, 2
    %v5417 = vrot.slane %v5413, 2
    %v5418 = vsel %vm825, %v5416, %v5417
    %5419 = vrot.lane.b32.xlu0 %v5418, 126
    %v5420 = vpop.permute.xlu0 %5419
    %5421 = vrot.lane.b32.xlu0 %v5417, 126
    %v5422 = vpop.permute.xlu0 %5421
    %v5425 = vadd.f32 %v5289, %v5420
    %v5426 = vadd.f32 %v5290, %v5422
    %v5427 = vmul.f32 %v4343, %v4375
    %v5428 = vmul.f32 %v4344, %v4376
    %s5429 = sld [smem:[#allocation5 + $0x1]]
    %v5430 = vstv %s5429
    %v5431 = vmul.f32 %v5427, %v5430
    %v5432 = vmul.f32 %v5428, %v5430
    %s5433 = sld [smem:[#allocation6 + $0x1]]
    %v5434 = vstv %s5433
    %v5435 = vadd.f32 %v5431, %v5434
    %v5436 = vadd.f32 %v5432, %v5434
    %s5437 = sld [smem:[#allocation8 + $0x9]]
    %v5438 = vstv %s5437
    %v5439 = vmul.f32 %v5438, %v5435
    %v5440 = vmul.f32 %v5438, %v5436
    %v5441 = vadd.f32 %v5306, %v5439
    %v5442 = vadd.f32 %v5307, %v5440
    %s5443 = sld [smem:[#allocation8 + $0x2d]]
    %v5444 = vstv %s5443
    %v5445 = vmul.f32 %v5444, %v5435
    %v5446 = vmul.f32 %v5444, %v5436
    %v5447 = vadd.f32 %v5323, %v5445
    %v5448 = vadd.f32 %v5324, %v5446
    %s5449 = sld [smem:[#allocation8 + $0x51]]
    %v5450 = vstv %s5449
    %v5451 = vmul.f32 %v5450, %v5435
    %v5452 = vmul.f32 %v5450, %v5436
    %v5453 = vadd.f32 %v5340, %v5451
    %v5454 = vadd.f32 %v5341, %v5452
    %s5455 = sld [smem:[#allocation8 + $0x75]]
    %v5456 = vstv %s5455
    %v5457 = vmul.f32 %v5456, %v5435
    %v5458 = vmul.f32 %v5456, %v5436
    %v5459 = vadd.f32 %v5357, %v5457
    %v5460 = vadd.f32 %v5358, %v5458
    %s5461 = sld [smem:[#allocation8 + $0x99]]
    %v5462 = vstv %s5461
    %v5463 = vmul.f32 %v5462, %v5435
    %v5464 = vmul.f32 %v5462, %v5436
    %v5465 = vadd.f32 %v5374, %v5463
    %v5466 = vadd.f32 %v5375, %v5464
    %s5467 = sld [smem:[#allocation8 + $0xbd]]
    %v5468 = vstv %s5467
    %v5469 = vmul.f32 %v5468, %v5435
    %v5470 = vmul.f32 %v5468, %v5436
    %v5471 = vadd.f32 %v5391, %v5469
    %v5472 = vadd.f32 %v5392, %v5470
    %s5473 = sld [smem:[#allocation8 + $0xe1]]
    %v5474 = vstv %s5473
    %v5475 = vmul.f32 %v5474, %v5435
    %v5476 = vmul.f32 %v5474, %v5436
    %v5477 = vadd.f32 %v5408, %v5475
    %v5478 = vadd.f32 %v5409, %v5476
    %s5479 = sld [smem:[#allocation8 + $0x105]]
    %v5480 = vstv %s5479
    %v5481 = vmul.f32 %v5480, %v5435
    %v5482 = vmul.f32 %v5480, %v5436
    %v5483 = vadd.f32 %v5425, %v5481
    %v5484 = vadd.f32 %v5426, %v5482
    %s5485 = sld [smem:[#allocation8 + $0xa]]
    %v5486 = vstv %s5485
    %v5487 = vmul.f32 %v5486, %v5435
    %v5488 = vmul.f32 %v5486, %v5436
    %5491 = vrot.lane.b32.xlu0 %v5487, 127
    %v5492 = vpop.permute.xlu0 %5491
    %5493 = vrot.lane.b32.xlu0 %v5488, 127
    %v5494 = vpop.permute.xlu0 %5493
    %v5497 = vadd.f32 %v5441, %v5492
    %v5498 = vadd.f32 %v5442, %v5494
    %s5499 = sld [smem:[#allocation8 + $0x2e]]
    %v5500 = vstv %s5499
    %v5501 = vmul.f32 %v5500, %v5435
    %v5502 = vmul.f32 %v5500, %v5436
    %5505 = vrot.lane.b32.xlu0 %v5501, 127
    %v5506 = vpop.permute.xlu0 %5505
    %5507 = vrot.lane.b32.xlu0 %v5502, 127
    %v5508 = vpop.permute.xlu0 %5507
    %v5511 = vadd.f32 %v5447, %v5506
    %v5512 = vadd.f32 %v5448, %v5508
    %s5513 = sld [smem:[#allocation8 + $0x52]]
    %v5514 = vstv %s5513
    %v5515 = vmul.f32 %v5514, %v5435
    %v5516 = vmul.f32 %v5514, %v5436
    %5519 = vrot.lane.b32.xlu0 %v5515, 127
    %v5520 = vpop.permute.xlu0 %5519
    %5521 = vrot.lane.b32.xlu0 %v5516, 127
    %v5522 = vpop.permute.xlu0 %5521
    %v5525 = vadd.f32 %v5453, %v5520
    %v5526 = vadd.f32 %v5454, %v5522
    %s5527 = sld [smem:[#allocation8 + $0x76]]
    %v5528 = vstv %s5527
    %v5529 = vmul.f32 %v5528, %v5435
    %v5530 = vmul.f32 %v5528, %v5436
    %5533 = vrot.lane.b32.xlu0 %v5529, 127
    %v5534 = vpop.permute.xlu0 %5533
    %5535 = vrot.lane.b32.xlu0 %v5530, 127
    %v5536 = vpop.permute.xlu0 %5535
    %v5539 = vadd.f32 %v5459, %v5534
    %v5540 = vadd.f32 %v5460, %v5536
    %s5541 = sld [smem:[#allocation8 + $0x9a]]
    %v5542 = vstv %s5541
    %v5543 = vmul.f32 %v5542, %v5435
    %v5544 = vmul.f32 %v5542, %v5436
    %5547 = vrot.lane.b32.xlu0 %v5543, 127
    %v5548 = vpop.permute.xlu0 %5547
    %5549 = vrot.lane.b32.xlu0 %v5544, 127
    %v5550 = vpop.permute.xlu0 %5549
    %v5553 = vadd.f32 %v5465, %v5548
    %v5554 = vadd.f32 %v5466, %v5550
    %s5555 = sld [smem:[#allocation8 + $0xbe]]
    %v5556 = vstv %s5555
    %v5557 = vmul.f32 %v5556, %v5435
    %v5558 = vmul.f32 %v5556, %v5436
    %5561 = vrot.lane.b32.xlu0 %v5557, 127
    %v5562 = vpop.permute.xlu0 %5561
    %5563 = vrot.lane.b32.xlu0 %v5558, 127
    %v5564 = vpop.permute.xlu0 %5563
    %v5567 = vadd.f32 %v5471, %v5562
    %v5568 = vadd.f32 %v5472, %v5564
    %s5569 = sld [smem:[#allocation8 + $0xe2]]
    %v5570 = vstv %s5569
    %v5571 = vmul.f32 %v5570, %v5435
    %v5572 = vmul.f32 %v5570, %v5436
    %5575 = vrot.lane.b32.xlu0 %v5571, 127
    %v5576 = vpop.permute.xlu0 %5575
    %5577 = vrot.lane.b32.xlu0 %v5572, 127
    %v5578 = vpop.permute.xlu0 %5577
    %v5581 = vadd.f32 %v5477, %v5576
    %v5582 = vadd.f32 %v5478, %v5578
    %s5583 = sld [smem:[#allocation8 + $0x106]]
    %v5584 = vstv %s5583
    %v5585 = vmul.f32 %v5584, %v5435
    %v5586 = vmul.f32 %v5584, %v5436
    %5589 = vrot.lane.b32.xlu0 %v5585, 127
    %v5590 = vpop.permute.xlu0 %5589
    %5591 = vrot.lane.b32.xlu0 %v5586, 127
    %v5592 = vpop.permute.xlu0 %5591
    %v5595 = vadd.f32 %v5483, %v5590
    %v5596 = vadd.f32 %v5484, %v5592
    %s5597 = sld [smem:[#allocation8 + $0xb]]
    %v5598 = vstv %s5597
    %v5599 = vmul.f32 %v5598, %v5435
    %v5600 = vmul.f32 %v5598, %v5436
    %5603 = vrot.lane.b32.xlu0 %v5599, 126
    %v5604 = vpop.permute.xlu0 %5603
    %5605 = vrot.lane.b32.xlu0 %v5600, 126
    %v5606 = vpop.permute.xlu0 %5605
    %v5609 = vadd.f32 %v5497, %v5604
    %v5610 = vadd.f32 %v5498, %v5606
    %s5611 = sld [smem:[#allocation8 + $0x2f]]
    %v5612 = vstv %s5611
    %v5613 = vmul.f32 %v5612, %v5435
    %v5614 = vmul.f32 %v5612, %v5436
    %5617 = vrot.lane.b32.xlu0 %v5613, 126
    %v5618 = vpop.permute.xlu0 %5617
    %5619 = vrot.lane.b32.xlu0 %v5614, 126
    %v5620 = vpop.permute.xlu0 %5619
    %v5623 = vadd.f32 %v5511, %v5618
    %v5624 = vadd.f32 %v5512, %v5620
    %s5625 = sld [smem:[#allocation8 + $0x53]]
    %v5626 = vstv %s5625
    %v5627 = vmul.f32 %v5626, %v5435
    %v5628 = vmul.f32 %v5626, %v5436
    %5631 = vrot.lane.b32.xlu0 %v5627, 126
    %v5632 = vpop.permute.xlu0 %5631
    %5633 = vrot.lane.b32.xlu0 %v5628, 126
    %v5634 = vpop.permute.xlu0 %5633
    %v5637 = vadd.f32 %v5525, %v5632
    %v5638 = vadd.f32 %v5526, %v5634
    %s5639 = sld [smem:[#allocation8 + $0x77]]
    %v5640 = vstv %s5639
    %v5641 = vmul.f32 %v5640, %v5435
    %v5642 = vmul.f32 %v5640, %v5436
    %5645 = vrot.lane.b32.xlu0 %v5641, 126
    %v5646 = vpop.permute.xlu0 %5645
    %5647 = vrot.lane.b32.xlu0 %v5642, 126
    %v5648 = vpop.permute.xlu0 %5647
    %v5651 = vadd.f32 %v5539, %v5646
    %v5652 = vadd.f32 %v5540, %v5648
    %s5653 = sld [smem:[#allocation8 + $0x9b]]
    %v5654 = vstv %s5653
    %v5655 = vmul.f32 %v5654, %v5435
    %v5656 = vmul.f32 %v5654, %v5436
    %5659 = vrot.lane.b32.xlu0 %v5655, 126
    %v5660 = vpop.permute.xlu0 %5659
    %5661 = vrot.lane.b32.xlu0 %v5656, 126
    %v5662 = vpop.permute.xlu0 %5661
    %v5665 = vadd.f32 %v5553, %v5660
    %v5666 = vadd.f32 %v5554, %v5662
    %s5667 = sld [smem:[#allocation8 + $0xbf]]
    %v5668 = vstv %s5667
    %v5669 = vmul.f32 %v5668, %v5435
    %v5670 = vmul.f32 %v5668, %v5436
    %5673 = vrot.lane.b32.xlu0 %v5669, 126
    %v5674 = vpop.permute.xlu0 %5673
    %5675 = vrot.lane.b32.xlu0 %v5670, 126
    %v5676 = vpop.permute.xlu0 %5675
    %v5679 = vadd.f32 %v5567, %v5674
    %v5680 = vadd.f32 %v5568, %v5676
    %s5681 = sld [smem:[#allocation8 + $0xe3]]
    %v5682 = vstv %s5681
    %v5683 = vmul.f32 %v5682, %v5435
    %v5684 = vmul.f32 %v5682, %v5436
    %5687 = vrot.lane.b32.xlu0 %v5683, 126
    %v5688 = vpop.permute.xlu0 %5687
    %5689 = vrot.lane.b32.xlu0 %v5684, 126
    %v5690 = vpop.permute.xlu0 %5689
    %v5693 = vadd.f32 %v5581, %v5688
    %v5694 = vadd.f32 %v5582, %v5690
    %s5695 = sld [smem:[#allocation8 + $0x107]]
    %v5696 = vstv %s5695
    %v5697 = vmul.f32 %v5696, %v5435
    %v5698 = vmul.f32 %v5696, %v5436
    %5701 = vrot.lane.b32.xlu0 %v5697, 126
    %v5702 = vpop.permute.xlu0 %5701
    %5703 = vrot.lane.b32.xlu0 %v5698, 126
    %v5704 = vpop.permute.xlu0 %5703
    %v5707 = vadd.f32 %v5595, %v5702
    %v5708 = vadd.f32 %v5596, %v5704
    %s5709 = sld [smem:[#allocation8 + $0xc]]
    %v5710 = vstv %s5709
    %v5711 = vmul.f32 %v5710, %v5435
    %v5712 = vmul.f32 %v5710, %v5436
    %v5715 = vrot.slane %v5711, 1
    %v5716 = vrot.slane %v5712, 1
    %v5717 = vsel %vm448, %v5715, %v5716
    %v5720 = vadd.f32 %v5609, %v5717
    %v5721 = vadd.f32 %v5610, %v5716
    %s5722 = sld [smem:[#allocation8 + $0x30]]
    %v5723 = vstv %s5722
    %v5724 = vmul.f32 %v5723, %v5435
    %v5725 = vmul.f32 %v5723, %v5436
    %v5728 = vrot.slane %v5724, 1
    %v5729 = vrot.slane %v5725, 1
    %v5730 = vsel %vm448, %v5728, %v5729
    %v5733 = vadd.f32 %v5623, %v5730
    %v5734 = vadd.f32 %v5624, %v5729
    %s5735 = sld [smem:[#allocation8 + $0x54]]
    %v5736 = vstv %s5735
    %v5737 = vmul.f32 %v5736, %v5435
    %v5738 = vmul.f32 %v5736, %v5436
    %v5741 = vrot.slane %v5737, 1
    %v5742 = vrot.slane %v5738, 1
    %v5743 = vsel %vm448, %v5741, %v5742
    %v5746 = vadd.f32 %v5637, %v5743
    %v5747 = vadd.f32 %v5638, %v5742
    %s5748 = sld [smem:[#allocation8 + $0x78]]
    %v5749 = vstv %s5748
    %v5750 = vmul.f32 %v5749, %v5435
    %v5751 = vmul.f32 %v5749, %v5436
    %v5754 = vrot.slane %v5750, 1
    %v5755 = vrot.slane %v5751, 1
    %v5756 = vsel %vm448, %v5754, %v5755
    %v5759 = vadd.f32 %v5651, %v5756
    %v5760 = vadd.f32 %v5652, %v5755
    %s5761 = sld [smem:[#allocation8 + $0x9c]]
    %v5762 = vstv %s5761
    %v5763 = vmul.f32 %v5762, %v5435
    %v5764 = vmul.f32 %v5762, %v5436
    %v5767 = vrot.slane %v5763, 1
    %v5768 = vrot.slane %v5764, 1
    %v5769 = vsel %vm448, %v5767, %v5768
    %v5772 = vadd.f32 %v5665, %v5769
    %v5773 = vadd.f32 %v5666, %v5768
    %s5774 = sld [smem:[#allocation8 + $0xc0]]
    %v5775 = vstv %s5774
    %v5776 = vmul.f32 %v5775, %v5435
    %v5777 = vmul.f32 %v5775, %v5436
    %v5780 = vrot.slane %v5776, 1
    %v5781 = vrot.slane %v5777, 1
    %v5782 = vsel %vm448, %v5780, %v5781
    %v5785 = vadd.f32 %v5679, %v5782
    %v5786 = vadd.f32 %v5680, %v5781
    %s5787 = sld [smem:[#allocation8 + $0xe4]]
    %v5788 = vstv %s5787
    %v5789 = vmul.f32 %v5788, %v5435
    %v5790 = vmul.f32 %v5788, %v5436
    %v5793 = vrot.slane %v5789, 1
    %v5794 = vrot.slane %v5790, 1
    %v5795 = vsel %vm448, %v5793, %v5794
    %v5798 = vadd.f32 %v5693, %v5795
    %v5799 = vadd.f32 %v5694, %v5794
    %s5800 = sld [smem:[#allocation8 + $0x108]]
    %v5801 = vstv %s5800
    %v5802 = vmul.f32 %v5801, %v5435
    %v5803 = vmul.f32 %v5801, %v5436
    %v5806 = vrot.slane %v5802, 1
    %v5807 = vrot.slane %v5803, 1
    %v5808 = vsel %vm448, %v5806, %v5807
    %v5811 = vadd.f32 %v5707, %v5808
    %v5812 = vadd.f32 %v5708, %v5807
    %s5813 = sld [smem:[#allocation8 + $0xd]]
    %v5814 = vstv %s5813
    %v5815 = vmul.f32 %v5814, %v5435
    %v5816 = vmul.f32 %v5814, %v5436
    %v5819 = vrot.slane %v5815, 1
    %v5820 = vrot.slane %v5816, 1
    %v5821 = vsel %vm448, %v5819, %v5820
    %5822 = vrot.lane.b32.xlu0 %v5821, 127
    %v5823 = vpop.permute.xlu0 %5822
    %5824 = vrot.lane.b32.xlu0 %v5820, 127
    %v5825 = vpop.permute.xlu0 %5824
    %v5828 = vadd.f32 %v5720, %v5823
    %v5829 = vadd.f32 %v5721, %v5825
    %s5830 = sld [smem:[#allocation8 + $0x31]]
    %v5831 = vstv %s5830
    %v5832 = vmul.f32 %v5831, %v5435
    %v5833 = vmul.f32 %v5831, %v5436
    %v5836 = vrot.slane %v5832, 1
    %v5837 = vrot.slane %v5833, 1
    %v5838 = vsel %vm448, %v5836, %v5837
    %5839 = vrot.lane.b32.xlu0 %v5838, 127
    %v5840 = vpop.permute.xlu0 %5839
    %5841 = vrot.lane.b32.xlu0 %v5837, 127
    %v5842 = vpop.permute.xlu0 %5841
    %v5845 = vadd.f32 %v5733, %v5840
    %v5846 = vadd.f32 %v5734, %v5842
    %s5847 = sld [smem:[#allocation8 + $0x55]]
    %v5848 = vstv %s5847
    %v5849 = vmul.f32 %v5848, %v5435
    %v5850 = vmul.f32 %v5848, %v5436
    %v5853 = vrot.slane %v5849, 1
    %v5854 = vrot.slane %v5850, 1
    %v5855 = vsel %vm448, %v5853, %v5854
    %5856 = vrot.lane.b32.xlu0 %v5855, 127
    %v5857 = vpop.permute.xlu0 %5856
    %5858 = vrot.lane.b32.xlu0 %v5854, 127
    %v5859 = vpop.permute.xlu0 %5858
    %v5862 = vadd.f32 %v5746, %v5857
    %v5863 = vadd.f32 %v5747, %v5859
    %s5864 = sld [smem:[#allocation8 + $0x79]]
    %v5865 = vstv %s5864
    %v5866 = vmul.f32 %v5865, %v5435
    %v5867 = vmul.f32 %v5865, %v5436
    %v5870 = vrot.slane %v5866, 1
    %v5871 = vrot.slane %v5867, 1
    %v5872 = vsel %vm448, %v5870, %v5871
    %5873 = vrot.lane.b32.xlu0 %v5872, 127
    %v5874 = vpop.permute.xlu0 %5873
    %5875 = vrot.lane.b32.xlu0 %v5871, 127
    %v5876 = vpop.permute.xlu0 %5875
    %v5879 = vadd.f32 %v5759, %v5874
    %v5880 = vadd.f32 %v5760, %v5876
    %s5881 = sld [smem:[#allocation8 + $0x9d]]
    %v5882 = vstv %s5881
    %v5883 = vmul.f32 %v5882, %v5435
    %v5884 = vmul.f32 %v5882, %v5436
    %v5887 = vrot.slane %v5883, 1
    %v5888 = vrot.slane %v5884, 1
    %v5889 = vsel %vm448, %v5887, %v5888
    %5890 = vrot.lane.b32.xlu0 %v5889, 127
    %v5891 = vpop.permute.xlu0 %5890
    %5892 = vrot.lane.b32.xlu0 %v5888, 127
    %v5893 = vpop.permute.xlu0 %5892
    %v5896 = vadd.f32 %v5772, %v5891
    %v5897 = vadd.f32 %v5773, %v5893
    %s5898 = sld [smem:[#allocation8 + $0xc1]]
    %v5899 = vstv %s5898
    %v5900 = vmul.f32 %v5899, %v5435
    %v5901 = vmul.f32 %v5899, %v5436
    %v5904 = vrot.slane %v5900, 1
    %v5905 = vrot.slane %v5901, 1
    %v5906 = vsel %vm448, %v5904, %v5905
    %5907 = vrot.lane.b32.xlu0 %v5906, 127
    %v5908 = vpop.permute.xlu0 %5907
    %5909 = vrot.lane.b32.xlu0 %v5905, 127
    %v5910 = vpop.permute.xlu0 %5909
    %v5913 = vadd.f32 %v5785, %v5908
    %v5914 = vadd.f32 %v5786, %v5910
    %s5915 = sld [smem:[#allocation8 + $0xe5]]
    %v5916 = vstv %s5915
    %v5917 = vmul.f32 %v5916, %v5435
    %v5918 = vmul.f32 %v5916, %v5436
    %v5921 = vrot.slane %v5917, 1
    %v5922 = vrot.slane %v5918, 1
    %v5923 = vsel %vm448, %v5921, %v5922
    %5924 = vrot.lane.b32.xlu0 %v5923, 127
    %v5925 = vpop.permute.xlu0 %5924
    %5926 = vrot.lane.b32.xlu0 %v5922, 127
    %v5927 = vpop.permute.xlu0 %5926
    %v5930 = vadd.f32 %v5798, %v5925
    %v5931 = vadd.f32 %v5799, %v5927
    %s5932 = sld [smem:[#allocation8 + $0x109]]
    %v5933 = vstv %s5932
    %v5934 = vmul.f32 %v5933, %v5435
    %v5935 = vmul.f32 %v5933, %v5436
    %v5938 = vrot.slane %v5934, 1
    %v5939 = vrot.slane %v5935, 1
    %v5940 = vsel %vm448, %v5938, %v5939
    %5941 = vrot.lane.b32.xlu0 %v5940, 127
    %v5942 = vpop.permute.xlu0 %5941
    %5943 = vrot.lane.b32.xlu0 %v5939, 127
    %v5944 = vpop.permute.xlu0 %5943
    %v5947 = vadd.f32 %v5811, %v5942
    %v5948 = vadd.f32 %v5812, %v5944
    %s5949 = sld [smem:[#allocation8 + $0xe]]
    %v5950 = vstv %s5949
    %v5951 = vmul.f32 %v5950, %v5435
    %v5952 = vmul.f32 %v5950, %v5436
    %v5955 = vrot.slane %v5951, 1
    %v5956 = vrot.slane %v5952, 1
    %v5957 = vsel %vm448, %v5955, %v5956
    %5958 = vrot.lane.b32.xlu0 %v5957, 126
    %v5959 = vpop.permute.xlu0 %5958
    %5960 = vrot.lane.b32.xlu0 %v5956, 126
    %v5961 = vpop.permute.xlu0 %5960
    %v5964 = vadd.f32 %v5828, %v5959
    %v5965 = vadd.f32 %v5829, %v5961
    %s5966 = sld [smem:[#allocation8 + $0x32]]
    %v5967 = vstv %s5966
    %v5968 = vmul.f32 %v5967, %v5435
    %v5969 = vmul.f32 %v5967, %v5436
    %v5972 = vrot.slane %v5968, 1
    %v5973 = vrot.slane %v5969, 1
    %v5974 = vsel %vm448, %v5972, %v5973
    %5975 = vrot.lane.b32.xlu0 %v5974, 126
    %v5976 = vpop.permute.xlu0 %5975
    %5977 = vrot.lane.b32.xlu0 %v5973, 126
    %v5978 = vpop.permute.xlu0 %5977
    %v5981 = vadd.f32 %v5845, %v5976
    %v5982 = vadd.f32 %v5846, %v5978
    %s5983 = sld [smem:[#allocation8 + $0x56]]
    %v5984 = vstv %s5983
    %v5985 = vmul.f32 %v5984, %v5435
    %v5986 = vmul.f32 %v5984, %v5436
    %v5989 = vrot.slane %v5985, 1
    %v5990 = vrot.slane %v5986, 1
    %v5991 = vsel %vm448, %v5989, %v5990
    %5992 = vrot.lane.b32.xlu0 %v5991, 126
    %v5993 = vpop.permute.xlu0 %5992
    %5994 = vrot.lane.b32.xlu0 %v5990, 126
    %v5995 = vpop.permute.xlu0 %5994
    %v5998 = vadd.f32 %v5862, %v5993
    %v5999 = vadd.f32 %v5863, %v5995
    %s6000 = sld [smem:[#allocation8 + $0x7a]]
    %v6001 = vstv %s6000
    %v6002 = vmul.f32 %v6001, %v5435
    %v6003 = vmul.f32 %v6001, %v5436
    %v6006 = vrot.slane %v6002, 1
    %v6007 = vrot.slane %v6003, 1
    %v6008 = vsel %vm448, %v6006, %v6007
    %6009 = vrot.lane.b32.xlu0 %v6008, 126
    %v6010 = vpop.permute.xlu0 %6009
    %6011 = vrot.lane.b32.xlu0 %v6007, 126
    %v6012 = vpop.permute.xlu0 %6011
    %v6015 = vadd.f32 %v5879, %v6010
    %v6016 = vadd.f32 %v5880, %v6012
    %s6017 = sld [smem:[#allocation8 + $0x9e]]
    %v6018 = vstv %s6017
    %v6019 = vmul.f32 %v6018, %v5435
    %v6020 = vmul.f32 %v6018, %v5436
    %v6023 = vrot.slane %v6019, 1
    %v6024 = vrot.slane %v6020, 1
    %v6025 = vsel %vm448, %v6023, %v6024
    %6026 = vrot.lane.b32.xlu0 %v6025, 126
    %v6027 = vpop.permute.xlu0 %6026
    %6028 = vrot.lane.b32.xlu0 %v6024, 126
    %v6029 = vpop.permute.xlu0 %6028
    %v6032 = vadd.f32 %v5896, %v6027
    %v6033 = vadd.f32 %v5897, %v6029
    %s6034 = sld [smem:[#allocation8 + $0xc2]]
    %v6035 = vstv %s6034
    %v6036 = vmul.f32 %v6035, %v5435
    %v6037 = vmul.f32 %v6035, %v5436
    %v6040 = vrot.slane %v6036, 1
    %v6041 = vrot.slane %v6037, 1
    %v6042 = vsel %vm448, %v6040, %v6041
    %6043 = vrot.lane.b32.xlu0 %v6042, 126
    %v6044 = vpop.permute.xlu0 %6043
    %6045 = vrot.lane.b32.xlu0 %v6041, 126
    %v6046 = vpop.permute.xlu0 %6045
    %v6049 = vadd.f32 %v5913, %v6044
    %v6050 = vadd.f32 %v5914, %v6046
    %s6051 = sld [smem:[#allocation8 + $0xe6]]
    %v6052 = vstv %s6051
    %v6053 = vmul.f32 %v6052, %v5435
    %v6054 = vmul.f32 %v6052, %v5436
    %v6057 = vrot.slane %v6053, 1
    %v6058 = vrot.slane %v6054, 1
    %v6059 = vsel %vm448, %v6057, %v6058
    %6060 = vrot.lane.b32.xlu0 %v6059, 126
    %v6061 = vpop.permute.xlu0 %6060
    %6062 = vrot.lane.b32.xlu0 %v6058, 126
    %v6063 = vpop.permute.xlu0 %6062
    %v6066 = vadd.f32 %v5930, %v6061
    %v6067 = vadd.f32 %v5931, %v6063
    %s6068 = sld [smem:[#allocation8 + $0x10a]]
    %v6069 = vstv %s6068
    %v6070 = vmul.f32 %v6069, %v5435
    %v6071 = vmul.f32 %v6069, %v5436
    %v6074 = vrot.slane %v6070, 1
    %v6075 = vrot.slane %v6071, 1
    %v6076 = vsel %vm448, %v6074, %v6075
    %6077 = vrot.lane.b32.xlu0 %v6076, 126
    %v6078 = vpop.permute.xlu0 %6077
    %6079 = vrot.lane.b32.xlu0 %v6075, 126
    %v6080 = vpop.permute.xlu0 %6079
    %v6083 = vadd.f32 %v5947, %v6078
    %v6084 = vadd.f32 %v5948, %v6080
    %s6085 = sld [smem:[#allocation8 + $0xf]]
    %v6086 = vstv %s6085
    %v6087 = vmul.f32 %v6086, %v5435
    %v6088 = vmul.f32 %v6086, %v5436
    %v6091 = vrot.slane %v6087, 2
    %v6092 = vrot.slane %v6088, 2
    %v6093 = vsel %vm825, %v6091, %v6092
    %v6096 = vadd.f32 %v5964, %v6093
    %v6097 = vadd.f32 %v5965, %v6092
    %s6098 = sld [smem:[#allocation8 + $0x33]]
    %v6099 = vstv %s6098
    %v6100 = vmul.f32 %v6099, %v5435
    %v6101 = vmul.f32 %v6099, %v5436
    %v6104 = vrot.slane %v6100, 2
    %v6105 = vrot.slane %v6101, 2
    %v6106 = vsel %vm825, %v6104, %v6105
    %v6109 = vadd.f32 %v5981, %v6106
    %v6110 = vadd.f32 %v5982, %v6105
    %s6111 = sld [smem:[#allocation8 + $0x57]]
    %v6112 = vstv %s6111
    %v6113 = vmul.f32 %v6112, %v5435
    %v6114 = vmul.f32 %v6112, %v5436
    %v6117 = vrot.slane %v6113, 2
    %v6118 = vrot.slane %v6114, 2
    %v6119 = vsel %vm825, %v6117, %v6118
    %v6122 = vadd.f32 %v5998, %v6119
    %v6123 = vadd.f32 %v5999, %v6118
    %s6124 = sld [smem:[#allocation8 + $0x7b]]
    %v6125 = vstv %s6124
    %v6126 = vmul.f32 %v6125, %v5435
    %v6127 = vmul.f32 %v6125, %v5436
    %v6130 = vrot.slane %v6126, 2
    %v6131 = vrot.slane %v6127, 2
    %v6132 = vsel %vm825, %v6130, %v6131
    %v6135 = vadd.f32 %v6015, %v6132
    %v6136 = vadd.f32 %v6016, %v6131
    %s6137 = sld [smem:[#allocation8 + $0x9f]]
    %v6138 = vstv %s6137
    %v6139 = vmul.f32 %v6138, %v5435
    %v6140 = vmul.f32 %v6138, %v5436
    %v6143 = vrot.slane %v6139, 2
    %v6144 = vrot.slane %v6140, 2
    %v6145 = vsel %vm825, %v6143, %v6144
    %v6148 = vadd.f32 %v6032, %v6145
    %v6149 = vadd.f32 %v6033, %v6144
    %s6150 = sld [smem:[#allocation8 + $0xc3]]
    %v6151 = vstv %s6150
    %v6152 = vmul.f32 %v6151, %v5435
    %v6153 = vmul.f32 %v6151, %v5436
    %v6156 = vrot.slane %v6152, 2
    %v6157 = vrot.slane %v6153, 2
    %v6158 = vsel %vm825, %v6156, %v6157
    %v6161 = vadd.f32 %v6049, %v6158
    %v6162 = vadd.f32 %v6050, %v6157
    %s6163 = sld [smem:[#allocation8 + $0xe7]]
    %v6164 = vstv %s6163
    %v6165 = vmul.f32 %v6164, %v5435
    %v6166 = vmul.f32 %v6164, %v5436
    %v6169 = vrot.slane %v6165, 2
    %v6170 = vrot.slane %v6166, 2
    %v6171 = vsel %vm825, %v6169, %v6170
    %v6174 = vadd.f32 %v6066, %v6171
    %v6175 = vadd.f32 %v6067, %v6170
    %s6176 = sld [smem:[#allocation8 + $0x10b]]
    %v6177 = vstv %s6176
    %v6178 = vmul.f32 %v6177, %v5435
    %v6179 = vmul.f32 %v6177, %v5436
    %v6182 = vrot.slane %v6178, 2
    %v6183 = vrot.slane %v6179, 2
    %v6184 = vsel %vm825, %v6182, %v6183
    %v6187 = vadd.f32 %v6083, %v6184
    %v6188 = vadd.f32 %v6084, %v6183
    %s6189 = sld [smem:[#allocation8 + $0x10]]
    %v6190 = vstv %s6189
    %v6191 = vmul.f32 %v6190, %v5435
    %v6192 = vmul.f32 %v6190, %v5436
    %v6195 = vrot.slane %v6191, 2
    %v6196 = vrot.slane %v6192, 2
    %v6197 = vsel %vm825, %v6195, %v6196
    %6198 = vrot.lane.b32.xlu0 %v6197, 127
    %v6199 = vpop.permute.xlu0 %6198
    %6200 = vrot.lane.b32.xlu0 %v6196, 127
    %v6201 = vpop.permute.xlu0 %6200
    %v6204 = vadd.f32 %v6096, %v6199
    %v6205 = vadd.f32 %v6097, %v6201
    %s6206 = sld [smem:[#allocation8 + $0x34]]
    %v6207 = vstv %s6206
    %v6208 = vmul.f32 %v6207, %v5435
    %v6209 = vmul.f32 %v6207, %v5436
    %v6212 = vrot.slane %v6208, 2
    %v6213 = vrot.slane %v6209, 2
    %v6214 = vsel %vm825, %v6212, %v6213
    %6215 = vrot.lane.b32.xlu0 %v6214, 127
    %v6216 = vpop.permute.xlu0 %6215
    %6217 = vrot.lane.b32.xlu0 %v6213, 127
    %v6218 = vpop.permute.xlu0 %6217
    %v6221 = vadd.f32 %v6109, %v6216
    %v6222 = vadd.f32 %v6110, %v6218
    %s6223 = sld [smem:[#allocation8 + $0x58]]
    %v6224 = vstv %s6223
    %v6225 = vmul.f32 %v6224, %v5435
    %v6226 = vmul.f32 %v6224, %v5436
    %v6229 = vrot.slane %v6225, 2
    %v6230 = vrot.slane %v6226, 2
    %v6231 = vsel %vm825, %v6229, %v6230
    %6232 = vrot.lane.b32.xlu0 %v6231, 127
    %v6233 = vpop.permute.xlu0 %6232
    %6234 = vrot.lane.b32.xlu0 %v6230, 127
    %v6235 = vpop.permute.xlu0 %6234
    %v6238 = vadd.f32 %v6122, %v6233
    %v6239 = vadd.f32 %v6123, %v6235
    %s6240 = sld [smem:[#allocation8 + $0x7c]]
    %v6241 = vstv %s6240
    %v6242 = vmul.f32 %v6241, %v5435
    %v6243 = vmul.f32 %v6241, %v5436
    %v6246 = vrot.slane %v6242, 2
    %v6247 = vrot.slane %v6243, 2
    %v6248 = vsel %vm825, %v6246, %v6247
    %6249 = vrot.lane.b32.xlu0 %v6248, 127
    %v6250 = vpop.permute.xlu0 %6249
    %6251 = vrot.lane.b32.xlu0 %v6247, 127
    %v6252 = vpop.permute.xlu0 %6251
    %v6255 = vadd.f32 %v6135, %v6250
    %v6256 = vadd.f32 %v6136, %v6252
    %s6257 = sld [smem:[#allocation8 + $0xa0]]
    %v6258 = vstv %s6257
    %v6259 = vmul.f32 %v6258, %v5435
    %v6260 = vmul.f32 %v6258, %v5436
    %v6263 = vrot.slane %v6259, 2
    %v6264 = vrot.slane %v6260, 2
    %v6265 = vsel %vm825, %v6263, %v6264
    %6266 = vrot.lane.b32.xlu0 %v6265, 127
    %v6267 = vpop.permute.xlu0 %6266
    %6268 = vrot.lane.b32.xlu0 %v6264, 127
    %v6269 = vpop.permute.xlu0 %6268
    %v6272 = vadd.f32 %v6148, %v6267
    %v6273 = vadd.f32 %v6149, %v6269
    %s6274 = sld [smem:[#allocation8 + $0xc4]]
    %v6275 = vstv %s6274
    %v6276 = vmul.f32 %v6275, %v5435
    %v6277 = vmul.f32 %v6275, %v5436
    %v6280 = vrot.slane %v6276, 2
    %v6281 = vrot.slane %v6277, 2
    %v6282 = vsel %vm825, %v6280, %v6281
    %6283 = vrot.lane.b32.xlu0 %v6282, 127
    %v6284 = vpop.permute.xlu0 %6283
    %6285 = vrot.lane.b32.xlu0 %v6281, 127
    %v6286 = vpop.permute.xlu0 %6285
    %v6289 = vadd.f32 %v6161, %v6284
    %v6290 = vadd.f32 %v6162, %v6286
    %s6291 = sld [smem:[#allocation8 + $0xe8]]
    %v6292 = vstv %s6291
    %v6293 = vmul.f32 %v6292, %v5435
    %v6294 = vmul.f32 %v6292, %v5436
    %v6297 = vrot.slane %v6293, 2
    %v6298 = vrot.slane %v6294, 2
    %v6299 = vsel %vm825, %v6297, %v6298
    %6300 = vrot.lane.b32.xlu0 %v6299, 127
    %v6301 = vpop.permute.xlu0 %6300
    %6302 = vrot.lane.b32.xlu0 %v6298, 127
    %v6303 = vpop.permute.xlu0 %6302
    %v6306 = vadd.f32 %v6174, %v6301
    %v6307 = vadd.f32 %v6175, %v6303
    %s6308 = sld [smem:[#allocation8 + $0x10c]]
    %v6309 = vstv %s6308
    %v6310 = vmul.f32 %v6309, %v5435
    %v6311 = vmul.f32 %v6309, %v5436
    %v6314 = vrot.slane %v6310, 2
    %v6315 = vrot.slane %v6311, 2
    %v6316 = vsel %vm825, %v6314, %v6315
    %6317 = vrot.lane.b32.xlu0 %v6316, 127
    %v6318 = vpop.permute.xlu0 %6317
    %6319 = vrot.lane.b32.xlu0 %v6315, 127
    %v6320 = vpop.permute.xlu0 %6319
    %v6323 = vadd.f32 %v6187, %v6318
    %v6324 = vadd.f32 %v6188, %v6320
    %s6325 = sld [smem:[#allocation8 + $0x11]]
    %v6326 = vstv %s6325
    %v6327 = vmul.f32 %v6326, %v5435
    %v6328 = vmul.f32 %v6326, %v5436
    %v6331 = vrot.slane %v6327, 2
    %v6332 = vrot.slane %v6328, 2
    %v6333 = vsel %vm825, %v6331, %v6332
    %6334 = vrot.lane.b32.xlu0 %v6333, 126
    %v6335 = vpop.permute.xlu0 %6334
    %6336 = vrot.lane.b32.xlu0 %v6332, 126
    %v6337 = vpop.permute.xlu0 %6336
    %v6340 = vadd.f32 %v6204, %v6335
    %v6341 = vadd.f32 %v6205, %v6337
    %s6342 = sld [smem:[#allocation8 + $0x35]]
    %v6343 = vstv %s6342
    %v6344 = vmul.f32 %v6343, %v5435
    %v6345 = vmul.f32 %v6343, %v5436
    %v6348 = vrot.slane %v6344, 2
    %v6349 = vrot.slane %v6345, 2
    %v6350 = vsel %vm825, %v6348, %v6349
    %6351 = vrot.lane.b32.xlu0 %v6350, 126
    %v6352 = vpop.permute.xlu0 %6351
    %6353 = vrot.lane.b32.xlu0 %v6349, 126
    %v6354 = vpop.permute.xlu0 %6353
    %v6357 = vadd.f32 %v6221, %v6352
    %v6358 = vadd.f32 %v6222, %v6354
    %s6359 = sld [smem:[#allocation8 + $0x59]]
    %v6360 = vstv %s6359
    %v6361 = vmul.f32 %v6360, %v5435
    %v6362 = vmul.f32 %v6360, %v5436
    %v6365 = vrot.slane %v6361, 2
    %v6366 = vrot.slane %v6362, 2
    %v6367 = vsel %vm825, %v6365, %v6366
    %6368 = vrot.lane.b32.xlu0 %v6367, 126
    %v6369 = vpop.permute.xlu0 %6368
    %6370 = vrot.lane.b32.xlu0 %v6366, 126
    %v6371 = vpop.permute.xlu0 %6370
    %v6374 = vadd.f32 %v6238, %v6369
    %v6375 = vadd.f32 %v6239, %v6371
    %s6376 = sld [smem:[#allocation8 + $0x7d]]
    %v6377 = vstv %s6376
    %v6378 = vmul.f32 %v6377, %v5435
    %v6379 = vmul.f32 %v6377, %v5436
    %v6382 = vrot.slane %v6378, 2
    %v6383 = vrot.slane %v6379, 2
    %v6384 = vsel %vm825, %v6382, %v6383
    %6385 = vrot.lane.b32.xlu0 %v6384, 126
    %v6386 = vpop.permute.xlu0 %6385
    %6387 = vrot.lane.b32.xlu0 %v6383, 126
    %v6388 = vpop.permute.xlu0 %6387
    %v6391 = vadd.f32 %v6255, %v6386
    %v6392 = vadd.f32 %v6256, %v6388
    %s6393 = sld [smem:[#allocation8 + $0xa1]]
    %v6394 = vstv %s6393
    %v6395 = vmul.f32 %v6394, %v5435
    %v6396 = vmul.f32 %v6394, %v5436
    %v6399 = vrot.slane %v6395, 2
    %v6400 = vrot.slane %v6396, 2
    %v6401 = vsel %vm825, %v6399, %v6400
    %6402 = vrot.lane.b32.xlu0 %v6401, 126
    %v6403 = vpop.permute.xlu0 %6402
    %6404 = vrot.lane.b32.xlu0 %v6400, 126
    %v6405 = vpop.permute.xlu0 %6404
    %v6408 = vadd.f32 %v6272, %v6403
    %v6409 = vadd.f32 %v6273, %v6405
    %s6410 = sld [smem:[#allocation8 + $0xc5]]
    %v6411 = vstv %s6410
    %v6412 = vmul.f32 %v6411, %v5435
    %v6413 = vmul.f32 %v6411, %v5436
    %v6416 = vrot.slane %v6412, 2
    %v6417 = vrot.slane %v6413, 2
    %v6418 = vsel %vm825, %v6416, %v6417
    %6419 = vrot.lane.b32.xlu0 %v6418, 126
    %v6420 = vpop.permute.xlu0 %6419
    %6421 = vrot.lane.b32.xlu0 %v6417, 126
    %v6422 = vpop.permute.xlu0 %6421
    %v6425 = vadd.f32 %v6289, %v6420
    %v6426 = vadd.f32 %v6290, %v6422
    %s6427 = sld [smem:[#allocation8 + $0xe9]]
    %v6428 = vstv %s6427
    %v6429 = vmul.f32 %v6428, %v5435
    %v6430 = vmul.f32 %v6428, %v5436
    %v6433 = vrot.slane %v6429, 2
    %v6434 = vrot.slane %v6430, 2
    %v6435 = vsel %vm825, %v6433, %v6434
    %6436 = vrot.lane.b32.xlu0 %v6435, 126
    %v6437 = vpop.permute.xlu0 %6436
    %6438 = vrot.lane.b32.xlu0 %v6434, 126
    %v6439 = vpop.permute.xlu0 %6438
    %v6442 = vadd.f32 %v6306, %v6437
    %v6443 = vadd.f32 %v6307, %v6439
    %s6444 = sld [smem:[#allocation8 + $0x10d]]
    %v6445 = vstv %s6444
    %v6446 = vmul.f32 %v6445, %v5435
    %v6447 = vmul.f32 %v6445, %v5436
    %v6450 = vrot.slane %v6446, 2
    %v6451 = vrot.slane %v6447, 2
    %v6452 = vsel %vm825, %v6450, %v6451
    %6453 = vrot.lane.b32.xlu0 %v6452, 126
    %v6454 = vpop.permute.xlu0 %6453
    %6455 = vrot.lane.b32.xlu0 %v6451, 126
    %v6456 = vpop.permute.xlu0 %6455
    %v6459 = vadd.f32 %v6323, %v6454
    %v6460 = vadd.f32 %v6324, %v6456
    %v6461 = vmul.f32 %v4345, %v4375
    %v6462 = vmul.f32 %v4346, %v4376
    %s6463 = sld [smem:[#allocation5 + $0x2]]
    %v6464 = vstv %s6463
    %v6465 = vmul.f32 %v6461, %v6464
    %v6466 = vmul.f32 %v6462, %v6464
    %s6467 = sld [smem:[#allocation6 + $0x2]]
    %v6468 = vstv %s6467
    %v6469 = vadd.f32 %v6465, %v6468
    %v6470 = vadd.f32 %v6466, %v6468
    %s6471 = sld [smem:[#allocation8 + $0x12]]
    %v6472 = vstv %s6471
    %v6473 = vmul.f32 %v6472, %v6469
    %v6474 = vmul.f32 %v6472, %v6470
    %v6475 = vadd.f32 %v6340, %v6473
    %v6476 = vadd.f32 %v6341, %v6474
    %s6477 = sld [smem:[#allocation8 + $0x36]]
    %v6478 = vstv %s6477
    %v6479 = vmul.f32 %v6478, %v6469
    %v6480 = vmul.f32 %v6478, %v6470
    %v6481 = vadd.f32 %v6357, %v6479
    %v6482 = vadd.f32 %v6358, %v6480
    %s6483 = sld [smem:[#allocation8 + $0x5a]]
    %v6484 = vstv %s6483
    %v6485 = vmul.f32 %v6484, %v6469
    %v6486 = vmul.f32 %v6484, %v6470
    %v6487 = vadd.f32 %v6374, %v6485
    %v6488 = vadd.f32 %v6375, %v6486
    %s6489 = sld [smem:[#allocation8 + $0x7e]]
    %v6490 = vstv %s6489
    %v6491 = vmul.f32 %v6490, %v6469
    %v6492 = vmul.f32 %v6490, %v6470
    %v6493 = vadd.f32 %v6391, %v6491
    %v6494 = vadd.f32 %v6392, %v6492
    %s6495 = sld [smem:[#allocation8 + $0xa2]]
    %v6496 = vstv %s6495
    %v6497 = vmul.f32 %v6496, %v6469
    %v6498 = vmul.f32 %v6496, %v6470
    %v6499 = vadd.f32 %v6408, %v6497
    %v6500 = vadd.f32 %v6409, %v6498
    %s6501 = sld [smem:[#allocation8 + $0xc6]]
    %v6502 = vstv %s6501
    %v6503 = vmul.f32 %v6502, %v6469
    %v6504 = vmul.f32 %v6502, %v6470
    %v6505 = vadd.f32 %v6425, %v6503
    %v6506 = vadd.f32 %v6426, %v6504
    %s6507 = sld [smem:[#allocation8 + $0xea]]
    %v6508 = vstv %s6507
    %v6509 = vmul.f32 %v6508, %v6469
    %v6510 = vmul.f32 %v6508, %v6470
    %v6511 = vadd.f32 %v6442, %v6509
    %v6512 = vadd.f32 %v6443, %v6510
    %s6513 = sld [smem:[#allocation8 + $0x10e]]
    %v6514 = vstv %s6513
    %v6515 = vmul.f32 %v6514, %v6469
    %v6516 = vmul.f32 %v6514, %v6470
    %v6517 = vadd.f32 %v6459, %v6515
    %v6518 = vadd.f32 %v6460, %v6516
    %s6519 = sld [smem:[#allocation8 + $0x13]]
    %v6520 = vstv %s6519
    %v6521 = vmul.f32 %v6520, %v6469
    %v6522 = vmul.f32 %v6520, %v6470
    %6525 = vrot.lane.b32.xlu0 %v6521, 127
    %v6526 = vpop.permute.xlu0 %6525
    %6527 = vrot.lane.b32.xlu0 %v6522, 127
    %v6528 = vpop.permute.xlu0 %6527
    %v6531 = vadd.f32 %v6475, %v6526
    %v6532 = vadd.f32 %v6476, %v6528
    %s6533 = sld [smem:[#allocation8 + $0x37]]
    %v6534 = vstv %s6533
    %v6535 = vmul.f32 %v6534, %v6469
    %v6536 = vmul.f32 %v6534, %v6470
    %6539 = vrot.lane.b32.xlu0 %v6535, 127
    %v6540 = vpop.permute.xlu0 %6539
    %6541 = vrot.lane.b32.xlu0 %v6536, 127
    %v6542 = vpop.permute.xlu0 %6541
    %v6545 = vadd.f32 %v6481, %v6540
    %v6546 = vadd.f32 %v6482, %v6542
    %s6547 = sld [smem:[#allocation8 + $0x5b]]
    %v6548 = vstv %s6547
    %v6549 = vmul.f32 %v6548, %v6469
    %v6550 = vmul.f32 %v6548, %v6470
    %6553 = vrot.lane.b32.xlu0 %v6549, 127
    %v6554 = vpop.permute.xlu0 %6553
    %6555 = vrot.lane.b32.xlu0 %v6550, 127
    %v6556 = vpop.permute.xlu0 %6555
    %v6559 = vadd.f32 %v6487, %v6554
    %v6560 = vadd.f32 %v6488, %v6556
    %s6561 = sld [smem:[#allocation8 + $0x7f]]
    %v6562 = vstv %s6561
    %v6563 = vmul.f32 %v6562, %v6469
    %v6564 = vmul.f32 %v6562, %v6470
    %6567 = vrot.lane.b32.xlu0 %v6563, 127
    %v6568 = vpop.permute.xlu0 %6567
    %6569 = vrot.lane.b32.xlu0 %v6564, 127
    %v6570 = vpop.permute.xlu0 %6569
    %v6573 = vadd.f32 %v6493, %v6568
    %v6574 = vadd.f32 %v6494, %v6570
    %s6575 = sld [smem:[#allocation8 + $0xa3]]
    %v6576 = vstv %s6575
    %v6577 = vmul.f32 %v6576, %v6469
    %v6578 = vmul.f32 %v6576, %v6470
    %6581 = vrot.lane.b32.xlu0 %v6577, 127
    %v6582 = vpop.permute.xlu0 %6581
    %6583 = vrot.lane.b32.xlu0 %v6578, 127
    %v6584 = vpop.permute.xlu0 %6583
    %v6587 = vadd.f32 %v6499, %v6582
    %v6588 = vadd.f32 %v6500, %v6584
    %s6589 = sld [smem:[#allocation8 + $0xc7]]
    %v6590 = vstv %s6589
    %v6591 = vmul.f32 %v6590, %v6469
    %v6592 = vmul.f32 %v6590, %v6470
    %6595 = vrot.lane.b32.xlu0 %v6591, 127
    %v6596 = vpop.permute.xlu0 %6595
    %6597 = vrot.lane.b32.xlu0 %v6592, 127
    %v6598 = vpop.permute.xlu0 %6597
    %v6601 = vadd.f32 %v6505, %v6596
    %v6602 = vadd.f32 %v6506, %v6598
    %s6603 = sld [smem:[#allocation8 + $0xeb]]
    %v6604 = vstv %s6603
    %v6605 = vmul.f32 %v6604, %v6469
    %v6606 = vmul.f32 %v6604, %v6470
    %6609 = vrot.lane.b32.xlu0 %v6605, 127
    %v6610 = vpop.permute.xlu0 %6609
    %6611 = vrot.lane.b32.xlu0 %v6606, 127
    %v6612 = vpop.permute.xlu0 %6611
    %v6615 = vadd.f32 %v6511, %v6610
    %v6616 = vadd.f32 %v6512, %v6612
    %s6617 = sld [smem:[#allocation8 + $0x10f]]
    %v6618 = vstv %s6617
    %v6619 = vmul.f32 %v6618, %v6469
    %v6620 = vmul.f32 %v6618, %v6470
    %6623 = vrot.lane.b32.xlu0 %v6619, 127
    %v6624 = vpop.permute.xlu0 %6623
    %6625 = vrot.lane.b32.xlu0 %v6620, 127
    %v6626 = vpop.permute.xlu0 %6625
    %v6629 = vadd.f32 %v6517, %v6624
    %v6630 = vadd.f32 %v6518, %v6626
    %s6631 = sld [smem:[#allocation8 + $0x14]]
    %v6632 = vstv %s6631
    %v6633 = vmul.f32 %v6632, %v6469
    %v6634 = vmul.f32 %v6632, %v6470
    %6637 = vrot.lane.b32.xlu0 %v6633, 126
    %v6638 = vpop.permute.xlu0 %6637
    %6639 = vrot.lane.b32.xlu0 %v6634, 126
    %v6640 = vpop.permute.xlu0 %6639
    %v6643 = vadd.f32 %v6531, %v6638
    %v6644 = vadd.f32 %v6532, %v6640
    %s6645 = sld [smem:[#allocation8 + $0x38]]
    %v6646 = vstv %s6645
    %v6647 = vmul.f32 %v6646, %v6469
    %v6648 = vmul.f32 %v6646, %v6470
    %6651 = vrot.lane.b32.xlu0 %v6647, 126
    %v6652 = vpop.permute.xlu0 %6651
    %6653 = vrot.lane.b32.xlu0 %v6648, 126
    %v6654 = vpop.permute.xlu0 %6653
    %v6657 = vadd.f32 %v6545, %v6652
    %v6658 = vadd.f32 %v6546, %v6654
    %s6659 = sld [smem:[#allocation8 + $0x5c]]
    %v6660 = vstv %s6659
    %v6661 = vmul.f32 %v6660, %v6469
    %v6662 = vmul.f32 %v6660, %v6470
    %6665 = vrot.lane.b32.xlu0 %v6661, 126
    %v6666 = vpop.permute.xlu0 %6665
    %6667 = vrot.lane.b32.xlu0 %v6662, 126
    %v6668 = vpop.permute.xlu0 %6667
    %v6671 = vadd.f32 %v6559, %v6666
    %v6672 = vadd.f32 %v6560, %v6668
    %s6673 = sld [smem:[#allocation8 + $0x80]]
    %v6674 = vstv %s6673
    %v6675 = vmul.f32 %v6674, %v6469
    %v6676 = vmul.f32 %v6674, %v6470
    %6679 = vrot.lane.b32.xlu0 %v6675, 126
    %v6680 = vpop.permute.xlu0 %6679
    %6681 = vrot.lane.b32.xlu0 %v6676, 126
    %v6682 = vpop.permute.xlu0 %6681
    %v6685 = vadd.f32 %v6573, %v6680
    %v6686 = vadd.f32 %v6574, %v6682
    %s6687 = sld [smem:[#allocation8 + $0xa4]]
    %v6688 = vstv %s6687
    %v6689 = vmul.f32 %v6688, %v6469
    %v6690 = vmul.f32 %v6688, %v6470
    %6693 = vrot.lane.b32.xlu0 %v6689, 126
    %v6694 = vpop.permute.xlu0 %6693
    %6695 = vrot.lane.b32.xlu0 %v6690, 126
    %v6696 = vpop.permute.xlu0 %6695
    %v6699 = vadd.f32 %v6587, %v6694
    %v6700 = vadd.f32 %v6588, %v6696
    %s6701 = sld [smem:[#allocation8 + $0xc8]]
    %v6702 = vstv %s6701
    %v6703 = vmul.f32 %v6702, %v6469
    %v6704 = vmul.f32 %v6702, %v6470
    %6707 = vrot.lane.b32.xlu0 %v6703, 126
    %v6708 = vpop.permute.xlu0 %6707
    %6709 = vrot.lane.b32.xlu0 %v6704, 126
    %v6710 = vpop.permute.xlu0 %6709
    %v6713 = vadd.f32 %v6601, %v6708
    %v6714 = vadd.f32 %v6602, %v6710
    %s6715 = sld [smem:[#allocation8 + $0xec]]
    %v6716 = vstv %s6715
    %v6717 = vmul.f32 %v6716, %v6469
    %v6718 = vmul.f32 %v6716, %v6470
    %6721 = vrot.lane.b32.xlu0 %v6717, 126
    %v6722 = vpop.permute.xlu0 %6721
    %6723 = vrot.lane.b32.xlu0 %v6718, 126
    %v6724 = vpop.permute.xlu0 %6723
    %v6727 = vadd.f32 %v6615, %v6722
    %v6728 = vadd.f32 %v6616, %v6724
    %s6729 = sld [smem:[#allocation8 + $0x110]]
    %v6730 = vstv %s6729
    %v6731 = vmul.f32 %v6730, %v6469
    %v6732 = vmul.f32 %v6730, %v6470
    %6735 = vrot.lane.b32.xlu0 %v6731, 126
    %v6736 = vpop.permute.xlu0 %6735
    %6737 = vrot.lane.b32.xlu0 %v6732, 126
    %v6738 = vpop.permute.xlu0 %6737
    %v6741 = vadd.f32 %v6629, %v6736
    %v6742 = vadd.f32 %v6630, %v6738
    %s6743 = sld [smem:[#allocation8 + $0x15]]
    %v6744 = vstv %s6743
    %v6745 = vmul.f32 %v6744, %v6469
    %v6746 = vmul.f32 %v6744, %v6470
    %v6749 = vrot.slane %v6745, 1
    %v6750 = vrot.slane %v6746, 1
    %v6751 = vsel %vm448, %v6749, %v6750
    %v6754 = vadd.f32 %v6643, %v6751
    %v6755 = vadd.f32 %v6644, %v6750
    %s6756 = sld [smem:[#allocation8 + $0x39]]
    %v6757 = vstv %s6756
    %v6758 = vmul.f32 %v6757, %v6469
    %v6759 = vmul.f32 %v6757, %v6470
    %v6762 = vrot.slane %v6758, 1
    %v6763 = vrot.slane %v6759, 1
    %v6764 = vsel %vm448, %v6762, %v6763
    %v6767 = vadd.f32 %v6657, %v6764
    %v6768 = vadd.f32 %v6658, %v6763
    %s6769 = sld [smem:[#allocation8 + $0x5d]]
    %v6770 = vstv %s6769
    %v6771 = vmul.f32 %v6770, %v6469
    %v6772 = vmul.f32 %v6770, %v6470
    %v6775 = vrot.slane %v6771, 1
    %v6776 = vrot.slane %v6772, 1
    %v6777 = vsel %vm448, %v6775, %v6776
    %v6780 = vadd.f32 %v6671, %v6777
    %v6781 = vadd.f32 %v6672, %v6776
    %s6782 = sld [smem:[#allocation8 + $0x81]]
    %v6783 = vstv %s6782
    %v6784 = vmul.f32 %v6783, %v6469
    %v6785 = vmul.f32 %v6783, %v6470
    %v6788 = vrot.slane %v6784, 1
    %v6789 = vrot.slane %v6785, 1
    %v6790 = vsel %vm448, %v6788, %v6789
    %v6793 = vadd.f32 %v6685, %v6790
    %v6794 = vadd.f32 %v6686, %v6789
    %s6795 = sld [smem:[#allocation8 + $0xa5]]
    %v6796 = vstv %s6795
    %v6797 = vmul.f32 %v6796, %v6469
    %v6798 = vmul.f32 %v6796, %v6470
    %v6801 = vrot.slane %v6797, 1
    %v6802 = vrot.slane %v6798, 1
    %v6803 = vsel %vm448, %v6801, %v6802
    %v6806 = vadd.f32 %v6699, %v6803
    %v6807 = vadd.f32 %v6700, %v6802
    %s6808 = sld [smem:[#allocation8 + $0xc9]]
    %v6809 = vstv %s6808
    %v6810 = vmul.f32 %v6809, %v6469
    %v6811 = vmul.f32 %v6809, %v6470
    %v6814 = vrot.slane %v6810, 1
    %v6815 = vrot.slane %v6811, 1
    %v6816 = vsel %vm448, %v6814, %v6815
    %v6819 = vadd.f32 %v6713, %v6816
    %v6820 = vadd.f32 %v6714, %v6815
    %s6821 = sld [smem:[#allocation8 + $0xed]]
    %v6822 = vstv %s6821
    %v6823 = vmul.f32 %v6822, %v6469
    %v6824 = vmul.f32 %v6822, %v6470
    %v6827 = vrot.slane %v6823, 1
    %v6828 = vrot.slane %v6824, 1
    %v6829 = vsel %vm448, %v6827, %v6828
    %v6832 = vadd.f32 %v6727, %v6829
    %v6833 = vadd.f32 %v6728, %v6828
    %s6834 = sld [smem:[#allocation8 + $0x111]]
    %v6835 = vstv %s6834
    %v6836 = vmul.f32 %v6835, %v6469
    %v6837 = vmul.f32 %v6835, %v6470
    %v6840 = vrot.slane %v6836, 1
    %v6841 = vrot.slane %v6837, 1
    %v6842 = vsel %vm448, %v6840, %v6841
    %v6845 = vadd.f32 %v6741, %v6842
    %v6846 = vadd.f32 %v6742, %v6841
    %s6847 = sld [smem:[#allocation8 + $0x16]]
    %v6848 = vstv %s6847
    %v6849 = vmul.f32 %v6848, %v6469
    %v6850 = vmul.f32 %v6848, %v6470
    %v6853 = vrot.slane %v6849, 1
    %v6854 = vrot.slane %v6850, 1
    %v6855 = vsel %vm448, %v6853, %v6854
    %6856 = vrot.lane.b32.xlu0 %v6855, 127
    %v6857 = vpop.permute.xlu0 %6856
    %6858 = vrot.lane.b32.xlu0 %v6854, 127
    %v6859 = vpop.permute.xlu0 %6858
    %v6862 = vadd.f32 %v6754, %v6857
    %v6863 = vadd.f32 %v6755, %v6859
    %s6864 = sld [smem:[#allocation8 + $0x3a]]
    %v6865 = vstv %s6864
    %v6866 = vmul.f32 %v6865, %v6469
    %v6867 = vmul.f32 %v6865, %v6470
    %v6870 = vrot.slane %v6866, 1
    %v6871 = vrot.slane %v6867, 1
    %v6872 = vsel %vm448, %v6870, %v6871
    %6873 = vrot.lane.b32.xlu0 %v6872, 127
    %v6874 = vpop.permute.xlu0 %6873
    %6875 = vrot.lane.b32.xlu0 %v6871, 127
    %v6876 = vpop.permute.xlu0 %6875
    %v6879 = vadd.f32 %v6767, %v6874
    %v6880 = vadd.f32 %v6768, %v6876
    %s6881 = sld [smem:[#allocation8 + $0x5e]]
    %v6882 = vstv %s6881
    %v6883 = vmul.f32 %v6882, %v6469
    %v6884 = vmul.f32 %v6882, %v6470
    %v6887 = vrot.slane %v6883, 1
    %v6888 = vrot.slane %v6884, 1
    %v6889 = vsel %vm448, %v6887, %v6888
    %6890 = vrot.lane.b32.xlu0 %v6889, 127
    %v6891 = vpop.permute.xlu0 %6890
    %6892 = vrot.lane.b32.xlu0 %v6888, 127
    %v6893 = vpop.permute.xlu0 %6892
    %v6896 = vadd.f32 %v6780, %v6891
    %v6897 = vadd.f32 %v6781, %v6893
    %s6898 = sld [smem:[#allocation8 + $0x82]]
    %v6899 = vstv %s6898
    %v6900 = vmul.f32 %v6899, %v6469
    %v6901 = vmul.f32 %v6899, %v6470
    %v6904 = vrot.slane %v6900, 1
    %v6905 = vrot.slane %v6901, 1
    %v6906 = vsel %vm448, %v6904, %v6905
    %6907 = vrot.lane.b32.xlu0 %v6906, 127
    %v6908 = vpop.permute.xlu0 %6907
    %6909 = vrot.lane.b32.xlu0 %v6905, 127
    %v6910 = vpop.permute.xlu0 %6909
    %v6913 = vadd.f32 %v6793, %v6908
    %v6914 = vadd.f32 %v6794, %v6910
    %s6915 = sld [smem:[#allocation8 + $0xa6]]
    %v6916 = vstv %s6915
    %v6917 = vmul.f32 %v6916, %v6469
    %v6918 = vmul.f32 %v6916, %v6470
    %v6921 = vrot.slane %v6917, 1
    %v6922 = vrot.slane %v6918, 1
    %v6923 = vsel %vm448, %v6921, %v6922
    %6924 = vrot.lane.b32.xlu0 %v6923, 127
    %v6925 = vpop.permute.xlu0 %6924
    %6926 = vrot.lane.b32.xlu0 %v6922, 127
    %v6927 = vpop.permute.xlu0 %6926
    %v6930 = vadd.f32 %v6806, %v6925
    %v6931 = vadd.f32 %v6807, %v6927
    %s6932 = sld [smem:[#allocation8 + $0xca]]
    %v6933 = vstv %s6932
    %v6934 = vmul.f32 %v6933, %v6469
    %v6935 = vmul.f32 %v6933, %v6470
    %v6938 = vrot.slane %v6934, 1
    %v6939 = vrot.slane %v6935, 1
    %v6940 = vsel %vm448, %v6938, %v6939
    %6941 = vrot.lane.b32.xlu0 %v6940, 127
    %v6942 = vpop.permute.xlu0 %6941
    %6943 = vrot.lane.b32.xlu0 %v6939, 127
    %v6944 = vpop.permute.xlu0 %6943
    %v6947 = vadd.f32 %v6819, %v6942
    %v6948 = vadd.f32 %v6820, %v6944
    %s6949 = sld [smem:[#allocation8 + $0xee]]
    %v6950 = vstv %s6949
    %v6951 = vmul.f32 %v6950, %v6469
    %v6952 = vmul.f32 %v6950, %v6470
    %v6955 = vrot.slane %v6951, 1
    %v6956 = vrot.slane %v6952, 1
    %v6957 = vsel %vm448, %v6955, %v6956
    %6958 = vrot.lane.b32.xlu0 %v6957, 127
    %v6959 = vpop.permute.xlu0 %6958
    %6960 = vrot.lane.b32.xlu0 %v6956, 127
    %v6961 = vpop.permute.xlu0 %6960
    %v6964 = vadd.f32 %v6832, %v6959
    %v6965 = vadd.f32 %v6833, %v6961
    %s6966 = sld [smem:[#allocation8 + $0x112]]
    %v6967 = vstv %s6966
    %v6968 = vmul.f32 %v6967, %v6469
    %v6969 = vmul.f32 %v6967, %v6470
    %v6972 = vrot.slane %v6968, 1
    %v6973 = vrot.slane %v6969, 1
    %v6974 = vsel %vm448, %v6972, %v6973
    %6975 = vrot.lane.b32.xlu0 %v6974, 127
    %v6976 = vpop.permute.xlu0 %6975
    %6977 = vrot.lane.b32.xlu0 %v6973, 127
    %v6978 = vpop.permute.xlu0 %6977
    %v6981 = vadd.f32 %v6845, %v6976
    %v6982 = vadd.f32 %v6846, %v6978
    %s6983 = sld [smem:[#allocation8 + $0x17]]
    %v6984 = vstv %s6983
    %v6985 = vmul.f32 %v6984, %v6469
    %v6986 = vmul.f32 %v6984, %v6470
    %v6989 = vrot.slane %v6985, 1
    %v6990 = vrot.slane %v6986, 1
    %v6991 = vsel %vm448, %v6989, %v6990
    %6992 = vrot.lane.b32.xlu0 %v6991, 126
    %v6993 = vpop.permute.xlu0 %6992
    %6994 = vrot.lane.b32.xlu0 %v6990, 126
    %v6995 = vpop.permute.xlu0 %6994
    %v6998 = vadd.f32 %v6862, %v6993
    %v6999 = vadd.f32 %v6863, %v6995
    %s7000 = sld [smem:[#allocation8 + $0x3b]]
    %v7001 = vstv %s7000
    %v7002 = vmul.f32 %v7001, %v6469
    %v7003 = vmul.f32 %v7001, %v6470
    %v7006 = vrot.slane %v7002, 1
    %v7007 = vrot.slane %v7003, 1
    %v7008 = vsel %vm448, %v7006, %v7007
    %7009 = vrot.lane.b32.xlu0 %v7008, 126
    %v7010 = vpop.permute.xlu0 %7009
    %7011 = vrot.lane.b32.xlu0 %v7007, 126
    %v7012 = vpop.permute.xlu0 %7011
    %v7015 = vadd.f32 %v6879, %v7010
    %v7016 = vadd.f32 %v6880, %v7012
    %s7017 = sld [smem:[#allocation8 + $0x5f]]
    %v7018 = vstv %s7017
    %v7019 = vmul.f32 %v7018, %v6469
    %v7020 = vmul.f32 %v7018, %v6470
    %v7023 = vrot.slane %v7019, 1
    %v7024 = vrot.slane %v7020, 1
    %v7025 = vsel %vm448, %v7023, %v7024
    %7026 = vrot.lane.b32.xlu0 %v7025, 126
    %v7027 = vpop.permute.xlu0 %7026
    %7028 = vrot.lane.b32.xlu0 %v7024, 126
    %v7029 = vpop.permute.xlu0 %7028
    %v7032 = vadd.f32 %v6896, %v7027
    %v7033 = vadd.f32 %v6897, %v7029
    %s7034 = sld [smem:[#allocation8 + $0x83]]
    %v7035 = vstv %s7034
    %v7036 = vmul.f32 %v7035, %v6469
    %v7037 = vmul.f32 %v7035, %v6470
    %v7040 = vrot.slane %v7036, 1
    %v7041 = vrot.slane %v7037, 1
    %v7042 = vsel %vm448, %v7040, %v7041
    %7043 = vrot.lane.b32.xlu0 %v7042, 126
    %v7044 = vpop.permute.xlu0 %7043
    %7045 = vrot.lane.b32.xlu0 %v7041, 126
    %v7046 = vpop.permute.xlu0 %7045
    %v7049 = vadd.f32 %v6913, %v7044
    %v7050 = vadd.f32 %v6914, %v7046
    %s7051 = sld [smem:[#allocation8 + $0xa7]]
    %v7052 = vstv %s7051
    %v7053 = vmul.f32 %v7052, %v6469
    %v7054 = vmul.f32 %v7052, %v6470
    %v7057 = vrot.slane %v7053, 1
    %v7058 = vrot.slane %v7054, 1
    %v7059 = vsel %vm448, %v7057, %v7058
    %7060 = vrot.lane.b32.xlu0 %v7059, 126
    %v7061 = vpop.permute.xlu0 %7060
    %7062 = vrot.lane.b32.xlu0 %v7058, 126
    %v7063 = vpop.permute.xlu0 %7062
    %v7066 = vadd.f32 %v6930, %v7061
    %v7067 = vadd.f32 %v6931, %v7063
    %s7068 = sld [smem:[#allocation8 + $0xcb]]
    %v7069 = vstv %s7068
    %v7070 = vmul.f32 %v7069, %v6469
    %v7071 = vmul.f32 %v7069, %v6470
    %v7074 = vrot.slane %v7070, 1
    %v7075 = vrot.slane %v7071, 1
    %v7076 = vsel %vm448, %v7074, %v7075
    %7077 = vrot.lane.b32.xlu0 %v7076, 126
    %v7078 = vpop.permute.xlu0 %7077
    %7079 = vrot.lane.b32.xlu0 %v7075, 126
    %v7080 = vpop.permute.xlu0 %7079
    %v7083 = vadd.f32 %v6947, %v7078
    %v7084 = vadd.f32 %v6948, %v7080
    %s7085 = sld [smem:[#allocation8 + $0xef]]
    %v7086 = vstv %s7085
    %v7087 = vmul.f32 %v7086, %v6469
    %v7088 = vmul.f32 %v7086, %v6470
    %v7091 = vrot.slane %v7087, 1
    %v7092 = vrot.slane %v7088, 1
    %v7093 = vsel %vm448, %v7091, %v7092
    %7094 = vrot.lane.b32.xlu0 %v7093, 126
    %v7095 = vpop.permute.xlu0 %7094
    %7096 = vrot.lane.b32.xlu0 %v7092, 126
    %v7097 = vpop.permute.xlu0 %7096
    %v7100 = vadd.f32 %v6964, %v7095
    %v7101 = vadd.f32 %v6965, %v7097
    %s7102 = sld [smem:[#allocation8 + $0x113]]
    %v7103 = vstv %s7102
    %v7104 = vmul.f32 %v7103, %v6469
    %v7105 = vmul.f32 %v7103, %v6470
    %v7108 = vrot.slane %v7104, 1
    %v7109 = vrot.slane %v7105, 1
    %v7110 = vsel %vm448, %v7108, %v7109
    %7111 = vrot.lane.b32.xlu0 %v7110, 126
    %v7112 = vpop.permute.xlu0 %7111
    %7113 = vrot.lane.b32.xlu0 %v7109, 126
    %v7114 = vpop.permute.xlu0 %7113
    %v7117 = vadd.f32 %v6981, %v7112
    %v7118 = vadd.f32 %v6982, %v7114
    %s7119 = sld [smem:[#allocation8 + $0x18]]
    %v7120 = vstv %s7119
    %v7121 = vmul.f32 %v7120, %v6469
    %v7122 = vmul.f32 %v7120, %v6470
    %v7125 = vrot.slane %v7121, 2
    %v7126 = vrot.slane %v7122, 2
    %v7127 = vsel %vm825, %v7125, %v7126
    %v7130 = vadd.f32 %v6998, %v7127
    %v7131 = vadd.f32 %v6999, %v7126
    %s7132 = sld [smem:[#allocation8 + $0x3c]]
    %v7133 = vstv %s7132
    %v7134 = vmul.f32 %v7133, %v6469
    %v7135 = vmul.f32 %v7133, %v6470
    %v7138 = vrot.slane %v7134, 2
    %v7139 = vrot.slane %v7135, 2
    %v7140 = vsel %vm825, %v7138, %v7139
    %v7143 = vadd.f32 %v7015, %v7140
    %v7144 = vadd.f32 %v7016, %v7139
    %s7145 = sld [smem:[#allocation8 + $0x60]]
    %v7146 = vstv %s7145
    %v7147 = vmul.f32 %v7146, %v6469
    %v7148 = vmul.f32 %v7146, %v6470
    %v7151 = vrot.slane %v7147, 2
    %v7152 = vrot.slane %v7148, 2
    %v7153 = vsel %vm825, %v7151, %v7152
    %v7156 = vadd.f32 %v7032, %v7153
    %v7157 = vadd.f32 %v7033, %v7152
    %s7158 = sld [smem:[#allocation8 + $0x84]]
    %v7159 = vstv %s7158
    %v7160 = vmul.f32 %v7159, %v6469
    %v7161 = vmul.f32 %v7159, %v6470
    %v7164 = vrot.slane %v7160, 2
    %v7165 = vrot.slane %v7161, 2
    %v7166 = vsel %vm825, %v7164, %v7165
    %v7169 = vadd.f32 %v7049, %v7166
    %v7170 = vadd.f32 %v7050, %v7165
    %s7171 = sld [smem:[#allocation8 + $0xa8]]
    %v7172 = vstv %s7171
    %v7173 = vmul.f32 %v7172, %v6469
    %v7174 = vmul.f32 %v7172, %v6470
    %v7177 = vrot.slane %v7173, 2
    %v7178 = vrot.slane %v7174, 2
    %v7179 = vsel %vm825, %v7177, %v7178
    %v7182 = vadd.f32 %v7066, %v7179
    %v7183 = vadd.f32 %v7067, %v7178
    %s7184 = sld [smem:[#allocation8 + $0xcc]]
    %v7185 = vstv %s7184
    %v7186 = vmul.f32 %v7185, %v6469
    %v7187 = vmul.f32 %v7185, %v6470
    %v7190 = vrot.slane %v7186, 2
    %v7191 = vrot.slane %v7187, 2
    %v7192 = vsel %vm825, %v7190, %v7191
    %v7195 = vadd.f32 %v7083, %v7192
    %v7196 = vadd.f32 %v7084, %v7191
    %s7197 = sld [smem:[#allocation8 + $0xf0]]
    %v7198 = vstv %s7197
    %v7199 = vmul.f32 %v7198, %v6469
    %v7200 = vmul.f32 %v7198, %v6470
    %v7203 = vrot.slane %v7199, 2
    %v7204 = vrot.slane %v7200, 2
    %v7205 = vsel %vm825, %v7203, %v7204
    %v7208 = vadd.f32 %v7100, %v7205
    %v7209 = vadd.f32 %v7101, %v7204
    %s7210 = sld [smem:[#allocation8 + $0x114]]
    %v7211 = vstv %s7210
    %v7212 = vmul.f32 %v7211, %v6469
    %v7213 = vmul.f32 %v7211, %v6470
    %v7216 = vrot.slane %v7212, 2
    %v7217 = vrot.slane %v7213, 2
    %v7218 = vsel %vm825, %v7216, %v7217
    %v7221 = vadd.f32 %v7117, %v7218
    %v7222 = vadd.f32 %v7118, %v7217
    %s7223 = sld [smem:[#allocation8 + $0x19]]
    %v7224 = vstv %s7223
    %v7225 = vmul.f32 %v7224, %v6469
    %v7226 = vmul.f32 %v7224, %v6470
    %v7229 = vrot.slane %v7225, 2
    %v7230 = vrot.slane %v7226, 2
    %v7231 = vsel %vm825, %v7229, %v7230
    %7232 = vrot.lane.b32.xlu0 %v7231, 127
    %v7233 = vpop.permute.xlu0 %7232
    %7234 = vrot.lane.b32.xlu0 %v7230, 127
    %v7235 = vpop.permute.xlu0 %7234
    %v7238 = vadd.f32 %v7130, %v7233
    %v7239 = vadd.f32 %v7131, %v7235
    %s7240 = sld [smem:[#allocation8 + $0x3d]]
    %v7241 = vstv %s7240
    %v7242 = vmul.f32 %v7241, %v6469
    %v7243 = vmul.f32 %v7241, %v6470
    %v7246 = vrot.slane %v7242, 2
    %v7247 = vrot.slane %v7243, 2
    %v7248 = vsel %vm825, %v7246, %v7247
    %7249 = vrot.lane.b32.xlu0 %v7248, 127
    %v7250 = vpop.permute.xlu0 %7249
    %7251 = vrot.lane.b32.xlu0 %v7247, 127
    %v7252 = vpop.permute.xlu0 %7251
    %v7255 = vadd.f32 %v7143, %v7250
    %v7256 = vadd.f32 %v7144, %v7252
    %s7257 = sld [smem:[#allocation8 + $0x61]]
    %v7258 = vstv %s7257
    %v7259 = vmul.f32 %v7258, %v6469
    %v7260 = vmul.f32 %v7258, %v6470
    %v7263 = vrot.slane %v7259, 2
    %v7264 = vrot.slane %v7260, 2
    %v7265 = vsel %vm825, %v7263, %v7264
    %7266 = vrot.lane.b32.xlu0 %v7265, 127
    %v7267 = vpop.permute.xlu0 %7266
    %7268 = vrot.lane.b32.xlu0 %v7264, 127
    %v7269 = vpop.permute.xlu0 %7268
    %v7272 = vadd.f32 %v7156, %v7267
    %v7273 = vadd.f32 %v7157, %v7269
    %s7274 = sld [smem:[#allocation8 + $0x85]]
    %v7275 = vstv %s7274
    %v7276 = vmul.f32 %v7275, %v6469
    %v7277 = vmul.f32 %v7275, %v6470
    %v7280 = vrot.slane %v7276, 2
    %v7281 = vrot.slane %v7277, 2
    %v7282 = vsel %vm825, %v7280, %v7281
    %7283 = vrot.lane.b32.xlu0 %v7282, 127
    %v7284 = vpop.permute.xlu0 %7283
    %7285 = vrot.lane.b32.xlu0 %v7281, 127
    %v7286 = vpop.permute.xlu0 %7285
    %v7289 = vadd.f32 %v7169, %v7284
    %v7290 = vadd.f32 %v7170, %v7286
    %s7291 = sld [smem:[#allocation8 + $0xa9]]
    %v7292 = vstv %s7291
    %v7293 = vmul.f32 %v7292, %v6469
    %v7294 = vmul.f32 %v7292, %v6470
    %v7297 = vrot.slane %v7293, 2
    %v7298 = vrot.slane %v7294, 2
    %v7299 = vsel %vm825, %v7297, %v7298
    %7300 = vrot.lane.b32.xlu0 %v7299, 127
    %v7301 = vpop.permute.xlu0 %7300
    %7302 = vrot.lane.b32.xlu0 %v7298, 127
    %v7303 = vpop.permute.xlu0 %7302
    %v7306 = vadd.f32 %v7182, %v7301
    %v7307 = vadd.f32 %v7183, %v7303
    %s7308 = sld [smem:[#allocation8 + $0xcd]]
    %v7309 = vstv %s7308
    %v7310 = vmul.f32 %v7309, %v6469
    %v7311 = vmul.f32 %v7309, %v6470
    %v7314 = vrot.slane %v7310, 2
    %v7315 = vrot.slane %v7311, 2
    %v7316 = vsel %vm825, %v7314, %v7315
    %7317 = vrot.lane.b32.xlu0 %v7316, 127
    %v7318 = vpop.permute.xlu0 %7317
    %7319 = vrot.lane.b32.xlu0 %v7315, 127
    %v7320 = vpop.permute.xlu0 %7319
    %v7323 = vadd.f32 %v7195, %v7318
    %v7324 = vadd.f32 %v7196, %v7320
    %s7325 = sld [smem:[#allocation8 + $0xf1]]
    %v7326 = vstv %s7325
    %v7327 = vmul.f32 %v7326, %v6469
    %v7328 = vmul.f32 %v7326, %v6470
    %v7331 = vrot.slane %v7327, 2
    %v7332 = vrot.slane %v7328, 2
    %v7333 = vsel %vm825, %v7331, %v7332
    %7334 = vrot.lane.b32.xlu0 %v7333, 127
    %v7335 = vpop.permute.xlu0 %7334
    %7336 = vrot.lane.b32.xlu0 %v7332, 127
    %v7337 = vpop.permute.xlu0 %7336
    %v7340 = vadd.f32 %v7208, %v7335
    %v7341 = vadd.f32 %v7209, %v7337
    %s7342 = sld [smem:[#allocation8 + $0x115]]
    %v7343 = vstv %s7342
    %v7344 = vmul.f32 %v7343, %v6469
    %v7345 = vmul.f32 %v7343, %v6470
    %v7348 = vrot.slane %v7344, 2
    %v7349 = vrot.slane %v7345, 2
    %v7350 = vsel %vm825, %v7348, %v7349
    %7351 = vrot.lane.b32.xlu0 %v7350, 127
    %v7352 = vpop.permute.xlu0 %7351
    %7353 = vrot.lane.b32.xlu0 %v7349, 127
    %v7354 = vpop.permute.xlu0 %7353
    %v7357 = vadd.f32 %v7221, %v7352
    %v7358 = vadd.f32 %v7222, %v7354
    %s7359 = sld [smem:[#allocation8 + $0x1a]]
    %v7360 = vstv %s7359
    %v7361 = vmul.f32 %v7360, %v6469
    %v7362 = vmul.f32 %v7360, %v6470
    %v7365 = vrot.slane %v7361, 2
    %v7366 = vrot.slane %v7362, 2
    %v7367 = vsel %vm825, %v7365, %v7366
    %7368 = vrot.lane.b32.xlu0 %v7367, 126
    %v7369 = vpop.permute.xlu0 %7368
    %7370 = vrot.lane.b32.xlu0 %v7366, 126
    %v7371 = vpop.permute.xlu0 %7370
    %v7374 = vadd.f32 %v7238, %v7369
    %v7375 = vadd.f32 %v7239, %v7371
    %s7376 = sld [smem:[#allocation8 + $0x3e]]
    %v7377 = vstv %s7376
    %v7378 = vmul.f32 %v7377, %v6469
    %v7379 = vmul.f32 %v7377, %v6470
    %v7382 = vrot.slane %v7378, 2
    %v7383 = vrot.slane %v7379, 2
    %v7384 = vsel %vm825, %v7382, %v7383
    %7385 = vrot.lane.b32.xlu0 %v7384, 126
    %v7386 = vpop.permute.xlu0 %7385
    %7387 = vrot.lane.b32.xlu0 %v7383, 126
    %v7388 = vpop.permute.xlu0 %7387
    %v7391 = vadd.f32 %v7255, %v7386
    %v7392 = vadd.f32 %v7256, %v7388
    %s7393 = sld [smem:[#allocation8 + $0x62]]
    %v7394 = vstv %s7393
    %v7395 = vmul.f32 %v7394, %v6469
    %v7396 = vmul.f32 %v7394, %v6470
    %v7399 = vrot.slane %v7395, 2
    %v7400 = vrot.slane %v7396, 2
    %v7401 = vsel %vm825, %v7399, %v7400
    %7402 = vrot.lane.b32.xlu0 %v7401, 126
    %v7403 = vpop.permute.xlu0 %7402
    %7404 = vrot.lane.b32.xlu0 %v7400, 126
    %v7405 = vpop.permute.xlu0 %7404
    %v7408 = vadd.f32 %v7272, %v7403
    %v7409 = vadd.f32 %v7273, %v7405
    %s7410 = sld [smem:[#allocation8 + $0x86]]
    %v7411 = vstv %s7410
    %v7412 = vmul.f32 %v7411, %v6469
    %v7413 = vmul.f32 %v7411, %v6470
    %v7416 = vrot.slane %v7412, 2
    %v7417 = vrot.slane %v7413, 2
    %v7418 = vsel %vm825, %v7416, %v7417
    %7419 = vrot.lane.b32.xlu0 %v7418, 126
    %v7420 = vpop.permute.xlu0 %7419
    %7421 = vrot.lane.b32.xlu0 %v7417, 126
    %v7422 = vpop.permute.xlu0 %7421
    %v7425 = vadd.f32 %v7289, %v7420
    %v7426 = vadd.f32 %v7290, %v7422
    %s7427 = sld [smem:[#allocation8 + $0xaa]]
    %v7428 = vstv %s7427
    %v7429 = vmul.f32 %v7428, %v6469
    %v7430 = vmul.f32 %v7428, %v6470
    %v7433 = vrot.slane %v7429, 2
    %v7434 = vrot.slane %v7430, 2
    %v7435 = vsel %vm825, %v7433, %v7434
    %7436 = vrot.lane.b32.xlu0 %v7435, 126
    %v7437 = vpop.permute.xlu0 %7436
    %7438 = vrot.lane.b32.xlu0 %v7434, 126
    %v7439 = vpop.permute.xlu0 %7438
    %v7442 = vadd.f32 %v7306, %v7437
    %v7443 = vadd.f32 %v7307, %v7439
    %s7444 = sld [smem:[#allocation8 + $0xce]]
    %v7445 = vstv %s7444
    %v7446 = vmul.f32 %v7445, %v6469
    %v7447 = vmul.f32 %v7445, %v6470
    %v7450 = vrot.slane %v7446, 2
    %v7451 = vrot.slane %v7447, 2
    %v7452 = vsel %vm825, %v7450, %v7451
    %7453 = vrot.lane.b32.xlu0 %v7452, 126
    %v7454 = vpop.permute.xlu0 %7453
    %7455 = vrot.lane.b32.xlu0 %v7451, 126
    %v7456 = vpop.permute.xlu0 %7455
    %v7459 = vadd.f32 %v7323, %v7454
    %v7460 = vadd.f32 %v7324, %v7456
    %s7461 = sld [smem:[#allocation8 + $0xf2]]
    %v7462 = vstv %s7461
    %v7463 = vmul.f32 %v7462, %v6469
    %v7464 = vmul.f32 %v7462, %v6470
    %v7467 = vrot.slane %v7463, 2
    %v7468 = vrot.slane %v7464, 2
    %v7469 = vsel %vm825, %v7467, %v7468
    %7470 = vrot.lane.b32.xlu0 %v7469, 126
    %v7471 = vpop.permute.xlu0 %7470
    %7472 = vrot.lane.b32.xlu0 %v7468, 126
    %v7473 = vpop.permute.xlu0 %7472
    %v7476 = vadd.f32 %v7340, %v7471
    %v7477 = vadd.f32 %v7341, %v7473
    %s7478 = sld [smem:[#allocation8 + $0x116]]
    %v7479 = vstv %s7478
    %v7480 = vmul.f32 %v7479, %v6469
    %v7481 = vmul.f32 %v7479, %v6470
    %v7484 = vrot.slane %v7480, 2
    %v7485 = vrot.slane %v7481, 2
    %v7486 = vsel %vm825, %v7484, %v7485
    %7487 = vrot.lane.b32.xlu0 %v7486, 126
    %v7488 = vpop.permute.xlu0 %7487
    %7489 = vrot.lane.b32.xlu0 %v7485, 126
    %v7490 = vpop.permute.xlu0 %7489
    %v7493 = vadd.f32 %v7357, %v7488
    %v7494 = vadd.f32 %v7358, %v7490
    %v7495 = vmul.f32 %v4347, %v4375
    %v7496 = vmul.f32 %v4348, %v4376
    %s7497 = sld [smem:[#allocation5 + $0x3]]
    %v7498 = vstv %s7497
    %v7499 = vmul.f32 %v7495, %v7498
    %v7500 = vmul.f32 %v7496, %v7498
    %s7501 = sld [smem:[#allocation6 + $0x3]]
    %v7502 = vstv %s7501
    %v7503 = vadd.f32 %v7499, %v7502
    %v7504 = vadd.f32 %v7500, %v7502
    %s7505 = sld [smem:[#allocation8 + $0x1b]]
    %v7506 = vstv %s7505
    %v7507 = vmul.f32 %v7506, %v7503
    %v7508 = vmul.f32 %v7506, %v7504
    %v7509 = vadd.f32 %v7374, %v7507
    %v7510 = vadd.f32 %v7375, %v7508
    %s7511 = sld [smem:[#allocation8 + $0x3f]]
    %v7512 = vstv %s7511
    %v7513 = vmul.f32 %v7512, %v7503
    %v7514 = vmul.f32 %v7512, %v7504
    %v7515 = vadd.f32 %v7391, %v7513
    %v7516 = vadd.f32 %v7392, %v7514
    %s7517 = sld [smem:[#allocation8 + $0x63]]
    %v7518 = vstv %s7517
    %v7519 = vmul.f32 %v7518, %v7503
    %v7520 = vmul.f32 %v7518, %v7504
    %v7521 = vadd.f32 %v7408, %v7519
    %v7522 = vadd.f32 %v7409, %v7520
    %s7523 = sld [smem:[#allocation8 + $0x87]]
    %v7524 = vstv %s7523
    %v7525 = vmul.f32 %v7524, %v7503
    %v7526 = vmul.f32 %v7524, %v7504
    %v7527 = vadd.f32 %v7425, %v7525
    %v7528 = vadd.f32 %v7426, %v7526
    %s7529 = sld [smem:[#allocation8 + $0xab]]
    %v7530 = vstv %s7529
    %v7531 = vmul.f32 %v7530, %v7503
    %v7532 = vmul.f32 %v7530, %v7504
    %v7533 = vadd.f32 %v7442, %v7531
    %v7534 = vadd.f32 %v7443, %v7532
    %s7535 = sld [smem:[#allocation8 + $0xcf]]
    %v7536 = vstv %s7535
    %v7537 = vmul.f32 %v7536, %v7503
    %v7538 = vmul.f32 %v7536, %v7504
    %v7539 = vadd.f32 %v7459, %v7537
    %v7540 = vadd.f32 %v7460, %v7538
    %s7541 = sld [smem:[#allocation8 + $0xf3]]
    %v7542 = vstv %s7541
    %v7543 = vmul.f32 %v7542, %v7503
    %v7544 = vmul.f32 %v7542, %v7504
    %v7545 = vadd.f32 %v7476, %v7543
    %v7546 = vadd.f32 %v7477, %v7544
    %s7547 = sld [smem:[#allocation8 + $0x117]]
    %v7548 = vstv %s7547
    %v7549 = vmul.f32 %v7548, %v7503
    %v7550 = vmul.f32 %v7548, %v7504
    %v7551 = vadd.f32 %v7493, %v7549
    %v7552 = vadd.f32 %v7494, %v7550
    %s7553 = sld [smem:[#allocation8 + $0x1c]]
    %v7554 = vstv %s7553
    %v7555 = vmul.f32 %v7554, %v7503
    %v7556 = vmul.f32 %v7554, %v7504
    %7559 = vrot.lane.b32.xlu0 %v7555, 127
    %v7560 = vpop.permute.xlu0 %7559
    %7561 = vrot.lane.b32.xlu0 %v7556, 127
    %v7562 = vpop.permute.xlu0 %7561
    %v7565 = vadd.f32 %v7509, %v7560
    %v7566 = vadd.f32 %v7510, %v7562
    %s7567 = sld [smem:[#allocation8 + $0x40]]
    %v7568 = vstv %s7567
    %v7569 = vmul.f32 %v7568, %v7503
    %v7570 = vmul.f32 %v7568, %v7504
    %7573 = vrot.lane.b32.xlu0 %v7569, 127
    %v7574 = vpop.permute.xlu0 %7573
    %7575 = vrot.lane.b32.xlu0 %v7570, 127
    %v7576 = vpop.permute.xlu0 %7575
    %v7579 = vadd.f32 %v7515, %v7574
    %v7580 = vadd.f32 %v7516, %v7576
    %s7581 = sld [smem:[#allocation8 + $0x64]]
    %v7582 = vstv %s7581
    %v7583 = vmul.f32 %v7582, %v7503
    %v7584 = vmul.f32 %v7582, %v7504
    %7587 = vrot.lane.b32.xlu0 %v7583, 127
    %v7588 = vpop.permute.xlu0 %7587
    %7589 = vrot.lane.b32.xlu0 %v7584, 127
    %v7590 = vpop.permute.xlu0 %7589
    %v7593 = vadd.f32 %v7521, %v7588
    %v7594 = vadd.f32 %v7522, %v7590
    %s7595 = sld [smem:[#allocation8 + $0x88]]
    %v7596 = vstv %s7595
    %v7597 = vmul.f32 %v7596, %v7503
    %v7598 = vmul.f32 %v7596, %v7504
    %7601 = vrot.lane.b32.xlu0 %v7597, 127
    %v7602 = vpop.permute.xlu0 %7601
    %7603 = vrot.lane.b32.xlu0 %v7598, 127
    %v7604 = vpop.permute.xlu0 %7603
    %v7607 = vadd.f32 %v7527, %v7602
    %v7608 = vadd.f32 %v7528, %v7604
    %s7609 = sld [smem:[#allocation8 + $0xac]]
    %v7610 = vstv %s7609
    %v7611 = vmul.f32 %v7610, %v7503
    %v7612 = vmul.f32 %v7610, %v7504
    %7615 = vrot.lane.b32.xlu0 %v7611, 127
    %v7616 = vpop.permute.xlu0 %7615
    %7617 = vrot.lane.b32.xlu0 %v7612, 127
    %v7618 = vpop.permute.xlu0 %7617
    %v7621 = vadd.f32 %v7533, %v7616
    %v7622 = vadd.f32 %v7534, %v7618
    %s7623 = sld [smem:[#allocation8 + $0xd0]]
    %v7624 = vstv %s7623
    %v7625 = vmul.f32 %v7624, %v7503
    %v7626 = vmul.f32 %v7624, %v7504
    %7629 = vrot.lane.b32.xlu0 %v7625, 127
    %v7630 = vpop.permute.xlu0 %7629
    %7631 = vrot.lane.b32.xlu0 %v7626, 127
    %v7632 = vpop.permute.xlu0 %7631
    %v7635 = vadd.f32 %v7539, %v7630
    %v7636 = vadd.f32 %v7540, %v7632
    %s7637 = sld [smem:[#allocation8 + $0xf4]]
    %v7638 = vstv %s7637
    %v7639 = vmul.f32 %v7638, %v7503
    %v7640 = vmul.f32 %v7638, %v7504
    %7643 = vrot.lane.b32.xlu0 %v7639, 127
    %v7644 = vpop.permute.xlu0 %7643
    %7645 = vrot.lane.b32.xlu0 %v7640, 127
    %v7646 = vpop.permute.xlu0 %7645
    %v7649 = vadd.f32 %v7545, %v7644
    %v7650 = vadd.f32 %v7546, %v7646
    %s7651 = sld [smem:[#allocation8 + $0x118]]
    %v7652 = vstv %s7651
    %v7653 = vmul.f32 %v7652, %v7503
    %v7654 = vmul.f32 %v7652, %v7504
    %7657 = vrot.lane.b32.xlu0 %v7653, 127
    %v7658 = vpop.permute.xlu0 %7657
    %7659 = vrot.lane.b32.xlu0 %v7654, 127
    %v7660 = vpop.permute.xlu0 %7659
    %v7663 = vadd.f32 %v7551, %v7658
    %v7664 = vadd.f32 %v7552, %v7660
    %s7665 = sld [smem:[#allocation8 + $0x1d]]
    %v7666 = vstv %s7665
    %v7667 = vmul.f32 %v7666, %v7503
    %v7668 = vmul.f32 %v7666, %v7504
    %7671 = vrot.lane.b32.xlu0 %v7667, 126
    %v7672 = vpop.permute.xlu0 %7671
    %7673 = vrot.lane.b32.xlu0 %v7668, 126
    %v7674 = vpop.permute.xlu0 %7673
    %v7677 = vadd.f32 %v7565, %v7672
    %v7678 = vadd.f32 %v7566, %v7674
    %s7679 = sld [smem:[#allocation8 + $0x41]]
    %v7680 = vstv %s7679
    %v7681 = vmul.f32 %v7680, %v7503
    %v7682 = vmul.f32 %v7680, %v7504
    %7685 = vrot.lane.b32.xlu0 %v7681, 126
    %v7686 = vpop.permute.xlu0 %7685
    %7687 = vrot.lane.b32.xlu0 %v7682, 126
    %v7688 = vpop.permute.xlu0 %7687
    %v7691 = vadd.f32 %v7579, %v7686
    %v7692 = vadd.f32 %v7580, %v7688
    %s7693 = sld [smem:[#allocation8 + $0x65]]
    %v7694 = vstv %s7693
    %v7695 = vmul.f32 %v7694, %v7503
    %v7696 = vmul.f32 %v7694, %v7504
    %7699 = vrot.lane.b32.xlu0 %v7695, 126
    %v7700 = vpop.permute.xlu0 %7699
    %7701 = vrot.lane.b32.xlu0 %v7696, 126
    %v7702 = vpop.permute.xlu0 %7701
    %v7705 = vadd.f32 %v7593, %v7700
    %v7706 = vadd.f32 %v7594, %v7702
    %s7707 = sld [smem:[#allocation8 + $0x89]]
    %v7708 = vstv %s7707
    %v7709 = vmul.f32 %v7708, %v7503
    %v7710 = vmul.f32 %v7708, %v7504
    %7713 = vrot.lane.b32.xlu0 %v7709, 126
    %v7714 = vpop.permute.xlu0 %7713
    %7715 = vrot.lane.b32.xlu0 %v7710, 126
    %v7716 = vpop.permute.xlu0 %7715
    %v7719 = vadd.f32 %v7607, %v7714
    %v7720 = vadd.f32 %v7608, %v7716
    %s7721 = sld [smem:[#allocation8 + $0xad]]
    %v7722 = vstv %s7721
    %v7723 = vmul.f32 %v7722, %v7503
    %v7724 = vmul.f32 %v7722, %v7504
    %7727 = vrot.lane.b32.xlu0 %v7723, 126
    %v7728 = vpop.permute.xlu0 %7727
    %7729 = vrot.lane.b32.xlu0 %v7724, 126
    %v7730 = vpop.permute.xlu0 %7729
    %v7733 = vadd.f32 %v7621, %v7728
    %v7734 = vadd.f32 %v7622, %v7730
    %s7735 = sld [smem:[#allocation8 + $0xd1]]
    %v7736 = vstv %s7735
    %v7737 = vmul.f32 %v7736, %v7503
    %v7738 = vmul.f32 %v7736, %v7504
    %7741 = vrot.lane.b32.xlu0 %v7737, 126
    %v7742 = vpop.permute.xlu0 %7741
    %7743 = vrot.lane.b32.xlu0 %v7738, 126
    %v7744 = vpop.permute.xlu0 %7743
    %v7747 = vadd.f32 %v7635, %v7742
    %v7748 = vadd.f32 %v7636, %v7744
    %s7749 = sld [smem:[#allocation8 + $0xf5]]
    %v7750 = vstv %s7749
    %v7751 = vmul.f32 %v7750, %v7503
    %v7752 = vmul.f32 %v7750, %v7504
    %7755 = vrot.lane.b32.xlu0 %v7751, 126
    %v7756 = vpop.permute.xlu0 %7755
    %7757 = vrot.lane.b32.xlu0 %v7752, 126
    %v7758 = vpop.permute.xlu0 %7757
    %v7761 = vadd.f32 %v7649, %v7756
    %v7762 = vadd.f32 %v7650, %v7758
    %s7763 = sld [smem:[#allocation8 + $0x119]]
    %v7764 = vstv %s7763
    %v7765 = vmul.f32 %v7764, %v7503
    %v7766 = vmul.f32 %v7764, %v7504
    %7769 = vrot.lane.b32.xlu0 %v7765, 126
    %v7770 = vpop.permute.xlu0 %7769
    %7771 = vrot.lane.b32.xlu0 %v7766, 126
    %v7772 = vpop.permute.xlu0 %7771
    %v7775 = vadd.f32 %v7663, %v7770
    %v7776 = vadd.f32 %v7664, %v7772
    %s7777 = sld [smem:[#allocation8 + $0x1e]]
    %v7778 = vstv %s7777
    %v7779 = vmul.f32 %v7778, %v7503
    %v7780 = vmul.f32 %v7778, %v7504
    %v7783 = vrot.slane %v7779, 1
    %v7784 = vrot.slane %v7780, 1
    %v7785 = vsel %vm448, %v7783, %v7784
    %v7788 = vadd.f32 %v7677, %v7785
    %v7789 = vadd.f32 %v7678, %v7784
    %s7790 = sld [smem:[#allocation8 + $0x42]]
    %v7791 = vstv %s7790
    %v7792 = vmul.f32 %v7791, %v7503
    %v7793 = vmul.f32 %v7791, %v7504
    %v7796 = vrot.slane %v7792, 1
    %v7797 = vrot.slane %v7793, 1
    %v7798 = vsel %vm448, %v7796, %v7797
    %v7801 = vadd.f32 %v7691, %v7798
    %v7802 = vadd.f32 %v7692, %v7797
    %s7803 = sld [smem:[#allocation8 + $0x66]]
    %v7804 = vstv %s7803
    %v7805 = vmul.f32 %v7804, %v7503
    %v7806 = vmul.f32 %v7804, %v7504
    %v7809 = vrot.slane %v7805, 1
    %v7810 = vrot.slane %v7806, 1
    %v7811 = vsel %vm448, %v7809, %v7810
    %v7814 = vadd.f32 %v7705, %v7811
    %v7815 = vadd.f32 %v7706, %v7810
    %s7816 = sld [smem:[#allocation8 + $0x8a]]
    %v7817 = vstv %s7816
    %v7818 = vmul.f32 %v7817, %v7503
    %v7819 = vmul.f32 %v7817, %v7504
    %v7822 = vrot.slane %v7818, 1
    %v7823 = vrot.slane %v7819, 1
    %v7824 = vsel %vm448, %v7822, %v7823
    %v7827 = vadd.f32 %v7719, %v7824
    %v7828 = vadd.f32 %v7720, %v7823
    %s7829 = sld [smem:[#allocation8 + $0xae]]
    %v7830 = vstv %s7829
    %v7831 = vmul.f32 %v7830, %v7503
    %v7832 = vmul.f32 %v7830, %v7504
    %v7835 = vrot.slane %v7831, 1
    %v7836 = vrot.slane %v7832, 1
    %v7837 = vsel %vm448, %v7835, %v7836
    %v7840 = vadd.f32 %v7733, %v7837
    %v7841 = vadd.f32 %v7734, %v7836
    %s7842 = sld [smem:[#allocation8 + $0xd2]]
    %v7843 = vstv %s7842
    %v7844 = vmul.f32 %v7843, %v7503
    %v7845 = vmul.f32 %v7843, %v7504
    %v7848 = vrot.slane %v7844, 1
    %v7849 = vrot.slane %v7845, 1
    %v7850 = vsel %vm448, %v7848, %v7849
    %v7853 = vadd.f32 %v7747, %v7850
    %v7854 = vadd.f32 %v7748, %v7849
    %s7855 = sld [smem:[#allocation8 + $0xf6]]
    %v7856 = vstv %s7855
    %v7857 = vmul.f32 %v7856, %v7503
    %v7858 = vmul.f32 %v7856, %v7504
    %v7861 = vrot.slane %v7857, 1
    %v7862 = vrot.slane %v7858, 1
    %v7863 = vsel %vm448, %v7861, %v7862
    %v7866 = vadd.f32 %v7761, %v7863
    %v7867 = vadd.f32 %v7762, %v7862
    %s7868 = sld [smem:[#allocation8 + $0x11a]]
    %v7869 = vstv %s7868
    %v7870 = vmul.f32 %v7869, %v7503
    %v7871 = vmul.f32 %v7869, %v7504
    %v7874 = vrot.slane %v7870, 1
    %v7875 = vrot.slane %v7871, 1
    %v7876 = vsel %vm448, %v7874, %v7875
    %v7879 = vadd.f32 %v7775, %v7876
    %v7880 = vadd.f32 %v7776, %v7875
    %s7881 = sld [smem:[#allocation8 + $0x1f]]
    %v7882 = vstv %s7881
    %v7883 = vmul.f32 %v7882, %v7503
    %v7884 = vmul.f32 %v7882, %v7504
    %v7887 = vrot.slane %v7883, 1
    %v7888 = vrot.slane %v7884, 1
    %v7889 = vsel %vm448, %v7887, %v7888
    %7890 = vrot.lane.b32.xlu0 %v7889, 127
    %v7891 = vpop.permute.xlu0 %7890
    %7892 = vrot.lane.b32.xlu0 %v7888, 127
    %v7893 = vpop.permute.xlu0 %7892
    %v7896 = vadd.f32 %v7788, %v7891
    %v7897 = vadd.f32 %v7789, %v7893
    %s7898 = sld [smem:[#allocation8 + $0x43]]
    %v7899 = vstv %s7898
    %v7900 = vmul.f32 %v7899, %v7503
    %v7901 = vmul.f32 %v7899, %v7504
    %v7904 = vrot.slane %v7900, 1
    %v7905 = vrot.slane %v7901, 1
    %v7906 = vsel %vm448, %v7904, %v7905
    %7907 = vrot.lane.b32.xlu0 %v7906, 127
    %v7908 = vpop.permute.xlu0 %7907
    %7909 = vrot.lane.b32.xlu0 %v7905, 127
    %v7910 = vpop.permute.xlu0 %7909
    %v7913 = vadd.f32 %v7801, %v7908
    %v7914 = vadd.f32 %v7802, %v7910
    %s7915 = sld [smem:[#allocation8 + $0x67]]
    %v7916 = vstv %s7915
    %v7917 = vmul.f32 %v7916, %v7503
    %v7918 = vmul.f32 %v7916, %v7504
    %v7921 = vrot.slane %v7917, 1
    %v7922 = vrot.slane %v7918, 1
    %v7923 = vsel %vm448, %v7921, %v7922
    %7924 = vrot.lane.b32.xlu0 %v7923, 127
    %v7925 = vpop.permute.xlu0 %7924
    %7926 = vrot.lane.b32.xlu0 %v7922, 127
    %v7927 = vpop.permute.xlu0 %7926
    %v7930 = vadd.f32 %v7814, %v7925
    %v7931 = vadd.f32 %v7815, %v7927
    %s7932 = sld [smem:[#allocation8 + $0x8b]]
    %v7933 = vstv %s7932
    %v7934 = vmul.f32 %v7933, %v7503
    %v7935 = vmul.f32 %v7933, %v7504
    %v7938 = vrot.slane %v7934, 1
    %v7939 = vrot.slane %v7935, 1
    %v7940 = vsel %vm448, %v7938, %v7939
    %7941 = vrot.lane.b32.xlu0 %v7940, 127
    %v7942 = vpop.permute.xlu0 %7941
    %7943 = vrot.lane.b32.xlu0 %v7939, 127
    %v7944 = vpop.permute.xlu0 %7943
    %v7947 = vadd.f32 %v7827, %v7942
    %v7948 = vadd.f32 %v7828, %v7944
    %s7949 = sld [smem:[#allocation8 + $0xaf]]
    %v7950 = vstv %s7949
    %v7951 = vmul.f32 %v7950, %v7503
    %v7952 = vmul.f32 %v7950, %v7504
    %v7955 = vrot.slane %v7951, 1
    %v7956 = vrot.slane %v7952, 1
    %v7957 = vsel %vm448, %v7955, %v7956
    %7958 = vrot.lane.b32.xlu0 %v7957, 127
    %v7959 = vpop.permute.xlu0 %7958
    %7960 = vrot.lane.b32.xlu0 %v7956, 127
    %v7961 = vpop.permute.xlu0 %7960
    %v7964 = vadd.f32 %v7840, %v7959
    %v7965 = vadd.f32 %v7841, %v7961
    %s7966 = sld [smem:[#allocation8 + $0xd3]]
    %v7967 = vstv %s7966
    %v7968 = vmul.f32 %v7967, %v7503
    %v7969 = vmul.f32 %v7967, %v7504
    %v7972 = vrot.slane %v7968, 1
    %v7973 = vrot.slane %v7969, 1
    %v7974 = vsel %vm448, %v7972, %v7973
    %7975 = vrot.lane.b32.xlu0 %v7974, 127
    %v7976 = vpop.permute.xlu0 %7975
    %7977 = vrot.lane.b32.xlu0 %v7973, 127
    %v7978 = vpop.permute.xlu0 %7977
    %v7981 = vadd.f32 %v7853, %v7976
    %v7982 = vadd.f32 %v7854, %v7978
    %s7983 = sld [smem:[#allocation8 + $0xf7]]
    %v7984 = vstv %s7983
    %v7985 = vmul.f32 %v7984, %v7503
    %v7986 = vmul.f32 %v7984, %v7504
    %v7989 = vrot.slane %v7985, 1
    %v7990 = vrot.slane %v7986, 1
    %v7991 = vsel %vm448, %v7989, %v7990
    %7992 = vrot.lane.b32.xlu0 %v7991, 127
    %v7993 = vpop.permute.xlu0 %7992
    %7994 = vrot.lane.b32.xlu0 %v7990, 127
    %v7995 = vpop.permute.xlu0 %7994
    %v7998 = vadd.f32 %v7866, %v7993
    %v7999 = vadd.f32 %v7867, %v7995
    %s8000 = sld [smem:[#allocation8 + $0x11b]]
    %v8001 = vstv %s8000
    %v8002 = vmul.f32 %v8001, %v7503
    %v8003 = vmul.f32 %v8001, %v7504
    %v8006 = vrot.slane %v8002, 1
    %v8007 = vrot.slane %v8003, 1
    %v8008 = vsel %vm448, %v8006, %v8007
    %8009 = vrot.lane.b32.xlu0 %v8008, 127
    %v8010 = vpop.permute.xlu0 %8009
    %8011 = vrot.lane.b32.xlu0 %v8007, 127
    %v8012 = vpop.permute.xlu0 %8011
    %v8015 = vadd.f32 %v7879, %v8010
    %v8016 = vadd.f32 %v7880, %v8012
    %s8017 = sld [smem:[#allocation8 + $0x20]]
    %v8018 = vstv %s8017
    %v8019 = vmul.f32 %v8018, %v7503
    %v8020 = vmul.f32 %v8018, %v7504
    %v8023 = vrot.slane %v8019, 1
    %v8024 = vrot.slane %v8020, 1
    %v8025 = vsel %vm448, %v8023, %v8024
    %8026 = vrot.lane.b32.xlu0 %v8025, 126
    %v8027 = vpop.permute.xlu0 %8026
    %8028 = vrot.lane.b32.xlu0 %v8024, 126
    %v8029 = vpop.permute.xlu0 %8028
    %v8032 = vadd.f32 %v7896, %v8027
    %v8033 = vadd.f32 %v7897, %v8029
    %s8034 = sld [smem:[#allocation8 + $0x44]]
    %v8035 = vstv %s8034
    %v8036 = vmul.f32 %v8035, %v7503
    %v8037 = vmul.f32 %v8035, %v7504
    %v8040 = vrot.slane %v8036, 1
    %v8041 = vrot.slane %v8037, 1
    %v8042 = vsel %vm448, %v8040, %v8041
    %8043 = vrot.lane.b32.xlu0 %v8042, 126
    %v8044 = vpop.permute.xlu0 %8043
    %8045 = vrot.lane.b32.xlu0 %v8041, 126
    %v8046 = vpop.permute.xlu0 %8045
    %v8049 = vadd.f32 %v7913, %v8044
    %v8050 = vadd.f32 %v7914, %v8046
    %s8051 = sld [smem:[#allocation8 + $0x68]]
    %v8052 = vstv %s8051
    %v8053 = vmul.f32 %v8052, %v7503
    %v8054 = vmul.f32 %v8052, %v7504
    %v8057 = vrot.slane %v8053, 1
    %v8058 = vrot.slane %v8054, 1
    %v8059 = vsel %vm448, %v8057, %v8058
    %8060 = vrot.lane.b32.xlu0 %v8059, 126
    %v8061 = vpop.permute.xlu0 %8060
    %8062 = vrot.lane.b32.xlu0 %v8058, 126
    %v8063 = vpop.permute.xlu0 %8062
    %v8066 = vadd.f32 %v7930, %v8061
    %v8067 = vadd.f32 %v7931, %v8063
    %s8068 = sld [smem:[#allocation8 + $0x8c]]
    %v8069 = vstv %s8068
    %v8070 = vmul.f32 %v8069, %v7503
    %v8071 = vmul.f32 %v8069, %v7504
    %v8074 = vrot.slane %v8070, 1
    %v8075 = vrot.slane %v8071, 1
    %v8076 = vsel %vm448, %v8074, %v8075
    %8077 = vrot.lane.b32.xlu0 %v8076, 126
    %v8078 = vpop.permute.xlu0 %8077
    %8079 = vrot.lane.b32.xlu0 %v8075, 126
    %v8080 = vpop.permute.xlu0 %8079
    %v8083 = vadd.f32 %v7947, %v8078
    %v8084 = vadd.f32 %v7948, %v8080
    %s8085 = sld [smem:[#allocation8 + $0xb0]]
    %v8086 = vstv %s8085
    %v8087 = vmul.f32 %v8086, %v7503
    %v8088 = vmul.f32 %v8086, %v7504
    %v8091 = vrot.slane %v8087, 1
    %v8092 = vrot.slane %v8088, 1
    %v8093 = vsel %vm448, %v8091, %v8092
    %8094 = vrot.lane.b32.xlu0 %v8093, 126
    %v8095 = vpop.permute.xlu0 %8094
    %8096 = vrot.lane.b32.xlu0 %v8092, 126
    %v8097 = vpop.permute.xlu0 %8096
    %v8100 = vadd.f32 %v7964, %v8095
    %v8101 = vadd.f32 %v7965, %v8097
    %s8102 = sld [smem:[#allocation8 + $0xd4]]
    %v8103 = vstv %s8102
    %v8104 = vmul.f32 %v8103, %v7503
    %v8105 = vmul.f32 %v8103, %v7504
    %v8108 = vrot.slane %v8104, 1
    %v8109 = vrot.slane %v8105, 1
    %v8110 = vsel %vm448, %v8108, %v8109
    %8111 = vrot.lane.b32.xlu0 %v8110, 126
    %v8112 = vpop.permute.xlu0 %8111
    %8113 = vrot.lane.b32.xlu0 %v8109, 126
    %v8114 = vpop.permute.xlu0 %8113
    %v8117 = vadd.f32 %v7981, %v8112
    %v8118 = vadd.f32 %v7982, %v8114
    %s8119 = sld [smem:[#allocation8 + $0xf8]]
    %v8120 = vstv %s8119
    %v8121 = vmul.f32 %v8120, %v7503
    %v8122 = vmul.f32 %v8120, %v7504
    %v8125 = vrot.slane %v8121, 1
    %v8126 = vrot.slane %v8122, 1
    %v8127 = vsel %vm448, %v8125, %v8126
    %8128 = vrot.lane.b32.xlu0 %v8127, 126
    %v8129 = vpop.permute.xlu0 %8128
    %8130 = vrot.lane.b32.xlu0 %v8126, 126
    %v8131 = vpop.permute.xlu0 %8130
    %v8134 = vadd.f32 %v7998, %v8129
    %v8135 = vadd.f32 %v7999, %v8131
    %s8136 = sld [smem:[#allocation8 + $0x11c]]
    %v8137 = vstv %s8136
    %v8138 = vmul.f32 %v8137, %v7503
    %v8139 = vmul.f32 %v8137, %v7504
    %v8142 = vrot.slane %v8138, 1
    %v8143 = vrot.slane %v8139, 1
    %v8144 = vsel %vm448, %v8142, %v8143
    %8145 = vrot.lane.b32.xlu0 %v8144, 126
    %v8146 = vpop.permute.xlu0 %8145
    %8147 = vrot.lane.b32.xlu0 %v8143, 126
    %v8148 = vpop.permute.xlu0 %8147
    %v8151 = vadd.f32 %v8015, %v8146
    %v8152 = vadd.f32 %v8016, %v8148
    %s8153 = sld [smem:[#allocation8 + $0x21]]
    %v8154 = vstv %s8153
    %v8155 = vmul.f32 %v8154, %v7503
    %v8156 = vmul.f32 %v8154, %v7504
    %v8159 = vrot.slane %v8155, 2
    %v8160 = vrot.slane %v8156, 2
    %v8161 = vsel %vm825, %v8159, %v8160
    %v8164 = vadd.f32 %v8032, %v8161
    %v8165 = vadd.f32 %v8033, %v8160
    %s8166 = sld [smem:[#allocation8 + $0x45]]
    %v8167 = vstv %s8166
    %v8168 = vmul.f32 %v8167, %v7503
    %v8169 = vmul.f32 %v8167, %v7504
    %v8172 = vrot.slane %v8168, 2
    %v8173 = vrot.slane %v8169, 2
    %v8174 = vsel %vm825, %v8172, %v8173
    %v8177 = vadd.f32 %v8049, %v8174
    %v8178 = vadd.f32 %v8050, %v8173
    %s8179 = sld [smem:[#allocation8 + $0x69]]
    %v8180 = vstv %s8179
    %v8181 = vmul.f32 %v8180, %v7503
    %v8182 = vmul.f32 %v8180, %v7504
    %v8185 = vrot.slane %v8181, 2
    %v8186 = vrot.slane %v8182, 2
    %v8187 = vsel %vm825, %v8185, %v8186
    %v8190 = vadd.f32 %v8066, %v8187
    %v8191 = vadd.f32 %v8067, %v8186
    %s8192 = sld [smem:[#allocation8 + $0x8d]]
    %v8193 = vstv %s8192
    %v8194 = vmul.f32 %v8193, %v7503
    %v8195 = vmul.f32 %v8193, %v7504
    %v8198 = vrot.slane %v8194, 2
    %v8199 = vrot.slane %v8195, 2
    %v8200 = vsel %vm825, %v8198, %v8199
    %v8203 = vadd.f32 %v8083, %v8200
    %v8204 = vadd.f32 %v8084, %v8199
    %s8205 = sld [smem:[#allocation8 + $0xb1]]
    %v8206 = vstv %s8205
    %v8207 = vmul.f32 %v8206, %v7503
    %v8208 = vmul.f32 %v8206, %v7504
    %v8211 = vrot.slane %v8207, 2
    %v8212 = vrot.slane %v8208, 2
    %v8213 = vsel %vm825, %v8211, %v8212
    %v8216 = vadd.f32 %v8100, %v8213
    %v8217 = vadd.f32 %v8101, %v8212
    %s8218 = sld [smem:[#allocation8 + $0xd5]]
    %v8219 = vstv %s8218
    %v8220 = vmul.f32 %v8219, %v7503
    %v8221 = vmul.f32 %v8219, %v7504
    %v8224 = vrot.slane %v8220, 2
    %v8225 = vrot.slane %v8221, 2
    %v8226 = vsel %vm825, %v8224, %v8225
    %v8229 = vadd.f32 %v8117, %v8226
    %v8230 = vadd.f32 %v8118, %v8225
    %s8231 = sld [smem:[#allocation8 + $0xf9]]
    %v8232 = vstv %s8231
    %v8233 = vmul.f32 %v8232, %v7503
    %v8234 = vmul.f32 %v8232, %v7504
    %v8237 = vrot.slane %v8233, 2
    %v8238 = vrot.slane %v8234, 2
    %v8239 = vsel %vm825, %v8237, %v8238
    %v8242 = vadd.f32 %v8134, %v8239
    %v8243 = vadd.f32 %v8135, %v8238
    %s8244 = sld [smem:[#allocation8 + $0x11d]]
    %v8245 = vstv %s8244
    %v8246 = vmul.f32 %v8245, %v7503
    %v8247 = vmul.f32 %v8245, %v7504
    %v8250 = vrot.slane %v8246, 2
    %v8251 = vrot.slane %v8247, 2
    %v8252 = vsel %vm825, %v8250, %v8251
    %v8255 = vadd.f32 %v8151, %v8252
    %v8256 = vadd.f32 %v8152, %v8251
    %s8257 = sld [smem:[#allocation8 + $0x22]]
    %v8258 = vstv %s8257
    %v8259 = vmul.f32 %v8258, %v7503
    %v8260 = vmul.f32 %v8258, %v7504
    %v8263 = vrot.slane %v8259, 2
    %v8264 = vrot.slane %v8260, 2
    %v8265 = vsel %vm825, %v8263, %v8264
    %8266 = vrot.lane.b32.xlu0 %v8265, 127
    %v8267 = vpop.permute.xlu0 %8266
    %8268 = vrot.lane.b32.xlu0 %v8264, 127
    %v8269 = vpop.permute.xlu0 %8268
    %v8272 = vadd.f32 %v8164, %v8267
    %v8273 = vadd.f32 %v8165, %v8269
    %s8274 = sld [smem:[#allocation8 + $0x46]]
    %v8275 = vstv %s8274
    %v8276 = vmul.f32 %v8275, %v7503
    %v8277 = vmul.f32 %v8275, %v7504
    %v8280 = vrot.slane %v8276, 2
    %v8281 = vrot.slane %v8277, 2
    %v8282 = vsel %vm825, %v8280, %v8281
    %8283 = vrot.lane.b32.xlu0 %v8282, 127
    %v8284 = vpop.permute.xlu0 %8283
    %8285 = vrot.lane.b32.xlu0 %v8281, 127
    %v8286 = vpop.permute.xlu0 %8285
    %v8289 = vadd.f32 %v8177, %v8284
    %v8290 = vadd.f32 %v8178, %v8286
    %s8291 = sld [smem:[#allocation8 + $0x6a]]
    %v8292 = vstv %s8291
    %v8293 = vmul.f32 %v8292, %v7503
    %v8294 = vmul.f32 %v8292, %v7504
    %v8297 = vrot.slane %v8293, 2
    %v8298 = vrot.slane %v8294, 2
    %v8299 = vsel %vm825, %v8297, %v8298
    %8300 = vrot.lane.b32.xlu0 %v8299, 127
    %v8301 = vpop.permute.xlu0 %8300
    %8302 = vrot.lane.b32.xlu0 %v8298, 127
    %v8303 = vpop.permute.xlu0 %8302
    %v8306 = vadd.f32 %v8190, %v8301
    %v8307 = vadd.f32 %v8191, %v8303
    %s8308 = sld [smem:[#allocation8 + $0x8e]]
    %v8309 = vstv %s8308
    %v8310 = vmul.f32 %v8309, %v7503
    %v8311 = vmul.f32 %v8309, %v7504
    %v8314 = vrot.slane %v8310, 2
    %v8315 = vrot.slane %v8311, 2
    %v8316 = vsel %vm825, %v8314, %v8315
    %8317 = vrot.lane.b32.xlu0 %v8316, 127
    %v8318 = vpop.permute.xlu0 %8317
    %8319 = vrot.lane.b32.xlu0 %v8315, 127
    %v8320 = vpop.permute.xlu0 %8319
    %v8323 = vadd.f32 %v8203, %v8318
    %v8324 = vadd.f32 %v8204, %v8320
    %s8325 = sld [smem:[#allocation8 + $0xb2]]
    %v8326 = vstv %s8325
    %v8327 = vmul.f32 %v8326, %v7503
    %v8328 = vmul.f32 %v8326, %v7504
    %v8331 = vrot.slane %v8327, 2
    %v8332 = vrot.slane %v8328, 2
    %v8333 = vsel %vm825, %v8331, %v8332
    %8334 = vrot.lane.b32.xlu0 %v8333, 127
    %v8335 = vpop.permute.xlu0 %8334
    %8336 = vrot.lane.b32.xlu0 %v8332, 127
    %v8337 = vpop.permute.xlu0 %8336
    %v8340 = vadd.f32 %v8216, %v8335
    %v8341 = vadd.f32 %v8217, %v8337
    %s8342 = sld [smem:[#allocation8 + $0xd6]]
    %v8343 = vstv %s8342
    %v8344 = vmul.f32 %v8343, %v7503
    %v8345 = vmul.f32 %v8343, %v7504
    %v8348 = vrot.slane %v8344, 2
    %v8349 = vrot.slane %v8345, 2
    %v8350 = vsel %vm825, %v8348, %v8349
    %8351 = vrot.lane.b32.xlu0 %v8350, 127
    %v8352 = vpop.permute.xlu0 %8351
    %8353 = vrot.lane.b32.xlu0 %v8349, 127
    %v8354 = vpop.permute.xlu0 %8353
    %v8357 = vadd.f32 %v8229, %v8352
    %v8358 = vadd.f32 %v8230, %v8354
    %s8359 = sld [smem:[#allocation8 + $0xfa]]
    %v8360 = vstv %s8359
    %v8361 = vmul.f32 %v8360, %v7503
    %v8362 = vmul.f32 %v8360, %v7504
    %v8365 = vrot.slane %v8361, 2
    %v8366 = vrot.slane %v8362, 2
    %v8367 = vsel %vm825, %v8365, %v8366
    %8368 = vrot.lane.b32.xlu0 %v8367, 127
    %v8369 = vpop.permute.xlu0 %8368
    %8370 = vrot.lane.b32.xlu0 %v8366, 127
    %v8371 = vpop.permute.xlu0 %8370
    %v8374 = vadd.f32 %v8242, %v8369
    %v8375 = vadd.f32 %v8243, %v8371
    %s8376 = sld [smem:[#allocation8 + $0x11e]]
    %v8377 = vstv %s8376
    %v8378 = vmul.f32 %v8377, %v7503
    %v8379 = vmul.f32 %v8377, %v7504
    %v8382 = vrot.slane %v8378, 2
    %v8383 = vrot.slane %v8379, 2
    %v8384 = vsel %vm825, %v8382, %v8383
    %8385 = vrot.lane.b32.xlu0 %v8384, 127
    %v8386 = vpop.permute.xlu0 %8385
    %8387 = vrot.lane.b32.xlu0 %v8383, 127
    %v8388 = vpop.permute.xlu0 %8387
    %v8391 = vadd.f32 %v8255, %v8386
    %v8392 = vadd.f32 %v8256, %v8388
    %s8393 = sld [smem:[#allocation8 + $0x23]]
    %v8394 = vstv %s8393
    %v8395 = vmul.f32 %v8394, %v7503
    %v8396 = vmul.f32 %v8394, %v7504
    %v8399 = vrot.slane %v8395, 2
    %v8400 = vrot.slane %v8396, 2
    %v8401 = vsel %vm825, %v8399, %v8400
    %8402 = vrot.lane.b32.xlu0 %v8401, 126
    %v8403 = vpop.permute.xlu0 %8402
    %8404 = vrot.lane.b32.xlu0 %v8400, 126
    %v8405 = vpop.permute.xlu0 %8404
    %v8408 = vadd.f32 %v8272, %v8403
    %v8409 = vadd.f32 %v8273, %v8405
    %s8410 = sld [smem:[#allocation8 + $0x47]]
    %v8411 = vstv %s8410
    %v8412 = vmul.f32 %v8411, %v7503
    %v8413 = vmul.f32 %v8411, %v7504
    %v8416 = vrot.slane %v8412, 2
    %v8417 = vrot.slane %v8413, 2
    %v8418 = vsel %vm825, %v8416, %v8417
    %8419 = vrot.lane.b32.xlu0 %v8418, 126
    %v8420 = vpop.permute.xlu0 %8419
    %8421 = vrot.lane.b32.xlu0 %v8417, 126
    %v8422 = vpop.permute.xlu0 %8421
    %v8425 = vadd.f32 %v8289, %v8420
    %v8426 = vadd.f32 %v8290, %v8422
    %s8427 = sld [smem:[#allocation8 + $0x6b]]
    %v8428 = vstv %s8427
    %v8429 = vmul.f32 %v8428, %v7503
    %v8430 = vmul.f32 %v8428, %v7504
    %v8433 = vrot.slane %v8429, 2
    %v8434 = vrot.slane %v8430, 2
    %v8435 = vsel %vm825, %v8433, %v8434
    %8436 = vrot.lane.b32.xlu0 %v8435, 126
    %v8437 = vpop.permute.xlu0 %8436
    %8438 = vrot.lane.b32.xlu0 %v8434, 126
    %v8439 = vpop.permute.xlu0 %8438
    %v8442 = vadd.f32 %v8306, %v8437
    %v8443 = vadd.f32 %v8307, %v8439
    %s8444 = sld [smem:[#allocation8 + $0x8f]]
    %v8445 = vstv %s8444
    %v8446 = vmul.f32 %v8445, %v7503
    %v8447 = vmul.f32 %v8445, %v7504
    %v8450 = vrot.slane %v8446, 2
    %v8451 = vrot.slane %v8447, 2
    %v8452 = vsel %vm825, %v8450, %v8451
    %8453 = vrot.lane.b32.xlu0 %v8452, 126
    %v8454 = vpop.permute.xlu0 %8453
    %8455 = vrot.lane.b32.xlu0 %v8451, 126
    %v8456 = vpop.permute.xlu0 %8455
    %v8459 = vadd.f32 %v8323, %v8454
    %v8460 = vadd.f32 %v8324, %v8456
    %s8461 = sld [smem:[#allocation8 + $0xb3]]
    %v8462 = vstv %s8461
    %v8463 = vmul.f32 %v8462, %v7503
    %v8464 = vmul.f32 %v8462, %v7504
    %v8467 = vrot.slane %v8463, 2
    %v8468 = vrot.slane %v8464, 2
    %v8469 = vsel %vm825, %v8467, %v8468
    %8470 = vrot.lane.b32.xlu0 %v8469, 126
    %v8471 = vpop.permute.xlu0 %8470
    %8472 = vrot.lane.b32.xlu0 %v8468, 126
    %v8473 = vpop.permute.xlu0 %8472
    %v8476 = vadd.f32 %v8340, %v8471
    %v8477 = vadd.f32 %v8341, %v8473
    %s8478 = sld [smem:[#allocation8 + $0xd7]]
    %v8479 = vstv %s8478
    %v8480 = vmul.f32 %v8479, %v7503
    %v8481 = vmul.f32 %v8479, %v7504
    %v8484 = vrot.slane %v8480, 2
    %v8485 = vrot.slane %v8481, 2
    %v8486 = vsel %vm825, %v8484, %v8485
    %8487 = vrot.lane.b32.xlu0 %v8486, 126
    %v8488 = vpop.permute.xlu0 %8487
    %8489 = vrot.lane.b32.xlu0 %v8485, 126
    %v8490 = vpop.permute.xlu0 %8489
    %v8493 = vadd.f32 %v8357, %v8488
    %v8494 = vadd.f32 %v8358, %v8490
    %s8495 = sld [smem:[#allocation8 + $0xfb]]
    %v8496 = vstv %s8495
    %v8497 = vmul.f32 %v8496, %v7503
    %v8498 = vmul.f32 %v8496, %v7504
    %v8501 = vrot.slane %v8497, 2
    %v8502 = vrot.slane %v8498, 2
    %v8503 = vsel %vm825, %v8501, %v8502
    %8504 = vrot.lane.b32.xlu0 %v8503, 126
    %v8505 = vpop.permute.xlu0 %8504
    %8506 = vrot.lane.b32.xlu0 %v8502, 126
    %v8507 = vpop.permute.xlu0 %8506
    %v8510 = vadd.f32 %v8374, %v8505
    %v8511 = vadd.f32 %v8375, %v8507
    %s8512 = sld [smem:[#allocation8 + $0x11f]]
    %v8513 = vstv %s8512
    %v8514 = vmul.f32 %v8513, %v7503
    %v8515 = vmul.f32 %v8513, %v7504
    %v8518 = vrot.slane %v8514, 2
    %v8519 = vrot.slane %v8515, 2
    %v8520 = vsel %vm825, %v8518, %v8519
    %8521 = vrot.lane.b32.xlu0 %v8520, 126
    %v8522 = vpop.permute.xlu0 %8521
    %8523 = vrot.lane.b32.xlu0 %v8519, 126
    %v8524 = vpop.permute.xlu0 %8523
    %v8527 = vadd.f32 %v8391, %v8522
    %v8528 = vadd.f32 %v8392, %v8524
    %s8529 = scalar_lea.vmem %s5, 128
    %8530 = vst.msk [vmem:[%s8529] sm:$0xff] %vm4298, %v8408
    %8531 = vst.msk [vmem:[%s8529 + $0x8] sm:$0x3f] %vm4300, %v8409
    %8532 = vst.msk [vmem:[%s8529 + $0x10] sm:$0xff] %vm4298, %v8425
    %8533 = vst.msk [vmem:[%s8529 + $0x18] sm:$0x3f] %vm4300, %v8426
    %8534 = vst.msk [vmem:[%s8529 + $0x20] sm:$0xff] %vm4298, %v8442
    %8535 = vst.msk [vmem:[%s8529 + $0x28] sm:$0x3f] %vm4300, %v8443
    %8536 = vst.msk [vmem:[%s8529 + $0x30] sm:$0xff] %vm4298, %v8459
    %8537 = vst.msk [vmem:[%s8529 + $0x38] sm:$0x3f] %vm4300, %v8460
    %8538 = vst.msk [vmem:[%s8529 + $0x40] sm:$0xff] %vm4298, %v8476
    %8539 = vst.msk [vmem:[%s8529 + $0x48] sm:$0x3f] %vm4300, %v8477
    %8540 = vst.msk [vmem:[%s8529 + $0x50] sm:$0xff] %vm4298, %v8493
    %8541 = vst.msk [vmem:[%s8529 + $0x58] sm:$0x3f] %vm4300, %v8494
    %8542 = vst.msk [vmem:[%s8529 + $0x60] sm:$0xff] %vm4298, %v8510
    %8543 = vst.msk [vmem:[%s8529 + $0x68] sm:$0x3f] %vm4300, %v8511
    %8544 = vst.msk [vmem:[%s8529 + $0x70] sm:$0xff] %vm4298, %v8527
    %8545 = vst.msk [vmem:[%s8529 + $0x78] sm:$0x3f] %vm4300, %v8528
    // Predicated region
    $region42: #{tpu_custom_call.1} parent=1 // pred_check
      _
    $region43: #{tpu_custom_call.1} parent=1 // pred_check_branch
      %8547 = sbr.rel (0) target = $region45
    $region44: #{tpu_custom_call.1} parent=1 // pred_region
      _
    $region45: #{tpu_custom_call.1} parent=1 // pred_fallthru
      _
    // Predicated region
    $region46: #{tpu_custom_call.1} parent=1 // pred_check
      _
    $region47: #{tpu_custom_call.1} parent=1 // pred_check_branch
      %8549 = sbr.rel (0) target = $region49
    $region48: #{tpu_custom_call.1} parent=1 // pred_region
      _
    $region49: #{tpu_custom_call.1} parent=1 // pred_fallthru
      _
    %8550 = vsyncpa [#allocation3], 1
    %8551 = vsyncpa [#allocation4], 1
    %8552 = vsyncpa [#allocation7], 1
    %8553 = vsyncpa [#allocation10], 1

</llo_original>
